<compile_context>
chip_gen: v7x
topology: tpu7x:2x2x1
jax: 0.10.0
libtpu: 0.0.40
codegen_flags: <defaults>
</compile_context>

<pallas_src>
import functools
import math

import jax
import jax.numpy as jnp
from jax import lax
from jax.experimental import pallas as pl
from jax.experimental.pallas import tpu as pltpu


# ---------------------------------------------------------------------------
# Fused kernel: whole forward pass in one invocation.
# ---------------------------------------------------------------------------

def _fused_kernel(*refs, num_layers, heads, head_dim, num_steps, neg_slope):
    H, C = heads, head_dim
    HC = H * C
    T = num_steps

    # ---- destructure positional refs (inputs then output) ----------------
    x2d_ref, adjT_ref, hm_ref = refs[0], refs[1], refs[2]
    pos = 3
    layer_p = []
    for _ in range(num_layers):
        layer_p.append(refs[pos:pos + 6])
        pos += 6
    ta_ref, wp_ref, bp_ref = refs[pos], refs[pos + 1], refs[pos + 2]
    out_ref = refs[pos + 3]

    N = adjT_ref.shape[1]
    hm = hm_ref[...]                                   # (H, 1, HC) head-block mask

    # Temporal-attention softmax weights: pure function of a constant parameter,
    # computed once (not per step).
    a = ta_ref[...]                                    # (1, T)
    a = a - jnp.max(a, axis=-1, keepdims=True)
    ea = jnp.exp(a)
    tw = ea * pl.reciprocal(jnp.sum(ea, axis=-1, keepdims=True), approx=True)

    # Adjacency (int8, source-major) -> f32 {0,1} once for all timesteps.
    adjT_all = adjT_ref[...].astype(jnp.float32)       # (T, N_src, N_tgt)

    # Layer-0 q|k|v projections batched over ALL timesteps (GRU-independent):
    # one (T*N, Din) @ (Din, 3*HC) matmul.  att_q/att_k already folded in.
    qkv0_all = jnp.dot(x2d_ref[...], layer_p[0][0][...],
                       preferred_element_type=jnp.float32)      # (T*N, 3*HC)

    h_state = [None] * num_layers
    feat = jnp.zeros((1, HC), jnp.float32)

    for t in range(T):          # static unroll (T tiny): cross-step visibility
        # Additive -inf mask, source-major, replicated per head along lanes:
        #   neg_big[j, h*N + i] = 0 if edge j->i exists else -1e30.
        neg = (adjT_all[t] - 1.0) * 1e30               # (N_src, N_tgt)
        neg_big = jnp.tile(neg, (1, H))                # (N, H*N)

        h = None
        for i in range(num_layers):
            wqkv_r, bias_r, wih_r, whh_r, bih_r, bhh_r = layer_p[i]

            # Fused q|k|v projection (single matmul per layer).
            if i == 0:
                qkv = qkv0_all[t * N:(t + 1) * N, :]
            else:
                qkv = jnp.dot(h, wqkv_r[...], preferred_element_type=jnp.float32)
            qa = qkv[:, :HC]            # q_i * att_q
            kb = qkv[:, HC:2 * HC]      # k_j * att_k
            v = qkv[:, 2 * HC:]

            # All-head scores with ONE matmul, lane-dense (last dim = H*N = 128):
            #   s[j, h*N+i] = sum_{c in head h} (q_i*att_q)_c * (k_j*att_k)_c
            qa_big = (qa[None, :, :] * hm).reshape(H * N, HC)        # (H*N, HC)
            s = lax.dot_general(kb, qa_big, (((1,), (1,)), ((), ())),
                                preferred_element_type=jnp.float32)  # (N, H*N)
            # leaky_relu + edge mask (one select + one add)
            s = jnp.where(s > 0.0, s, neg_slope * s) + neg_big
            m = jnp.max(s, axis=0, keepdims=True)                    # over sources
            e = jnp.exp(s - m)
            p = e * pl.reciprocal(jnp.sum(e, axis=0, keepdims=True), approx=True)

            # attn @ v with ONE matmul (contract the source axis), then keep
            # each head's own channel block -> concat-over-heads (N, HC).
            o = lax.dot_general(p, v, (((0,), (0,)), ((), ())),
                                preferred_element_type=jnp.float32)  # (H*N, HC)
            gat_out = jnp.sum(o.reshape(H, N, HC) * hm, axis=0) + bias_r[...]

            # GRUCell (gate order r, z, n).  Reference skips the GRU at t == 0
            # (hidden is None) — skipped statically here, no wasted matmuls.
            if t == 0:
                h_new = gat_out
            else:
                h_prev = h_state[i]
                gi = jnp.dot(gat_out, wih_r[...],
                             preferred_element_type=jnp.float32) + bih_r[...]
                gh = jnp.dot(h_prev, whh_r[...],
                             preferred_element_type=jnp.float32) + bhh_r[...]
                r_g = jax.nn.sigmoid(gi[:, :HC] + gh[:, :HC])
                z_g = jax.nn.sigmoid(gi[:, HC:2 * HC] + gh[:, HC:2 * HC])
                n_g = jnp.tanh(gi[:, 2 * HC:] + r_g * gh[:, 2 * HC:])
                h_new = (1.0 - z_g) * n_g + z_g * h_prev
            h_state[i] = h_new
            h = h_new
            # dropout(p=0) == identity

        # Online temporal readout: feat += softmax(time_attention)[t] * mean-pool.
        pooled_t = jnp.mean(h, axis=0, keepdims=True)                # (1, HC)
        feat = feat + tw[:, t:t + 1] * pooled_t

    # Output projection.
    out_ref[...] = (jnp.dot(feat, wp_ref[...], preferred_element_type=jnp.float32)
                    + bp_ref[...])


# ---------------------------------------------------------------------------
# Wrapper: one pallas_call (grid-free), all operands whole-array in VMEM.
# ---------------------------------------------------------------------------

def temporal_gnn_forward(x_seq, adjT_seq, params, *, num_layers, heads, head_dim,
                         neg_slope=0.2):
    T, N, Din = x_seq.shape
    HC = heads * head_dim
    out_dim = params["wp"].shape[1]

    # Head-block mask: hm[h, 0, c] = 1 iff channel c belongs to head h.
    hm = (jnp.arange(HC)[None, None, :] // head_dim
          == jnp.arange(heads)[:, None, None]).astype(jnp.float32)   # (H, 1, HC)

    # Flatten timesteps so layer-0 projections batch into one matmul in-kernel.
    x2d = x_seq.reshape(T * N, Din)
    adjT_i8 = adjT_seq.astype(jnp.int8)        # 4x less HBM traffic than f32

    inputs = [x2d, adjT_i8, hm]
    for i in range(num_layers):
        g, r = params["gat"][i], params["gru"][i]
        # Fuse q|k|v and fold the att_q / att_k column scalings into the weights.
        wqkv = jnp.concatenate(
            [g["wq"] * g["att_q"], g["wk"] * g["att_k"], g["wv"]], axis=1)
        inputs += [wqkv, g["bias"], r["w_ih"], r["w_hh"], r["b_ih"], r["b_hh"]]
    inputs += [params["time_attention"], params["wp"], params["bp"]]

    kern = functools.partial(_fused_kernel, num_layers=num_layers, heads=heads,
                             head_dim=head_dim, num_steps=T, neg_slope=neg_slope)

    vmem = pl.BlockSpec(memory_space=pltpu.MemorySpace.VMEM)   # whole array in VMEM
    return pl.pallas_call(
        kern,
        out_shape=jax.ShapeDtypeStruct((1, out_dim), jnp.float32),
        in_specs=[vmem] * len(inputs),
        out_specs=vmem,
    )(*inputs)


# ---------------------------------------------------------------------------
# Deterministic parameter init (self-consistent; note: real torch GRUCell /
# Linear weights would need a transpose when ported, since we store (in, out)).
# ---------------------------------------------------------------------------

def _xavier(key, shape):
    fan_in, fan_out = shape[0], shape[-1]
    limit = math.sqrt(6.0 / (fan_in + fan_out))
    return jax.random.uniform(key, shape, jnp.float32, -limit, limit)


def init_params(key, *, in_channels, hidden_channels, out_channels,
                num_layers, num_time_steps, heads):
    head_dim = hidden_channels
    hc = heads * head_dim
    params = {"gat": [], "gru": []}
    for i in range(num_layers):
        din = in_channels if i == 0 else hc
        key, *ks = jax.random.split(key, 6)
        params["gat"].append({
            "wq": _xavier(ks[0], (din, hc)),
            "wk": _xavier(ks[1], (din, hc)),
            "wv": _xavier(ks[2], (din, hc)),
            "att_q": _xavier(ks[3], (1, hc)),
            "att_k": _xavier(ks[4], (1, hc)),
            "bias": jnp.zeros((1, hc), jnp.float32),
        })
        key, k1, k2 = jax.random.split(key, 3)
        params["gru"].append({
            "w_ih": _xavier(k1, (hc, 3 * hc)),
            "w_hh": _xavier(k2, (hc, 3 * hc)),
            "b_ih": jnp.zeros((1, 3 * hc), jnp.float32),
            "b_hh": jnp.zeros((1, 3 * hc), jnp.float32),
        })
    key, k1, k2 = jax.random.split(key, 3)
    params["time_attention"] = jnp.ones((1, num_time_steps), jnp.float32)  # init.ones_
    params["wp"] = _xavier(k1, (hc, out_channels))
    params["bp"] = jnp.zeros((1, out_channels), jnp.float32)
    return params


# ---------------------------------------------------------------------------
# Main
# ---------------------------------------------------------------------------

if __name__ == "__main__":
    IN_CH, HIDDEN_CH, OUT_CH = 8, 4, 8
    HEADS = 8
    NUM_LAYERS = 2
    T = 4
    N = 16  # nodes per graph

    key = jax.random.PRNGKey(0)
    key, kx = jax.random.split(key)
    params = init_params(key, in_channels=IN_CH, hidden_channels=HIDDEN_CH,
                         out_channels=OUT_CH, num_layers=NUM_LAYERS,
                         num_time_steps=T, heads=HEADS)

    # Node feature sequence: (T, N, in_channels)
    x_seq = jax.random.normal(kx, (T, N, IN_CH), jnp.float32)

    # Per-time-step graphs, stored SOURCE-major: adjT[t][j, i] = 1 iff edge j->i.
    # Self-loops + a ring with time-varying offset (self-loops guarantee every
    # target has >= 1 edge, so the dense masked softmax matches PyG semantics).
    eye = jnp.eye(N, dtype=jnp.float32)
    adj_list = []
    for t in range(T):
        ring = jnp.roll(eye, t + 1, axis=1)        # edge j -> (j + t + 1) % N
        adj_list.append(jnp.clip(eye + ring, 0.0, 1.0))
    adjT_seq = jnp.stack(adj_list, axis=0)          # (T, N, N) source-major mask

    fwd = jax.jit(functools.partial(temporal_gnn_forward,
                                    num_layers=NUM_LAYERS,
                                    heads=HEADS,
                                    head_dim=HIDDEN_CH))
    out = fwd(x_seq, adjT_seq, params)
    jax.block_until_ready(out)
    assert out.shape == (1, OUT_CH)
    assert bool(jnp.all(jnp.isfinite(out)))
    print("KERNEL_OK")
</pallas_src>

<mosaic_0001>
module attributes {stable_mosaic.version = 11 : i64} {
  func.func @_fused_kernel(%arg0: memref<64x8xf32, #tpu.memory_space<vmem>>, %arg1: memref<4x16x16xi8, #tpu.memory_space<vmem>>, %arg2: memref<8x1x32xf32, #tpu.memory_space<vmem>>, %arg3: memref<8x96xf32, #tpu.memory_space<vmem>>, %arg4: memref<1x32xf32, #tpu.memory_space<vmem>>, %arg5: memref<32x96xf32, #tpu.memory_space<vmem>>, %arg6: memref<32x96xf32, #tpu.memory_space<vmem>>, %arg7: memref<1x96xf32, #tpu.memory_space<vmem>>, %arg8: memref<1x96xf32, #tpu.memory_space<vmem>>, %arg9: memref<32x96xf32, #tpu.memory_space<vmem>>, %arg10: memref<1x32xf32, #tpu.memory_space<vmem>>, %arg11: memref<32x96xf32, #tpu.memory_space<vmem>>, %arg12: memref<32x96xf32, #tpu.memory_space<vmem>>, %arg13: memref<1x96xf32, #tpu.memory_space<vmem>>, %arg14: memref<1x96xf32, #tpu.memory_space<vmem>>, %arg15: memref<1x4xf32, #tpu.memory_space<vmem>>, %arg16: memref<32x8xf32, #tpu.memory_space<vmem>>, %arg17: memref<1x8xf32, #tpu.memory_space<vmem>>, %arg18: memref<1x8xf32, #tpu.memory_space<vmem>>) attributes {dimension_semantics = [], scalar_prefetch = 0 : i64, scratch_operands = 0 : i64, tpu.core_type = #tpu.core_type<tc>} {
    %c0 = arith.constant 0 : index
    %c0_0 = arith.constant 0 : index
    %c0_1 = arith.constant 0 : index
    %0 = vector.load %arg2[%c0, %c0_0, %c0_1] : memref<8x1x32xf32, #tpu.memory_space<vmem>>, vector<8x1x32xf32>
    %c0_2 = arith.constant 0 : index
    %c0_3 = arith.constant 0 : index
    %1 = vector.load %arg15[%c0_2, %c0_3] : memref<1x4xf32, #tpu.memory_space<vmem>>, vector<1x4xf32>
    %cst = arith.constant dense<0xFF800000> : vector<1xf32>
    %2 = vector.multi_reduction <maximumf>, %1, %cst [1] : vector<1x4xf32> to vector<1xf32>
    %3 = vector.shape_cast %2 : vector<1xf32> to vector<1x1xf32>
    %4 = vector.broadcast %3 : vector<1x1xf32> to vector<1x4xf32>
    %5 = arith.subf %1, %4 : vector<1x4xf32>
    %6 = math.exp %5 : vector<1x4xf32>
    %cst_4 = arith.constant dense<0.000000e+00> : vector<1xf32>
    %7 = vector.multi_reduction <add>, %6, %cst_4 [1] : vector<1x4xf32> to vector<1xf32>
    %8 = vector.shape_cast %7 : vector<1xf32> to vector<1x1xf32>
    %9 = tpu.reciprocal %8 {approx = true} : vector<1x1xf32> -> vector<1x1xf32>
    %10 = vector.broadcast %9 : vector<1x1xf32> to vector<1x4xf32>
    %11 = arith.mulf %6, %10 : vector<1x4xf32>
    %c0_5 = arith.constant 0 : index
    %c0_6 = arith.constant 0 : index
    %c0_7 = arith.constant 0 : index
    %12 = vector.load %arg1[%c0_5, %c0_6, %c0_7] : memref<4x16x16xi8, #tpu.memory_space<vmem>>, vector<4x16x16xi8>
    %13 = arith.sitofp %12 : vector<4x16x16xi8> to vector<4x16x16xf32>
    %c0_8 = arith.constant 0 : index
    %c0_9 = arith.constant 0 : index
    %14 = vector.load %arg0[%c0_8, %c0_9] : memref<64x8xf32, #tpu.memory_space<vmem>>, vector<64x8xf32>
    %c0_10 = arith.constant 0 : index
    %c0_11 = arith.constant 0 : index
    %15 = vector.load %arg3[%c0_10, %c0_11] : memref<8x96xf32, #tpu.memory_space<vmem>>, vector<8x96xf32>
    %cst_12 = arith.constant dense<0.000000e+00> : vector<64x96xf32>
    %16 = tpu.matmul %14, %15, %cst_12 {dimension_numbers = #tpu.dot_dimension_numbers<[1], [0], [0], [1], [0, 0, 1, 1], [], []>} : vector<64x8xf32>, vector<8x96xf32>, vector<64x96xf32> -> vector<64x96xf32>
    %cst_13 = arith.constant 0.000000e+00 : f32
    %17 = vector.broadcast %cst_13 : f32 to vector<1x32xf32>
    %18 = vector.extract_strided_slice %13 {offsets = [0, 0, 0], sizes = [1, 16, 16], strides = [1, 1, 1]} : vector<4x16x16xf32> to vector<1x16x16xf32>
    %19 = vector.shape_cast %18 : vector<1x16x16xf32> to vector<16x16xf32>
    %cst_14 = arith.constant 1.000000e+00 : f32
    %20 = vector.broadcast %cst_14 : f32 to vector<16x16xf32>
    %21 = arith.subf %19, %20 : vector<16x16xf32>
    %cst_15 = arith.constant 1.000000e+30 : f32
    %22 = vector.broadcast %cst_15 : f32 to vector<16x16xf32>
    %23 = arith.mulf %21, %22 : vector<16x16xf32>
    %24 = tpu.concatenate %23, %23, %23, %23, %23, %23, %23, %23 in 1 : vector<16x16xf32>, vector<16x16xf32>, vector<16x16xf32>, vector<16x16xf32>, vector<16x16xf32>, vector<16x16xf32>, vector<16x16xf32>, vector<16x16xf32> -> vector<16x128xf32>
    %25 = vector.extract_strided_slice %16 {offsets = [0, 0], sizes = [16, 96], strides = [1, 1]} : vector<64x96xf32> to vector<16x96xf32>
    %26 = vector.extract_strided_slice %25 {offsets = [0, 0], sizes = [16, 32], strides = [1, 1]} : vector<16x96xf32> to vector<16x32xf32>
    %27 = vector.extract_strided_slice %25 {offsets = [0, 32], sizes = [16, 32], strides = [1, 1]} : vector<16x96xf32> to vector<16x32xf32>
    %28 = vector.extract_strided_slice %25 {offsets = [0, 64], sizes = [16, 32], strides = [1, 1]} : vector<16x96xf32> to vector<16x32xf32>
    %29 = vector.shape_cast %26 : vector<16x32xf32> to vector<1x16x32xf32>
    %30 = vector.broadcast %29 : vector<1x16x32xf32> to vector<8x16x32xf32>
    %31 = vector.broadcast %0 : vector<8x1x32xf32> to vector<8x16x32xf32>
    %32 = arith.mulf %30, %31 : vector<8x16x32xf32>
    %33 = vector.shape_cast %32 : vector<8x16x32xf32> to vector<128x32xf32>
    %cst_16 = arith.constant dense<0.000000e+00> : vector<16x128xf32>
    %34 = tpu.matmul %27, %33, %cst_16 {dimension_numbers = #tpu.dot_dimension_numbers<[1], [1], [0], [0], [0, 0, 1, 0], [], []>} : vector<16x32xf32>, vector<128x32xf32>, vector<16x128xf32> -> vector<16x128xf32>
    %cst_17 = arith.constant 0.000000e+00 : f32
    %35 = vector.broadcast %cst_17 : f32 to vector<16x128xf32>
    %36 = arith.cmpf ogt, %34, %35 : vector<16x128xf32>
    %cst_18 = arith.constant 2.000000e-01 : f32
    %37 = vector.broadcast %cst_18 : f32 to vector<16x128xf32>
    %38 = arith.mulf %37, %34 : vector<16x128xf32>
    %39 = arith.select %36, %34, %38 : vector<16x128xi1>, vector<16x128xf32>
    %40 = arith.addf %39, %24 : vector<16x128xf32>
    %cst_19 = arith.constant dense<0xFF800000> : vector<128xf32>
    %41 = vector.multi_reduction <maximumf>, %40, %cst_19 [0] : vector<16x128xf32> to vector<128xf32>
    %42 = vector.shape_cast %41 : vector<128xf32> to vector<1x128xf32>
    %43 = vector.broadcast %42 : vector<1x128xf32> to vector<16x128xf32>
    %44 = arith.subf %40, %43 : vector<16x128xf32>
    %45 = math.exp %44 : vector<16x128xf32>
    %cst_20 = arith.constant dense<0.000000e+00> : vector<128xf32>
    %46 = vector.multi_reduction <add>, %45, %cst_20 [0] : vector<16x128xf32> to vector<128xf32>
    %47 = vector.shape_cast %46 : vector<128xf32> to vector<1x128xf32>
    %48 = tpu.reciprocal %47 {approx = true} : vector<1x128xf32> -> vector<1x128xf32>
    %49 = vector.broadcast %48 : vector<1x128xf32> to vector<16x128xf32>
    %50 = arith.mulf %45, %49 : vector<16x128xf32>
    %cst_21 = arith.constant dense<0.000000e+00> : vector<128x32xf32>
    %51 = tpu.matmul %50, %28, %cst_21 {dimension_numbers = #tpu.dot_dimension_numbers<[0], [0], [1], [1], [0, 1, 1, 1], [], []>} : vector<16x128xf32>, vector<16x32xf32>, vector<128x32xf32> -> vector<128x32xf32>
    %52 = vector.shape_cast %51 : vector<128x32xf32> to vector<8x16x32xf32>
    %53 = vector.broadcast %0 : vector<8x1x32xf32> to vector<8x16x32xf32>
    %54 = arith.mulf %52, %53 : vector<8x16x32xf32>
    %cst_22 = arith.constant dense<0.000000e+00> : vector<16x32xf32>
    %55 = vector.multi_reduction <add>, %54, %cst_22 [0] : vector<8x16x32xf32> to vector<16x32xf32>
    %c0_23 = arith.constant 0 : index
    %c0_24 = arith.constant 0 : index
    %56 = vector.load %arg4[%c0_23, %c0_24] : memref<1x32xf32, #tpu.memory_space<vmem>>, vector<1x32xf32>
    %57 = vector.broadcast %56 : vector<1x32xf32> to vector<16x32xf32>
    %58 = arith.addf %55, %57 : vector<16x32xf32>
    %c0_25 = arith.constant 0 : index
    %c0_26 = arith.constant 0 : index
    %59 = vector.load %arg9[%c0_25, %c0_26] : memref<32x96xf32, #tpu.memory_space<vmem>>, vector<32x96xf32>
    %cst_27 = arith.constant dense<0.000000e+00> : vector<16x96xf32>
    %60 = tpu.matmul %58, %59, %cst_27 {dimension_numbers = #tpu.dot_dimension_numbers<[1], [0], [0], [1], [0, 0, 1, 1], [], []>} : vector<16x32xf32>, vector<32x96xf32>, vector<16x96xf32> -> vector<16x96xf32>
    %61 = vector.extract_strided_slice %60 {offsets = [0, 0], sizes = [16, 32], strides = [1, 1]} : vector<16x96xf32> to vector<16x32xf32>
    %62 = vector.extract_strided_slice %60 {offsets = [0, 32], sizes = [16, 32], strides = [1, 1]} : vector<16x96xf32> to vector<16x32xf32>
    %63 = vector.extract_strided_slice %60 {offsets = [0, 64], sizes = [16, 32], strides = [1, 1]} : vector<16x96xf32> to vector<16x32xf32>
    %64 = vector.shape_cast %61 : vector<16x32xf32> to vector<1x16x32xf32>
    %65 = vector.broadcast %64 : vector<1x16x32xf32> to vector<8x16x32xf32>
    %66 = vector.broadcast %0 : vector<8x1x32xf32> to vector<8x16x32xf32>
    %67 = arith.mulf %65, %66 : vector<8x16x32xf32>
    %68 = vector.shape_cast %67 : vector<8x16x32xf32> to vector<128x32xf32>
    %cst_28 = arith.constant dense<0.000000e+00> : vector<16x128xf32>
    %69 = tpu.matmul %62, %68, %cst_28 {dimension_numbers = #tpu.dot_dimension_numbers<[1], [1], [0], [0], [0, 0, 1, 0], [], []>} : vector<16x32xf32>, vector<128x32xf32>, vector<16x128xf32> -> vector<16x128xf32>
    %cst_29 = arith.constant 0.000000e+00 : f32
    %70 = vector.broadcast %cst_29 : f32 to vector<16x128xf32>
    %71 = arith.cmpf ogt, %69, %70 : vector<16x128xf32>
    %cst_30 = arith.constant 2.000000e-01 : f32
    %72 = vector.broadcast %cst_30 : f32 to vector<16x128xf32>
    %73 = arith.mulf %72, %69 : vector<16x128xf32>
    %74 = arith.select %71, %69, %73 : vector<16x128xi1>, vector<16x128xf32>
    %75 = arith.addf %74, %24 : vector<16x128xf32>
    %cst_31 = arith.constant dense<0xFF800000> : vector<128xf32>
    %76 = vector.multi_reduction <maximumf>, %75, %cst_31 [0] : vector<16x128xf32> to vector<128xf32>
    %77 = vector.shape_cast %76 : vector<128xf32> to vector<1x128xf32>
    %78 = vector.broadcast %77 : vector<1x128xf32> to vector<16x128xf32>
    %79 = arith.subf %75, %78 : vector<16x128xf32>
    %80 = math.exp %79 : vector<16x128xf32>
    %cst_32 = arith.constant dense<0.000000e+00> : vector<128xf32>
    %81 = vector.multi_reduction <add>, %80, %cst_32 [0] : vector<16x128xf32> to vector<128xf32>
    %82 = vector.shape_cast %81 : vector<128xf32> to vector<1x128xf32>
    %83 = tpu.reciprocal %82 {approx = true} : vector<1x128xf32> -> vector<1x128xf32>
    %84 = vector.broadcast %83 : vector<1x128xf32> to vector<16x128xf32>
    %85 = arith.mulf %80, %84 : vector<16x128xf32>
    %cst_33 = arith.constant dense<0.000000e+00> : vector<128x32xf32>
    %86 = tpu.matmul %85, %63, %cst_33 {dimension_numbers = #tpu.dot_dimension_numbers<[0], [0], [1], [1], [0, 1, 1, 1], [], []>} : vector<16x128xf32>, vector<16x32xf32>, vector<128x32xf32> -> vector<128x32xf32>
    %87 = vector.shape_cast %86 : vector<128x32xf32> to vector<8x16x32xf32>
    %88 = vector.broadcast %0 : vector<8x1x32xf32> to vector<8x16x32xf32>
    %89 = arith.mulf %87, %88 : vector<8x16x32xf32>
    %cst_34 = arith.constant dense<0.000000e+00> : vector<16x32xf32>
    %90 = vector.multi_reduction <add>, %89, %cst_34 [0] : vector<8x16x32xf32> to vector<16x32xf32>
    %c0_35 = arith.constant 0 : index
    %c0_36 = arith.constant 0 : index
    %91 = vector.load %arg10[%c0_35, %c0_36] : memref<1x32xf32, #tpu.memory_space<vmem>>, vector<1x32xf32>
    %92 = vector.broadcast %91 : vector<1x32xf32> to vector<16x32xf32>
    %93 = arith.addf %90, %92 : vector<16x32xf32>
    %cst_37 = arith.constant dense<0.000000e+00> : vector<32xf32>
    %94 = vector.multi_reduction <add>, %93, %cst_37 [0] : vector<16x32xf32> to vector<32xf32>
    %95 = vector.shape_cast %94 : vector<32xf32> to vector<1x32xf32>
    %cst_38 = arith.constant 1.600000e+01 : f32
    %96 = vector.broadcast %cst_38 : f32 to vector<1x32xf32>
    %97 = arith.divf %95, %96 : vector<1x32xf32>
    %98 = vector.extract_strided_slice %11 {offsets = [0, 0], sizes = [1, 1], strides = [1, 1]} : vector<1x4xf32> to vector<1x1xf32>
    %99 = vector.broadcast %98 : vector<1x1xf32> to vector<1x32xf32>
    %100 = arith.mulf %99, %97 : vector<1x32xf32>
    %101 = arith.addf %17, %100 : vector<1x32xf32>
    %102 = vector.extract_strided_slice %13 {offsets = [1, 0, 0], sizes = [1, 16, 16], strides = [1, 1, 1]} : vector<4x16x16xf32> to vector<1x16x16xf32>
    %103 = vector.shape_cast %102 : vector<1x16x16xf32> to vector<16x16xf32>
    %cst_39 = arith.constant 1.000000e+00 : f32
    %104 = vector.broadcast %cst_39 : f32 to vector<16x16xf32>
    %105 = arith.subf %103, %104 : vector<16x16xf32>
    %cst_40 = arith.constant 1.000000e+30 : f32
    %106 = vector.broadcast %cst_40 : f32 to vector<16x16xf32>
    %107 = arith.mulf %105, %106 : vector<16x16xf32>
    %108 = tpu.concatenate %107, %107, %107, %107, %107, %107, %107, %107 in 1 : vector<16x16xf32>, vector<16x16xf32>, vector<16x16xf32>, vector<16x16xf32>, vector<16x16xf32>, vector<16x16xf32>, vector<16x16xf32>, vector<16x16xf32> -> vector<16x128xf32>
    %109 = vector.extract_strided_slice %16 {offsets = [16, 0], sizes = [16, 96], strides = [1, 1]} : vector<64x96xf32> to vector<16x96xf32>
    %110 = vector.extract_strided_slice %109 {offsets = [0, 0], sizes = [16, 32], strides = [1, 1]} : vector<16x96xf32> to vector<16x32xf32>
    %111 = vector.extract_strided_slice %109 {offsets = [0, 32], sizes = [16, 32], strides = [1, 1]} : vector<16x96xf32> to vector<16x32xf32>
    %112 = vector.extract_strided_slice %109 {offsets = [0, 64], sizes = [16, 32], strides = [1, 1]} : vector<16x96xf32> to vector<16x32xf32>
    %113 = vector.shape_cast %110 : vector<16x32xf32> to vector<1x16x32xf32>
    %114 = vector.broadcast %113 : vector<1x16x32xf32> to vector<8x16x32xf32>
    %115 = vector.broadcast %0 : vector<8x1x32xf32> to vector<8x16x32xf32>
    %116 = arith.mulf %114, %115 : vector<8x16x32xf32>
    %117 = vector.shape_cast %116 : vector<8x16x32xf32> to vector<128x32xf32>
    %cst_41 = arith.constant dense<0.000000e+00> : vector<16x128xf32>
    %118 = tpu.matmul %111, %117, %cst_41 {dimension_numbers = #tpu.dot_dimension_numbers<[1], [1], [0], [0], [0, 0, 1, 0], [], []>} : vector<16x32xf32>, vector<128x32xf32>, vector<16x128xf32> -> vector<16x128xf32>
    %cst_42 = arith.constant 0.000000e+00 : f32
    %119 = vector.broadcast %cst_42 : f32 to vector<16x128xf32>
    %120 = arith.cmpf ogt, %118, %119 : vector<16x128xf32>
    %cst_43 = arith.constant 2.000000e-01 : f32
    %121 = vector.broadcast %cst_43 : f32 to vector<16x128xf32>
    %122 = arith.mulf %121, %118 : vector<16x128xf32>
    %123 = arith.select %120, %118, %122 : vector<16x128xi1>, vector<16x128xf32>
    %124 = arith.addf %123, %108 : vector<16x128xf32>
    %cst_44 = arith.constant dense<0xFF800000> : vector<128xf32>
    %125 = vector.multi_reduction <maximumf>, %124, %cst_44 [0] : vector<16x128xf32> to vector<128xf32>
    %126 = vector.shape_cast %125 : vector<128xf32> to vector<1x128xf32>
    %127 = vector.broadcast %126 : vector<1x128xf32> to vector<16x128xf32>
    %128 = arith.subf %124, %127 : vector<16x128xf32>
    %129 = math.exp %128 : vector<16x128xf32>
    %cst_45 = arith.constant dense<0.000000e+00> : vector<128xf32>
    %130 = vector.multi_reduction <add>, %129, %cst_45 [0] : vector<16x128xf32> to vector<128xf32>
    %131 = vector.shape_cast %130 : vector<128xf32> to vector<1x128xf32>
    %132 = tpu.reciprocal %131 {approx = true} : vector<1x128xf32> -> vector<1x128xf32>
    %133 = vector.broadcast %132 : vector<1x128xf32> to vector<16x128xf32>
    %134 = arith.mulf %129, %133 : vector<16x128xf32>
    %cst_46 = arith.constant dense<0.000000e+00> : vector<128x32xf32>
    %135 = tpu.matmul %134, %112, %cst_46 {dimension_numbers = #tpu.dot_dimension_numbers<[0], [0], [1], [1], [0, 1, 1, 1], [], []>} : vector<16x128xf32>, vector<16x32xf32>, vector<128x32xf32> -> vector<128x32xf32>
    %136 = vector.shape_cast %135 : vector<128x32xf32> to vector<8x16x32xf32>
    %137 = vector.broadcast %0 : vector<8x1x32xf32> to vector<8x16x32xf32>
    %138 = arith.mulf %136, %137 : vector<8x16x32xf32>
    %cst_47 = arith.constant dense<0.000000e+00> : vector<16x32xf32>
    %139 = vector.multi_reduction <add>, %138, %cst_47 [0] : vector<8x16x32xf32> to vector<16x32xf32>
    %c0_48 = arith.constant 0 : index
    %c0_49 = arith.constant 0 : index
    %140 = vector.load %arg4[%c0_48, %c0_49] : memref<1x32xf32, #tpu.memory_space<vmem>>, vector<1x32xf32>
    %141 = vector.broadcast %140 : vector<1x32xf32> to vector<16x32xf32>
    %142 = arith.addf %139, %141 : vector<16x32xf32>
    %c0_50 = arith.constant 0 : index
    %c0_51 = arith.constant 0 : index
    %143 = vector.load %arg5[%c0_50, %c0_51] : memref<32x96xf32, #tpu.memory_space<vmem>>, vector<32x96xf32>
    %cst_52 = arith.constant dense<0.000000e+00> : vector<16x96xf32>
    %144 = tpu.matmul %142, %143, %cst_52 {dimension_numbers = #tpu.dot_dimension_numbers<[1], [0], [0], [1], [0, 0, 1, 1], [], []>} : vector<16x32xf32>, vector<32x96xf32>, vector<16x96xf32> -> vector<16x96xf32>
    %c0_53 = arith.constant 0 : index
    %c0_54 = arith.constant 0 : index
    %145 = vector.load %arg7[%c0_53, %c0_54] : memref<1x96xf32, #tpu.memory_space<vmem>>, vector<1x96xf32>
    %146 = vector.broadcast %145 : vector<1x96xf32> to vector<16x96xf32>
    %147 = arith.addf %144, %146 : vector<16x96xf32>
    %c0_55 = arith.constant 0 : index
    %c0_56 = arith.constant 0 : index
    %148 = vector.load %arg6[%c0_55, %c0_56] : memref<32x96xf32, #tpu.memory_space<vmem>>, vector<32x96xf32>
    %cst_57 = arith.constant dense<0.000000e+00> : vector<16x96xf32>
    %149 = tpu.matmul %58, %148, %cst_57 {dimension_numbers = #tpu.dot_dimension_numbers<[1], [0], [0], [1], [0, 0, 1, 1], [], []>} : vector<16x32xf32>, vector<32x96xf32>, vector<16x96xf32> -> vector<16x96xf32>
    %c0_58 = arith.constant 0 : index
    %c0_59 = arith.constant 0 : index
    %150 = vector.load %arg8[%c0_58, %c0_59] : memref<1x96xf32, #tpu.memory_space<vmem>>, vector<1x96xf32>
    %151 = vector.broadcast %150 : vector<1x96xf32> to vector<16x96xf32>
    %152 = arith.addf %149, %151 : vector<16x96xf32>
    %153 = vector.extract_strided_slice %147 {offsets = [0, 0], sizes = [16, 32], strides = [1, 1]} : vector<16x96xf32> to vector<16x32xf32>
    %154 = vector.extract_strided_slice %152 {offsets = [0, 0], sizes = [16, 32], strides = [1, 1]} : vector<16x96xf32> to vector<16x32xf32>
    %155 = arith.addf %153, %154 : vector<16x32xf32>
    %156 = arith.negf %155 : vector<16x32xf32>
    %157 = math.exp %156 : vector<16x32xf32>
    %cst_60 = arith.constant 1.000000e+00 : f32
    %158 = vector.broadcast %cst_60 : f32 to vector<16x32xf32>
    %159 = arith.addf %158, %157 : vector<16x32xf32>
    %160 = arith.divf %158, %159 : vector<16x32xf32>
    %161 = vector.extract_strided_slice %147 {offsets = [0, 32], sizes = [16, 32], strides = [1, 1]} : vector<16x96xf32> to vector<16x32xf32>
    %162 = vector.extract_strided_slice %152 {offsets = [0, 32], sizes = [16, 32], strides = [1, 1]} : vector<16x96xf32> to vector<16x32xf32>
    %163 = arith.addf %161, %162 : vector<16x32xf32>
    %164 = arith.negf %163 : vector<16x32xf32>
    %165 = math.exp %164 : vector<16x32xf32>
    %cst_61 = arith.constant 1.000000e+00 : f32
    %166 = vector.broadcast %cst_61 : f32 to vector<16x32xf32>
    %167 = arith.addf %166, %165 : vector<16x32xf32>
    %168 = arith.divf %166, %167 : vector<16x32xf32>
    %169 = vector.extract_strided_slice %147 {offsets = [0, 64], sizes = [16, 32], strides = [1, 1]} : vector<16x96xf32> to vector<16x32xf32>
    %170 = vector.extract_strided_slice %152 {offsets = [0, 64], sizes = [16, 32], strides = [1, 1]} : vector<16x96xf32> to vector<16x32xf32>
    %171 = arith.mulf %160, %170 : vector<16x32xf32>
    %172 = arith.addf %169, %171 : vector<16x32xf32>
    %173 = math.tanh %172 : vector<16x32xf32>
    %cst_62 = arith.constant 1.000000e+00 : f32
    %174 = vector.broadcast %cst_62 : f32 to vector<16x32xf32>
    %175 = arith.subf %174, %168 : vector<16x32xf32>
    %176 = arith.mulf %175, %173 : vector<16x32xf32>
    %177 = arith.mulf %168, %58 : vector<16x32xf32>
    %178 = arith.addf %176, %177 : vector<16x32xf32>
    %c0_63 = arith.constant 0 : index
    %c0_64 = arith.constant 0 : index
    %179 = vector.load %arg9[%c0_63, %c0_64] : memref<32x96xf32, #tpu.memory_space<vmem>>, vector<32x96xf32>
    %cst_65 = arith.constant dense<0.000000e+00> : vector<16x96xf32>
    %180 = tpu.matmul %178, %179, %cst_65 {dimension_numbers = #tpu.dot_dimension_numbers<[1], [0], [0], [1], [0, 0, 1, 1], [], []>} : vector<16x32xf32>, vector<32x96xf32>, vector<16x96xf32> -> vector<16x96xf32>
    %181 = vector.extract_strided_slice %180 {offsets = [0, 0], sizes = [16, 32], strides = [1, 1]} : vector<16x96xf32> to vector<16x32xf32>
    %182 = vector.extract_strided_slice %180 {offsets = [0, 32], sizes = [16, 32], strides = [1, 1]} : vector<16x96xf32> to vector<16x32xf32>
    %183 = vector.extract_strided_slice %180 {offsets = [0, 64], sizes = [16, 32], strides = [1, 1]} : vector<16x96xf32> to vector<16x32xf32>
    %184 = vector.shape_cast %181 : vector<16x32xf32> to vector<1x16x32xf32>
    %185 = vector.broadcast %184 : vector<1x16x32xf32> to vector<8x16x32xf32>
    %186 = vector.broadcast %0 : vector<8x1x32xf32> to vector<8x16x32xf32>
    %187 = arith.mulf %185, %186 : vector<8x16x32xf32>
    %188 = vector.shape_cast %187 : vector<8x16x32xf32> to vector<128x32xf32>
    %cst_66 = arith.constant dense<0.000000e+00> : vector<16x128xf32>
    %189 = tpu.matmul %182, %188, %cst_66 {dimension_numbers = #tpu.dot_dimension_numbers<[1], [1], [0], [0], [0, 0, 1, 0], [], []>} : vector<16x32xf32>, vector<128x32xf32>, vector<16x128xf32> -> vector<16x128xf32>
    %cst_67 = arith.constant 0.000000e+00 : f32
    %190 = vector.broadcast %cst_67 : f32 to vector<16x128xf32>
    %191 = arith.cmpf ogt, %189, %190 : vector<16x128xf32>
    %cst_68 = arith.constant 2.000000e-01 : f32
    %192 = vector.broadcast %cst_68 : f32 to vector<16x128xf32>
    %193 = arith.mulf %192, %189 : vector<16x128xf32>
    %194 = arith.select %191, %189, %193 : vector<16x128xi1>, vector<16x128xf32>
    %195 = arith.addf %194, %108 : vector<16x128xf32>
    %cst_69 = arith.constant dense<0xFF800000> : vector<128xf32>
    %196 = vector.multi_reduction <maximumf>, %195, %cst_69 [0] : vector<16x128xf32> to vector<128xf32>
    %197 = vector.shape_cast %196 : vector<128xf32> to vector<1x128xf32>
    %198 = vector.broadcast %197 : vector<1x128xf32> to vector<16x128xf32>
    %199 = arith.subf %195, %198 : vector<16x128xf32>
    %200 = math.exp %199 : vector<16x128xf32>
    %cst_70 = arith.constant dense<0.000000e+00> : vector<128xf32>
    %201 = vector.multi_reduction <add>, %200, %cst_70 [0] : vector<16x128xf32> to vector<128xf32>
    %202 = vector.shape_cast %201 : vector<128xf32> to vector<1x128xf32>
    %203 = tpu.reciprocal %202 {approx = true} : vector<1x128xf32> -> vector<1x128xf32>
    %204 = vector.broadcast %203 : vector<1x128xf32> to vector<16x128xf32>
    %205 = arith.mulf %200, %204 : vector<16x128xf32>
    %cst_71 = arith.constant dense<0.000000e+00> : vector<128x32xf32>
    %206 = tpu.matmul %205, %183, %cst_71 {dimension_numbers = #tpu.dot_dimension_numbers<[0], [0], [1], [1], [0, 1, 1, 1], [], []>} : vector<16x128xf32>, vector<16x32xf32>, vector<128x32xf32> -> vector<128x32xf32>
    %207 = vector.shape_cast %206 : vector<128x32xf32> to vector<8x16x32xf32>
    %208 = vector.broadcast %0 : vector<8x1x32xf32> to vector<8x16x32xf32>
    %209 = arith.mulf %207, %208 : vector<8x16x32xf32>
    %cst_72 = arith.constant dense<0.000000e+00> : vector<16x32xf32>
    %210 = vector.multi_reduction <add>, %209, %cst_72 [0] : vector<8x16x32xf32> to vector<16x32xf32>
    %c0_73 = arith.constant 0 : index
    %c0_74 = arith.constant 0 : index
    %211 = vector.load %arg10[%c0_73, %c0_74] : memref<1x32xf32, #tpu.memory_space<vmem>>, vector<1x32xf32>
    %212 = vector.broadcast %211 : vector<1x32xf32> to vector<16x32xf32>
    %213 = arith.addf %210, %212 : vector<16x32xf32>
    %c0_75 = arith.constant 0 : index
    %c0_76 = arith.constant 0 : index
    %214 = vector.load %arg11[%c0_75, %c0_76] : memref<32x96xf32, #tpu.memory_space<vmem>>, vector<32x96xf32>
    %cst_77 = arith.constant dense<0.000000e+00> : vector<16x96xf32>
    %215 = tpu.matmul %213, %214, %cst_77 {dimension_numbers = #tpu.dot_dimension_numbers<[1], [0], [0], [1], [0, 0, 1, 1], [], []>} : vector<16x32xf32>, vector<32x96xf32>, vector<16x96xf32> -> vector<16x96xf32>
    %c0_78 = arith.constant 0 : index
    %c0_79 = arith.constant 0 : index
    %216 = vector.load %arg13[%c0_78, %c0_79] : memref<1x96xf32, #tpu.memory_space<vmem>>, vector<1x96xf32>
    %217 = vector.broadcast %216 : vector<1x96xf32> to vector<16x96xf32>
    %218 = arith.addf %215, %217 : vector<16x96xf32>
    %c0_80 = arith.constant 0 : index
    %c0_81 = arith.constant 0 : index
    %219 = vector.load %arg12[%c0_80, %c0_81] : memref<32x96xf32, #tpu.memory_space<vmem>>, vector<32x96xf32>
    %cst_82 = arith.constant dense<0.000000e+00> : vector<16x96xf32>
    %220 = tpu.matmul %93, %219, %cst_82 {dimension_numbers = #tpu.dot_dimension_numbers<[1], [0], [0], [1], [0, 0, 1, 1], [], []>} : vector<16x32xf32>, vector<32x96xf32>, vector<16x96xf32> -> vector<16x96xf32>
    %c0_83 = arith.constant 0 : index
    %c0_84 = arith.constant 0 : index
    %221 = vector.load %arg14[%c0_83, %c0_84] : memref<1x96xf32, #tpu.memory_space<vmem>>, vector<1x96xf32>
    %222 = vector.broadcast %221 : vector<1x96xf32> to vector<16x96xf32>
    %223 = arith.addf %220, %222 : vector<16x96xf32>
    %224 = vector.extract_strided_slice %218 {offsets = [0, 0], sizes = [16, 32], strides = [1, 1]} : vector<16x96xf32> to vector<16x32xf32>
    %225 = vector.extract_strided_slice %223 {offsets = [0, 0], sizes = [16, 32], strides = [1, 1]} : vector<16x96xf32> to vector<16x32xf32>
    %226 = arith.addf %224, %225 : vector<16x32xf32>
    %227 = arith.negf %226 : vector<16x32xf32>
    %228 = math.exp %227 : vector<16x32xf32>
    %cst_85 = arith.constant 1.000000e+00 : f32
    %229 = vector.broadcast %cst_85 : f32 to vector<16x32xf32>
    %230 = arith.addf %229, %228 : vector<16x32xf32>
    %231 = arith.divf %229, %230 : vector<16x32xf32>
    %232 = vector.extract_strided_slice %218 {offsets = [0, 32], sizes = [16, 32], strides = [1, 1]} : vector<16x96xf32> to vector<16x32xf32>
    %233 = vector.extract_strided_slice %223 {offsets = [0, 32], sizes = [16, 32], strides = [1, 1]} : vector<16x96xf32> to vector<16x32xf32>
    %234 = arith.addf %232, %233 : vector<16x32xf32>
    %235 = arith.negf %234 : vector<16x32xf32>
    %236 = math.exp %235 : vector<16x32xf32>
    %cst_86 = arith.constant 1.000000e+00 : f32
    %237 = vector.broadcast %cst_86 : f32 to vector<16x32xf32>
    %238 = arith.addf %237, %236 : vector<16x32xf32>
    %239 = arith.divf %237, %238 : vector<16x32xf32>
    %240 = vector.extract_strided_slice %218 {offsets = [0, 64], sizes = [16, 32], strides = [1, 1]} : vector<16x96xf32> to vector<16x32xf32>
    %241 = vector.extract_strided_slice %223 {offsets = [0, 64], sizes = [16, 32], strides = [1, 1]} : vector<16x96xf32> to vector<16x32xf32>
    %242 = arith.mulf %231, %241 : vector<16x32xf32>
    %243 = arith.addf %240, %242 : vector<16x32xf32>
    %244 = math.tanh %243 : vector<16x32xf32>
    %cst_87 = arith.constant 1.000000e+00 : f32
    %245 = vector.broadcast %cst_87 : f32 to vector<16x32xf32>
    %246 = arith.subf %245, %239 : vector<16x32xf32>
    %247 = arith.mulf %246, %244 : vector<16x32xf32>
    %248 = arith.mulf %239, %93 : vector<16x32xf32>
    %249 = arith.addf %247, %248 : vector<16x32xf32>
    %cst_88 = arith.constant dense<0.000000e+00> : vector<32xf32>
    %250 = vector.multi_reduction <add>, %249, %cst_88 [0] : vector<16x32xf32> to vector<32xf32>
    %251 = vector.shape_cast %250 : vector<32xf32> to vector<1x32xf32>
    %cst_89 = arith.constant 1.600000e+01 : f32
    %252 = vector.broadcast %cst_89 : f32 to vector<1x32xf32>
    %253 = arith.divf %251, %252 : vector<1x32xf32>
    %254 = vector.extract_strided_slice %11 {offsets = [0, 1], sizes = [1, 1], strides = [1, 1]} : vector<1x4xf32> to vector<1x1xf32>
    %255 = vector.broadcast %254 : vector<1x1xf32> to vector<1x32xf32>
    %256 = arith.mulf %255, %253 : vector<1x32xf32>
    %257 = arith.addf %101, %256 : vector<1x32xf32>
    %258 = vector.extract_strided_slice %13 {offsets = [2, 0, 0], sizes = [1, 16, 16], strides = [1, 1, 1]} : vector<4x16x16xf32> to vector<1x16x16xf32>
    %259 = vector.shape_cast %258 : vector<1x16x16xf32> to vector<16x16xf32>
    %cst_90 = arith.constant 1.000000e+00 : f32
    %260 = vector.broadcast %cst_90 : f32 to vector<16x16xf32>
    %261 = arith.subf %259, %260 : vector<16x16xf32>
    %cst_91 = arith.constant 1.000000e+30 : f32
    %262 = vector.broadcast %cst_91 : f32 to vector<16x16xf32>
    %263 = arith.mulf %261, %262 : vector<16x16xf32>
    %264 = tpu.concatenate %263, %263, %263, %263, %263, %263, %263, %263 in 1 : vector<16x16xf32>, vector<16x16xf32>, vector<16x16xf32>, vector<16x16xf32>, vector<16x16xf32>, vector<16x16xf32>, vector<16x16xf32>, vector<16x16xf32> -> vector<16x128xf32>
    %265 = vector.extract_strided_slice %16 {offsets = [32, 0], sizes = [16, 96], strides = [1, 1]} : vector<64x96xf32> to vector<16x96xf32>
    %266 = vector.extract_strided_slice %265 {offsets = [0, 0], sizes = [16, 32], strides = [1, 1]} : vector<16x96xf32> to vector<16x32xf32>
    %267 = vector.extract_strided_slice %265 {offsets = [0, 32], sizes = [16, 32], strides = [1, 1]} : vector<16x96xf32> to vector<16x32xf32>
    %268 = vector.extract_strided_slice %265 {offsets = [0, 64], sizes = [16, 32], strides = [1, 1]} : vector<16x96xf32> to vector<16x32xf32>
    %269 = vector.shape_cast %266 : vector<16x32xf32> to vector<1x16x32xf32>
    %270 = vector.broadcast %269 : vector<1x16x32xf32> to vector<8x16x32xf32>
    %271 = vector.broadcast %0 : vector<8x1x32xf32> to vector<8x16x32xf32>
    %272 = arith.mulf %270, %271 : vector<8x16x32xf32>
    %273 = vector.shape_cast %272 : vector<8x16x32xf32> to vector<128x32xf32>
    %cst_92 = arith.constant dense<0.000000e+00> : vector<16x128xf32>
    %274 = tpu.matmul %267, %273, %cst_92 {dimension_numbers = #tpu.dot_dimension_numbers<[1], [1], [0], [0], [0, 0, 1, 0], [], []>} : vector<16x32xf32>, vector<128x32xf32>, vector<16x128xf32> -> vector<16x128xf32>
    %cst_93 = arith.constant 0.000000e+00 : f32
    %275 = vector.broadcast %cst_93 : f32 to vector<16x128xf32>
    %276 = arith.cmpf ogt, %274, %275 : vector<16x128xf32>
    %cst_94 = arith.constant 2.000000e-01 : f32
    %277 = vector.broadcast %cst_94 : f32 to vector<16x128xf32>
    %278 = arith.mulf %277, %274 : vector<16x128xf32>
    %279 = arith.select %276, %274, %278 : vector<16x128xi1>, vector<16x128xf32>
    %280 = arith.addf %279, %264 : vector<16x128xf32>
    %cst_95 = arith.constant dense<0xFF800000> : vector<128xf32>
    %281 = vector.multi_reduction <maximumf>, %280, %cst_95 [0] : vector<16x128xf32> to vector<128xf32>
    %282 = vector.shape_cast %281 : vector<128xf32> to vector<1x128xf32>
    %283 = vector.broadcast %282 : vector<1x128xf32> to vector<16x128xf32>
    %284 = arith.subf %280, %283 : vector<16x128xf32>
    %285 = math.exp %284 : vector<16x128xf32>
    %cst_96 = arith.constant dense<0.000000e+00> : vector<128xf32>
    %286 = vector.multi_reduction <add>, %285, %cst_96 [0] : vector<16x128xf32> to vector<128xf32>
    %287 = vector.shape_cast %286 : vector<128xf32> to vector<1x128xf32>
    %288 = tpu.reciprocal %287 {approx = true} : vector<1x128xf32> -> vector<1x128xf32>
    %289 = vector.broadcast %288 : vector<1x128xf32> to vector<16x128xf32>
    %290 = arith.mulf %285, %289 : vector<16x128xf32>
    %cst_97 = arith.constant dense<0.000000e+00> : vector<128x32xf32>
    %291 = tpu.matmul %290, %268, %cst_97 {dimension_numbers = #tpu.dot_dimension_numbers<[0], [0], [1], [1], [0, 1, 1, 1], [], []>} : vector<16x128xf32>, vector<16x32xf32>, vector<128x32xf32> -> vector<128x32xf32>
    %292 = vector.shape_cast %291 : vector<128x32xf32> to vector<8x16x32xf32>
    %293 = vector.broadcast %0 : vector<8x1x32xf32> to vector<8x16x32xf32>
    %294 = arith.mulf %292, %293 : vector<8x16x32xf32>
    %cst_98 = arith.constant dense<0.000000e+00> : vector<16x32xf32>
    %295 = vector.multi_reduction <add>, %294, %cst_98 [0] : vector<8x16x32xf32> to vector<16x32xf32>
    %c0_99 = arith.constant 0 : index
    %c0_100 = arith.constant 0 : index
    %296 = vector.load %arg4[%c0_99, %c0_100] : memref<1x32xf32, #tpu.memory_space<vmem>>, vector<1x32xf32>
    %297 = vector.broadcast %296 : vector<1x32xf32> to vector<16x32xf32>
    %298 = arith.addf %295, %297 : vector<16x32xf32>
    %c0_101 = arith.constant 0 : index
    %c0_102 = arith.constant 0 : index
    %299 = vector.load %arg5[%c0_101, %c0_102] : memref<32x96xf32, #tpu.memory_space<vmem>>, vector<32x96xf32>
    %cst_103 = arith.constant dense<0.000000e+00> : vector<16x96xf32>
    %300 = tpu.matmul %298, %299, %cst_103 {dimension_numbers = #tpu.dot_dimension_numbers<[1], [0], [0], [1], [0, 0, 1, 1], [], []>} : vector<16x32xf32>, vector<32x96xf32>, vector<16x96xf32> -> vector<16x96xf32>
    %c0_104 = arith.constant 0 : index
    %c0_105 = arith.constant 0 : index
    %301 = vector.load %arg7[%c0_104, %c0_105] : memref<1x96xf32, #tpu.memory_space<vmem>>, vector<1x96xf32>
    %302 = vector.broadcast %301 : vector<1x96xf32> to vector<16x96xf32>
    %303 = arith.addf %300, %302 : vector<16x96xf32>
    %c0_106 = arith.constant 0 : index
    %c0_107 = arith.constant 0 : index
    %304 = vector.load %arg6[%c0_106, %c0_107] : memref<32x96xf32, #tpu.memory_space<vmem>>, vector<32x96xf32>
    %cst_108 = arith.constant dense<0.000000e+00> : vector<16x96xf32>
    %305 = tpu.matmul %178, %304, %cst_108 {dimension_numbers = #tpu.dot_dimension_numbers<[1], [0], [0], [1], [0, 0, 1, 1], [], []>} : vector<16x32xf32>, vector<32x96xf32>, vector<16x96xf32> -> vector<16x96xf32>
    %c0_109 = arith.constant 0 : index
    %c0_110 = arith.constant 0 : index
    %306 = vector.load %arg8[%c0_109, %c0_110] : memref<1x96xf32, #tpu.memory_space<vmem>>, vector<1x96xf32>
    %307 = vector.broadcast %306 : vector<1x96xf32> to vector<16x96xf32>
    %308 = arith.addf %305, %307 : vector<16x96xf32>
    %309 = vector.extract_strided_slice %303 {offsets = [0, 0], sizes = [16, 32], strides = [1, 1]} : vector<16x96xf32> to vector<16x32xf32>
    %310 = vector.extract_strided_slice %308 {offsets = [0, 0], sizes = [16, 32], strides = [1, 1]} : vector<16x96xf32> to vector<16x32xf32>
    %311 = arith.addf %309, %310 : vector<16x32xf32>
    %312 = arith.negf %311 : vector<16x32xf32>
    %313 = math.exp %312 : vector<16x32xf32>
    %cst_111 = arith.constant 1.000000e+00 : f32
    %314 = vector.broadcast %cst_111 : f32 to vector<16x32xf32>
    %315 = arith.addf %314, %313 : vector<16x32xf32>
    %316 = arith.divf %314, %315 : vector<16x32xf32>
    %317 = vector.extract_strided_slice %303 {offsets = [0, 32], sizes = [16, 32], strides = [1, 1]} : vector<16x96xf32> to vector<16x32xf32>
    %318 = vector.extract_strided_slice %308 {offsets = [0, 32], sizes = [16, 32], strides = [1, 1]} : vector<16x96xf32> to vector<16x32xf32>
    %319 = arith.addf %317, %318 : vector<16x32xf32>
    %320 = arith.negf %319 : vector<16x32xf32>
    %321 = math.exp %320 : vector<16x32xf32>
    %cst_112 = arith.constant 1.000000e+00 : f32
    %322 = vector.broadcast %cst_112 : f32 to vector<16x32xf32>
    %323 = arith.addf %322, %321 : vector<16x32xf32>
    %324 = arith.divf %322, %323 : vector<16x32xf32>
    %325 = vector.extract_strided_slice %303 {offsets = [0, 64], sizes = [16, 32], strides = [1, 1]} : vector<16x96xf32> to vector<16x32xf32>
    %326 = vector.extract_strided_slice %308 {offsets = [0, 64], sizes = [16, 32], strides = [1, 1]} : vector<16x96xf32> to vector<16x32xf32>
    %327 = arith.mulf %316, %326 : vector<16x32xf32>
    %328 = arith.addf %325, %327 : vector<16x32xf32>
    %329 = math.tanh %328 : vector<16x32xf32>
    %cst_113 = arith.constant 1.000000e+00 : f32
    %330 = vector.broadcast %cst_113 : f32 to vector<16x32xf32>
    %331 = arith.subf %330, %324 : vector<16x32xf32>
    %332 = arith.mulf %331, %329 : vector<16x32xf32>
    %333 = arith.mulf %324, %178 : vector<16x32xf32>
    %334 = arith.addf %332, %333 : vector<16x32xf32>
    %c0_114 = arith.constant 0 : index
    %c0_115 = arith.constant 0 : index
    %335 = vector.load %arg9[%c0_114, %c0_115] : memref<32x96xf32, #tpu.memory_space<vmem>>, vector<32x96xf32>
    %cst_116 = arith.constant dense<0.000000e+00> : vector<16x96xf32>
    %336 = tpu.matmul %334, %335, %cst_116 {dimension_numbers = #tpu.dot_dimension_numbers<[1], [0], [0], [1], [0, 0, 1, 1], [], []>} : vector<16x32xf32>, vector<32x96xf32>, vector<16x96xf32> -> vector<16x96xf32>
    %337 = vector.extract_strided_slice %336 {offsets = [0, 0], sizes = [16, 32], strides = [1, 1]} : vector<16x96xf32> to vector<16x32xf32>
    %338 = vector.extract_strided_slice %336 {offsets = [0, 32], sizes = [16, 32], strides = [1, 1]} : vector<16x96xf32> to vector<16x32xf32>
    %339 = vector.extract_strided_slice %336 {offsets = [0, 64], sizes = [16, 32], strides = [1, 1]} : vector<16x96xf32> to vector<16x32xf32>
    %340 = vector.shape_cast %337 : vector<16x32xf32> to vector<1x16x32xf32>
    %341 = vector.broadcast %340 : vector<1x16x32xf32> to vector<8x16x32xf32>
    %342 = vector.broadcast %0 : vector<8x1x32xf32> to vector<8x16x32xf32>
    %343 = arith.mulf %341, %342 : vector<8x16x32xf32>
    %344 = vector.shape_cast %343 : vector<8x16x32xf32> to vector<128x32xf32>
    %cst_117 = arith.constant dense<0.000000e+00> : vector<16x128xf32>
    %345 = tpu.matmul %338, %344, %cst_117 {dimension_numbers = #tpu.dot_dimension_numbers<[1], [1], [0], [0], [0, 0, 1, 0], [], []>} : vector<16x32xf32>, vector<128x32xf32>, vector<16x128xf32> -> vector<16x128xf32>
    %cst_118 = arith.constant 0.000000e+00 : f32
    %346 = vector.broadcast %cst_118 : f32 to vector<16x128xf32>
    %347 = arith.cmpf ogt, %345, %346 : vector<16x128xf32>
    %cst_119 = arith.constant 2.000000e-01 : f32
    %348 = vector.broadcast %cst_119 : f32 to vector<16x128xf32>
    %349 = arith.mulf %348, %345 : vector<16x128xf32>
    %350 = arith.select %347, %345, %349 : vector<16x128xi1>, vector<16x128xf32>
    %351 = arith.addf %350, %264 : vector<16x128xf32>
    %cst_120 = arith.constant dense<0xFF800000> : vector<128xf32>
    %352 = vector.multi_reduction <maximumf>, %351, %cst_120 [0] : vector<16x128xf32> to vector<128xf32>
    %353 = vector.shape_cast %352 : vector<128xf32> to vector<1x128xf32>
    %354 = vector.broadcast %353 : vector<1x128xf32> to vector<16x128xf32>
    %355 = arith.subf %351, %354 : vector<16x128xf32>
    %356 = math.exp %355 : vector<16x128xf32>
    %cst_121 = arith.constant dense<0.000000e+00> : vector<128xf32>
    %357 = vector.multi_reduction <add>, %356, %cst_121 [0] : vector<16x128xf32> to vector<128xf32>
    %358 = vector.shape_cast %357 : vector<128xf32> to vector<1x128xf32>
    %359 = tpu.reciprocal %358 {approx = true} : vector<1x128xf32> -> vector<1x128xf32>
    %360 = vector.broadcast %359 : vector<1x128xf32> to vector<16x128xf32>
    %361 = arith.mulf %356, %360 : vector<16x128xf32>
    %cst_122 = arith.constant dense<0.000000e+00> : vector<128x32xf32>
    %362 = tpu.matmul %361, %339, %cst_122 {dimension_numbers = #tpu.dot_dimension_numbers<[0], [0], [1], [1], [0, 1, 1, 1], [], []>} : vector<16x128xf32>, vector<16x32xf32>, vector<128x32xf32> -> vector<128x32xf32>
    %363 = vector.shape_cast %362 : vector<128x32xf32> to vector<8x16x32xf32>
    %364 = vector.broadcast %0 : vector<8x1x32xf32> to vector<8x16x32xf32>
    %365 = arith.mulf %363, %364 : vector<8x16x32xf32>
    %cst_123 = arith.constant dense<0.000000e+00> : vector<16x32xf32>
    %366 = vector.multi_reduction <add>, %365, %cst_123 [0] : vector<8x16x32xf32> to vector<16x32xf32>
    %c0_124 = arith.constant 0 : index
    %c0_125 = arith.constant 0 : index
    %367 = vector.load %arg10[%c0_124, %c0_125] : memref<1x32xf32, #tpu.memory_space<vmem>>, vector<1x32xf32>
    %368 = vector.broadcast %367 : vector<1x32xf32> to vector<16x32xf32>
    %369 = arith.addf %366, %368 : vector<16x32xf32>
    %c0_126 = arith.constant 0 : index
    %c0_127 = arith.constant 0 : index
    %370 = vector.load %arg11[%c0_126, %c0_127] : memref<32x96xf32, #tpu.memory_space<vmem>>, vector<32x96xf32>
    %cst_128 = arith.constant dense<0.000000e+00> : vector<16x96xf32>
    %371 = tpu.matmul %369, %370, %cst_128 {dimension_numbers = #tpu.dot_dimension_numbers<[1], [0], [0], [1], [0, 0, 1, 1], [], []>} : vector<16x32xf32>, vector<32x96xf32>, vector<16x96xf32> -> vector<16x96xf32>
    %c0_129 = arith.constant 0 : index
    %c0_130 = arith.constant 0 : index
    %372 = vector.load %arg13[%c0_129, %c0_130] : memref<1x96xf32, #tpu.memory_space<vmem>>, vector<1x96xf32>
    %373 = vector.broadcast %372 : vector<1x96xf32> to vector<16x96xf32>
    %374 = arith.addf %371, %373 : vector<16x96xf32>
    %c0_131 = arith.constant 0 : index
    %c0_132 = arith.constant 0 : index
    %375 = vector.load %arg12[%c0_131, %c0_132] : memref<32x96xf32, #tpu.memory_space<vmem>>, vector<32x96xf32>
    %cst_133 = arith.constant dense<0.000000e+00> : vector<16x96xf32>
    %376 = tpu.matmul %249, %375, %cst_133 {dimension_numbers = #tpu.dot_dimension_numbers<[1], [0], [0], [1], [0, 0, 1, 1], [], []>} : vector<16x32xf32>, vector<32x96xf32>, vector<16x96xf32> -> vector<16x96xf32>
    %c0_134 = arith.constant 0 : index
    %c0_135 = arith.constant 0 : index
    %377 = vector.load %arg14[%c0_134, %c0_135] : memref<1x96xf32, #tpu.memory_space<vmem>>, vector<1x96xf32>
    %378 = vector.broadcast %377 : vector<1x96xf32> to vector<16x96xf32>
    %379 = arith.addf %376, %378 : vector<16x96xf32>
    %380 = vector.extract_strided_slice %374 {offsets = [0, 0], sizes = [16, 32], strides = [1, 1]} : vector<16x96xf32> to vector<16x32xf32>
    %381 = vector.extract_strided_slice %379 {offsets = [0, 0], sizes = [16, 32], strides = [1, 1]} : vector<16x96xf32> to vector<16x32xf32>
    %382 = arith.addf %380, %381 : vector<16x32xf32>
    %383 = arith.negf %382 : vector<16x32xf32>
    %384 = math.exp %383 : vector<16x32xf32>
    %cst_136 = arith.constant 1.000000e+00 : f32
    %385 = vector.broadcast %cst_136 : f32 to vector<16x32xf32>
    %386 = arith.addf %385, %384 : vector<16x32xf32>
    %387 = arith.divf %385, %386 : vector<16x32xf32>
    %388 = vector.extract_strided_slice %374 {offsets = [0, 32], sizes = [16, 32], strides = [1, 1]} : vector<16x96xf32> to vector<16x32xf32>
    %389 = vector.extract_strided_slice %379 {offsets = [0, 32], sizes = [16, 32], strides = [1, 1]} : vector<16x96xf32> to vector<16x32xf32>
    %390 = arith.addf %388, %389 : vector<16x32xf32>
    %391 = arith.negf %390 : vector<16x32xf32>
    %392 = math.exp %391 : vector<16x32xf32>
    %cst_137 = arith.constant 1.000000e+00 : f32
    %393 = vector.broadcast %cst_137 : f32 to vector<16x32xf32>
    %394 = arith.addf %393, %392 : vector<16x32xf32>
    %395 = arith.divf %393, %394 : vector<16x32xf32>
    %396 = vector.extract_strided_slice %374 {offsets = [0, 64], sizes = [16, 32], strides = [1, 1]} : vector<16x96xf32> to vector<16x32xf32>
    %397 = vector.extract_strided_slice %379 {offsets = [0, 64], sizes = [16, 32], strides = [1, 1]} : vector<16x96xf32> to vector<16x32xf32>
    %398 = arith.mulf %387, %397 : vector<16x32xf32>
    %399 = arith.addf %396, %398 : vector<16x32xf32>
    %400 = math.tanh %399 : vector<16x32xf32>
    %cst_138 = arith.constant 1.000000e+00 : f32
    %401 = vector.broadcast %cst_138 : f32 to vector<16x32xf32>
    %402 = arith.subf %401, %395 : vector<16x32xf32>
    %403 = arith.mulf %402, %400 : vector<16x32xf32>
    %404 = arith.mulf %395, %249 : vector<16x32xf32>
    %405 = arith.addf %403, %404 : vector<16x32xf32>
    %cst_139 = arith.constant dense<0.000000e+00> : vector<32xf32>
    %406 = vector.multi_reduction <add>, %405, %cst_139 [0] : vector<16x32xf32> to vector<32xf32>
    %407 = vector.shape_cast %406 : vector<32xf32> to vector<1x32xf32>
    %cst_140 = arith.constant 1.600000e+01 : f32
    %408 = vector.broadcast %cst_140 : f32 to vector<1x32xf32>
    %409 = arith.divf %407, %408 : vector<1x32xf32>
    %410 = vector.extract_strided_slice %11 {offsets = [0, 2], sizes = [1, 1], strides = [1, 1]} : vector<1x4xf32> to vector<1x1xf32>
    %411 = vector.broadcast %410 : vector<1x1xf32> to vector<1x32xf32>
    %412 = arith.mulf %411, %409 : vector<1x32xf32>
    %413 = arith.addf %257, %412 : vector<1x32xf32>
    %414 = vector.extract_strided_slice %13 {offsets = [3, 0, 0], sizes = [1, 16, 16], strides = [1, 1, 1]} : vector<4x16x16xf32> to vector<1x16x16xf32>
    %415 = vector.shape_cast %414 : vector<1x16x16xf32> to vector<16x16xf32>
    %cst_141 = arith.constant 1.000000e+00 : f32
    %416 = vector.broadcast %cst_141 : f32 to vector<16x16xf32>
    %417 = arith.subf %415, %416 : vector<16x16xf32>
    %cst_142 = arith.constant 1.000000e+30 : f32
    %418 = vector.broadcast %cst_142 : f32 to vector<16x16xf32>
    %419 = arith.mulf %417, %418 : vector<16x16xf32>
    %420 = tpu.concatenate %419, %419, %419, %419, %419, %419, %419, %419 in 1 : vector<16x16xf32>, vector<16x16xf32>, vector<16x16xf32>, vector<16x16xf32>, vector<16x16xf32>, vector<16x16xf32>, vector<16x16xf32>, vector<16x16xf32> -> vector<16x128xf32>
    %421 = vector.extract_strided_slice %16 {offsets = [48, 0], sizes = [16, 96], strides = [1, 1]} : vector<64x96xf32> to vector<16x96xf32>
    %422 = vector.extract_strided_slice %421 {offsets = [0, 0], sizes = [16, 32], strides = [1, 1]} : vector<16x96xf32> to vector<16x32xf32>
    %423 = vector.extract_strided_slice %421 {offsets = [0, 32], sizes = [16, 32], strides = [1, 1]} : vector<16x96xf32> to vector<16x32xf32>
    %424 = vector.extract_strided_slice %421 {offsets = [0, 64], sizes = [16, 32], strides = [1, 1]} : vector<16x96xf32> to vector<16x32xf32>
    %425 = vector.shape_cast %422 : vector<16x32xf32> to vector<1x16x32xf32>
    %426 = vector.broadcast %425 : vector<1x16x32xf32> to vector<8x16x32xf32>
    %427 = vector.broadcast %0 : vector<8x1x32xf32> to vector<8x16x32xf32>
    %428 = arith.mulf %426, %427 : vector<8x16x32xf32>
    %429 = vector.shape_cast %428 : vector<8x16x32xf32> to vector<128x32xf32>
    %cst_143 = arith.constant dense<0.000000e+00> : vector<16x128xf32>
    %430 = tpu.matmul %423, %429, %cst_143 {dimension_numbers = #tpu.dot_dimension_numbers<[1], [1], [0], [0], [0, 0, 1, 0], [], []>} : vector<16x32xf32>, vector<128x32xf32>, vector<16x128xf32> -> vector<16x128xf32>
    %cst_144 = arith.constant 0.000000e+00 : f32
    %431 = vector.broadcast %cst_144 : f32 to vector<16x128xf32>
    %432 = arith.cmpf ogt, %430, %431 : vector<16x128xf32>
    %cst_145 = arith.constant 2.000000e-01 : f32
    %433 = vector.broadcast %cst_145 : f32 to vector<16x128xf32>
    %434 = arith.mulf %433, %430 : vector<16x128xf32>
    %435 = arith.select %432, %430, %434 : vector<16x128xi1>, vector<16x128xf32>
    %436 = arith.addf %435, %420 : vector<16x128xf32>
    %cst_146 = arith.constant dense<0xFF800000> : vector<128xf32>
    %437 = vector.multi_reduction <maximumf>, %436, %cst_146 [0] : vector<16x128xf32> to vector<128xf32>
    %438 = vector.shape_cast %437 : vector<128xf32> to vector<1x128xf32>
    %439 = vector.broadcast %438 : vector<1x128xf32> to vector<16x128xf32>
    %440 = arith.subf %436, %439 : vector<16x128xf32>
    %441 = math.exp %440 : vector<16x128xf32>
    %cst_147 = arith.constant dense<0.000000e+00> : vector<128xf32>
    %442 = vector.multi_reduction <add>, %441, %cst_147 [0] : vector<16x128xf32> to vector<128xf32>
    %443 = vector.shape_cast %442 : vector<128xf32> to vector<1x128xf32>
    %444 = tpu.reciprocal %443 {approx = true} : vector<1x128xf32> -> vector<1x128xf32>
    %445 = vector.broadcast %444 : vector<1x128xf32> to vector<16x128xf32>
    %446 = arith.mulf %441, %445 : vector<16x128xf32>
    %cst_148 = arith.constant dense<0.000000e+00> : vector<128x32xf32>
    %447 = tpu.matmul %446, %424, %cst_148 {dimension_numbers = #tpu.dot_dimension_numbers<[0], [0], [1], [1], [0, 1, 1, 1], [], []>} : vector<16x128xf32>, vector<16x32xf32>, vector<128x32xf32> -> vector<128x32xf32>
    %448 = vector.shape_cast %447 : vector<128x32xf32> to vector<8x16x32xf32>
    %449 = vector.broadcast %0 : vector<8x1x32xf32> to vector<8x16x32xf32>
    %450 = arith.mulf %448, %449 : vector<8x16x32xf32>
    %cst_149 = arith.constant dense<0.000000e+00> : vector<16x32xf32>
    %451 = vector.multi_reduction <add>, %450, %cst_149 [0] : vector<8x16x32xf32> to vector<16x32xf32>
    %c0_150 = arith.constant 0 : index
    %c0_151 = arith.constant 0 : index
    %452 = vector.load %arg4[%c0_150, %c0_151] : memref<1x32xf32, #tpu.memory_space<vmem>>, vector<1x32xf32>
    %453 = vector.broadcast %452 : vector<1x32xf32> to vector<16x32xf32>
    %454 = arith.addf %451, %453 : vector<16x32xf32>
    %c0_152 = arith.constant 0 : index
    %c0_153 = arith.constant 0 : index
    %455 = vector.load %arg5[%c0_152, %c0_153] : memref<32x96xf32, #tpu.memory_space<vmem>>, vector<32x96xf32>
    %cst_154 = arith.constant dense<0.000000e+00> : vector<16x96xf32>
    %456 = tpu.matmul %454, %455, %cst_154 {dimension_numbers = #tpu.dot_dimension_numbers<[1], [0], [0], [1], [0, 0, 1, 1], [], []>} : vector<16x32xf32>, vector<32x96xf32>, vector<16x96xf32> -> vector<16x96xf32>
    %c0_155 = arith.constant 0 : index
    %c0_156 = arith.constant 0 : index
    %457 = vector.load %arg7[%c0_155, %c0_156] : memref<1x96xf32, #tpu.memory_space<vmem>>, vector<1x96xf32>
    %458 = vector.broadcast %457 : vector<1x96xf32> to vector<16x96xf32>
    %459 = arith.addf %456, %458 : vector<16x96xf32>
    %c0_157 = arith.constant 0 : index
    %c0_158 = arith.constant 0 : index
    %460 = vector.load %arg6[%c0_157, %c0_158] : memref<32x96xf32, #tpu.memory_space<vmem>>, vector<32x96xf32>
    %cst_159 = arith.constant dense<0.000000e+00> : vector<16x96xf32>
    %461 = tpu.matmul %334, %460, %cst_159 {dimension_numbers = #tpu.dot_dimension_numbers<[1], [0], [0], [1], [0, 0, 1, 1], [], []>} : vector<16x32xf32>, vector<32x96xf32>, vector<16x96xf32> -> vector<16x96xf32>
    %c0_160 = arith.constant 0 : index
    %c0_161 = arith.constant 0 : index
    %462 = vector.load %arg8[%c0_160, %c0_161] : memref<1x96xf32, #tpu.memory_space<vmem>>, vector<1x96xf32>
    %463 = vector.broadcast %462 : vector<1x96xf32> to vector<16x96xf32>
    %464 = arith.addf %461, %463 : vector<16x96xf32>
    %465 = vector.extract_strided_slice %459 {offsets = [0, 0], sizes = [16, 32], strides = [1, 1]} : vector<16x96xf32> to vector<16x32xf32>
    %466 = vector.extract_strided_slice %464 {offsets = [0, 0], sizes = [16, 32], strides = [1, 1]} : vector<16x96xf32> to vector<16x32xf32>
    %467 = arith.addf %465, %466 : vector<16x32xf32>
    %468 = arith.negf %467 : vector<16x32xf32>
    %469 = math.exp %468 : vector<16x32xf32>
    %cst_162 = arith.constant 1.000000e+00 : f32
    %470 = vector.broadcast %cst_162 : f32 to vector<16x32xf32>
    %471 = arith.addf %470, %469 : vector<16x32xf32>
    %472 = arith.divf %470, %471 : vector<16x32xf32>
    %473 = vector.extract_strided_slice %459 {offsets = [0, 32], sizes = [16, 32], strides = [1, 1]} : vector<16x96xf32> to vector<16x32xf32>
    %474 = vector.extract_strided_slice %464 {offsets = [0, 32], sizes = [16, 32], strides = [1, 1]} : vector<16x96xf32> to vector<16x32xf32>
    %475 = arith.addf %473, %474 : vector<16x32xf32>
    %476 = arith.negf %475 : vector<16x32xf32>
    %477 = math.exp %476 : vector<16x32xf32>
    %cst_163 = arith.constant 1.000000e+00 : f32
    %478 = vector.broadcast %cst_163 : f32 to vector<16x32xf32>
    %479 = arith.addf %478, %477 : vector<16x32xf32>
    %480 = arith.divf %478, %479 : vector<16x32xf32>
    %481 = vector.extract_strided_slice %459 {offsets = [0, 64], sizes = [16, 32], strides = [1, 1]} : vector<16x96xf32> to vector<16x32xf32>
    %482 = vector.extract_strided_slice %464 {offsets = [0, 64], sizes = [16, 32], strides = [1, 1]} : vector<16x96xf32> to vector<16x32xf32>
    %483 = arith.mulf %472, %482 : vector<16x32xf32>
    %484 = arith.addf %481, %483 : vector<16x32xf32>
    %485 = math.tanh %484 : vector<16x32xf32>
    %cst_164 = arith.constant 1.000000e+00 : f32
    %486 = vector.broadcast %cst_164 : f32 to vector<16x32xf32>
    %487 = arith.subf %486, %480 : vector<16x32xf32>
    %488 = arith.mulf %487, %485 : vector<16x32xf32>
    %489 = arith.mulf %480, %334 : vector<16x32xf32>
    %490 = arith.addf %488, %489 : vector<16x32xf32>
    %c0_165 = arith.constant 0 : index
    %c0_166 = arith.constant 0 : index
    %491 = vector.load %arg9[%c0_165, %c0_166] : memref<32x96xf32, #tpu.memory_space<vmem>>, vector<32x96xf32>
    %cst_167 = arith.constant dense<0.000000e+00> : vector<16x96xf32>
    %492 = tpu.matmul %490, %491, %cst_167 {dimension_numbers = #tpu.dot_dimension_numbers<[1], [0], [0], [1], [0, 0, 1, 1], [], []>} : vector<16x32xf32>, vector<32x96xf32>, vector<16x96xf32> -> vector<16x96xf32>
    %493 = vector.extract_strided_slice %492 {offsets = [0, 0], sizes = [16, 32], strides = [1, 1]} : vector<16x96xf32> to vector<16x32xf32>
    %494 = vector.extract_strided_slice %492 {offsets = [0, 32], sizes = [16, 32], strides = [1, 1]} : vector<16x96xf32> to vector<16x32xf32>
    %495 = vector.extract_strided_slice %492 {offsets = [0, 64], sizes = [16, 32], strides = [1, 1]} : vector<16x96xf32> to vector<16x32xf32>
    %496 = vector.shape_cast %493 : vector<16x32xf32> to vector<1x16x32xf32>
    %497 = vector.broadcast %496 : vector<1x16x32xf32> to vector<8x16x32xf32>
    %498 = vector.broadcast %0 : vector<8x1x32xf32> to vector<8x16x32xf32>
    %499 = arith.mulf %497, %498 : vector<8x16x32xf32>
    %500 = vector.shape_cast %499 : vector<8x16x32xf32> to vector<128x32xf32>
    %cst_168 = arith.constant dense<0.000000e+00> : vector<16x128xf32>
    %501 = tpu.matmul %494, %500, %cst_168 {dimension_numbers = #tpu.dot_dimension_numbers<[1], [1], [0], [0], [0, 0, 1, 0], [], []>} : vector<16x32xf32>, vector<128x32xf32>, vector<16x128xf32> -> vector<16x128xf32>
    %cst_169 = arith.constant 0.000000e+00 : f32
    %502 = vector.broadcast %cst_169 : f32 to vector<16x128xf32>
    %503 = arith.cmpf ogt, %501, %502 : vector<16x128xf32>
    %cst_170 = arith.constant 2.000000e-01 : f32
    %504 = vector.broadcast %cst_170 : f32 to vector<16x128xf32>
    %505 = arith.mulf %504, %501 : vector<16x128xf32>
    %506 = arith.select %503, %501, %505 : vector<16x128xi1>, vector<16x128xf32>
    %507 = arith.addf %506, %420 : vector<16x128xf32>
    %cst_171 = arith.constant dense<0xFF800000> : vector<128xf32>
    %508 = vector.multi_reduction <maximumf>, %507, %cst_171 [0] : vector<16x128xf32> to vector<128xf32>
    %509 = vector.shape_cast %508 : vector<128xf32> to vector<1x128xf32>
    %510 = vector.broadcast %509 : vector<1x128xf32> to vector<16x128xf32>
    %511 = arith.subf %507, %510 : vector<16x128xf32>
    %512 = math.exp %511 : vector<16x128xf32>
    %cst_172 = arith.constant dense<0.000000e+00> : vector<128xf32>
    %513 = vector.multi_reduction <add>, %512, %cst_172 [0] : vector<16x128xf32> to vector<128xf32>
    %514 = vector.shape_cast %513 : vector<128xf32> to vector<1x128xf32>
    %515 = tpu.reciprocal %514 {approx = true} : vector<1x128xf32> -> vector<1x128xf32>
    %516 = vector.broadcast %515 : vector<1x128xf32> to vector<16x128xf32>
    %517 = arith.mulf %512, %516 : vector<16x128xf32>
    %cst_173 = arith.constant dense<0.000000e+00> : vector<128x32xf32>
    %518 = tpu.matmul %517, %495, %cst_173 {dimension_numbers = #tpu.dot_dimension_numbers<[0], [0], [1], [1], [0, 1, 1, 1], [], []>} : vector<16x128xf32>, vector<16x32xf32>, vector<128x32xf32> -> vector<128x32xf32>
    %519 = vector.shape_cast %518 : vector<128x32xf32> to vector<8x16x32xf32>
    %520 = vector.broadcast %0 : vector<8x1x32xf32> to vector<8x16x32xf32>
    %521 = arith.mulf %519, %520 : vector<8x16x32xf32>
    %cst_174 = arith.constant dense<0.000000e+00> : vector<16x32xf32>
    %522 = vector.multi_reduction <add>, %521, %cst_174 [0] : vector<8x16x32xf32> to vector<16x32xf32>
    %c0_175 = arith.constant 0 : index
    %c0_176 = arith.constant 0 : index
    %523 = vector.load %arg10[%c0_175, %c0_176] : memref<1x32xf32, #tpu.memory_space<vmem>>, vector<1x32xf32>
    %524 = vector.broadcast %523 : vector<1x32xf32> to vector<16x32xf32>
    %525 = arith.addf %522, %524 : vector<16x32xf32>
    %c0_177 = arith.constant 0 : index
    %c0_178 = arith.constant 0 : index
    %526 = vector.load %arg11[%c0_177, %c0_178] : memref<32x96xf32, #tpu.memory_space<vmem>>, vector<32x96xf32>
    %cst_179 = arith.constant dense<0.000000e+00> : vector<16x96xf32>
    %527 = tpu.matmul %525, %526, %cst_179 {dimension_numbers = #tpu.dot_dimension_numbers<[1], [0], [0], [1], [0, 0, 1, 1], [], []>} : vector<16x32xf32>, vector<32x96xf32>, vector<16x96xf32> -> vector<16x96xf32>
    %c0_180 = arith.constant 0 : index
    %c0_181 = arith.constant 0 : index
    %528 = vector.load %arg13[%c0_180, %c0_181] : memref<1x96xf32, #tpu.memory_space<vmem>>, vector<1x96xf32>
    %529 = vector.broadcast %528 : vector<1x96xf32> to vector<16x96xf32>
    %530 = arith.addf %527, %529 : vector<16x96xf32>
    %c0_182 = arith.constant 0 : index
    %c0_183 = arith.constant 0 : index
    %531 = vector.load %arg12[%c0_182, %c0_183] : memref<32x96xf32, #tpu.memory_space<vmem>>, vector<32x96xf32>
    %cst_184 = arith.constant dense<0.000000e+00> : vector<16x96xf32>
    %532 = tpu.matmul %405, %531, %cst_184 {dimension_numbers = #tpu.dot_dimension_numbers<[1], [0], [0], [1], [0, 0, 1, 1], [], []>} : vector<16x32xf32>, vector<32x96xf32>, vector<16x96xf32> -> vector<16x96xf32>
    %c0_185 = arith.constant 0 : index
    %c0_186 = arith.constant 0 : index
    %533 = vector.load %arg14[%c0_185, %c0_186] : memref<1x96xf32, #tpu.memory_space<vmem>>, vector<1x96xf32>
    %534 = vector.broadcast %533 : vector<1x96xf32> to vector<16x96xf32>
    %535 = arith.addf %532, %534 : vector<16x96xf32>
    %536 = vector.extract_strided_slice %530 {offsets = [0, 0], sizes = [16, 32], strides = [1, 1]} : vector<16x96xf32> to vector<16x32xf32>
    %537 = vector.extract_strided_slice %535 {offsets = [0, 0], sizes = [16, 32], strides = [1, 1]} : vector<16x96xf32> to vector<16x32xf32>
    %538 = arith.addf %536, %537 : vector<16x32xf32>
    %539 = arith.negf %538 : vector<16x32xf32>
    %540 = math.exp %539 : vector<16x32xf32>
    %cst_187 = arith.constant 1.000000e+00 : f32
    %541 = vector.broadcast %cst_187 : f32 to vector<16x32xf32>
    %542 = arith.addf %541, %540 : vector<16x32xf32>
    %543 = arith.divf %541, %542 : vector<16x32xf32>
    %544 = vector.extract_strided_slice %530 {offsets = [0, 32], sizes = [16, 32], strides = [1, 1]} : vector<16x96xf32> to vector<16x32xf32>
    %545 = vector.extract_strided_slice %535 {offsets = [0, 32], sizes = [16, 32], strides = [1, 1]} : vector<16x96xf32> to vector<16x32xf32>
    %546 = arith.addf %544, %545 : vector<16x32xf32>
    %547 = arith.negf %546 : vector<16x32xf32>
    %548 = math.exp %547 : vector<16x32xf32>
    %cst_188 = arith.constant 1.000000e+00 : f32
    %549 = vector.broadcast %cst_188 : f32 to vector<16x32xf32>
    %550 = arith.addf %549, %548 : vector<16x32xf32>
    %551 = arith.divf %549, %550 : vector<16x32xf32>
    %552 = vector.extract_strided_slice %530 {offsets = [0, 64], sizes = [16, 32], strides = [1, 1]} : vector<16x96xf32> to vector<16x32xf32>
    %553 = vector.extract_strided_slice %535 {offsets = [0, 64], sizes = [16, 32], strides = [1, 1]} : vector<16x96xf32> to vector<16x32xf32>
    %554 = arith.mulf %543, %553 : vector<16x32xf32>
    %555 = arith.addf %552, %554 : vector<16x32xf32>
    %556 = math.tanh %555 : vector<16x32xf32>
    %cst_189 = arith.constant 1.000000e+00 : f32
    %557 = vector.broadcast %cst_189 : f32 to vector<16x32xf32>
    %558 = arith.subf %557, %551 : vector<16x32xf32>
    %559 = arith.mulf %558, %556 : vector<16x32xf32>
    %560 = arith.mulf %551, %405 : vector<16x32xf32>
    %561 = arith.addf %559, %560 : vector<16x32xf32>
    %cst_190 = arith.constant dense<0.000000e+00> : vector<32xf32>
    %562 = vector.multi_reduction <add>, %561, %cst_190 [0] : vector<16x32xf32> to vector<32xf32>
    %563 = vector.shape_cast %562 : vector<32xf32> to vector<1x32xf32>
    %cst_191 = arith.constant 1.600000e+01 : f32
    %564 = vector.broadcast %cst_191 : f32 to vector<1x32xf32>
    %565 = arith.divf %563, %564 : vector<1x32xf32>
    %566 = vector.extract_strided_slice %11 {offsets = [0, 3], sizes = [1, 1], strides = [1, 1]} : vector<1x4xf32> to vector<1x1xf32>
    %567 = vector.broadcast %566 : vector<1x1xf32> to vector<1x32xf32>
    %568 = arith.mulf %567, %565 : vector<1x32xf32>
    %569 = arith.addf %413, %568 : vector<1x32xf32>
    %c0_192 = arith.constant 0 : index
    %c0_193 = arith.constant 0 : index
    %570 = vector.load %arg16[%c0_192, %c0_193] : memref<32x8xf32, #tpu.memory_space<vmem>>, vector<32x8xf32>
    %cst_194 = arith.constant dense<0.000000e+00> : vector<1x8xf32>
    %571 = tpu.matmul %569, %570, %cst_194 {dimension_numbers = #tpu.dot_dimension_numbers<[1], [0], [0], [1], [0, 0, 1, 1], [], []>} : vector<1x32xf32>, vector<32x8xf32>, vector<1x8xf32> -> vector<1x8xf32>
    %c0_195 = arith.constant 0 : index
    %c0_196 = arith.constant 0 : index
    %572 = vector.load %arg17[%c0_195, %c0_196] : memref<1x8xf32, #tpu.memory_space<vmem>>, vector<1x8xf32>
    %573 = arith.addf %571, %572 : vector<1x8xf32>
    %c0_197 = arith.constant 0 : index
    %c0_198 = arith.constant 0 : index
    %574 = vector.load %arg18[%c0_197, %c0_198] : memref<1x8xf32, #tpu.memory_space<vmem>>, vector<1x8xf32>
    tpu.vector_store %arg18[%c0_197, %c0_198], %573 {strides = array<i32>} : memref<1x8xf32, #tpu.memory_space<vmem>>, vector<1x8xf32>,
    return
  }
}

</mosaic_0001>

<llo_original>
// kernel: temporal_gnn_forward.1
$region0: #{temporal_gnn_forward.1}
  #allocation0 [shape = 'u32[]', space=smem, size = 0x4, offset = 0x4, fixed_abs, tag = 'smem constant byte address 0x4 - core index']
  #allocation1 [shape = 'u32[144,128]{1,0:T(1,128)}', space=vmem, size = 0x12000, scoped, tag = 'internal scratch']
  %s0 = inlined_call_operand.vmem [shape: f32[64,8], index: 0, kind: input, shape index: {}]
  %s1 = inlined_call_operand.vmem [shape: s8[4,16,16], index: 1, kind: input, shape index: {}]
  %s2 = inlined_call_operand.vmem [shape: f32[8,1,32], index: 2, kind: input, shape index: {}]
  %s3 = inlined_call_operand.vmem [shape: f32[8,96], index: 3, kind: input, shape index: {}]
  %s4 = inlined_call_operand.vmem [shape: f32[1,32], index: 4, kind: input, shape index: {}]
  %s5 = inlined_call_operand.vmem [shape: f32[32,96], index: 5, kind: input, shape index: {}]
  %s6 = inlined_call_operand.vmem [shape: f32[32,96], index: 6, kind: input, shape index: {}]
  %s7 = inlined_call_operand.vmem [shape: f32[1,96], index: 7, kind: input, shape index: {}]
  %s8 = inlined_call_operand.vmem [shape: f32[1,96], index: 8, kind: input, shape index: {}]
  %s9 = inlined_call_operand.vmem [shape: f32[32,96], index: 9, kind: input, shape index: {}]
  %s10 = inlined_call_operand.vmem [shape: f32[1,32], index: 10, kind: input, shape index: {}]
  %s11 = inlined_call_operand.vmem [shape: f32[32,96], index: 11, kind: input, shape index: {}]
  %s12 = inlined_call_operand.vmem [shape: f32[32,96], index: 12, kind: input, shape index: {}]
  %s13 = inlined_call_operand.vmem [shape: f32[1,96], index: 13, kind: input, shape index: {}]
  %s14 = inlined_call_operand.vmem [shape: f32[1,96], index: 14, kind: input, shape index: {}]
  %s15 = inlined_call_operand.vmem [shape: f32[1,4], index: 15, kind: input, shape index: {}]
  %s16 = inlined_call_operand.vmem [shape: f32[32,8], index: 16, kind: input, shape index: {}]
  %s17 = inlined_call_operand.vmem [shape: f32[1,8], index: 17, kind: input, shape index: {}]
  %s18 = inlined_call_operand.hbm [shape: f32[1,8], index: 18, kind: output, shape index: {}]
  %s19 = sld [smem:[#allocation0]]
  $region82: #{temporal_gnn_forward.1} parent=0
    _
  %s21 = ssub.s32 1, %s19
  %s22 = scalar_select 0, %s21, %s19
  $region1: #{temporal_gnn_forward.1} parent=0
    #allocation2 [shape = 'u8[512]{0}', space=vmem, size = 0x400, scoped, tag = 'output window, operand 0, single buffered']
    #allocation3 [shape = 's32[1]{0}', space=sflag, size = 0x4, scoped, tag = 'scoped memory for temporal_gnn_forward.1']
    %23 = vsyncpa [#allocation3], 0
    // Predicated region
    $region2: #{temporal_gnn_forward.1} parent=1 // pred_check
      _
    $region3: #{temporal_gnn_forward.1} parent=1 // pred_check_branch
      %25 = sbr.rel (0) target = $region5
    $region4: #{temporal_gnn_forward.1} parent=1 // pred_region
      _
    $region5: #{temporal_gnn_forward.1} parent=1 // pred_fallthru
      _
    // Predicated region
    $region6: #{temporal_gnn_forward.1} parent=1 // pred_check
      _
    $region7: #{temporal_gnn_forward.1} parent=1 // pred_check_branch
      %27 = sbr.rel (0) target = $region9
    $region8: #{temporal_gnn_forward.1} parent=1 // pred_region
      _
    $region9: #{temporal_gnn_forward.1} parent=1 // pred_fallthru
      _
    // Predicated region
    $region10: #{temporal_gnn_forward.1} parent=1 // pred_check
      _
    $region11: #{temporal_gnn_forward.1} parent=1 // pred_check_branch
      %29 = sbr.rel (0) target = $region13
    $region12: #{temporal_gnn_forward.1} parent=1 // pred_region
      _
    $region13: #{temporal_gnn_forward.1} parent=1 // pred_fallthru
      _
    // Predicated region
    $region14: #{temporal_gnn_forward.1} parent=1 // pred_check
      _
    $region15: #{temporal_gnn_forward.1} parent=1 // pred_check_branch
      %31 = sbr.rel (0) target = $region17
    $region16: #{temporal_gnn_forward.1} parent=1 // pred_region
      _
    $region17: #{temporal_gnn_forward.1} parent=1 // pred_fallthru
      _
    // Predicated region
    $region18: #{temporal_gnn_forward.1} parent=1 // pred_check
      _
    $region19: #{temporal_gnn_forward.1} parent=1 // pred_check_branch
      %33 = sbr.rel (0) target = $region21
    $region20: #{temporal_gnn_forward.1} parent=1 // pred_region
      _
    $region21: #{temporal_gnn_forward.1} parent=1 // pred_fallthru
      _
    // Predicated region
    $region22: #{temporal_gnn_forward.1} parent=1 // pred_check
      _
    $region23: #{temporal_gnn_forward.1} parent=1 // pred_check_branch
      %35 = sbr.rel (0) target = $region25
    $region24: #{temporal_gnn_forward.1} parent=1 // pred_region
      _
    $region25: #{temporal_gnn_forward.1} parent=1 // pred_fallthru
      _
    // Predicated region
    $region26: #{temporal_gnn_forward.1} parent=1 // pred_check
      _
    $region27: #{temporal_gnn_forward.1} parent=1 // pred_check_branch
      %37 = sbr.rel (0) target = $region29
    $region28: #{temporal_gnn_forward.1} parent=1 // pred_region
      _
    $region29: #{temporal_gnn_forward.1} parent=1 // pred_fallthru
      _
    // Predicated region
    $region30: #{temporal_gnn_forward.1} parent=1 // pred_check
      _
    $region31: #{temporal_gnn_forward.1} parent=1 // pred_check_branch
      %39 = sbr.rel (0) target = $region33
    $region32: #{temporal_gnn_forward.1} parent=1 // pred_region
      _
    $region33: #{temporal_gnn_forward.1} parent=1 // pred_fallthru
      _
    // Predicated region
    $region34: #{temporal_gnn_forward.1} parent=1 // pred_check
      _
    $region35: #{temporal_gnn_forward.1} parent=1 // pred_check_branch
      %41 = sbr.rel (0) target = $region37
    $region36: #{temporal_gnn_forward.1} parent=1 // pred_region
      _
    $region37: #{temporal_gnn_forward.1} parent=1 // pred_fallthru
      _
    // Predicated region
    $region38: #{temporal_gnn_forward.1} parent=1 // pred_check
      _
    $region39: #{temporal_gnn_forward.1} parent=1 // pred_check_branch
      %43 = sbr.rel (0) target = $region41
    $region40: #{temporal_gnn_forward.1} parent=1 // pred_region
      _
    $region41: #{temporal_gnn_forward.1} parent=1 // pred_fallthru
      _
    // Predicated region
    $region42: #{temporal_gnn_forward.1} parent=1 // pred_check
      _
    $region43: #{temporal_gnn_forward.1} parent=1 // pred_check_branch
      %45 = sbr.rel (0) target = $region45
    $region44: #{temporal_gnn_forward.1} parent=1 // pred_region
      _
    $region45: #{temporal_gnn_forward.1} parent=1 // pred_fallthru
      _
    // Predicated region
    $region46: #{temporal_gnn_forward.1} parent=1 // pred_check
      _
    $region47: #{temporal_gnn_forward.1} parent=1 // pred_check_branch
      %47 = sbr.rel (0) target = $region49
    $region48: #{temporal_gnn_forward.1} parent=1 // pred_region
      _
    $region49: #{temporal_gnn_forward.1} parent=1 // pred_fallthru
      _
    // Predicated region
    $region50: #{temporal_gnn_forward.1} parent=1 // pred_check
      _
    $region51: #{temporal_gnn_forward.1} parent=1 // pred_check_branch
      %49 = sbr.rel (0) target = $region53
    $region52: #{temporal_gnn_forward.1} parent=1 // pred_region
      _
    $region53: #{temporal_gnn_forward.1} parent=1 // pred_fallthru
      _
    // Predicated region
    $region54: #{temporal_gnn_forward.1} parent=1 // pred_check
      _
    $region55: #{temporal_gnn_forward.1} parent=1 // pred_check_branch
      %51 = sbr.rel (0) target = $region57
    $region56: #{temporal_gnn_forward.1} parent=1 // pred_region
      _
    $region57: #{temporal_gnn_forward.1} parent=1 // pred_fallthru
      _
    // Predicated region
    $region58: #{temporal_gnn_forward.1} parent=1 // pred_check
      _
    $region59: #{temporal_gnn_forward.1} parent=1 // pred_check_branch
      %53 = sbr.rel (0) target = $region61
    $region60: #{temporal_gnn_forward.1} parent=1 // pred_region
      _
    $region61: #{temporal_gnn_forward.1} parent=1 // pred_fallthru
      _
    // Predicated region
    $region62: #{temporal_gnn_forward.1} parent=1 // pred_check
      _
    $region63: #{temporal_gnn_forward.1} parent=1 // pred_check_branch
      %55 = sbr.rel (0) target = $region65
    $region64: #{temporal_gnn_forward.1} parent=1 // pred_region
      _
    $region65: #{temporal_gnn_forward.1} parent=1 // pred_fallthru
      _
    // Predicated region
    $region66: #{temporal_gnn_forward.1} parent=1 // pred_check
      _
    $region67: #{temporal_gnn_forward.1} parent=1 // pred_check_branch
      %57 = sbr.rel (0) target = $region69
    $region68: #{temporal_gnn_forward.1} parent=1 // pred_region
      _
    $region69: #{temporal_gnn_forward.1} parent=1 // pred_fallthru
      _
    // Predicated region
    $region70: #{temporal_gnn_forward.1} parent=1 // pred_check
      _
    $region71: #{temporal_gnn_forward.1} parent=1 // pred_check_branch
      %59 = sbr.rel (0) target = $region73
    $region72: #{temporal_gnn_forward.1} parent=1 // pred_region
      _
    $region73: #{temporal_gnn_forward.1} parent=1 // pred_fallthru
      _
    %v60 = vld [vmem:[%s2] sm:$0x1]
    %v61 = vld [vmem:[%s2 + $0x1] sm:$0x1]
    %v62 = vld [vmem:[%s2 + $0x2] sm:$0x1]
    %v63 = vld [vmem:[%s2 + $0x3] sm:$0x1]
    %v64 = vld [vmem:[%s2 + $0x4] sm:$0x1]
    %v65 = vld [vmem:[%s2 + $0x5] sm:$0x1]
    %v66 = vld [vmem:[%s2 + $0x6] sm:$0x1]
    %v67 = vld [vmem:[%s2 + $0x7] sm:$0x1]
    %v68 = vld [vmem:[%s15] sm:$0x1]
    %vm69 = vcmask 24576
    %v70 = vsel %vm69, %v68, -inf
    %71 = vmax.xlane.f32.xlu0 %v70
    %v72 = vpop.xlane.xlu0 %71
    %v73 = vsub.f32 %v68, %v72
    %v74 = vmul.f32 %v73, 1.442695
    %v75 = vpow.pop %v74
    %v76 = vsel %vm69, %v75, 0.0
    %77 = vadd.xlane.f32.xlu0 %v76
    %v78 = vpop.xlane.xlu0 %77
    %v79 = vrcp.pop %v78
    %v80 = vmul.f32 %v75, %v79
    %v81 = vld [vmem:[%s1] sm:$0x3]
    %v82 = vld [vmem:[%s1 + $0x2] sm:$0x3]
    %v83 = vld [vmem:[%s1 + $0x4] sm:$0x3]
    %v84 = vld [vmem:[%s1 + $0x6] sm:$0x3]
    %v85 = vld [vmem:[%s1 + $0x8] sm:$0x3]
    %v86 = vld [vmem:[%s1 + $0xa] sm:$0x3]
    %v87 = vld [vmem:[%s1 + $0xc] sm:$0x3]
    %v88 = vld [vmem:[%s1 + $0xe] sm:$0x3]
    %v89 = vunpack.c.0.s8 %v81
    %v90 = vunpack.c.0.s8 %v82
    %v91 = vunpack.c.0.s8 %v83
    %v92 = vunpack.c.0.s8 %v84
    %v93 = vunpack.c.0.s8 %v85
    %v94 = vunpack.c.0.s8 %v86
    %v95 = vunpack.c.0.s8 %v87
    %v96 = vunpack.c.0.s8 %v88
    %v97 = vcvt.s32.f32 %v89
    %v98 = vcvt.s32.f32 %v90
    %v99 = vcvt.s32.f32 %v91
    %v100 = vcvt.s32.f32 %v92
    %v101 = vcvt.s32.f32 %v93
    %v102 = vcvt.s32.f32 %v94
    %v103 = vcvt.s32.f32 %v95
    %v104 = vcvt.s32.f32 %v96
    %v105 = vld [vmem:[%s0] sm:$0xff]
    %v106 = vld [vmem:[%s0 + $0x8] sm:$0xff]
    %v107 = vld [vmem:[%s0 + $0x10] sm:$0xff]
    %v108 = vld [vmem:[%s0 + $0x18] sm:$0xff]
    %v109 = vld [vmem:[%s0 + $0x20] sm:$0xff]
    %v110 = vld [vmem:[%s0 + $0x28] sm:$0xff]
    %v111 = vld [vmem:[%s0 + $0x30] sm:$0xff]
    %v112 = vld [vmem:[%s0 + $0x38] sm:$0xff]
    %v113 = vld [vmem:[%s3] sm:$0xff]
    %vm114 = vcmask 64512
    %v116 = vsel %vm114, %v105, 0
    %v119 = vsel %vm114, %v106, 0
    %v122 = vsel %vm114, %v107, 0
    %v125 = vsel %vm114, %v108, 0
    %v128 = vsel %vm114, %v109, 0
    %v131 = vsel %vm114, %v110, 0
    %v134 = vsel %vm114, %v111, 0
    %v137 = vsel %vm114, %v112, 0
    %139 = vmatprep.subr.mxu0 0.0
    %140 = vmatpush1.msra.mxu0 %v113
    %141 = vmatprep.subr.mxu0 0.0
    %142 = vmatpush1.msra.mxu0 0.0
    %143 = vmatprep.subr.mxu0 0.0
    %144 = vmatpush1.msra.mxu0 0.0
    %145 = vmatprep.subr.mxu0 0.0
    %146 = vmatpush1.msra.mxu0 0.0
    %147 = vmatprep.subr.mxu0 0.0
    %148 = vmatpush1.msra.mxu0 0.0
    %149 = vmatprep.subr.mxu0 0.0
    %150 = vmatpush1.msra.mxu0 0.0
    %151 = vmatprep.subr.mxu0 0.0
    %152 = vmatpush1.msra.mxu0 0.0
    %153 = vmatprep.subr.mxu0 0.0
    %154 = vmatpush1.msra.mxu0 0.0
    %155 = vmatprep.subr.mxu0 0.0
    %156 = vmatpush1.msra.mxu0 0.0
    %157 = vmatprep.subr.mxu0 0.0
    %158 = vmatpush1.msra.mxu0 0.0
    %159 = vmatprep.subr.mxu0 0.0
    %160 = vmatpush1.msra.mxu0 0.0
    %161 = vmatprep.subr.mxu0 0.0
    %162 = vmatpush1.msra.mxu0 0.0
    %163 = vmatprep.subr.mxu0 0.0
    %164 = vmatpush1.msra.mxu0 0.0
    %165 = vmatprep.subr.mxu0 0.0
    %166 = vmatpush1.msra.mxu0 0.0
    %167 = vmatprep.subr.mxu0 0.0
    %168 = vmatpush1.msra.mxu0 0.0
    %169 = vmatprep.subr.mxu0 0.0
    %170 = vmatpush1.msra.mxu0 0.0
    %171 = vmatprep.subr.mxu0 0.0
    %172 = vmatpush1.msra.mxu0 0.0
    %173 = vmatprep.subr.mxu0 0.0
    %174 = vmatpush1.msra.mxu0 0.0
    %175 = vmatprep.subr.mxu0 0.0
    %176 = vmatpush1.msra.mxu0 0.0
    %177 = vmatprep.subr.mxu0 0.0
    %178 = vmatpush1.msra.mxu0 0.0
    %179 = vmatprep.subr.mxu0 0.0
    %180 = vmatpush1.msra.mxu0 0.0
    %181 = vmatprep.subr.mxu0 0.0
    %182 = vmatpush1.msra.mxu0 0.0
    %183 = vmatprep.subr.mxu0 0.0
    %184 = vmatpush1.msra.mxu0 0.0
    %185 = vmatprep.subr.mxu0 0.0
    %186 = vmatpush1.msra.mxu0 0.0
    %187 = vmatprep.subr.mxu0 0.0
    %188 = vmatpush1.msra.mxu0 0.0
    %189 = vmatprep.subr.mxu0 0.0
    %190 = vmatpush1.msra.mxu0 0.0
    %191 = vmatprep.subr.mxu0 0.0
    %192 = vmatpush1.msra.mxu0 0.0
    %193 = vmatprep.subr.mxu0 0.0
    %194 = vmatpush1.msra.mxu0 0.0
    %195 = vmatprep.subr.mxu0 0.0
    %196 = vmatpush1.msra.mxu0 0.0
    %197 = vmatprep.subr.mxu0 0.0
    %198 = vmatpush1.msra.mxu0 0.0
    %199 = vmatprep.subr.mxu0 0.0
    %200 = vmatpush1.msra.mxu0 0.0
    %201 = vmatprep.subr.mxu0 0.0
    %202 = vmatpush1.msra.mxu0 0.0
    %203 = vmatprep.mubr.f32.mxu0 0.0
    %204 = vmatmul.mubr.f32.gmra.mrb[0].mxu0 %v116
    %v205 = vpop.f32.mrb[0].mxu0
    %v206 = vadd.f32 0.0, %v205
    %v207 = vpop.f32.mrb[0].mxu0
    %208 = vmatprep.mubr.f32.mxu0 0.0
    %209 = vmatmul.mubr.f32.gmra.mrb[0].mxu0 %v119
    %v210 = vpop.f32.mrb[0].mxu0
    %v211 = vadd.f32 0.0, %v210
    %v212 = vpop.f32.mrb[0].mxu0
    %213 = vmatprep.mubr.f32.mxu0 0.0
    %214 = vmatmul.mubr.f32.gmra.mrb[0].mxu0 %v122
    %v215 = vpop.f32.mrb[0].mxu0
    %v216 = vadd.f32 0.0, %v215
    %v217 = vpop.f32.mrb[0].mxu0
    %218 = vmatprep.mubr.f32.mxu0 0.0
    %219 = vmatmul.mubr.f32.gmra.mrb[0].mxu0 %v125
    %v220 = vpop.f32.mrb[0].mxu0
    %v221 = vadd.f32 0.0, %v220
    %v222 = vpop.f32.mrb[0].mxu0
    %223 = vmatprep.mubr.f32.mxu0 0.0
    %224 = vmatmul.mubr.f32.gmra.mrb[0].mxu0 %v128
    %v225 = vpop.f32.mrb[0].mxu0
    %v226 = vadd.f32 0.0, %v225
    %v227 = vpop.f32.mrb[0].mxu0
    %228 = vmatprep.mubr.f32.mxu0 0.0
    %229 = vmatmul.mubr.f32.gmra.mrb[0].mxu0 %v131
    %v230 = vpop.f32.mrb[0].mxu0
    %v231 = vadd.f32 0.0, %v230
    %v232 = vpop.f32.mrb[0].mxu0
    %233 = vmatprep.mubr.f32.mxu0 0.0
    %234 = vmatmul.mubr.f32.gmra.mrb[0].mxu0 %v134
    %v235 = vpop.f32.mrb[0].mxu0
    %v236 = vadd.f32 0.0, %v235
    %v237 = vpop.f32.mrb[0].mxu0
    %238 = vmatprep.mubr.f32.mxu0 0.0
    %239 = vmatmul.mubr.f32.gmra.mrb[0].mxu0 %v137
    %v240 = vpop.f32.mrb[0].mxu0
    %v241 = vadd.f32 0.0, %v240
    %v242 = vpop.f32.mrb[0].mxu0
    %243 = vdwg.mxu0
    %v244 = vsub.f32 %v97, 1.0
    %v245 = vsub.f32 %v98, 1.0
    %v246 = vmul.f32 %v244, 1e+30
    %v247 = vmul.f32 %v245, 1e+30
    %250 = vrot.lane.b32.xlu0 %v246, 16
    %v251 = vpop.permute.xlu0 %250
    %252 = vrot.lane.b32.xlu0 %v247, 16
    %v253 = vpop.permute.xlu0 %252
    %256 = vrot.lane.b32.xlu0 %v246, 32
    %v257 = vpop.permute.xlu0 %256
    %258 = vrot.lane.b32.xlu0 %v247, 32
    %v259 = vpop.permute.xlu0 %258
    %262 = vrot.lane.b32.xlu0 %v246, 48
    %v263 = vpop.permute.xlu0 %262
    %264 = vrot.lane.b32.xlu0 %v247, 48
    %v265 = vpop.permute.xlu0 %264
    %268 = vrot.lane.b32.xlu0 %v246, 64
    %v269 = vpop.permute.xlu0 %268
    %270 = vrot.lane.b32.xlu0 %v247, 64
    %v271 = vpop.permute.xlu0 %270
    %274 = vrot.lane.b32.xlu0 %v246, 80
    %v275 = vpop.permute.xlu0 %274
    %276 = vrot.lane.b32.xlu0 %v247, 80
    %v277 = vpop.permute.xlu0 %276
    %280 = vrot.lane.b32.xlu0 %v246, 96
    %v281 = vpop.permute.xlu0 %280
    %282 = vrot.lane.b32.xlu0 %v247, 96
    %v283 = vpop.permute.xlu0 %282
    %286 = vrot.lane.b32.xlu0 %v246, 112
    %v287 = vpop.permute.xlu0 %286
    %288 = vrot.lane.b32.xlu0 %v247, 112
    %v289 = vpop.permute.xlu0 %288
    %vm292 = vcmask 130048
    %v293 = vsel %vm292, %v246, %v251
    %v294 = vsel %vm292, %v247, %v253
    %vm295 = vcmask 261120
    %v296 = vsel %vm295, %v293, %v257
    %v297 = vsel %vm295, %v294, %v259
    %vm298 = vcmask 392192
    %v299 = vsel %vm298, %v296, %v263
    %v300 = vsel %vm298, %v297, %v265
    %vm301 = vcmask 523264
    %v302 = vsel %vm301, %v299, %v269
    %v303 = vsel %vm301, %v300, %v271
    %vm304 = vcmask 654336
    %v305 = vsel %vm304, %v302, %v275
    %v306 = vsel %vm304, %v303, %v277
    %vm307 = vcmask 785408
    %v308 = vsel %vm307, %v305, %v281
    %v309 = vsel %vm307, %v306, %v283
    %vm310 = vcmask 916480
    %v311 = vsel %vm310, %v308, %v287
    %v312 = vsel %vm310, %v309, %v289
    %v321 = vlaneseq
    %v322 = vshrl.u32 %v321, 7
    %v323 = vsub.s32 0, %v322
    %v324 = vrot.slane %v60, %v323
    %v325 = vlaneseq
    %v326 = vshrl.u32 %v325, 7
    %v327 = vsub.s32 0, %v326
    %v328 = vrot.slane %v61, %v327
    %v329 = vlaneseq
    %v330 = vshrl.u32 %v329, 7
    %v331 = vsub.s32 0, %v330
    %v332 = vrot.slane %v62, %v331
    %v333 = vlaneseq
    %v334 = vshrl.u32 %v333, 7
    %v335 = vsub.s32 0, %v334
    %v336 = vrot.slane %v63, %v335
    %v337 = vlaneseq
    %v338 = vshrl.u32 %v337, 7
    %v339 = vsub.s32 0, %v338
    %v340 = vrot.slane %v64, %v339
    %v341 = vlaneseq
    %v342 = vshrl.u32 %v341, 7
    %v343 = vsub.s32 0, %v342
    %v344 = vrot.slane %v65, %v343
    %v345 = vlaneseq
    %v346 = vshrl.u32 %v345, 7
    %v347 = vsub.s32 0, %v346
    %v348 = vrot.slane %v66, %v347
    %v349 = vlaneseq
    %v350 = vshrl.u32 %v349, 7
    %v351 = vsub.s32 0, %v350
    %v352 = vrot.slane %v67, %v351
    %v361 = vmul.f32 %v206, %v324
    %v362 = vmul.f32 %v211, %v324
    %v363 = vmul.f32 %v206, %v328
    %v364 = vmul.f32 %v211, %v328
    %v365 = vmul.f32 %v206, %v332
    %v366 = vmul.f32 %v211, %v332
    %v367 = vmul.f32 %v206, %v336
    %v368 = vmul.f32 %v211, %v336
    %v369 = vmul.f32 %v206, %v340
    %v370 = vmul.f32 %v211, %v340
    %v371 = vmul.f32 %v206, %v344
    %v372 = vmul.f32 %v211, %v344
    %v373 = vmul.f32 %v206, %v348
    %v374 = vmul.f32 %v211, %v348
    %v375 = vmul.f32 %v206, %v352
    %v376 = vmul.f32 %v211, %v352
    %379 = vrot.lane.b32.xlu0 %v206, 96
    %v380 = vpop.permute.xlu0 %379
    %381 = vrot.lane.b32.xlu0 %v211, 96
    %v382 = vpop.permute.xlu0 %381
    %v383 = vsel %vm295, %v380, 0
    %v385 = vsel %vm295, %v382, 0
    %v388 = vsel %vm295, %v361, 0
    %v391 = vsel %vm295, %v362, 0
    %v394 = vsel %vm295, %v363, 0
    %v397 = vsel %vm295, %v364, 0
    %v400 = vsel %vm295, %v365, 0
    %v403 = vsel %vm295, %v366, 0
    %v406 = vsel %vm295, %v367, 0
    %v409 = vsel %vm295, %v368, 0
    %v412 = vsel %vm295, %v369, 0
    %v415 = vsel %vm295, %v370, 0
    %v418 = vsel %vm295, %v371, 0
    %v421 = vsel %vm295, %v372, 0
    %v424 = vsel %vm295, %v373, 0
    %v427 = vsel %vm295, %v374, 0
    %v430 = vsel %vm295, %v375, 0
    %v433 = vsel %vm295, %v376, 0
    %435 = vmatprep.subr.mxu0 0.0
    %436 = vmatpush1.xpose.msra.mxu0 %v388
    %437 = vmatprep.subr.mxu0 0.0
    %438 = vmatpush1.xpose.msra.mxu0 %v391
    %439 = vmatprep.subr.mxu0 0.0
    %440 = vmatpush1.xpose.msra.mxu0 %v394
    %441 = vmatprep.subr.mxu0 0.0
    %442 = vmatpush1.xpose.msra.mxu0 %v397
    %443 = vmatprep.subr.mxu0 0.0
    %444 = vmatpush1.xpose.msra.mxu0 %v400
    %445 = vmatprep.subr.mxu0 0.0
    %446 = vmatpush1.xpose.msra.mxu0 %v403
    %447 = vmatprep.subr.mxu0 0.0
    %448 = vmatpush1.xpose.msra.mxu0 %v406
    %449 = vmatprep.subr.mxu0 0.0
    %450 = vmatpush1.xpose.msra.mxu0 %v409
    %451 = vmatprep.subr.mxu0 0.0
    %452 = vmatpush1.xpose.msra.mxu0 %v412
    %453 = vmatprep.subr.mxu0 0.0
    %454 = vmatpush1.xpose.msra.mxu0 %v415
    %455 = vmatprep.subr.mxu0 0.0
    %456 = vmatpush1.xpose.msra.mxu0 %v418
    %457 = vmatprep.subr.mxu0 0.0
    %458 = vmatpush1.xpose.msra.mxu0 %v421
    %459 = vmatprep.subr.mxu0 0.0
    %460 = vmatpush1.xpose.msra.mxu0 %v424
    %461 = vmatprep.subr.mxu0 0.0
    %462 = vmatpush1.xpose.msra.mxu0 %v427
    %463 = vmatprep.subr.mxu0 0.0
    %464 = vmatpush1.xpose.msra.mxu0 %v430
    %465 = vmatprep.subr.mxu0 0.0
    %466 = vmatpush1.xpose.msra.mxu0 %v433
    %467 = vmatprep.subr.mxu0 0.0
    %468 = vmatpush1.xpose.msra.mxu0 0.0
    %469 = vmatprep.subr.mxu0 0.0
    %470 = vmatpush1.xpose.msra.mxu0 0.0
    %471 = vmatprep.subr.mxu0 0.0
    %472 = vmatpush1.xpose.msra.mxu0 0.0
    %473 = vmatprep.subr.mxu0 0.0
    %474 = vmatpush1.xpose.msra.mxu0 0.0
    %475 = vmatprep.subr.mxu0 0.0
    %476 = vmatpush1.xpose.msra.mxu0 0.0
    %477 = vmatprep.subr.mxu0 0.0
    %478 = vmatpush1.xpose.msra.mxu0 0.0
    %479 = vmatprep.subr.mxu0 0.0
    %480 = vmatpush1.xpose.msra.mxu0 0.0
    %481 = vmatprep.subr.mxu0 0.0
    %482 = vmatpush1.xpose.msra.mxu0 0.0
    %483 = vmatprep.subr.mxu0 0.0
    %484 = vmatpush1.xpose.msra.mxu0 0.0
    %485 = vmatprep.subr.mxu0 0.0
    %486 = vmatpush1.xpose.msra.mxu0 0.0
    %487 = vmatprep.subr.mxu0 0.0
    %488 = vmatpush1.xpose.msra.mxu0 0.0
    %489 = vmatprep.subr.mxu0 0.0
    %490 = vmatpush1.xpose.msra.mxu0 0.0
    %491 = vmatprep.subr.mxu0 0.0
    %492 = vmatpush1.xpose.msra.mxu0 0.0
    %493 = vmatprep.subr.mxu0 0.0
    %494 = vmatpush1.xpose.msra.mxu0 0.0
    %495 = vmatprep.subr.mxu0 0.0
    %496 = vmatpush1.xpose.msra.mxu0 0.0
    %497 = vmatprep.subr.mxu0 0.0
    %498 = vmatpush1.xpose.msra.mxu0 0.0
    %499 = vmatprep.mubr.f32.mxu0 0.0
    %500 = vmatmul.mubr.f32.gmra.mrb[0].mxu0 %v383
    %v501 = vpop.f32.mrb[0].mxu0
    %v502 = vadd.f32 0.0, %v501
    %v503 = vpop.f32.mrb[0].mxu0
    %504 = vmatprep.mubr.f32.mxu0 0.0
    %505 = vmatmul.mubr.f32.gmra.mrb[0].mxu0 %v385
    %v506 = vpop.f32.mrb[0].mxu0
    %v507 = vadd.f32 0.0, %v506
    %v508 = vpop.f32.mrb[0].mxu0
    %509 = vdwg.mxu0
    %vm510 = vcmp.gt.f32.partialorder %v502, 0.0
    %vm511 = vcmp.gt.f32.partialorder %v507, 0.0
    %v512 = vmul.f32 %v502, 0.2
    %v513 = vmul.f32 %v507, 0.2
    %v514 = vsel %vm510, %v502, %v512
    %v515 = vsel %vm511, %v507, %v513
    %v516 = vadd.f32 %v514, %v311
    %v517 = vadd.f32 %v515, %v312
    %v518 = vmax.f32 %v516, %v517
    %v519 = vrot.slane %v518, 4
    %v520 = vmax.f32 %v518, %v519
    %v521 = vrot.slane %v520, 2
    %v522 = vmax.f32 %v520, %v521
    %v523 = vrot.slane %v522, 1
    %v524 = vmax.f32 %v522, %v523
    %v525 = vsub.f32 %v516, %v524
    %v526 = vsub.f32 %v517, %v524
    %v527 = vmul.f32 %v525, 1.442695
    %v528 = vpow.pop %v527
    %v529 = vmul.f32 %v526, 1.442695
    %v530 = vpow.pop %v529
    %v531 = vadd.f32 %v528, %v530
    %v532 = vrot.slane %v531, 4
    %v533 = vadd.f32 %v531, %v532
    %v534 = vrot.slane %v533, 2
    %v535 = vadd.f32 %v533, %v534
    %v536 = vrot.slane %v535, 1
    %v537 = vadd.f32 %v535, %v536
    %v538 = vrcp.pop %v537
    %v539 = vmul.f32 %v528, %v538
    %v540 = vmul.f32 %v530, %v538
    %541 = vxpose.xlu0.b32.start [1/16] %v539, 128
    %542 = vxpose.xlu0.b32.cont [2/16] %v540, 128
    %543 = vxpose.xlu0.b32.cont [3/16] 0.0, 128
    %544 = vxpose.xlu0.b32.cont [4/16] 0.0, 128
    %545 = vxpose.xlu0.b32.cont [5/16] 0.0, 128
    %546 = vxpose.xlu0.b32.cont [6/16] 0.0, 128
    %547 = vxpose.xlu0.b32.cont [7/16] 0.0, 128
    %548 = vxpose.xlu0.b32.cont [8/16] 0.0, 128
    %549 = vxpose.xlu0.b32.cont [9/16] 0.0, 128
    %550 = vxpose.xlu0.b32.cont [10/16] 0.0, 128
    %551 = vxpose.xlu0.b32.cont [11/16] 0.0, 128
    %552 = vxpose.xlu0.b32.cont [12/16] 0.0, 128
    %553 = vxpose.xlu0.b32.cont [13/16] 0.0, 128
    %554 = vxpose.xlu0.b32.cont [14/16] 0.0, 128
    %555 = vxpose.xlu0.b32.cont [15/16] 0.0, 128
    %556 = vxpose.xlu0.b32.end [16/16] 0.0, 128
    %v557 = vpop.trf.xlu0
    %v558 = vpop.trf.xlu0
    %v559 = vpop.trf.xlu0
    %v560 = vpop.trf.xlu0
    %v561 = vpop.trf.xlu0
    %v562 = vpop.trf.xlu0
    %v563 = vpop.trf.xlu0
    %v564 = vpop.trf.xlu0
    %v565 = vpop.trf.xlu0
    %v566 = vpop.trf.xlu0
    %v567 = vpop.trf.xlu0
    %v568 = vpop.trf.xlu0
    %v569 = vpop.trf.xlu0
    %v570 = vpop.trf.xlu0
    %v571 = vpop.trf.xlu0
    %v572 = vpop.trf.xlu0
    %573 = vrot.lane.b32.xlu0 %v206, 64
    %v574 = vpop.permute.xlu0 %573
    %575 = vrot.lane.b32.xlu0 %v211, 64
    %v576 = vpop.permute.xlu0 %575
    %v580 = vsel %vm292, %v557, 0
    %v583 = vsel %vm292, %v558, 0
    %v586 = vsel %vm292, %v559, 0
    %v589 = vsel %vm292, %v560, 0
    %v592 = vsel %vm292, %v561, 0
    %v595 = vsel %vm292, %v562, 0
    %v598 = vsel %vm292, %v563, 0
    %v601 = vsel %vm292, %v564, 0
    %v604 = vsel %vm292, %v565, 0
    %v607 = vsel %vm292, %v566, 0
    %v610 = vsel %vm292, %v567, 0
    %v613 = vsel %vm292, %v568, 0
    %v616 = vsel %vm292, %v569, 0
    %v619 = vsel %vm292, %v570, 0
    %v622 = vsel %vm292, %v571, 0
    %v625 = vsel %vm292, %v572, 0
    %627 = vmatprep.subr.mxu0 0.0
    %628 = vmatpush1.msra.mxu0 %v574
    %629 = vmatprep.subr.mxu0 0.0
    %630 = vmatpush1.msra.mxu0 %v576
    %631 = vmatprep.subr.mxu0 0.0
    %632 = vmatpush1.msra.mxu0 0.0
    %633 = vmatprep.subr.mxu0 0.0
    %634 = vmatpush1.msra.mxu0 0.0
    %635 = vmatprep.subr.mxu0 0.0
    %636 = vmatpush1.msra.mxu0 0.0
    %637 = vmatprep.subr.mxu0 0.0
    %638 = vmatpush1.msra.mxu0 0.0
    %639 = vmatprep.subr.mxu0 0.0
    %640 = vmatpush1.msra.mxu0 0.0
    %641 = vmatprep.subr.mxu0 0.0
    %642 = vmatpush1.msra.mxu0 0.0
    %643 = vmatprep.subr.mxu0 0.0
    %644 = vmatpush1.msra.mxu0 0.0
    %645 = vmatprep.subr.mxu0 0.0
    %646 = vmatpush1.msra.mxu0 0.0
    %647 = vmatprep.subr.mxu0 0.0
    %648 = vmatpush1.msra.mxu0 0.0
    %649 = vmatprep.subr.mxu0 0.0
    %650 = vmatpush1.msra.mxu0 0.0
    %651 = vmatprep.subr.mxu0 0.0
    %652 = vmatpush1.msra.mxu0 0.0
    %653 = vmatprep.subr.mxu0 0.0
    %654 = vmatpush1.msra.mxu0 0.0
    %655 = vmatprep.subr.mxu0 0.0
    %656 = vmatpush1.msra.mxu0 0.0
    %657 = vmatprep.subr.mxu0 0.0
    %658 = vmatpush1.msra.mxu0 0.0
    %659 = vmatprep.subr.mxu0 0.0
    %660 = vmatpush1.msra.mxu0 0.0
    %661 = vmatprep.subr.mxu0 0.0
    %662 = vmatpush1.msra.mxu0 0.0
    %663 = vmatprep.subr.mxu0 0.0
    %664 = vmatpush1.msra.mxu0 0.0
    %665 = vmatprep.subr.mxu0 0.0
    %666 = vmatpush1.msra.mxu0 0.0
    %667 = vmatprep.subr.mxu0 0.0
    %668 = vmatpush1.msra.mxu0 0.0
    %669 = vmatprep.subr.mxu0 0.0
    %670 = vmatpush1.msra.mxu0 0.0
    %671 = vmatprep.subr.mxu0 0.0
    %672 = vmatpush1.msra.mxu0 0.0
    %673 = vmatprep.subr.mxu0 0.0
    %674 = vmatpush1.msra.mxu0 0.0
    %675 = vmatprep.subr.mxu0 0.0
    %676 = vmatpush1.msra.mxu0 0.0
    %677 = vmatprep.subr.mxu0 0.0
    %678 = vmatpush1.msra.mxu0 0.0
    %679 = vmatprep.subr.mxu0 0.0
    %680 = vmatpush1.msra.mxu0 0.0
    %681 = vmatprep.subr.mxu0 0.0
    %682 = vmatpush1.msra.mxu0 0.0
    %683 = vmatprep.subr.mxu0 0.0
    %684 = vmatpush1.msra.mxu0 0.0
    %685 = vmatprep.subr.mxu0 0.0
    %686 = vmatpush1.msra.mxu0 0.0
    %687 = vmatprep.subr.mxu0 0.0
    %688 = vmatpush1.msra.mxu0 0.0
    %689 = vmatprep.subr.mxu0 0.0
    %690 = vmatpush1.msra.mxu0 0.0
    %691 = vmatprep.mubr.f32.mxu0 0.0
    %692 = vmatmul.mubr.f32.gmra.mrb[0].mxu0 %v580
    %v693 = vpop.f32.mrb[0].mxu0
    %v694 = vadd.f32 0.0, %v693
    %v695 = vpop.f32.mrb[0].mxu0
    %696 = vmatprep.mubr.f32.mxu0 0.0
    %697 = vmatmul.mubr.f32.gmra.mrb[0].mxu0 %v583
    %v698 = vpop.f32.mrb[0].mxu0
    %v699 = vadd.f32 0.0, %v698
    %v700 = vpop.f32.mrb[0].mxu0
    %701 = vmatprep.mubr.f32.mxu0 0.0
    %702 = vmatmul.mubr.f32.gmra.mrb[0].mxu0 %v586
    %v703 = vpop.f32.mrb[0].mxu0
    %v704 = vadd.f32 0.0, %v703
    %v705 = vpop.f32.mrb[0].mxu0
    %706 = vmatprep.mubr.f32.mxu0 0.0
    %707 = vmatmul.mubr.f32.gmra.mrb[0].mxu0 %v589
    %v708 = vpop.f32.mrb[0].mxu0
    %v709 = vadd.f32 0.0, %v708
    %v710 = vpop.f32.mrb[0].mxu0
    %711 = vmatprep.mubr.f32.mxu0 0.0
    %712 = vmatmul.mubr.f32.gmra.mrb[0].mxu0 %v592
    %v713 = vpop.f32.mrb[0].mxu0
    %v714 = vadd.f32 0.0, %v713
    %v715 = vpop.f32.mrb[0].mxu0
    %716 = vmatprep.mubr.f32.mxu0 0.0
    %717 = vmatmul.mubr.f32.gmra.mrb[0].mxu0 %v595
    %v718 = vpop.f32.mrb[0].mxu0
    %v719 = vadd.f32 0.0, %v718
    %v720 = vpop.f32.mrb[0].mxu0
    %721 = vmatprep.mubr.f32.mxu0 0.0
    %722 = vmatmul.mubr.f32.gmra.mrb[0].mxu0 %v598
    %v723 = vpop.f32.mrb[0].mxu0
    %v724 = vadd.f32 0.0, %v723
    %v725 = vpop.f32.mrb[0].mxu0
    %726 = vmatprep.mubr.f32.mxu0 0.0
    %727 = vmatmul.mubr.f32.gmra.mrb[0].mxu0 %v601
    %v728 = vpop.f32.mrb[0].mxu0
    %v729 = vadd.f32 0.0, %v728
    %v730 = vpop.f32.mrb[0].mxu0
    %731 = vmatprep.mubr.f32.mxu0 0.0
    %732 = vmatmul.mubr.f32.gmra.mrb[0].mxu0 %v604
    %v733 = vpop.f32.mrb[0].mxu0
    %v734 = vadd.f32 0.0, %v733
    %v735 = vpop.f32.mrb[0].mxu0
    %736 = vmatprep.mubr.f32.mxu0 0.0
    %737 = vmatmul.mubr.f32.gmra.mrb[0].mxu0 %v607
    %v738 = vpop.f32.mrb[0].mxu0
    %v739 = vadd.f32 0.0, %v738
    %v740 = vpop.f32.mrb[0].mxu0
    %741 = vmatprep.mubr.f32.mxu0 0.0
    %742 = vmatmul.mubr.f32.gmra.mrb[0].mxu0 %v610
    %v743 = vpop.f32.mrb[0].mxu0
    %v744 = vadd.f32 0.0, %v743
    %v745 = vpop.f32.mrb[0].mxu0
    %746 = vmatprep.mubr.f32.mxu0 0.0
    %747 = vmatmul.mubr.f32.gmra.mrb[0].mxu0 %v613
    %v748 = vpop.f32.mrb[0].mxu0
    %v749 = vadd.f32 0.0, %v748
    %v750 = vpop.f32.mrb[0].mxu0
    %751 = vmatprep.mubr.f32.mxu0 0.0
    %752 = vmatmul.mubr.f32.gmra.mrb[0].mxu0 %v616
    %v753 = vpop.f32.mrb[0].mxu0
    %v754 = vadd.f32 0.0, %v753
    %v755 = vpop.f32.mrb[0].mxu0
    %756 = vmatprep.mubr.f32.mxu0 0.0
    %757 = vmatmul.mubr.f32.gmra.mrb[0].mxu0 %v619
    %v758 = vpop.f32.mrb[0].mxu0
    %v759 = vadd.f32 0.0, %v758
    %v760 = vpop.f32.mrb[0].mxu0
    %761 = vmatprep.mubr.f32.mxu0 0.0
    %762 = vmatmul.mubr.f32.gmra.mrb[0].mxu0 %v622
    %v763 = vpop.f32.mrb[0].mxu0
    %v764 = vadd.f32 0.0, %v763
    %v765 = vpop.f32.mrb[0].mxu0
    %766 = vmatprep.mubr.f32.mxu0 0.0
    %767 = vmatmul.mubr.f32.gmra.mrb[0].mxu0 %v625
    %v768 = vpop.f32.mrb[0].mxu0
    %v769 = vadd.f32 0.0, %v768
    %v770 = vpop.f32.mrb[0].mxu0
    %771 = vdwg.mxu0
    %v772 = vmul.f32 %v694, %v324
    %v773 = vmul.f32 %v699, %v324
    %v774 = vmul.f32 %v704, %v328
    %v775 = vmul.f32 %v709, %v328
    %v776 = vmul.f32 %v714, %v332
    %v777 = vmul.f32 %v719, %v332
    %v778 = vmul.f32 %v724, %v336
    %v779 = vmul.f32 %v729, %v336
    %v780 = vmul.f32 %v734, %v340
    %v781 = vmul.f32 %v739, %v340
    %v782 = vmul.f32 %v744, %v344
    %v783 = vmul.f32 %v749, %v344
    %v784 = vmul.f32 %v754, %v348
    %v785 = vmul.f32 %v759, %v348
    %v786 = vmul.f32 %v764, %v352
    %v787 = vmul.f32 %v769, %v352
    %v788 = vsel %vm295, %v772, 0.0
    %v789 = vsel %vm295, %v774, 0.0
    %v790 = vadd.f32 %v788, %v789
    %v791 = vsel %vm295, %v776, 0.0
    %v792 = vadd.f32 %v790, %v791
    %v793 = vsel %vm295, %v778, 0.0
    %v794 = vadd.f32 %v792, %v793
    %v795 = vsel %vm295, %v780, 0.0
    %v796 = vadd.f32 %v794, %v795
    %v797 = vsel %vm295, %v782, 0.0
    %v798 = vadd.f32 %v796, %v797
    %v799 = vsel %vm295, %v784, 0.0
    %v800 = vadd.f32 %v798, %v799
    %v801 = vsel %vm295, %v786, 0.0
    %v802 = vadd.f32 %v800, %v801
    %v803 = vsel %vm295, %v773, 0.0
    %v804 = vsel %vm295, %v775, 0.0
    %v805 = vadd.f32 %v803, %v804
    %v806 = vsel %vm295, %v777, 0.0
    %v807 = vadd.f32 %v805, %v806
    %v808 = vsel %vm295, %v779, 0.0
    %v809 = vadd.f32 %v807, %v808
    %v810 = vsel %vm295, %v781, 0.0
    %v811 = vadd.f32 %v809, %v810
    %v812 = vsel %vm295, %v783, 0.0
    %v813 = vadd.f32 %v811, %v812
    %v814 = vsel %vm295, %v785, 0.0
    %v815 = vadd.f32 %v813, %v814
    %v816 = vsel %vm295, %v787, 0.0
    %v817 = vadd.f32 %v815, %v816
    %v818 = vld [vmem:[%s4] sm:$0x1]
    %v820 = vlaneseq
    %v821 = vshrl.u32 %v820, 7
    %v822 = vsub.s32 0, %v821
    %v823 = vrot.slane %v818, %v822
    %v825 = vadd.f32 %v802, %v823
    %v826 = vadd.f32 %v817, %v823
    %v827 = vld [vmem:[%s9] sm:$0xff]
    %v828 = vld [vmem:[%s9 + $0x8] sm:$0xff]
    %v829 = vld [vmem:[%s9 + $0x10] sm:$0xff]
    %v830 = vld [vmem:[%s9 + $0x18] sm:$0xff]
    %v832 = vsel %vm295, %v825, 0
    %v835 = vsel %vm295, %v826, 0
    %837 = vmatprep.subr.mxu0 0.0
    %838 = vmatpush1.msra.mxu0 %v827
    %839 = vmatprep.subr.mxu0 0.0
    %840 = vmatpush1.msra.mxu0 %v828
    %841 = vmatprep.subr.mxu0 0.0
    %842 = vmatpush1.msra.mxu0 %v829
    %843 = vmatprep.subr.mxu0 0.0
    %844 = vmatpush1.msra.mxu0 %v830
    %845 = vmatprep.subr.mxu0 0.0
    %846 = vmatpush1.msra.mxu0 0.0
    %847 = vmatprep.subr.mxu0 0.0
    %848 = vmatpush1.msra.mxu0 0.0
    %849 = vmatprep.subr.mxu0 0.0
    %850 = vmatpush1.msra.mxu0 0.0
    %851 = vmatprep.subr.mxu0 0.0
    %852 = vmatpush1.msra.mxu0 0.0
    %853 = vmatprep.subr.mxu0 0.0
    %854 = vmatpush1.msra.mxu0 0.0
    %855 = vmatprep.subr.mxu0 0.0
    %856 = vmatpush1.msra.mxu0 0.0
    %857 = vmatprep.subr.mxu0 0.0
    %858 = vmatpush1.msra.mxu0 0.0
    %859 = vmatprep.subr.mxu0 0.0
    %860 = vmatpush1.msra.mxu0 0.0
    %861 = vmatprep.subr.mxu0 0.0
    %862 = vmatpush1.msra.mxu0 0.0
    %863 = vmatprep.subr.mxu0 0.0
    %864 = vmatpush1.msra.mxu0 0.0
    %865 = vmatprep.subr.mxu0 0.0
    %866 = vmatpush1.msra.mxu0 0.0
    %867 = vmatprep.subr.mxu0 0.0
    %868 = vmatpush1.msra.mxu0 0.0
    %869 = vmatprep.subr.mxu0 0.0
    %870 = vmatpush1.msra.mxu0 0.0
    %871 = vmatprep.subr.mxu0 0.0
    %872 = vmatpush1.msra.mxu0 0.0
    %873 = vmatprep.subr.mxu0 0.0
    %874 = vmatpush1.msra.mxu0 0.0
    %875 = vmatprep.subr.mxu0 0.0
    %876 = vmatpush1.msra.mxu0 0.0
    %877 = vmatprep.subr.mxu0 0.0
    %878 = vmatpush1.msra.mxu0 0.0
    %879 = vmatprep.subr.mxu0 0.0
    %880 = vmatpush1.msra.mxu0 0.0
    %881 = vmatprep.subr.mxu0 0.0
    %882 = vmatpush1.msra.mxu0 0.0
    %883 = vmatprep.subr.mxu0 0.0
    %884 = vmatpush1.msra.mxu0 0.0
    %885 = vmatprep.subr.mxu0 0.0
    %886 = vmatpush1.msra.mxu0 0.0
    %887 = vmatprep.subr.mxu0 0.0
    %888 = vmatpush1.msra.mxu0 0.0
    %889 = vmatprep.subr.mxu0 0.0
    %890 = vmatpush1.msra.mxu0 0.0
    %891 = vmatprep.subr.mxu0 0.0
    %892 = vmatpush1.msra.mxu0 0.0
    %893 = vmatprep.subr.mxu0 0.0
    %894 = vmatpush1.msra.mxu0 0.0
    %895 = vmatprep.subr.mxu0 0.0
    %896 = vmatpush1.msra.mxu0 0.0
    %897 = vmatprep.subr.mxu0 0.0
    %898 = vmatpush1.msra.mxu0 0.0
    %899 = vmatprep.subr.mxu0 0.0
    %900 = vmatpush1.msra.mxu0 0.0
    %901 = vmatprep.mubr.f32.mxu0 0.0
    %902 = vmatmul.mubr.f32.gmra.mrb[0].mxu0 %v832
    %v903 = vpop.f32.mrb[0].mxu0
    %v904 = vadd.f32 0.0, %v903
    %v905 = vpop.f32.mrb[0].mxu0
    %906 = vmatprep.mubr.f32.mxu0 0.0
    %907 = vmatmul.mubr.f32.gmra.mrb[0].mxu0 %v835
    %v908 = vpop.f32.mrb[0].mxu0
    %v909 = vadd.f32 0.0, %v908
    %v910 = vpop.f32.mrb[0].mxu0
    %911 = vdwg.mxu0
    %v912 = vmul.f32 %v904, %v324
    %v913 = vmul.f32 %v909, %v324
    %v914 = vmul.f32 %v904, %v328
    %v915 = vmul.f32 %v909, %v328
    %v916 = vmul.f32 %v904, %v332
    %v917 = vmul.f32 %v909, %v332
    %v918 = vmul.f32 %v904, %v336
    %v919 = vmul.f32 %v909, %v336
    %v920 = vmul.f32 %v904, %v340
    %v921 = vmul.f32 %v909, %v340
    %v922 = vmul.f32 %v904, %v344
    %v923 = vmul.f32 %v909, %v344
    %v924 = vmul.f32 %v904, %v348
    %v925 = vmul.f32 %v909, %v348
    %v926 = vmul.f32 %v904, %v352
    %v927 = vmul.f32 %v909, %v352
    %930 = vrot.lane.b32.xlu0 %v904, 96
    %v931 = vpop.permute.xlu0 %930
    %932 = vrot.lane.b32.xlu0 %v909, 96
    %v933 = vpop.permute.xlu0 %932
    %v934 = vsel %vm295, %v931, 0
    %v936 = vsel %vm295, %v933, 0
    %v939 = vsel %vm295, %v912, 0
    %v942 = vsel %vm295, %v913, 0
    %v945 = vsel %vm295, %v914, 0
    %v948 = vsel %vm295, %v915, 0
    %v951 = vsel %vm295, %v916, 0
    %v954 = vsel %vm295, %v917, 0
    %v957 = vsel %vm295, %v918, 0
    %v960 = vsel %vm295, %v919, 0
    %v963 = vsel %vm295, %v920, 0
    %v966 = vsel %vm295, %v921, 0
    %v969 = vsel %vm295, %v922, 0
    %v972 = vsel %vm295, %v923, 0
    %v975 = vsel %vm295, %v924, 0
    %v978 = vsel %vm295, %v925, 0
    %v981 = vsel %vm295, %v926, 0
    %v984 = vsel %vm295, %v927, 0
    %986 = vmatprep.subr.mxu0 0.0
    %987 = vmatpush1.xpose.msra.mxu0 %v939
    %988 = vmatprep.subr.mxu0 0.0
    %989 = vmatpush1.xpose.msra.mxu0 %v942
    %990 = vmatprep.subr.mxu0 0.0
    %991 = vmatpush1.xpose.msra.mxu0 %v945
    %992 = vmatprep.subr.mxu0 0.0
    %993 = vmatpush1.xpose.msra.mxu0 %v948
    %994 = vmatprep.subr.mxu0 0.0
    %995 = vmatpush1.xpose.msra.mxu0 %v951
    %996 = vmatprep.subr.mxu0 0.0
    %997 = vmatpush1.xpose.msra.mxu0 %v954
    %998 = vmatprep.subr.mxu0 0.0
    %999 = vmatpush1.xpose.msra.mxu0 %v957
    %1000 = vmatprep.subr.mxu0 0.0
    %1001 = vmatpush1.xpose.msra.mxu0 %v960
    %1002 = vmatprep.subr.mxu0 0.0
    %1003 = vmatpush1.xpose.msra.mxu0 %v963
    %1004 = vmatprep.subr.mxu0 0.0
    %1005 = vmatpush1.xpose.msra.mxu0 %v966
    %1006 = vmatprep.subr.mxu0 0.0
    %1007 = vmatpush1.xpose.msra.mxu0 %v969
    %1008 = vmatprep.subr.mxu0 0.0
    %1009 = vmatpush1.xpose.msra.mxu0 %v972
    %1010 = vmatprep.subr.mxu0 0.0
    %1011 = vmatpush1.xpose.msra.mxu0 %v975
    %1012 = vmatprep.subr.mxu0 0.0
    %1013 = vmatpush1.xpose.msra.mxu0 %v978
    %1014 = vmatprep.subr.mxu0 0.0
    %1015 = vmatpush1.xpose.msra.mxu0 %v981
    %1016 = vmatprep.subr.mxu0 0.0
    %1017 = vmatpush1.xpose.msra.mxu0 %v984
    %1018 = vmatprep.subr.mxu0 0.0
    %1019 = vmatpush1.xpose.msra.mxu0 0.0
    %1020 = vmatprep.subr.mxu0 0.0
    %1021 = vmatpush1.xpose.msra.mxu0 0.0
    %1022 = vmatprep.subr.mxu0 0.0
    %1023 = vmatpush1.xpose.msra.mxu0 0.0
    %1024 = vmatprep.subr.mxu0 0.0
    %1025 = vmatpush1.xpose.msra.mxu0 0.0
    %1026 = vmatprep.subr.mxu0 0.0
    %1027 = vmatpush1.xpose.msra.mxu0 0.0
    %1028 = vmatprep.subr.mxu0 0.0
    %1029 = vmatpush1.xpose.msra.mxu0 0.0
    %1030 = vmatprep.subr.mxu0 0.0
    %1031 = vmatpush1.xpose.msra.mxu0 0.0
    %1032 = vmatprep.subr.mxu0 0.0
    %1033 = vmatpush1.xpose.msra.mxu0 0.0
    %1034 = vmatprep.subr.mxu0 0.0
    %1035 = vmatpush1.xpose.msra.mxu0 0.0
    %1036 = vmatprep.subr.mxu0 0.0
    %1037 = vmatpush1.xpose.msra.mxu0 0.0
    %1038 = vmatprep.subr.mxu0 0.0
    %1039 = vmatpush1.xpose.msra.mxu0 0.0
    %1040 = vmatprep.subr.mxu0 0.0
    %1041 = vmatpush1.xpose.msra.mxu0 0.0
    %1042 = vmatprep.subr.mxu0 0.0
    %1043 = vmatpush1.xpose.msra.mxu0 0.0
    %1044 = vmatprep.subr.mxu0 0.0
    %1045 = vmatpush1.xpose.msra.mxu0 0.0
    %1046 = vmatprep.subr.mxu0 0.0
    %1047 = vmatpush1.xpose.msra.mxu0 0.0
    %1048 = vmatprep.subr.mxu0 0.0
    %1049 = vmatpush1.xpose.msra.mxu0 0.0
    %1050 = vmatprep.mubr.f32.mxu0 0.0
    %1051 = vmatmul.mubr.f32.gmra.mrb[0].mxu0 %v934
    %v1052 = vpop.f32.mrb[0].mxu0
    %v1053 = vadd.f32 0.0, %v1052
    %v1054 = vpop.f32.mrb[0].mxu0
    %1055 = vmatprep.mubr.f32.mxu0 0.0
    %1056 = vmatmul.mubr.f32.gmra.mrb[0].mxu0 %v936
    %v1057 = vpop.f32.mrb[0].mxu0
    %v1058 = vadd.f32 0.0, %v1057
    %v1059 = vpop.f32.mrb[0].mxu0
    %1060 = vdwg.mxu0
    %vm1061 = vcmp.gt.f32.partialorder %v1053, 0.0
    %vm1062 = vcmp.gt.f32.partialorder %v1058, 0.0
    %v1063 = vmul.f32 %v1053, 0.2
    %v1064 = vmul.f32 %v1058, 0.2
    %v1065 = vsel %vm1061, %v1053, %v1063
    %v1066 = vsel %vm1062, %v1058, %v1064
    %v1067 = vadd.f32 %v1065, %v311
    %v1068 = vadd.f32 %v1066, %v312
    %v1069 = vmax.f32 %v1067, %v1068
    %v1070 = vrot.slane %v1069, 4
    %v1071 = vmax.f32 %v1069, %v1070
    %v1072 = vrot.slane %v1071, 2
    %v1073 = vmax.f32 %v1071, %v1072
    %v1074 = vrot.slane %v1073, 1
    %v1075 = vmax.f32 %v1073, %v1074
    %v1076 = vsub.f32 %v1067, %v1075
    %v1077 = vsub.f32 %v1068, %v1075
    %v1078 = vmul.f32 %v1076, 1.442695
    %v1079 = vpow.pop %v1078
    %v1080 = vmul.f32 %v1077, 1.442695
    %v1081 = vpow.pop %v1080
    %v1082 = vadd.f32 %v1079, %v1081
    %v1083 = vrot.slane %v1082, 4
    %v1084 = vadd.f32 %v1082, %v1083
    %v1085 = vrot.slane %v1084, 2
    %v1086 = vadd.f32 %v1084, %v1085
    %v1087 = vrot.slane %v1086, 1
    %v1088 = vadd.f32 %v1086, %v1087
    %v1089 = vrcp.pop %v1088
    %v1090 = vmul.f32 %v1079, %v1089
    %v1091 = vmul.f32 %v1081, %v1089
    %1092 = vxpose.xlu0.b32.start [1/16] %v1090, 128
    %1093 = vxpose.xlu0.b32.cont [2/16] %v1091, 128
    %1094 = vxpose.xlu0.b32.cont [3/16] 0.0, 128
    %1095 = vxpose.xlu0.b32.cont [4/16] 0.0, 128
    %1096 = vxpose.xlu0.b32.cont [5/16] 0.0, 128
    %1097 = vxpose.xlu0.b32.cont [6/16] 0.0, 128
    %1098 = vxpose.xlu0.b32.cont [7/16] 0.0, 128
    %1099 = vxpose.xlu0.b32.cont [8/16] 0.0, 128
    %1100 = vxpose.xlu0.b32.cont [9/16] 0.0, 128
    %1101 = vxpose.xlu0.b32.cont [10/16] 0.0, 128
    %1102 = vxpose.xlu0.b32.cont [11/16] 0.0, 128
    %1103 = vxpose.xlu0.b32.cont [12/16] 0.0, 128
    %1104 = vxpose.xlu0.b32.cont [13/16] 0.0, 128
    %1105 = vxpose.xlu0.b32.cont [14/16] 0.0, 128
    %1106 = vxpose.xlu0.b32.cont [15/16] 0.0, 128
    %1107 = vxpose.xlu0.b32.end [16/16] 0.0, 128
    %v1108 = vpop.trf.xlu0
    %v1109 = vpop.trf.xlu0
    %v1110 = vpop.trf.xlu0
    %v1111 = vpop.trf.xlu0
    %v1112 = vpop.trf.xlu0
    %v1113 = vpop.trf.xlu0
    %v1114 = vpop.trf.xlu0
    %v1115 = vpop.trf.xlu0
    %v1116 = vpop.trf.xlu0
    %v1117 = vpop.trf.xlu0
    %v1118 = vpop.trf.xlu0
    %v1119 = vpop.trf.xlu0
    %v1120 = vpop.trf.xlu0
    %v1121 = vpop.trf.xlu0
    %v1122 = vpop.trf.xlu0
    %v1123 = vpop.trf.xlu0
    %1124 = vrot.lane.b32.xlu0 %v904, 64
    %v1125 = vpop.permute.xlu0 %1124
    %1126 = vrot.lane.b32.xlu0 %v909, 64
    %v1127 = vpop.permute.xlu0 %1126
    %v1131 = vsel %vm292, %v1108, 0
    %v1134 = vsel %vm292, %v1109, 0
    %v1137 = vsel %vm292, %v1110, 0
    %v1140 = vsel %vm292, %v1111, 0
    %v1143 = vsel %vm292, %v1112, 0
    %v1146 = vsel %vm292, %v1113, 0
    %v1149 = vsel %vm292, %v1114, 0
    %v1152 = vsel %vm292, %v1115, 0
    %v1155 = vsel %vm292, %v1116, 0
    %v1158 = vsel %vm292, %v1117, 0
    %v1161 = vsel %vm292, %v1118, 0
    %v1164 = vsel %vm292, %v1119, 0
    %v1167 = vsel %vm292, %v1120, 0
    %v1170 = vsel %vm292, %v1121, 0
    %v1173 = vsel %vm292, %v1122, 0
    %v1176 = vsel %vm292, %v1123, 0
    %1178 = vmatprep.subr.mxu0 0.0
    %1179 = vmatpush1.msra.mxu0 %v1125
    %1180 = vmatprep.subr.mxu0 0.0
    %1181 = vmatpush1.msra.mxu0 %v1127
    %1182 = vmatprep.subr.mxu0 0.0
    %1183 = vmatpush1.msra.mxu0 0.0
    %1184 = vmatprep.subr.mxu0 0.0
    %1185 = vmatpush1.msra.mxu0 0.0
    %1186 = vmatprep.subr.mxu0 0.0
    %1187 = vmatpush1.msra.mxu0 0.0
    %1188 = vmatprep.subr.mxu0 0.0
    %1189 = vmatpush1.msra.mxu0 0.0
    %1190 = vmatprep.subr.mxu0 0.0
    %1191 = vmatpush1.msra.mxu0 0.0
    %1192 = vmatprep.subr.mxu0 0.0
    %1193 = vmatpush1.msra.mxu0 0.0
    %1194 = vmatprep.subr.mxu0 0.0
    %1195 = vmatpush1.msra.mxu0 0.0
    %1196 = vmatprep.subr.mxu0 0.0
    %1197 = vmatpush1.msra.mxu0 0.0
    %1198 = vmatprep.subr.mxu0 0.0
    %1199 = vmatpush1.msra.mxu0 0.0
    %1200 = vmatprep.subr.mxu0 0.0
    %1201 = vmatpush1.msra.mxu0 0.0
    %1202 = vmatprep.subr.mxu0 0.0
    %1203 = vmatpush1.msra.mxu0 0.0
    %1204 = vmatprep.subr.mxu0 0.0
    %1205 = vmatpush1.msra.mxu0 0.0
    %1206 = vmatprep.subr.mxu0 0.0
    %1207 = vmatpush1.msra.mxu0 0.0
    %1208 = vmatprep.subr.mxu0 0.0
    %1209 = vmatpush1.msra.mxu0 0.0
    %1210 = vmatprep.subr.mxu0 0.0
    %1211 = vmatpush1.msra.mxu0 0.0
    %1212 = vmatprep.subr.mxu0 0.0
    %1213 = vmatpush1.msra.mxu0 0.0
    %1214 = vmatprep.subr.mxu0 0.0
    %1215 = vmatpush1.msra.mxu0 0.0
    %1216 = vmatprep.subr.mxu0 0.0
    %1217 = vmatpush1.msra.mxu0 0.0
    %1218 = vmatprep.subr.mxu0 0.0
    %1219 = vmatpush1.msra.mxu0 0.0
    %1220 = vmatprep.subr.mxu0 0.0
    %1221 = vmatpush1.msra.mxu0 0.0
    %1222 = vmatprep.subr.mxu0 0.0
    %1223 = vmatpush1.msra.mxu0 0.0
    %1224 = vmatprep.subr.mxu0 0.0
    %1225 = vmatpush1.msra.mxu0 0.0
    %1226 = vmatprep.subr.mxu0 0.0
    %1227 = vmatpush1.msra.mxu0 0.0
    %1228 = vmatprep.subr.mxu0 0.0
    %1229 = vmatpush1.msra.mxu0 0.0
    %1230 = vmatprep.subr.mxu0 0.0
    %1231 = vmatpush1.msra.mxu0 0.0
    %1232 = vmatprep.subr.mxu0 0.0
    %1233 = vmatpush1.msra.mxu0 0.0
    %1234 = vmatprep.subr.mxu0 0.0
    %1235 = vmatpush1.msra.mxu0 0.0
    %1236 = vmatprep.subr.mxu0 0.0
    %1237 = vmatpush1.msra.mxu0 0.0
    %1238 = vmatprep.subr.mxu0 0.0
    %1239 = vmatpush1.msra.mxu0 0.0
    %1240 = vmatprep.subr.mxu0 0.0
    %1241 = vmatpush1.msra.mxu0 0.0
    %1242 = vmatprep.mubr.f32.mxu0 0.0
    %1243 = vmatmul.mubr.f32.gmra.mrb[0].mxu0 %v1131
    %v1244 = vpop.f32.mrb[0].mxu0
    %v1245 = vadd.f32 0.0, %v1244
    %v1246 = vpop.f32.mrb[0].mxu0
    %1247 = vmatprep.mubr.f32.mxu0 0.0
    %1248 = vmatmul.mubr.f32.gmra.mrb[0].mxu0 %v1134
    %v1249 = vpop.f32.mrb[0].mxu0
    %v1250 = vadd.f32 0.0, %v1249
    %v1251 = vpop.f32.mrb[0].mxu0
    %1252 = vmatprep.mubr.f32.mxu0 0.0
    %1253 = vmatmul.mubr.f32.gmra.mrb[0].mxu0 %v1137
    %v1254 = vpop.f32.mrb[0].mxu0
    %v1255 = vadd.f32 0.0, %v1254
    %v1256 = vpop.f32.mrb[0].mxu0
    %1257 = vmatprep.mubr.f32.mxu0 0.0
    %1258 = vmatmul.mubr.f32.gmra.mrb[0].mxu0 %v1140
    %v1259 = vpop.f32.mrb[0].mxu0
    %v1260 = vadd.f32 0.0, %v1259
    %v1261 = vpop.f32.mrb[0].mxu0
    %1262 = vmatprep.mubr.f32.mxu0 0.0
    %1263 = vmatmul.mubr.f32.gmra.mrb[0].mxu0 %v1143
    %v1264 = vpop.f32.mrb[0].mxu0
    %v1265 = vadd.f32 0.0, %v1264
    %v1266 = vpop.f32.mrb[0].mxu0
    %1267 = vmatprep.mubr.f32.mxu0 0.0
    %1268 = vmatmul.mubr.f32.gmra.mrb[0].mxu0 %v1146
    %v1269 = vpop.f32.mrb[0].mxu0
    %v1270 = vadd.f32 0.0, %v1269
    %v1271 = vpop.f32.mrb[0].mxu0
    %1272 = vmatprep.mubr.f32.mxu0 0.0
    %1273 = vmatmul.mubr.f32.gmra.mrb[0].mxu0 %v1149
    %v1274 = vpop.f32.mrb[0].mxu0
    %v1275 = vadd.f32 0.0, %v1274
    %v1276 = vpop.f32.mrb[0].mxu0
    %1277 = vmatprep.mubr.f32.mxu0 0.0
    %1278 = vmatmul.mubr.f32.gmra.mrb[0].mxu0 %v1152
    %v1279 = vpop.f32.mrb[0].mxu0
    %v1280 = vadd.f32 0.0, %v1279
    %v1281 = vpop.f32.mrb[0].mxu0
    %1282 = vmatprep.mubr.f32.mxu0 0.0
    %1283 = vmatmul.mubr.f32.gmra.mrb[0].mxu0 %v1155
    %v1284 = vpop.f32.mrb[0].mxu0
    %v1285 = vadd.f32 0.0, %v1284
    %v1286 = vpop.f32.mrb[0].mxu0
    %1287 = vmatprep.mubr.f32.mxu0 0.0
    %1288 = vmatmul.mubr.f32.gmra.mrb[0].mxu0 %v1158
    %v1289 = vpop.f32.mrb[0].mxu0
    %v1290 = vadd.f32 0.0, %v1289
    %v1291 = vpop.f32.mrb[0].mxu0
    %1292 = vmatprep.mubr.f32.mxu0 0.0
    %1293 = vmatmul.mubr.f32.gmra.mrb[0].mxu0 %v1161
    %v1294 = vpop.f32.mrb[0].mxu0
    %v1295 = vadd.f32 0.0, %v1294
    %v1296 = vpop.f32.mrb[0].mxu0
    %1297 = vmatprep.mubr.f32.mxu0 0.0
    %1298 = vmatmul.mubr.f32.gmra.mrb[0].mxu0 %v1164
    %v1299 = vpop.f32.mrb[0].mxu0
    %v1300 = vadd.f32 0.0, %v1299
    %v1301 = vpop.f32.mrb[0].mxu0
    %1302 = vmatprep.mubr.f32.mxu0 0.0
    %1303 = vmatmul.mubr.f32.gmra.mrb[0].mxu0 %v1167
    %v1304 = vpop.f32.mrb[0].mxu0
    %v1305 = vadd.f32 0.0, %v1304
    %v1306 = vpop.f32.mrb[0].mxu0
    %1307 = vmatprep.mubr.f32.mxu0 0.0
    %1308 = vmatmul.mubr.f32.gmra.mrb[0].mxu0 %v1170
    %v1309 = vpop.f32.mrb[0].mxu0
    %v1310 = vadd.f32 0.0, %v1309
    %v1311 = vpop.f32.mrb[0].mxu0
    %1312 = vmatprep.mubr.f32.mxu0 0.0
    %1313 = vmatmul.mubr.f32.gmra.mrb[0].mxu0 %v1173
    %v1314 = vpop.f32.mrb[0].mxu0
    %v1315 = vadd.f32 0.0, %v1314
    %v1316 = vpop.f32.mrb[0].mxu0
    %1317 = vmatprep.mubr.f32.mxu0 0.0
    %1318 = vmatmul.mubr.f32.gmra.mrb[0].mxu0 %v1176
    %v1319 = vpop.f32.mrb[0].mxu0
    %v1320 = vadd.f32 0.0, %v1319
    %v1321 = vpop.f32.mrb[0].mxu0
    %1322 = vdwg.mxu0
    %v1323 = vmul.f32 %v1245, %v324
    %v1324 = vmul.f32 %v1250, %v324
    %v1325 = vmul.f32 %v1255, %v328
    %v1326 = vmul.f32 %v1260, %v328
    %v1327 = vmul.f32 %v1265, %v332
    %v1328 = vmul.f32 %v1270, %v332
    %v1329 = vmul.f32 %v1275, %v336
    %v1330 = vmul.f32 %v1280, %v336
    %v1331 = vmul.f32 %v1285, %v340
    %v1332 = vmul.f32 %v1290, %v340
    %v1333 = vmul.f32 %v1295, %v344
    %v1334 = vmul.f32 %v1300, %v344
    %v1335 = vmul.f32 %v1305, %v348
    %v1336 = vmul.f32 %v1310, %v348
    %v1337 = vmul.f32 %v1315, %v352
    %v1338 = vmul.f32 %v1320, %v352
    %v1339 = vsel %vm295, %v1323, 0.0
    %v1340 = vsel %vm295, %v1325, 0.0
    %v1341 = vadd.f32 %v1339, %v1340
    %v1342 = vsel %vm295, %v1327, 0.0
    %v1343 = vadd.f32 %v1341, %v1342
    %v1344 = vsel %vm295, %v1329, 0.0
    %v1345 = vadd.f32 %v1343, %v1344
    %v1346 = vsel %vm295, %v1331, 0.0
    %v1347 = vadd.f32 %v1345, %v1346
    %v1348 = vsel %vm295, %v1333, 0.0
    %v1349 = vadd.f32 %v1347, %v1348
    %v1350 = vsel %vm295, %v1335, 0.0
    %v1351 = vadd.f32 %v1349, %v1350
    %v1352 = vsel %vm295, %v1337, 0.0
    %v1353 = vadd.f32 %v1351, %v1352
    %v1354 = vsel %vm295, %v1324, 0.0
    %v1355 = vsel %vm295, %v1326, 0.0
    %v1356 = vadd.f32 %v1354, %v1355
    %v1357 = vsel %vm295, %v1328, 0.0
    %v1358 = vadd.f32 %v1356, %v1357
    %v1359 = vsel %vm295, %v1330, 0.0
    %v1360 = vadd.f32 %v1358, %v1359
    %v1361 = vsel %vm295, %v1332, 0.0
    %v1362 = vadd.f32 %v1360, %v1361
    %v1363 = vsel %vm295, %v1334, 0.0
    %v1364 = vadd.f32 %v1362, %v1363
    %v1365 = vsel %vm295, %v1336, 0.0
    %v1366 = vadd.f32 %v1364, %v1365
    %v1367 = vsel %vm295, %v1338, 0.0
    %v1368 = vadd.f32 %v1366, %v1367
    %v1369 = vld [vmem:[%s10] sm:$0x1]
    %v1371 = vlaneseq
    %v1372 = vshrl.u32 %v1371, 7
    %v1373 = vsub.s32 0, %v1372
    %v1374 = vrot.slane %v1369, %v1373
    %v1376 = vadd.f32 %v1353, %v1374
    %v1377 = vadd.f32 %v1368, %v1374
    %v1378 = vsel %vm295, %v1376, 0.0
    %v1379 = vsel %vm295, %v1377, 0.0
    %v1380 = vadd.f32 %v1378, %v1379
    %v1381 = vrot.slane %v1380, 4
    %v1382 = vadd.f32 %v1380, %v1381
    %v1383 = vrot.slane %v1382, 2
    %v1384 = vadd.f32 %v1382, %v1383
    %v1385 = vrot.slane %v1384, 1
    %v1386 = vadd.f32 %v1384, %v1385
    %v1387 = vrcp.pop 16.0
    %v1388 = vmul.f32 %v1386, %v1387
    %1390 = vset.pattern.permute.xlu0 0
    %1391 = vperm.xlu0 %1390, %v80
    %v1392 = vpop.permute.xlu0 %1391
    %v1394 = vlaneseq
    %v1395 = vshrl.u32 %v1394, 7
    %v1396 = vsub.s32 0, %v1395
    %v1397 = vrot.slane %v1392, %v1396
    %v1398 = vmul.f32 %v1397, %v1388
    %v1399 = vadd.f32 %v1398, 0.0
    %v1400 = vsub.f32 %v99, 1.0
    %v1401 = vsub.f32 %v100, 1.0
    %v1402 = vmul.f32 %v1400, 1e+30
    %v1403 = vmul.f32 %v1401, 1e+30
    %1406 = vrot.lane.b32.xlu0 %v1402, 16
    %v1407 = vpop.permute.xlu0 %1406
    %1408 = vrot.lane.b32.xlu0 %v1403, 16
    %v1409 = vpop.permute.xlu0 %1408
    %1412 = vrot.lane.b32.xlu0 %v1402, 32
    %v1413 = vpop.permute.xlu0 %1412
    %1414 = vrot.lane.b32.xlu0 %v1403, 32
    %v1415 = vpop.permute.xlu0 %1414
    %1418 = vrot.lane.b32.xlu0 %v1402, 48
    %v1419 = vpop.permute.xlu0 %1418
    %1420 = vrot.lane.b32.xlu0 %v1403, 48
    %v1421 = vpop.permute.xlu0 %1420
    %1424 = vrot.lane.b32.xlu0 %v1402, 64
    %v1425 = vpop.permute.xlu0 %1424
    %1426 = vrot.lane.b32.xlu0 %v1403, 64
    %v1427 = vpop.permute.xlu0 %1426
    %1430 = vrot.lane.b32.xlu0 %v1402, 80
    %v1431 = vpop.permute.xlu0 %1430
    %1432 = vrot.lane.b32.xlu0 %v1403, 80
    %v1433 = vpop.permute.xlu0 %1432
    %1436 = vrot.lane.b32.xlu0 %v1402, 96
    %v1437 = vpop.permute.xlu0 %1436
    %1438 = vrot.lane.b32.xlu0 %v1403, 96
    %v1439 = vpop.permute.xlu0 %1438
    %1442 = vrot.lane.b32.xlu0 %v1402, 112
    %v1443 = vpop.permute.xlu0 %1442
    %1444 = vrot.lane.b32.xlu0 %v1403, 112
    %v1445 = vpop.permute.xlu0 %1444
    %v1448 = vsel %vm292, %v1402, %v1407
    %v1449 = vsel %vm292, %v1403, %v1409
    %v1450 = vsel %vm295, %v1448, %v1413
    %v1451 = vsel %vm295, %v1449, %v1415
    %v1452 = vsel %vm298, %v1450, %v1419
    %v1453 = vsel %vm298, %v1451, %v1421
    %v1454 = vsel %vm301, %v1452, %v1425
    %v1455 = vsel %vm301, %v1453, %v1427
    %v1456 = vsel %vm304, %v1454, %v1431
    %v1457 = vsel %vm304, %v1455, %v1433
    %v1458 = vsel %vm307, %v1456, %v1437
    %v1459 = vsel %vm307, %v1457, %v1439
    %v1460 = vsel %vm310, %v1458, %v1443
    %v1461 = vsel %vm310, %v1459, %v1445
    %v1462 = vmul.f32 %v216, %v324
    %v1463 = vmul.f32 %v221, %v324
    %v1464 = vmul.f32 %v216, %v328
    %v1465 = vmul.f32 %v221, %v328
    %v1466 = vmul.f32 %v216, %v332
    %v1467 = vmul.f32 %v221, %v332
    %v1468 = vmul.f32 %v216, %v336
    %v1469 = vmul.f32 %v221, %v336
    %v1470 = vmul.f32 %v216, %v340
    %v1471 = vmul.f32 %v221, %v340
    %v1472 = vmul.f32 %v216, %v344
    %v1473 = vmul.f32 %v221, %v344
    %v1474 = vmul.f32 %v216, %v348
    %v1475 = vmul.f32 %v221, %v348
    %v1476 = vmul.f32 %v216, %v352
    %v1477 = vmul.f32 %v221, %v352
    %1480 = vrot.lane.b32.xlu0 %v216, 96
    %v1481 = vpop.permute.xlu0 %1480
    %1482 = vrot.lane.b32.xlu0 %v221, 96
    %v1483 = vpop.permute.xlu0 %1482
    %v1484 = vsel %vm295, %v1481, 0
    %v1486 = vsel %vm295, %v1483, 0
    %v1489 = vsel %vm295, %v1462, 0
    %v1492 = vsel %vm295, %v1463, 0
    %v1495 = vsel %vm295, %v1464, 0
    %v1498 = vsel %vm295, %v1465, 0
    %v1501 = vsel %vm295, %v1466, 0
    %v1504 = vsel %vm295, %v1467, 0
    %v1507 = vsel %vm295, %v1468, 0
    %v1510 = vsel %vm295, %v1469, 0
    %v1513 = vsel %vm295, %v1470, 0
    %v1516 = vsel %vm295, %v1471, 0
    %v1519 = vsel %vm295, %v1472, 0
    %v1522 = vsel %vm295, %v1473, 0
    %v1525 = vsel %vm295, %v1474, 0
    %v1528 = vsel %vm295, %v1475, 0
    %v1531 = vsel %vm295, %v1476, 0
    %v1534 = vsel %vm295, %v1477, 0
    %1536 = vmatprep.subr.mxu0 0.0
    %1537 = vmatpush1.xpose.msra.mxu0 %v1489
    %1538 = vmatprep.subr.mxu0 0.0
    %1539 = vmatpush1.xpose.msra.mxu0 %v1492
    %1540 = vmatprep.subr.mxu0 0.0
    %1541 = vmatpush1.xpose.msra.mxu0 %v1495
    %1542 = vmatprep.subr.mxu0 0.0
    %1543 = vmatpush1.xpose.msra.mxu0 %v1498
    %1544 = vmatprep.subr.mxu0 0.0
    %1545 = vmatpush1.xpose.msra.mxu0 %v1501
    %1546 = vmatprep.subr.mxu0 0.0
    %1547 = vmatpush1.xpose.msra.mxu0 %v1504
    %1548 = vmatprep.subr.mxu0 0.0
    %1549 = vmatpush1.xpose.msra.mxu0 %v1507
    %1550 = vmatprep.subr.mxu0 0.0
    %1551 = vmatpush1.xpose.msra.mxu0 %v1510
    %1552 = vmatprep.subr.mxu0 0.0
    %1553 = vmatpush1.xpose.msra.mxu0 %v1513
    %1554 = vmatprep.subr.mxu0 0.0
    %1555 = vmatpush1.xpose.msra.mxu0 %v1516
    %1556 = vmatprep.subr.mxu0 0.0
    %1557 = vmatpush1.xpose.msra.mxu0 %v1519
    %1558 = vmatprep.subr.mxu0 0.0
    %1559 = vmatpush1.xpose.msra.mxu0 %v1522
    %1560 = vmatprep.subr.mxu0 0.0
    %1561 = vmatpush1.xpose.msra.mxu0 %v1525
    %1562 = vmatprep.subr.mxu0 0.0
    %1563 = vmatpush1.xpose.msra.mxu0 %v1528
    %1564 = vmatprep.subr.mxu0 0.0
    %1565 = vmatpush1.xpose.msra.mxu0 %v1531
    %1566 = vmatprep.subr.mxu0 0.0
    %1567 = vmatpush1.xpose.msra.mxu0 %v1534
    %1568 = vmatprep.subr.mxu0 0.0
    %1569 = vmatpush1.xpose.msra.mxu0 0.0
    %1570 = vmatprep.subr.mxu0 0.0
    %1571 = vmatpush1.xpose.msra.mxu0 0.0
    %1572 = vmatprep.subr.mxu0 0.0
    %1573 = vmatpush1.xpose.msra.mxu0 0.0
    %1574 = vmatprep.subr.mxu0 0.0
    %1575 = vmatpush1.xpose.msra.mxu0 0.0
    %1576 = vmatprep.subr.mxu0 0.0
    %1577 = vmatpush1.xpose.msra.mxu0 0.0
    %1578 = vmatprep.subr.mxu0 0.0
    %1579 = vmatpush1.xpose.msra.mxu0 0.0
    %1580 = vmatprep.subr.mxu0 0.0
    %1581 = vmatpush1.xpose.msra.mxu0 0.0
    %1582 = vmatprep.subr.mxu0 0.0
    %1583 = vmatpush1.xpose.msra.mxu0 0.0
    %1584 = vmatprep.subr.mxu0 0.0
    %1585 = vmatpush1.xpose.msra.mxu0 0.0
    %1586 = vmatprep.subr.mxu0 0.0
    %1587 = vmatpush1.xpose.msra.mxu0 0.0
    %1588 = vmatprep.subr.mxu0 0.0
    %1589 = vmatpush1.xpose.msra.mxu0 0.0
    %1590 = vmatprep.subr.mxu0 0.0
    %1591 = vmatpush1.xpose.msra.mxu0 0.0
    %1592 = vmatprep.subr.mxu0 0.0
    %1593 = vmatpush1.xpose.msra.mxu0 0.0
    %1594 = vmatprep.subr.mxu0 0.0
    %1595 = vmatpush1.xpose.msra.mxu0 0.0
    %1596 = vmatprep.subr.mxu0 0.0
    %1597 = vmatpush1.xpose.msra.mxu0 0.0
    %1598 = vmatprep.subr.mxu0 0.0
    %1599 = vmatpush1.xpose.msra.mxu0 0.0
    %1600 = vmatprep.mubr.f32.mxu0 0.0
    %1601 = vmatmul.mubr.f32.gmra.mrb[0].mxu0 %v1484
    %v1602 = vpop.f32.mrb[0].mxu0
    %v1603 = vadd.f32 0.0, %v1602
    %v1604 = vpop.f32.mrb[0].mxu0
    %1605 = vmatprep.mubr.f32.mxu0 0.0
    %1606 = vmatmul.mubr.f32.gmra.mrb[0].mxu0 %v1486
    %v1607 = vpop.f32.mrb[0].mxu0
    %v1608 = vadd.f32 0.0, %v1607
    %v1609 = vpop.f32.mrb[0].mxu0
    %1610 = vdwg.mxu0
    %vm1611 = vcmp.gt.f32.partialorder %v1603, 0.0
    %vm1612 = vcmp.gt.f32.partialorder %v1608, 0.0
    %v1613 = vmul.f32 %v1603, 0.2
    %v1614 = vmul.f32 %v1608, 0.2
    %v1615 = vsel %vm1611, %v1603, %v1613
    %v1616 = vsel %vm1612, %v1608, %v1614
    %v1617 = vadd.f32 %v1615, %v1460
    %v1618 = vadd.f32 %v1616, %v1461
    %v1619 = vmax.f32 %v1617, %v1618
    %v1620 = vrot.slane %v1619, 4
    %v1621 = vmax.f32 %v1619, %v1620
    %v1622 = vrot.slane %v1621, 2
    %v1623 = vmax.f32 %v1621, %v1622
    %v1624 = vrot.slane %v1623, 1
    %v1625 = vmax.f32 %v1623, %v1624
    %v1626 = vsub.f32 %v1617, %v1625
    %v1627 = vsub.f32 %v1618, %v1625
    %v1628 = vmul.f32 %v1626, 1.442695
    %v1629 = vpow.pop %v1628
    %v1630 = vmul.f32 %v1627, 1.442695
    %v1631 = vpow.pop %v1630
    %v1632 = vadd.f32 %v1629, %v1631
    %v1633 = vrot.slane %v1632, 4
    %v1634 = vadd.f32 %v1632, %v1633
    %v1635 = vrot.slane %v1634, 2
    %v1636 = vadd.f32 %v1634, %v1635
    %v1637 = vrot.slane %v1636, 1
    %v1638 = vadd.f32 %v1636, %v1637
    %v1639 = vrcp.pop %v1638
    %v1640 = vmul.f32 %v1629, %v1639
    %v1641 = vmul.f32 %v1631, %v1639
    %1642 = vxpose.xlu0.b32.start [1/16] %v1640, 128
    %1643 = vxpose.xlu0.b32.cont [2/16] %v1641, 128
    %1644 = vxpose.xlu0.b32.cont [3/16] 0.0, 128
    %1645 = vxpose.xlu0.b32.cont [4/16] 0.0, 128
    %1646 = vxpose.xlu0.b32.cont [5/16] 0.0, 128
    %1647 = vxpose.xlu0.b32.cont [6/16] 0.0, 128
    %1648 = vxpose.xlu0.b32.cont [7/16] 0.0, 128
    %1649 = vxpose.xlu0.b32.cont [8/16] 0.0, 128
    %1650 = vxpose.xlu0.b32.cont [9/16] 0.0, 128
    %1651 = vxpose.xlu0.b32.cont [10/16] 0.0, 128
    %1652 = vxpose.xlu0.b32.cont [11/16] 0.0, 128
    %1653 = vxpose.xlu0.b32.cont [12/16] 0.0, 128
    %1654 = vxpose.xlu0.b32.cont [13/16] 0.0, 128
    %1655 = vxpose.xlu0.b32.cont [14/16] 0.0, 128
    %1656 = vxpose.xlu0.b32.cont [15/16] 0.0, 128
    %1657 = vxpose.xlu0.b32.end [16/16] 0.0, 128
    %v1658 = vpop.trf.xlu0
    %v1659 = vpop.trf.xlu0
    %v1660 = vpop.trf.xlu0
    %v1661 = vpop.trf.xlu0
    %v1662 = vpop.trf.xlu0
    %v1663 = vpop.trf.xlu0
    %v1664 = vpop.trf.xlu0
    %v1665 = vpop.trf.xlu0
    %v1666 = vpop.trf.xlu0
    %v1667 = vpop.trf.xlu0
    %v1668 = vpop.trf.xlu0
    %v1669 = vpop.trf.xlu0
    %v1670 = vpop.trf.xlu0
    %v1671 = vpop.trf.xlu0
    %v1672 = vpop.trf.xlu0
    %v1673 = vpop.trf.xlu0
    %1674 = vrot.lane.b32.xlu0 %v216, 64
    %v1675 = vpop.permute.xlu0 %1674
    %1676 = vrot.lane.b32.xlu0 %v221, 64
    %v1677 = vpop.permute.xlu0 %1676
    %v1681 = vsel %vm292, %v1658, 0
    %v1684 = vsel %vm292, %v1659, 0
    %v1687 = vsel %vm292, %v1660, 0
    %v1690 = vsel %vm292, %v1661, 0
    %v1693 = vsel %vm292, %v1662, 0
    %v1696 = vsel %vm292, %v1663, 0
    %v1699 = vsel %vm292, %v1664, 0
    %v1702 = vsel %vm292, %v1665, 0
    %v1705 = vsel %vm292, %v1666, 0
    %v1708 = vsel %vm292, %v1667, 0
    %v1711 = vsel %vm292, %v1668, 0
    %v1714 = vsel %vm292, %v1669, 0
    %v1717 = vsel %vm292, %v1670, 0
    %v1720 = vsel %vm292, %v1671, 0
    %v1723 = vsel %vm292, %v1672, 0
    %v1726 = vsel %vm292, %v1673, 0
    %1728 = vmatprep.subr.mxu0 0.0
    %1729 = vmatpush1.msra.mxu0 %v1675
    %1730 = vmatprep.subr.mxu0 0.0
    %1731 = vmatpush1.msra.mxu0 %v1677
    %1732 = vmatprep.subr.mxu0 0.0
    %1733 = vmatpush1.msra.mxu0 0.0
    %1734 = vmatprep.subr.mxu0 0.0
    %1735 = vmatpush1.msra.mxu0 0.0
    %1736 = vmatprep.subr.mxu0 0.0
    %1737 = vmatpush1.msra.mxu0 0.0
    %1738 = vmatprep.subr.mxu0 0.0
    %1739 = vmatpush1.msra.mxu0 0.0
    %1740 = vmatprep.subr.mxu0 0.0
    %1741 = vmatpush1.msra.mxu0 0.0
    %1742 = vmatprep.subr.mxu0 0.0
    %1743 = vmatpush1.msra.mxu0 0.0
    %1744 = vmatprep.subr.mxu0 0.0
    %1745 = vmatpush1.msra.mxu0 0.0
    %1746 = vmatprep.subr.mxu0 0.0
    %1747 = vmatpush1.msra.mxu0 0.0
    %1748 = vmatprep.subr.mxu0 0.0
    %1749 = vmatpush1.msra.mxu0 0.0
    %1750 = vmatprep.subr.mxu0 0.0
    %1751 = vmatpush1.msra.mxu0 0.0
    %1752 = vmatprep.subr.mxu0 0.0
    %1753 = vmatpush1.msra.mxu0 0.0
    %1754 = vmatprep.subr.mxu0 0.0
    %1755 = vmatpush1.msra.mxu0 0.0
    %1756 = vmatprep.subr.mxu0 0.0
    %1757 = vmatpush1.msra.mxu0 0.0
    %1758 = vmatprep.subr.mxu0 0.0
    %1759 = vmatpush1.msra.mxu0 0.0
    %1760 = vmatprep.subr.mxu0 0.0
    %1761 = vmatpush1.msra.mxu0 0.0
    %1762 = vmatprep.subr.mxu0 0.0
    %1763 = vmatpush1.msra.mxu0 0.0
    %1764 = vmatprep.subr.mxu0 0.0
    %1765 = vmatpush1.msra.mxu0 0.0
    %1766 = vmatprep.subr.mxu0 0.0
    %1767 = vmatpush1.msra.mxu0 0.0
    %1768 = vmatprep.subr.mxu0 0.0
    %1769 = vmatpush1.msra.mxu0 0.0
    %1770 = vmatprep.subr.mxu0 0.0
    %1771 = vmatpush1.msra.mxu0 0.0
    %1772 = vmatprep.subr.mxu0 0.0
    %1773 = vmatpush1.msra.mxu0 0.0
    %1774 = vmatprep.subr.mxu0 0.0
    %1775 = vmatpush1.msra.mxu0 0.0
    %1776 = vmatprep.subr.mxu0 0.0
    %1777 = vmatpush1.msra.mxu0 0.0
    %1778 = vmatprep.subr.mxu0 0.0
    %1779 = vmatpush1.msra.mxu0 0.0
    %1780 = vmatprep.subr.mxu0 0.0
    %1781 = vmatpush1.msra.mxu0 0.0
    %1782 = vmatprep.subr.mxu0 0.0
    %1783 = vmatpush1.msra.mxu0 0.0
    %1784 = vmatprep.subr.mxu0 0.0
    %1785 = vmatpush1.msra.mxu0 0.0
    %1786 = vmatprep.subr.mxu0 0.0
    %1787 = vmatpush1.msra.mxu0 0.0
    %1788 = vmatprep.subr.mxu0 0.0
    %1789 = vmatpush1.msra.mxu0 0.0
    %1790 = vmatprep.subr.mxu0 0.0
    %1791 = vmatpush1.msra.mxu0 0.0
    %1792 = vmatprep.mubr.f32.mxu0 0.0
    %1793 = vmatmul.mubr.f32.gmra.mrb[0].mxu0 %v1681
    %v1794 = vpop.f32.mrb[0].mxu0
    %v1795 = vadd.f32 0.0, %v1794
    %v1796 = vpop.f32.mrb[0].mxu0
    %1797 = vmatprep.mubr.f32.mxu0 0.0
    %1798 = vmatmul.mubr.f32.gmra.mrb[0].mxu0 %v1684
    %v1799 = vpop.f32.mrb[0].mxu0
    %v1800 = vadd.f32 0.0, %v1799
    %v1801 = vpop.f32.mrb[0].mxu0
    %1802 = vmatprep.mubr.f32.mxu0 0.0
    %1803 = vmatmul.mubr.f32.gmra.mrb[0].mxu0 %v1687
    %v1804 = vpop.f32.mrb[0].mxu0
    %v1805 = vadd.f32 0.0, %v1804
    %v1806 = vpop.f32.mrb[0].mxu0
    %1807 = vmatprep.mubr.f32.mxu0 0.0
    %1808 = vmatmul.mubr.f32.gmra.mrb[0].mxu0 %v1690
    %v1809 = vpop.f32.mrb[0].mxu0
    %v1810 = vadd.f32 0.0, %v1809
    %v1811 = vpop.f32.mrb[0].mxu0
    %1812 = vmatprep.mubr.f32.mxu0 0.0
    %1813 = vmatmul.mubr.f32.gmra.mrb[0].mxu0 %v1693
    %v1814 = vpop.f32.mrb[0].mxu0
    %v1815 = vadd.f32 0.0, %v1814
    %v1816 = vpop.f32.mrb[0].mxu0
    %1817 = vmatprep.mubr.f32.mxu0 0.0
    %1818 = vmatmul.mubr.f32.gmra.mrb[0].mxu0 %v1696
    %v1819 = vpop.f32.mrb[0].mxu0
    %v1820 = vadd.f32 0.0, %v1819
    %v1821 = vpop.f32.mrb[0].mxu0
    %1822 = vmatprep.mubr.f32.mxu0 0.0
    %1823 = vmatmul.mubr.f32.gmra.mrb[0].mxu0 %v1699
    %v1824 = vpop.f32.mrb[0].mxu0
    %v1825 = vadd.f32 0.0, %v1824
    %v1826 = vpop.f32.mrb[0].mxu0
    %1827 = vmatprep.mubr.f32.mxu0 0.0
    %1828 = vmatmul.mubr.f32.gmra.mrb[0].mxu0 %v1702
    %v1829 = vpop.f32.mrb[0].mxu0
    %v1830 = vadd.f32 0.0, %v1829
    %v1831 = vpop.f32.mrb[0].mxu0
    %1832 = vmatprep.mubr.f32.mxu0 0.0
    %1833 = vmatmul.mubr.f32.gmra.mrb[0].mxu0 %v1705
    %v1834 = vpop.f32.mrb[0].mxu0
    %v1835 = vadd.f32 0.0, %v1834
    %v1836 = vpop.f32.mrb[0].mxu0
    %1837 = vmatprep.mubr.f32.mxu0 0.0
    %1838 = vmatmul.mubr.f32.gmra.mrb[0].mxu0 %v1708
    %v1839 = vpop.f32.mrb[0].mxu0
    %v1840 = vadd.f32 0.0, %v1839
    %v1841 = vpop.f32.mrb[0].mxu0
    %1842 = vmatprep.mubr.f32.mxu0 0.0
    %1843 = vmatmul.mubr.f32.gmra.mrb[0].mxu0 %v1711
    %v1844 = vpop.f32.mrb[0].mxu0
    %v1845 = vadd.f32 0.0, %v1844
    %v1846 = vpop.f32.mrb[0].mxu0
    %1847 = vmatprep.mubr.f32.mxu0 0.0
    %1848 = vmatmul.mubr.f32.gmra.mrb[0].mxu0 %v1714
    %v1849 = vpop.f32.mrb[0].mxu0
    %v1850 = vadd.f32 0.0, %v1849
    %v1851 = vpop.f32.mrb[0].mxu0
    %1852 = vmatprep.mubr.f32.mxu0 0.0
    %1853 = vmatmul.mubr.f32.gmra.mrb[0].mxu0 %v1717
    %v1854 = vpop.f32.mrb[0].mxu0
    %v1855 = vadd.f32 0.0, %v1854
    %v1856 = vpop.f32.mrb[0].mxu0
    %1857 = vmatprep.mubr.f32.mxu0 0.0
    %1858 = vmatmul.mubr.f32.gmra.mrb[0].mxu0 %v1720
    %v1859 = vpop.f32.mrb[0].mxu0
    %v1860 = vadd.f32 0.0, %v1859
    %v1861 = vpop.f32.mrb[0].mxu0
    %1862 = vmatprep.mubr.f32.mxu0 0.0
    %1863 = vmatmul.mubr.f32.gmra.mrb[0].mxu0 %v1723
    %v1864 = vpop.f32.mrb[0].mxu0
    %v1865 = vadd.f32 0.0, %v1864
    %v1866 = vpop.f32.mrb[0].mxu0
    %1867 = vmatprep.mubr.f32.mxu0 0.0
    %1868 = vmatmul.mubr.f32.gmra.mrb[0].mxu0 %v1726
    %v1869 = vpop.f32.mrb[0].mxu0
    %v1870 = vadd.f32 0.0, %v1869
    %v1871 = vpop.f32.mrb[0].mxu0
    %1872 = vdwg.mxu0
    %v1873 = vmul.f32 %v1795, %v324
    %v1874 = vmul.f32 %v1800, %v324
    %v1875 = vmul.f32 %v1805, %v328
    %v1876 = vmul.f32 %v1810, %v328
    %v1877 = vmul.f32 %v1815, %v332
    %v1878 = vmul.f32 %v1820, %v332
    %v1879 = vmul.f32 %v1825, %v336
    %v1880 = vmul.f32 %v1830, %v336
    %v1881 = vmul.f32 %v1835, %v340
    %v1882 = vmul.f32 %v1840, %v340
    %v1883 = vmul.f32 %v1845, %v344
    %v1884 = vmul.f32 %v1850, %v344
    %v1885 = vmul.f32 %v1855, %v348
    %v1886 = vmul.f32 %v1860, %v348
    %v1887 = vmul.f32 %v1865, %v352
    %v1888 = vmul.f32 %v1870, %v352
    %v1889 = vsel %vm295, %v1873, 0.0
    %v1890 = vsel %vm295, %v1875, 0.0
    %v1891 = vadd.f32 %v1889, %v1890
    %v1892 = vsel %vm295, %v1877, 0.0
    %v1893 = vadd.f32 %v1891, %v1892
    %v1894 = vsel %vm295, %v1879, 0.0
    %v1895 = vadd.f32 %v1893, %v1894
    %v1896 = vsel %vm295, %v1881, 0.0
    %v1897 = vadd.f32 %v1895, %v1896
    %v1898 = vsel %vm295, %v1883, 0.0
    %v1899 = vadd.f32 %v1897, %v1898
    %v1900 = vsel %vm295, %v1885, 0.0
    %v1901 = vadd.f32 %v1899, %v1900
    %v1902 = vsel %vm295, %v1887, 0.0
    %v1903 = vadd.f32 %v1901, %v1902
    %v1904 = vsel %vm295, %v1874, 0.0
    %v1905 = vsel %vm295, %v1876, 0.0
    %v1906 = vadd.f32 %v1904, %v1905
    %v1907 = vsel %vm295, %v1878, 0.0
    %v1908 = vadd.f32 %v1906, %v1907
    %v1909 = vsel %vm295, %v1880, 0.0
    %v1910 = vadd.f32 %v1908, %v1909
    %v1911 = vsel %vm295, %v1882, 0.0
    %v1912 = vadd.f32 %v1910, %v1911
    %v1913 = vsel %vm295, %v1884, 0.0
    %v1914 = vadd.f32 %v1912, %v1913
    %v1915 = vsel %vm295, %v1886, 0.0
    %v1916 = vadd.f32 %v1914, %v1915
    %v1917 = vsel %vm295, %v1888, 0.0
    %v1918 = vadd.f32 %v1916, %v1917
    %v1919 = vadd.f32 %v1903, %v823
    %v1920 = vadd.f32 %v1918, %v823
    %v1921 = vld [vmem:[%s5] sm:$0xff]
    %v1922 = vld [vmem:[%s5 + $0x8] sm:$0xff]
    %v1923 = vld [vmem:[%s5 + $0x10] sm:$0xff]
    %v1924 = vld [vmem:[%s5 + $0x18] sm:$0xff]
    %v1925 = vld [vmem:[%s7] sm:$0x1]
    %v1927 = vlaneseq
    %v1928 = vshrl.u32 %v1927, 7
    %v1929 = vsub.s32 0, %v1928
    %v1930 = vrot.slane %v1925, %v1929
    %v1933 = vsel %vm295, %v1919, 0
    %v1936 = vsel %vm295, %v1920, 0
    %1938 = vmatprep.subr.mxu0 0.0
    %1939 = vmatpush1.msra.mxu0 %v1921
    %1940 = vmatprep.subr.mxu0 0.0
    %1941 = vmatpush1.msra.mxu0 %v1922
    %1942 = vmatprep.subr.mxu0 0.0
    %1943 = vmatpush1.msra.mxu0 %v1923
    %1944 = vmatprep.subr.mxu0 0.0
    %1945 = vmatpush1.msra.mxu0 %v1924
    %1946 = vmatprep.subr.mxu0 0.0
    %1947 = vmatpush1.msra.mxu0 0.0
    %1948 = vmatprep.subr.mxu0 0.0
    %1949 = vmatpush1.msra.mxu0 0.0
    %1950 = vmatprep.subr.mxu0 0.0
    %1951 = vmatpush1.msra.mxu0 0.0
    %1952 = vmatprep.subr.mxu0 0.0
    %1953 = vmatpush1.msra.mxu0 0.0
    %1954 = vmatprep.subr.mxu0 0.0
    %1955 = vmatpush1.msra.mxu0 0.0
    %1956 = vmatprep.subr.mxu0 0.0
    %1957 = vmatpush1.msra.mxu0 0.0
    %1958 = vmatprep.subr.mxu0 0.0
    %1959 = vmatpush1.msra.mxu0 0.0
    %1960 = vmatprep.subr.mxu0 0.0
    %1961 = vmatpush1.msra.mxu0 0.0
    %1962 = vmatprep.subr.mxu0 0.0
    %1963 = vmatpush1.msra.mxu0 0.0
    %1964 = vmatprep.subr.mxu0 0.0
    %1965 = vmatpush1.msra.mxu0 0.0
    %1966 = vmatprep.subr.mxu0 0.0
    %1967 = vmatpush1.msra.mxu0 0.0
    %1968 = vmatprep.subr.mxu0 0.0
    %1969 = vmatpush1.msra.mxu0 0.0
    %1970 = vmatprep.subr.mxu0 0.0
    %1971 = vmatpush1.msra.mxu0 0.0
    %1972 = vmatprep.subr.mxu0 0.0
    %1973 = vmatpush1.msra.mxu0 0.0
    %1974 = vmatprep.subr.mxu0 0.0
    %1975 = vmatpush1.msra.mxu0 0.0
    %1976 = vmatprep.subr.mxu0 0.0
    %1977 = vmatpush1.msra.mxu0 0.0
    %1978 = vmatprep.subr.mxu0 0.0
    %1979 = vmatpush1.msra.mxu0 0.0
    %1980 = vmatprep.subr.mxu0 0.0
    %1981 = vmatpush1.msra.mxu0 0.0
    %1982 = vmatprep.subr.mxu0 0.0
    %1983 = vmatpush1.msra.mxu0 0.0
    %1984 = vmatprep.subr.mxu0 0.0
    %1985 = vmatpush1.msra.mxu0 0.0
    %1986 = vmatprep.subr.mxu0 0.0
    %1987 = vmatpush1.msra.mxu0 0.0
    %1988 = vmatprep.subr.mxu0 0.0
    %1989 = vmatpush1.msra.mxu0 0.0
    %1990 = vmatprep.subr.mxu0 0.0
    %1991 = vmatpush1.msra.mxu0 0.0
    %1992 = vmatprep.subr.mxu0 0.0
    %1993 = vmatpush1.msra.mxu0 0.0
    %1994 = vmatprep.subr.mxu0 0.0
    %1995 = vmatpush1.msra.mxu0 0.0
    %1996 = vmatprep.subr.mxu0 0.0
    %1997 = vmatpush1.msra.mxu0 0.0
    %1998 = vmatprep.subr.mxu0 0.0
    %1999 = vmatpush1.msra.mxu0 0.0
    %2000 = vmatprep.subr.mxu0 0.0
    %2001 = vmatpush1.msra.mxu0 0.0
    %2002 = vmatprep.mubr.f32.mxu0 0.0
    %2003 = vmatmul.mubr.f32.gmra.mrb[0].mxu0 %v1933
    %v2004 = vpop.f32.mrb[0].mxu0
    %v2005 = vadd.f32 %v1930, %v2004
    %v2006 = vpop.f32.mrb[0].mxu0
    %2007 = vmatprep.mubr.f32.mxu0 0.0
    %2008 = vmatmul.mubr.f32.gmra.mrb[0].mxu0 %v1936
    %v2009 = vpop.f32.mrb[0].mxu0
    %v2010 = vadd.f32 %v1930, %v2009
    %v2011 = vpop.f32.mrb[0].mxu0
    %2012 = vdwg.mxu0
    %v2013 = vld [vmem:[%s6] sm:$0xff]
    %v2014 = vld [vmem:[%s6 + $0x8] sm:$0xff]
    %v2015 = vld [vmem:[%s6 + $0x10] sm:$0xff]
    %v2016 = vld [vmem:[%s6 + $0x18] sm:$0xff]
    %v2017 = vld [vmem:[%s8] sm:$0x1]
    %v2019 = vlaneseq
    %v2020 = vshrl.u32 %v2019, 7
    %v2021 = vsub.s32 0, %v2020
    %v2022 = vrot.slane %v2017, %v2021
    %2024 = vmatprep.subr.mxu0 0.0
    %2025 = vmatpush1.msra.mxu0 %v2013
    %2026 = vmatprep.subr.mxu0 0.0
    %2027 = vmatpush1.msra.mxu0 %v2014
    %2028 = vmatprep.subr.mxu0 0.0
    %2029 = vmatpush1.msra.mxu0 %v2015
    %2030 = vmatprep.subr.mxu0 0.0
    %2031 = vmatpush1.msra.mxu0 %v2016
    %2032 = vmatprep.subr.mxu0 0.0
    %2033 = vmatpush1.msra.mxu0 0.0
    %2034 = vmatprep.subr.mxu0 0.0
    %2035 = vmatpush1.msra.mxu0 0.0
    %2036 = vmatprep.subr.mxu0 0.0
    %2037 = vmatpush1.msra.mxu0 0.0
    %2038 = vmatprep.subr.mxu0 0.0
    %2039 = vmatpush1.msra.mxu0 0.0
    %2040 = vmatprep.subr.mxu0 0.0
    %2041 = vmatpush1.msra.mxu0 0.0
    %2042 = vmatprep.subr.mxu0 0.0
    %2043 = vmatpush1.msra.mxu0 0.0
    %2044 = vmatprep.subr.mxu0 0.0
    %2045 = vmatpush1.msra.mxu0 0.0
    %2046 = vmatprep.subr.mxu0 0.0
    %2047 = vmatpush1.msra.mxu0 0.0
    %2048 = vmatprep.subr.mxu0 0.0
    %2049 = vmatpush1.msra.mxu0 0.0
    %2050 = vmatprep.subr.mxu0 0.0
    %2051 = vmatpush1.msra.mxu0 0.0
    %2052 = vmatprep.subr.mxu0 0.0
    %2053 = vmatpush1.msra.mxu0 0.0
    %2054 = vmatprep.subr.mxu0 0.0
    %2055 = vmatpush1.msra.mxu0 0.0
    %2056 = vmatprep.subr.mxu0 0.0
    %2057 = vmatpush1.msra.mxu0 0.0
    %2058 = vmatprep.subr.mxu0 0.0
    %2059 = vmatpush1.msra.mxu0 0.0
    %2060 = vmatprep.subr.mxu0 0.0
    %2061 = vmatpush1.msra.mxu0 0.0
    %2062 = vmatprep.subr.mxu0 0.0
    %2063 = vmatpush1.msra.mxu0 0.0
    %2064 = vmatprep.subr.mxu0 0.0
    %2065 = vmatpush1.msra.mxu0 0.0
    %2066 = vmatprep.subr.mxu0 0.0
    %2067 = vmatpush1.msra.mxu0 0.0
    %2068 = vmatprep.subr.mxu0 0.0
    %2069 = vmatpush1.msra.mxu0 0.0
    %2070 = vmatprep.subr.mxu0 0.0
    %2071 = vmatpush1.msra.mxu0 0.0
    %2072 = vmatprep.subr.mxu0 0.0
    %2073 = vmatpush1.msra.mxu0 0.0
    %2074 = vmatprep.subr.mxu0 0.0
    %2075 = vmatpush1.msra.mxu0 0.0
    %2076 = vmatprep.subr.mxu0 0.0
    %2077 = vmatpush1.msra.mxu0 0.0
    %2078 = vmatprep.subr.mxu0 0.0
    %2079 = vmatpush1.msra.mxu0 0.0
    %2080 = vmatprep.subr.mxu0 0.0
    %2081 = vmatpush1.msra.mxu0 0.0
    %2082 = vmatprep.subr.mxu0 0.0
    %2083 = vmatpush1.msra.mxu0 0.0
    %2084 = vmatprep.subr.mxu0 0.0
    %2085 = vmatpush1.msra.mxu0 0.0
    %2086 = vmatprep.subr.mxu0 0.0
    %2087 = vmatpush1.msra.mxu0 0.0
    %2088 = vmatprep.mubr.f32.mxu0 0.0
    %2089 = vmatmul.mubr.f32.gmra.mrb[0].mxu0 %v832
    %v2090 = vpop.f32.mrb[0].mxu0
    %v2091 = vadd.f32 %v2022, %v2090
    %v2092 = vpop.f32.mrb[0].mxu0
    %2093 = vmatprep.mubr.f32.mxu0 0.0
    %2094 = vmatmul.mubr.f32.gmra.mrb[0].mxu0 %v835
    %v2095 = vpop.f32.mrb[0].mxu0
    %v2096 = vadd.f32 %v2022, %v2095
    %v2097 = vpop.f32.mrb[0].mxu0
    %2098 = vdwg.mxu0
    %v2099 = vadd.f32 %v2005, %v2091
    %v2100 = vadd.f32 %v2010, %v2096
    %v2101 = vxor.u32 %v2099, 2147483648
    %v2102 = vxor.u32 %v2100, 2147483648
    %v2103 = vmul.f32 %v2101, 1.442695
    %v2104 = vpow.pop %v2103
    %v2105 = vmul.f32 %v2102, 1.442695
    %v2106 = vpow.pop %v2105
    %v2107 = vadd.f32 %v2104, 1.0
    %v2108 = vadd.f32 %v2106, 1.0
    %v2109 = vrcp.pop %v2107
    %v2110 = vmul.f32 1.0, %v2109
    %v2111 = vrcp.pop %v2108
    %v2112 = vmul.f32 1.0, %v2111
    %2115 = vrot.lane.b32.xlu0 %v2091, 64
    %v2116 = vpop.permute.xlu0 %2115
    %2117 = vrot.lane.b32.xlu0 %v2096, 64
    %v2118 = vpop.permute.xlu0 %2117
    %v2121 = vmul.f32 %v2110, %v2116
    %v2122 = vmul.f32 %v2112, %v2118
    %2125 = vrot.lane.b32.xlu0 %v2121, 64
    %v2126 = vpop.permute.xlu0 %2125
    %2127 = vrot.lane.b32.xlu0 %v2122, 64
    %v2128 = vpop.permute.xlu0 %2127
    %v2131 = vadd.f32 %v2005, %v2126
    %v2132 = vadd.f32 %v2010, %v2128
    %v2133 = vtanh.pop %v2131
    %v2134 = vtanh.pop %v2132
    %v2135 = vsub.f32 1.0, %v2110
    %v2136 = vsub.f32 1.0, %v2112
    %2139 = vrot.lane.b32.xlu0 %v2133, 96
    %v2140 = vpop.permute.xlu0 %2139
    %2141 = vrot.lane.b32.xlu0 %v2134, 96
    %v2142 = vpop.permute.xlu0 %2141
    %v2145 = vmul.f32 %v2135, %v2140
    %v2146 = vmul.f32 %v2136, %v2142
    %2147 = vrot.lane.b32.xlu0 %v825, 32
    %v2148 = vpop.permute.xlu0 %2147
    %2149 = vrot.lane.b32.xlu0 %v826, 32
    %v2150 = vpop.permute.xlu0 %2149
    %v2153 = vmul.f32 %v2110, %v2148
    %v2154 = vmul.f32 %v2112, %v2150
    %v2155 = vadd.f32 %v2145, %v2153
    %v2156 = vadd.f32 %v2146, %v2154
    %2159 = vrot.lane.b32.xlu0 %v2155, 96
    %v2160 = vpop.permute.xlu0 %2159
    %2161 = vrot.lane.b32.xlu0 %v2156, 96
    %v2162 = vpop.permute.xlu0 %2161
    %v2163 = vsel %vm295, %v2160, 0
    %v2165 = vsel %vm295, %v2162, 0
    %2167 = vmatprep.subr.mxu0 0.0
    %2168 = vmatpush1.msra.mxu0 %v827
    %2169 = vmatprep.subr.mxu0 0.0
    %2170 = vmatpush1.msra.mxu0 %v828
    %2171 = vmatprep.subr.mxu0 0.0
    %2172 = vmatpush1.msra.mxu0 %v829
    %2173 = vmatprep.subr.mxu0 0.0
    %2174 = vmatpush1.msra.mxu0 %v830
    %2175 = vmatprep.subr.mxu0 0.0
    %2176 = vmatpush1.msra.mxu0 0.0
    %2177 = vmatprep.subr.mxu0 0.0
    %2178 = vmatpush1.msra.mxu0 0.0
    %2179 = vmatprep.subr.mxu0 0.0
    %2180 = vmatpush1.msra.mxu0 0.0
    %2181 = vmatprep.subr.mxu0 0.0
    %2182 = vmatpush1.msra.mxu0 0.0
    %2183 = vmatprep.subr.mxu0 0.0
    %2184 = vmatpush1.msra.mxu0 0.0
    %2185 = vmatprep.subr.mxu0 0.0
    %2186 = vmatpush1.msra.mxu0 0.0
    %2187 = vmatprep.subr.mxu0 0.0
    %2188 = vmatpush1.msra.mxu0 0.0
    %2189 = vmatprep.subr.mxu0 0.0
    %2190 = vmatpush1.msra.mxu0 0.0
    %2191 = vmatprep.subr.mxu0 0.0
    %2192 = vmatpush1.msra.mxu0 0.0
    %2193 = vmatprep.subr.mxu0 0.0
    %2194 = vmatpush1.msra.mxu0 0.0
    %2195 = vmatprep.subr.mxu0 0.0
    %2196 = vmatpush1.msra.mxu0 0.0
    %2197 = vmatprep.subr.mxu0 0.0
    %2198 = vmatpush1.msra.mxu0 0.0
    %2199 = vmatprep.subr.mxu0 0.0
    %2200 = vmatpush1.msra.mxu0 0.0
    %2201 = vmatprep.subr.mxu0 0.0
    %2202 = vmatpush1.msra.mxu0 0.0
    %2203 = vmatprep.subr.mxu0 0.0
    %2204 = vmatpush1.msra.mxu0 0.0
    %2205 = vmatprep.subr.mxu0 0.0
    %2206 = vmatpush1.msra.mxu0 0.0
    %2207 = vmatprep.subr.mxu0 0.0
    %2208 = vmatpush1.msra.mxu0 0.0
    %2209 = vmatprep.subr.mxu0 0.0
    %2210 = vmatpush1.msra.mxu0 0.0
    %2211 = vmatprep.subr.mxu0 0.0
    %2212 = vmatpush1.msra.mxu0 0.0
    %2213 = vmatprep.subr.mxu0 0.0
    %2214 = vmatpush1.msra.mxu0 0.0
    %2215 = vmatprep.subr.mxu0 0.0
    %2216 = vmatpush1.msra.mxu0 0.0
    %2217 = vmatprep.subr.mxu0 0.0
    %2218 = vmatpush1.msra.mxu0 0.0
    %2219 = vmatprep.subr.mxu0 0.0
    %2220 = vmatpush1.msra.mxu0 0.0
    %2221 = vmatprep.subr.mxu0 0.0
    %2222 = vmatpush1.msra.mxu0 0.0
    %2223 = vmatprep.subr.mxu0 0.0
    %2224 = vmatpush1.msra.mxu0 0.0
    %2225 = vmatprep.subr.mxu0 0.0
    %2226 = vmatpush1.msra.mxu0 0.0
    %2227 = vmatprep.subr.mxu0 0.0
    %2228 = vmatpush1.msra.mxu0 0.0
    %2229 = vmatprep.subr.mxu0 0.0
    %2230 = vmatpush1.msra.mxu0 0.0
    %2231 = vmatprep.mubr.f32.mxu0 0.0
    %2232 = vmatmul.mubr.f32.gmra.mrb[0].mxu0 %v2163
    %v2233 = vpop.f32.mrb[0].mxu0
    %v2234 = vadd.f32 0.0, %v2233
    %v2235 = vpop.f32.mrb[0].mxu0
    %2236 = vmatprep.mubr.f32.mxu0 0.0
    %2237 = vmatmul.mubr.f32.gmra.mrb[0].mxu0 %v2165
    %v2238 = vpop.f32.mrb[0].mxu0
    %v2239 = vadd.f32 0.0, %v2238
    %v2240 = vpop.f32.mrb[0].mxu0
    %2241 = vdwg.mxu0
    %v2242 = vmul.f32 %v2234, %v324
    %v2243 = vmul.f32 %v2239, %v324
    %v2244 = vmul.f32 %v2234, %v328
    %v2245 = vmul.f32 %v2239, %v328
    %v2246 = vmul.f32 %v2234, %v332
    %v2247 = vmul.f32 %v2239, %v332
    %v2248 = vmul.f32 %v2234, %v336
    %v2249 = vmul.f32 %v2239, %v336
    %v2250 = vmul.f32 %v2234, %v340
    %v2251 = vmul.f32 %v2239, %v340
    %v2252 = vmul.f32 %v2234, %v344
    %v2253 = vmul.f32 %v2239, %v344
    %v2254 = vmul.f32 %v2234, %v348
    %v2255 = vmul.f32 %v2239, %v348
    %v2256 = vmul.f32 %v2234, %v352
    %v2257 = vmul.f32 %v2239, %v352
    %2260 = vrot.lane.b32.xlu0 %v2234, 96
    %v2261 = vpop.permute.xlu0 %2260
    %2262 = vrot.lane.b32.xlu0 %v2239, 96
    %v2263 = vpop.permute.xlu0 %2262
    %v2264 = vsel %vm295, %v2261, 0
    %v2266 = vsel %vm295, %v2263, 0
    %v2269 = vsel %vm295, %v2242, 0
    %v2272 = vsel %vm295, %v2243, 0
    %v2275 = vsel %vm295, %v2244, 0
    %v2278 = vsel %vm295, %v2245, 0
    %v2281 = vsel %vm295, %v2246, 0
    %v2284 = vsel %vm295, %v2247, 0
    %v2287 = vsel %vm295, %v2248, 0
    %v2290 = vsel %vm295, %v2249, 0
    %v2293 = vsel %vm295, %v2250, 0
    %v2296 = vsel %vm295, %v2251, 0
    %v2299 = vsel %vm295, %v2252, 0
    %v2302 = vsel %vm295, %v2253, 0
    %v2305 = vsel %vm295, %v2254, 0
    %v2308 = vsel %vm295, %v2255, 0
    %v2311 = vsel %vm295, %v2256, 0
    %v2314 = vsel %vm295, %v2257, 0
    %2316 = vmatprep.subr.mxu0 0.0
    %2317 = vmatpush1.xpose.msra.mxu0 %v2269
    %2318 = vmatprep.subr.mxu0 0.0
    %2319 = vmatpush1.xpose.msra.mxu0 %v2272
    %2320 = vmatprep.subr.mxu0 0.0
    %2321 = vmatpush1.xpose.msra.mxu0 %v2275
    %2322 = vmatprep.subr.mxu0 0.0
    %2323 = vmatpush1.xpose.msra.mxu0 %v2278
    %2324 = vmatprep.subr.mxu0 0.0
    %2325 = vmatpush1.xpose.msra.mxu0 %v2281
    %2326 = vmatprep.subr.mxu0 0.0
    %2327 = vmatpush1.xpose.msra.mxu0 %v2284
    %2328 = vmatprep.subr.mxu0 0.0
    %2329 = vmatpush1.xpose.msra.mxu0 %v2287
    %2330 = vmatprep.subr.mxu0 0.0
    %2331 = vmatpush1.xpose.msra.mxu0 %v2290
    %2332 = vmatprep.subr.mxu0 0.0
    %2333 = vmatpush1.xpose.msra.mxu0 %v2293
    %2334 = vmatprep.subr.mxu0 0.0
    %2335 = vmatpush1.xpose.msra.mxu0 %v2296
    %2336 = vmatprep.subr.mxu0 0.0
    %2337 = vmatpush1.xpose.msra.mxu0 %v2299
    %2338 = vmatprep.subr.mxu0 0.0
    %2339 = vmatpush1.xpose.msra.mxu0 %v2302
    %2340 = vmatprep.subr.mxu0 0.0
    %2341 = vmatpush1.xpose.msra.mxu0 %v2305
    %2342 = vmatprep.subr.mxu0 0.0
    %2343 = vmatpush1.xpose.msra.mxu0 %v2308
    %2344 = vmatprep.subr.mxu0 0.0
    %2345 = vmatpush1.xpose.msra.mxu0 %v2311
    %2346 = vmatprep.subr.mxu0 0.0
    %2347 = vmatpush1.xpose.msra.mxu0 %v2314
    %2348 = vmatprep.subr.mxu0 0.0
    %2349 = vmatpush1.xpose.msra.mxu0 0.0
    %2350 = vmatprep.subr.mxu0 0.0
    %2351 = vmatpush1.xpose.msra.mxu0 0.0
    %2352 = vmatprep.subr.mxu0 0.0
    %2353 = vmatpush1.xpose.msra.mxu0 0.0
    %2354 = vmatprep.subr.mxu0 0.0
    %2355 = vmatpush1.xpose.msra.mxu0 0.0
    %2356 = vmatprep.subr.mxu0 0.0
    %2357 = vmatpush1.xpose.msra.mxu0 0.0
    %2358 = vmatprep.subr.mxu0 0.0
    %2359 = vmatpush1.xpose.msra.mxu0 0.0
    %2360 = vmatprep.subr.mxu0 0.0
    %2361 = vmatpush1.xpose.msra.mxu0 0.0
    %2362 = vmatprep.subr.mxu0 0.0
    %2363 = vmatpush1.xpose.msra.mxu0 0.0
    %2364 = vmatprep.subr.mxu0 0.0
    %2365 = vmatpush1.xpose.msra.mxu0 0.0
    %2366 = vmatprep.subr.mxu0 0.0
    %2367 = vmatpush1.xpose.msra.mxu0 0.0
    %2368 = vmatprep.subr.mxu0 0.0
    %2369 = vmatpush1.xpose.msra.mxu0 0.0
    %2370 = vmatprep.subr.mxu0 0.0
    %2371 = vmatpush1.xpose.msra.mxu0 0.0
    %2372 = vmatprep.subr.mxu0 0.0
    %2373 = vmatpush1.xpose.msra.mxu0 0.0
    %2374 = vmatprep.subr.mxu0 0.0
    %2375 = vmatpush1.xpose.msra.mxu0 0.0
    %2376 = vmatprep.subr.mxu0 0.0
    %2377 = vmatpush1.xpose.msra.mxu0 0.0
    %2378 = vmatprep.subr.mxu0 0.0
    %2379 = vmatpush1.xpose.msra.mxu0 0.0
    %2380 = vmatprep.mubr.f32.mxu0 0.0
    %2381 = vmatmul.mubr.f32.gmra.mrb[0].mxu0 %v2264
    %v2382 = vpop.f32.mrb[0].mxu0
    %v2383 = vadd.f32 0.0, %v2382
    %v2384 = vpop.f32.mrb[0].mxu0
    %2385 = vmatprep.mubr.f32.mxu0 0.0
    %2386 = vmatmul.mubr.f32.gmra.mrb[0].mxu0 %v2266
    %v2387 = vpop.f32.mrb[0].mxu0
    %v2388 = vadd.f32 0.0, %v2387
    %v2389 = vpop.f32.mrb[0].mxu0
    %2390 = vdwg.mxu0
    %vm2391 = vcmp.gt.f32.partialorder %v2383, 0.0
    %vm2392 = vcmp.gt.f32.partialorder %v2388, 0.0
    %v2393 = vmul.f32 %v2383, 0.2
    %v2394 = vmul.f32 %v2388, 0.2
    %v2395 = vsel %vm2391, %v2383, %v2393
    %v2396 = vsel %vm2392, %v2388, %v2394
    %v2397 = vadd.f32 %v2395, %v1460
    %v2398 = vadd.f32 %v2396, %v1461
    %v2399 = vmax.f32 %v2397, %v2398
    %v2400 = vrot.slane %v2399, 4
    %v2401 = vmax.f32 %v2399, %v2400
    %v2402 = vrot.slane %v2401, 2
    %v2403 = vmax.f32 %v2401, %v2402
    %v2404 = vrot.slane %v2403, 1
    %v2405 = vmax.f32 %v2403, %v2404
    %v2406 = vsub.f32 %v2397, %v2405
    %v2407 = vsub.f32 %v2398, %v2405
    %v2408 = vmul.f32 %v2406, 1.442695
    %v2409 = vpow.pop %v2408
    %v2410 = vmul.f32 %v2407, 1.442695
    %v2411 = vpow.pop %v2410
    %v2412 = vadd.f32 %v2409, %v2411
    %v2413 = vrot.slane %v2412, 4
    %v2414 = vadd.f32 %v2412, %v2413
    %v2415 = vrot.slane %v2414, 2
    %v2416 = vadd.f32 %v2414, %v2415
    %v2417 = vrot.slane %v2416, 1
    %v2418 = vadd.f32 %v2416, %v2417
    %v2419 = vrcp.pop %v2418
    %v2420 = vmul.f32 %v2409, %v2419
    %v2421 = vmul.f32 %v2411, %v2419
    %2422 = vxpose.xlu0.b32.start [1/16] %v2420, 128
    %2423 = vxpose.xlu0.b32.cont [2/16] %v2421, 128
    %2424 = vxpose.xlu0.b32.cont [3/16] 0.0, 128
    %2425 = vxpose.xlu0.b32.cont [4/16] 0.0, 128
    %2426 = vxpose.xlu0.b32.cont [5/16] 0.0, 128
    %2427 = vxpose.xlu0.b32.cont [6/16] 0.0, 128
    %2428 = vxpose.xlu0.b32.cont [7/16] 0.0, 128
    %2429 = vxpose.xlu0.b32.cont [8/16] 0.0, 128
    %2430 = vxpose.xlu0.b32.cont [9/16] 0.0, 128
    %2431 = vxpose.xlu0.b32.cont [10/16] 0.0, 128
    %2432 = vxpose.xlu0.b32.cont [11/16] 0.0, 128
    %2433 = vxpose.xlu0.b32.cont [12/16] 0.0, 128
    %2434 = vxpose.xlu0.b32.cont [13/16] 0.0, 128
    %2435 = vxpose.xlu0.b32.cont [14/16] 0.0, 128
    %2436 = vxpose.xlu0.b32.cont [15/16] 0.0, 128
    %2437 = vxpose.xlu0.b32.end [16/16] 0.0, 128
    %v2438 = vpop.trf.xlu0
    %v2439 = vpop.trf.xlu0
    %v2440 = vpop.trf.xlu0
    %v2441 = vpop.trf.xlu0
    %v2442 = vpop.trf.xlu0
    %v2443 = vpop.trf.xlu0
    %v2444 = vpop.trf.xlu0
    %v2445 = vpop.trf.xlu0
    %v2446 = vpop.trf.xlu0
    %v2447 = vpop.trf.xlu0
    %v2448 = vpop.trf.xlu0
    %v2449 = vpop.trf.xlu0
    %v2450 = vpop.trf.xlu0
    %v2451 = vpop.trf.xlu0
    %v2452 = vpop.trf.xlu0
    %v2453 = vpop.trf.xlu0
    %2454 = vrot.lane.b32.xlu0 %v2234, 64
    %v2455 = vpop.permute.xlu0 %2454
    %2456 = vrot.lane.b32.xlu0 %v2239, 64
    %v2457 = vpop.permute.xlu0 %2456
    %v2461 = vsel %vm292, %v2438, 0
    %v2464 = vsel %vm292, %v2439, 0
    %v2467 = vsel %vm292, %v2440, 0
    %v2470 = vsel %vm292, %v2441, 0
    %v2473 = vsel %vm292, %v2442, 0
    %v2476 = vsel %vm292, %v2443, 0
    %v2479 = vsel %vm292, %v2444, 0
    %v2482 = vsel %vm292, %v2445, 0
    %v2485 = vsel %vm292, %v2446, 0
    %v2488 = vsel %vm292, %v2447, 0
    %v2491 = vsel %vm292, %v2448, 0
    %v2494 = vsel %vm292, %v2449, 0
    %v2497 = vsel %vm292, %v2450, 0
    %v2500 = vsel %vm292, %v2451, 0
    %v2503 = vsel %vm292, %v2452, 0
    %v2506 = vsel %vm292, %v2453, 0
    %2508 = vmatprep.subr.mxu0 0.0
    %2509 = vmatpush1.msra.mxu0 %v2455
    %2510 = vmatprep.subr.mxu0 0.0
    %2511 = vmatpush1.msra.mxu0 %v2457
    %2512 = vmatprep.subr.mxu0 0.0
    %2513 = vmatpush1.msra.mxu0 0.0
    %2514 = vmatprep.subr.mxu0 0.0
    %2515 = vmatpush1.msra.mxu0 0.0
    %2516 = vmatprep.subr.mxu0 0.0
    %2517 = vmatpush1.msra.mxu0 0.0
    %2518 = vmatprep.subr.mxu0 0.0
    %2519 = vmatpush1.msra.mxu0 0.0
    %2520 = vmatprep.subr.mxu0 0.0
    %2521 = vmatpush1.msra.mxu0 0.0
    %2522 = vmatprep.subr.mxu0 0.0
    %2523 = vmatpush1.msra.mxu0 0.0
    %2524 = vmatprep.subr.mxu0 0.0
    %2525 = vmatpush1.msra.mxu0 0.0
    %2526 = vmatprep.subr.mxu0 0.0
    %2527 = vmatpush1.msra.mxu0 0.0
    %2528 = vmatprep.subr.mxu0 0.0
    %2529 = vmatpush1.msra.mxu0 0.0
    %2530 = vmatprep.subr.mxu0 0.0
    %2531 = vmatpush1.msra.mxu0 0.0
    %2532 = vmatprep.subr.mxu0 0.0
    %2533 = vmatpush1.msra.mxu0 0.0
    %2534 = vmatprep.subr.mxu0 0.0
    %2535 = vmatpush1.msra.mxu0 0.0
    %2536 = vmatprep.subr.mxu0 0.0
    %2537 = vmatpush1.msra.mxu0 0.0
    %2538 = vmatprep.subr.mxu0 0.0
    %2539 = vmatpush1.msra.mxu0 0.0
    %2540 = vmatprep.subr.mxu0 0.0
    %2541 = vmatpush1.msra.mxu0 0.0
    %2542 = vmatprep.subr.mxu0 0.0
    %2543 = vmatpush1.msra.mxu0 0.0
    %2544 = vmatprep.subr.mxu0 0.0
    %2545 = vmatpush1.msra.mxu0 0.0
    %2546 = vmatprep.subr.mxu0 0.0
    %2547 = vmatpush1.msra.mxu0 0.0
    %2548 = vmatprep.subr.mxu0 0.0
    %2549 = vmatpush1.msra.mxu0 0.0
    %2550 = vmatprep.subr.mxu0 0.0
    %2551 = vmatpush1.msra.mxu0 0.0
    %2552 = vmatprep.subr.mxu0 0.0
    %2553 = vmatpush1.msra.mxu0 0.0
    %2554 = vmatprep.subr.mxu0 0.0
    %2555 = vmatpush1.msra.mxu0 0.0
    %2556 = vmatprep.subr.mxu0 0.0
    %2557 = vmatpush1.msra.mxu0 0.0
    %2558 = vmatprep.subr.mxu0 0.0
    %2559 = vmatpush1.msra.mxu0 0.0
    %2560 = vmatprep.subr.mxu0 0.0
    %2561 = vmatpush1.msra.mxu0 0.0
    %2562 = vmatprep.subr.mxu0 0.0
    %2563 = vmatpush1.msra.mxu0 0.0
    %2564 = vmatprep.subr.mxu0 0.0
    %2565 = vmatpush1.msra.mxu0 0.0
    %2566 = vmatprep.subr.mxu0 0.0
    %2567 = vmatpush1.msra.mxu0 0.0
    %2568 = vmatprep.subr.mxu0 0.0
    %2569 = vmatpush1.msra.mxu0 0.0
    %2570 = vmatprep.subr.mxu0 0.0
    %2571 = vmatpush1.msra.mxu0 0.0
    %2572 = vmatprep.mubr.f32.mxu0 0.0
    %2573 = vmatmul.mubr.f32.gmra.mrb[0].mxu0 %v2461
    %v2574 = vpop.f32.mrb[0].mxu0
    %v2575 = vadd.f32 0.0, %v2574
    %v2576 = vpop.f32.mrb[0].mxu0
    %2577 = vmatprep.mubr.f32.mxu0 0.0
    %2578 = vmatmul.mubr.f32.gmra.mrb[0].mxu0 %v2464
    %v2579 = vpop.f32.mrb[0].mxu0
    %v2580 = vadd.f32 0.0, %v2579
    %v2581 = vpop.f32.mrb[0].mxu0
    %2582 = vmatprep.mubr.f32.mxu0 0.0
    %2583 = vmatmul.mubr.f32.gmra.mrb[0].mxu0 %v2467
    %v2584 = vpop.f32.mrb[0].mxu0
    %v2585 = vadd.f32 0.0, %v2584
    %v2586 = vpop.f32.mrb[0].mxu0
    %2587 = vmatprep.mubr.f32.mxu0 0.0
    %2588 = vmatmul.mubr.f32.gmra.mrb[0].mxu0 %v2470
    %v2589 = vpop.f32.mrb[0].mxu0
    %v2590 = vadd.f32 0.0, %v2589
    %v2591 = vpop.f32.mrb[0].mxu0
    %2592 = vmatprep.mubr.f32.mxu0 0.0
    %2593 = vmatmul.mubr.f32.gmra.mrb[0].mxu0 %v2473
    %v2594 = vpop.f32.mrb[0].mxu0
    %v2595 = vadd.f32 0.0, %v2594
    %v2596 = vpop.f32.mrb[0].mxu0
    %2597 = vmatprep.mubr.f32.mxu0 0.0
    %2598 = vmatmul.mubr.f32.gmra.mrb[0].mxu0 %v2476
    %v2599 = vpop.f32.mrb[0].mxu0
    %v2600 = vadd.f32 0.0, %v2599
    %v2601 = vpop.f32.mrb[0].mxu0
    %2602 = vmatprep.mubr.f32.mxu0 0.0
    %2603 = vmatmul.mubr.f32.gmra.mrb[0].mxu0 %v2479
    %v2604 = vpop.f32.mrb[0].mxu0
    %v2605 = vadd.f32 0.0, %v2604
    %v2606 = vpop.f32.mrb[0].mxu0
    %2607 = vmatprep.mubr.f32.mxu0 0.0
    %2608 = vmatmul.mubr.f32.gmra.mrb[0].mxu0 %v2482
    %v2609 = vpop.f32.mrb[0].mxu0
    %v2610 = vadd.f32 0.0, %v2609
    %v2611 = vpop.f32.mrb[0].mxu0
    %2612 = vmatprep.mubr.f32.mxu0 0.0
    %2613 = vmatmul.mubr.f32.gmra.mrb[0].mxu0 %v2485
    %v2614 = vpop.f32.mrb[0].mxu0
    %v2615 = vadd.f32 0.0, %v2614
    %v2616 = vpop.f32.mrb[0].mxu0
    %2617 = vmatprep.mubr.f32.mxu0 0.0
    %2618 = vmatmul.mubr.f32.gmra.mrb[0].mxu0 %v2488
    %v2619 = vpop.f32.mrb[0].mxu0
    %v2620 = vadd.f32 0.0, %v2619
    %v2621 = vpop.f32.mrb[0].mxu0
    %2622 = vmatprep.mubr.f32.mxu0 0.0
    %2623 = vmatmul.mubr.f32.gmra.mrb[0].mxu0 %v2491
    %v2624 = vpop.f32.mrb[0].mxu0
    %v2625 = vadd.f32 0.0, %v2624
    %v2626 = vpop.f32.mrb[0].mxu0
    %2627 = vmatprep.mubr.f32.mxu0 0.0
    %2628 = vmatmul.mubr.f32.gmra.mrb[0].mxu0 %v2494
    %v2629 = vpop.f32.mrb[0].mxu0
    %v2630 = vadd.f32 0.0, %v2629
    %v2631 = vpop.f32.mrb[0].mxu0
    %2632 = vmatprep.mubr.f32.mxu0 0.0
    %2633 = vmatmul.mubr.f32.gmra.mrb[0].mxu0 %v2497
    %v2634 = vpop.f32.mrb[0].mxu0
    %v2635 = vadd.f32 0.0, %v2634
    %v2636 = vpop.f32.mrb[0].mxu0
    %2637 = vmatprep.mubr.f32.mxu0 0.0
    %2638 = vmatmul.mubr.f32.gmra.mrb[0].mxu0 %v2500
    %v2639 = vpop.f32.mrb[0].mxu0
    %v2640 = vadd.f32 0.0, %v2639
    %v2641 = vpop.f32.mrb[0].mxu0
    %2642 = vmatprep.mubr.f32.mxu0 0.0
    %2643 = vmatmul.mubr.f32.gmra.mrb[0].mxu0 %v2503
    %v2644 = vpop.f32.mrb[0].mxu0
    %v2645 = vadd.f32 0.0, %v2644
    %v2646 = vpop.f32.mrb[0].mxu0
    %2647 = vmatprep.mubr.f32.mxu0 0.0
    %2648 = vmatmul.mubr.f32.gmra.mrb[0].mxu0 %v2506
    %v2649 = vpop.f32.mrb[0].mxu0
    %v2650 = vadd.f32 0.0, %v2649
    %v2651 = vpop.f32.mrb[0].mxu0
    %2652 = vdwg.mxu0
    %v2653 = vmul.f32 %v2575, %v324
    %v2654 = vmul.f32 %v2580, %v324
    %v2655 = vmul.f32 %v2585, %v328
    %v2656 = vmul.f32 %v2590, %v328
    %v2657 = vmul.f32 %v2595, %v332
    %v2658 = vmul.f32 %v2600, %v332
    %v2659 = vmul.f32 %v2605, %v336
    %v2660 = vmul.f32 %v2610, %v336
    %v2661 = vmul.f32 %v2615, %v340
    %v2662 = vmul.f32 %v2620, %v340
    %v2663 = vmul.f32 %v2625, %v344
    %v2664 = vmul.f32 %v2630, %v344
    %v2665 = vmul.f32 %v2635, %v348
    %v2666 = vmul.f32 %v2640, %v348
    %v2667 = vmul.f32 %v2645, %v352
    %v2668 = vmul.f32 %v2650, %v352
    %v2669 = vsel %vm295, %v2653, 0.0
    %v2670 = vsel %vm295, %v2655, 0.0
    %v2671 = vadd.f32 %v2669, %v2670
    %v2672 = vsel %vm295, %v2657, 0.0
    %v2673 = vadd.f32 %v2671, %v2672
    %v2674 = vsel %vm295, %v2659, 0.0
    %v2675 = vadd.f32 %v2673, %v2674
    %v2676 = vsel %vm295, %v2661, 0.0
    %v2677 = vadd.f32 %v2675, %v2676
    %v2678 = vsel %vm295, %v2663, 0.0
    %v2679 = vadd.f32 %v2677, %v2678
    %v2680 = vsel %vm295, %v2665, 0.0
    %v2681 = vadd.f32 %v2679, %v2680
    %v2682 = vsel %vm295, %v2667, 0.0
    %v2683 = vadd.f32 %v2681, %v2682
    %v2684 = vsel %vm295, %v2654, 0.0
    %v2685 = vsel %vm295, %v2656, 0.0
    %v2686 = vadd.f32 %v2684, %v2685
    %v2687 = vsel %vm295, %v2658, 0.0
    %v2688 = vadd.f32 %v2686, %v2687
    %v2689 = vsel %vm295, %v2660, 0.0
    %v2690 = vadd.f32 %v2688, %v2689
    %v2691 = vsel %vm295, %v2662, 0.0
    %v2692 = vadd.f32 %v2690, %v2691
    %v2693 = vsel %vm295, %v2664, 0.0
    %v2694 = vadd.f32 %v2692, %v2693
    %v2695 = vsel %vm295, %v2666, 0.0
    %v2696 = vadd.f32 %v2694, %v2695
    %v2697 = vsel %vm295, %v2668, 0.0
    %v2698 = vadd.f32 %v2696, %v2697
    %v2699 = vadd.f32 %v2683, %v1374
    %v2700 = vadd.f32 %v2698, %v1374
    %v2701 = vld [vmem:[%s11] sm:$0xff]
    %v2702 = vld [vmem:[%s11 + $0x8] sm:$0xff]
    %v2703 = vld [vmem:[%s11 + $0x10] sm:$0xff]
    %v2704 = vld [vmem:[%s11 + $0x18] sm:$0xff]
    %v2705 = vld [vmem:[%s13] sm:$0x1]
    %v2707 = vlaneseq
    %v2708 = vshrl.u32 %v2707, 7
    %v2709 = vsub.s32 0, %v2708
    %v2710 = vrot.slane %v2705, %v2709
    %v2713 = vsel %vm295, %v2699, 0
    %v2716 = vsel %vm295, %v2700, 0
    %2718 = vmatprep.subr.mxu0 0.0
    %2719 = vmatpush1.msra.mxu0 %v2701
    %2720 = vmatprep.subr.mxu0 0.0
    %2721 = vmatpush1.msra.mxu0 %v2702
    %2722 = vmatprep.subr.mxu0 0.0
    %2723 = vmatpush1.msra.mxu0 %v2703
    %2724 = vmatprep.subr.mxu0 0.0
    %2725 = vmatpush1.msra.mxu0 %v2704
    %2726 = vmatprep.subr.mxu0 0.0
    %2727 = vmatpush1.msra.mxu0 0.0
    %2728 = vmatprep.subr.mxu0 0.0
    %2729 = vmatpush1.msra.mxu0 0.0
    %2730 = vmatprep.subr.mxu0 0.0
    %2731 = vmatpush1.msra.mxu0 0.0
    %2732 = vmatprep.subr.mxu0 0.0
    %2733 = vmatpush1.msra.mxu0 0.0
    %2734 = vmatprep.subr.mxu0 0.0
    %2735 = vmatpush1.msra.mxu0 0.0
    %2736 = vmatprep.subr.mxu0 0.0
    %2737 = vmatpush1.msra.mxu0 0.0
    %2738 = vmatprep.subr.mxu0 0.0
    %2739 = vmatpush1.msra.mxu0 0.0
    %2740 = vmatprep.subr.mxu0 0.0
    %2741 = vmatpush1.msra.mxu0 0.0
    %2742 = vmatprep.subr.mxu0 0.0
    %2743 = vmatpush1.msra.mxu0 0.0
    %2744 = vmatprep.subr.mxu0 0.0
    %2745 = vmatpush1.msra.mxu0 0.0
    %2746 = vmatprep.subr.mxu0 0.0
    %2747 = vmatpush1.msra.mxu0 0.0
    %2748 = vmatprep.subr.mxu0 0.0
    %2749 = vmatpush1.msra.mxu0 0.0
    %2750 = vmatprep.subr.mxu0 0.0
    %2751 = vmatpush1.msra.mxu0 0.0
    %2752 = vmatprep.subr.mxu0 0.0
    %2753 = vmatpush1.msra.mxu0 0.0
    %2754 = vmatprep.subr.mxu0 0.0
    %2755 = vmatpush1.msra.mxu0 0.0
    %2756 = vmatprep.subr.mxu0 0.0
    %2757 = vmatpush1.msra.mxu0 0.0
    %2758 = vmatprep.subr.mxu0 0.0
    %2759 = vmatpush1.msra.mxu0 0.0
    %2760 = vmatprep.subr.mxu0 0.0
    %2761 = vmatpush1.msra.mxu0 0.0
    %2762 = vmatprep.subr.mxu0 0.0
    %2763 = vmatpush1.msra.mxu0 0.0
    %2764 = vmatprep.subr.mxu0 0.0
    %2765 = vmatpush1.msra.mxu0 0.0
    %2766 = vmatprep.subr.mxu0 0.0
    %2767 = vmatpush1.msra.mxu0 0.0
    %2768 = vmatprep.subr.mxu0 0.0
    %2769 = vmatpush1.msra.mxu0 0.0
    %2770 = vmatprep.subr.mxu0 0.0
    %2771 = vmatpush1.msra.mxu0 0.0
    %2772 = vmatprep.subr.mxu0 0.0
    %2773 = vmatpush1.msra.mxu0 0.0
    %2774 = vmatprep.subr.mxu0 0.0
    %2775 = vmatpush1.msra.mxu0 0.0
    %2776 = vmatprep.subr.mxu0 0.0
    %2777 = vmatpush1.msra.mxu0 0.0
    %2778 = vmatprep.subr.mxu0 0.0
    %2779 = vmatpush1.msra.mxu0 0.0
    %2780 = vmatprep.subr.mxu0 0.0
    %2781 = vmatpush1.msra.mxu0 0.0
    %2782 = vmatprep.mubr.f32.mxu0 0.0
    %2783 = vmatmul.mubr.f32.gmra.mrb[0].mxu0 %v2713
    %v2784 = vpop.f32.mrb[0].mxu0
    %v2785 = vadd.f32 %v2710, %v2784
    %v2786 = vpop.f32.mrb[0].mxu0
    %2787 = vmatprep.mubr.f32.mxu0 0.0
    %2788 = vmatmul.mubr.f32.gmra.mrb[0].mxu0 %v2716
    %v2789 = vpop.f32.mrb[0].mxu0
    %v2790 = vadd.f32 %v2710, %v2789
    %v2791 = vpop.f32.mrb[0].mxu0
    %2792 = vdwg.mxu0
    %v2793 = vld [vmem:[%s12] sm:$0xff]
    %v2794 = vld [vmem:[%s12 + $0x8] sm:$0xff]
    %v2795 = vld [vmem:[%s12 + $0x10] sm:$0xff]
    %v2796 = vld [vmem:[%s12 + $0x18] sm:$0xff]
    %v2797 = vld [vmem:[%s14] sm:$0x1]
    %v2799 = vlaneseq
    %v2800 = vshrl.u32 %v2799, 7
    %v2801 = vsub.s32 0, %v2800
    %v2802 = vrot.slane %v2797, %v2801
    %v2805 = vsel %vm295, %v1376, 0
    %v2808 = vsel %vm295, %v1377, 0
    %2810 = vmatprep.subr.mxu0 0.0
    %2811 = vmatpush1.msra.mxu0 %v2793
    %2812 = vmatprep.subr.mxu0 0.0
    %2813 = vmatpush1.msra.mxu0 %v2794
    %2814 = vmatprep.subr.mxu0 0.0
    %2815 = vmatpush1.msra.mxu0 %v2795
    %2816 = vmatprep.subr.mxu0 0.0
    %2817 = vmatpush1.msra.mxu0 %v2796
    %2818 = vmatprep.subr.mxu0 0.0
    %2819 = vmatpush1.msra.mxu0 0.0
    %2820 = vmatprep.subr.mxu0 0.0
    %2821 = vmatpush1.msra.mxu0 0.0
    %2822 = vmatprep.subr.mxu0 0.0
    %2823 = vmatpush1.msra.mxu0 0.0
    %2824 = vmatprep.subr.mxu0 0.0
    %2825 = vmatpush1.msra.mxu0 0.0
    %2826 = vmatprep.subr.mxu0 0.0
    %2827 = vmatpush1.msra.mxu0 0.0
    %2828 = vmatprep.subr.mxu0 0.0
    %2829 = vmatpush1.msra.mxu0 0.0
    %2830 = vmatprep.subr.mxu0 0.0
    %2831 = vmatpush1.msra.mxu0 0.0
    %2832 = vmatprep.subr.mxu0 0.0
    %2833 = vmatpush1.msra.mxu0 0.0
    %2834 = vmatprep.subr.mxu0 0.0
    %2835 = vmatpush1.msra.mxu0 0.0
    %2836 = vmatprep.subr.mxu0 0.0
    %2837 = vmatpush1.msra.mxu0 0.0
    %2838 = vmatprep.subr.mxu0 0.0
    %2839 = vmatpush1.msra.mxu0 0.0
    %2840 = vmatprep.subr.mxu0 0.0
    %2841 = vmatpush1.msra.mxu0 0.0
    %2842 = vmatprep.subr.mxu0 0.0
    %2843 = vmatpush1.msra.mxu0 0.0
    %2844 = vmatprep.subr.mxu0 0.0
    %2845 = vmatpush1.msra.mxu0 0.0
    %2846 = vmatprep.subr.mxu0 0.0
    %2847 = vmatpush1.msra.mxu0 0.0
    %2848 = vmatprep.subr.mxu0 0.0
    %2849 = vmatpush1.msra.mxu0 0.0
    %2850 = vmatprep.subr.mxu0 0.0
    %2851 = vmatpush1.msra.mxu0 0.0
    %2852 = vmatprep.subr.mxu0 0.0
    %2853 = vmatpush1.msra.mxu0 0.0
    %2854 = vmatprep.subr.mxu0 0.0
    %2855 = vmatpush1.msra.mxu0 0.0
    %2856 = vmatprep.subr.mxu0 0.0
    %2857 = vmatpush1.msra.mxu0 0.0
    %2858 = vmatprep.subr.mxu0 0.0
    %2859 = vmatpush1.msra.mxu0 0.0
    %2860 = vmatprep.subr.mxu0 0.0
    %2861 = vmatpush1.msra.mxu0 0.0
    %2862 = vmatprep.subr.mxu0 0.0
    %2863 = vmatpush1.msra.mxu0 0.0
    %2864 = vmatprep.subr.mxu0 0.0
    %2865 = vmatpush1.msra.mxu0 0.0
    %2866 = vmatprep.subr.mxu0 0.0
    %2867 = vmatpush1.msra.mxu0 0.0
    %2868 = vmatprep.subr.mxu0 0.0
    %2869 = vmatpush1.msra.mxu0 0.0
    %2870 = vmatprep.subr.mxu0 0.0
    %2871 = vmatpush1.msra.mxu0 0.0
    %2872 = vmatprep.subr.mxu0 0.0
    %2873 = vmatpush1.msra.mxu0 0.0
    %2874 = vmatprep.mubr.f32.mxu0 0.0
    %2875 = vmatmul.mubr.f32.gmra.mrb[0].mxu0 %v2805
    %v2876 = vpop.f32.mrb[0].mxu0
    %v2877 = vadd.f32 %v2802, %v2876
    %v2878 = vpop.f32.mrb[0].mxu0
    %2879 = vmatprep.mubr.f32.mxu0 0.0
    %2880 = vmatmul.mubr.f32.gmra.mrb[0].mxu0 %v2808
    %v2881 = vpop.f32.mrb[0].mxu0
    %v2882 = vadd.f32 %v2802, %v2881
    %v2883 = vpop.f32.mrb[0].mxu0
    %2884 = vdwg.mxu0
    %v2885 = vadd.f32 %v2785, %v2877
    %v2886 = vadd.f32 %v2790, %v2882
    %v2887 = vxor.u32 %v2885, 2147483648
    %v2888 = vxor.u32 %v2886, 2147483648
    %v2889 = vmul.f32 %v2887, 1.442695
    %v2890 = vpow.pop %v2889
    %v2891 = vmul.f32 %v2888, 1.442695
    %v2892 = vpow.pop %v2891
    %v2893 = vadd.f32 %v2890, 1.0
    %v2894 = vadd.f32 %v2892, 1.0
    %v2895 = vrcp.pop %v2893
    %v2896 = vmul.f32 1.0, %v2895
    %v2897 = vrcp.pop %v2894
    %v2898 = vmul.f32 1.0, %v2897
    %2901 = vrot.lane.b32.xlu0 %v2877, 64
    %v2902 = vpop.permute.xlu0 %2901
    %2903 = vrot.lane.b32.xlu0 %v2882, 64
    %v2904 = vpop.permute.xlu0 %2903
    %v2907 = vmul.f32 %v2896, %v2902
    %v2908 = vmul.f32 %v2898, %v2904
    %2911 = vrot.lane.b32.xlu0 %v2907, 64
    %v2912 = vpop.permute.xlu0 %2911
    %2913 = vrot.lane.b32.xlu0 %v2908, 64
    %v2914 = vpop.permute.xlu0 %2913
    %v2917 = vadd.f32 %v2785, %v2912
    %v2918 = vadd.f32 %v2790, %v2914
    %v2919 = vtanh.pop %v2917
    %v2920 = vtanh.pop %v2918
    %v2921 = vsub.f32 1.0, %v2896
    %v2922 = vsub.f32 1.0, %v2898
    %2925 = vrot.lane.b32.xlu0 %v2919, 96
    %v2926 = vpop.permute.xlu0 %2925
    %2927 = vrot.lane.b32.xlu0 %v2920, 96
    %v2928 = vpop.permute.xlu0 %2927
    %v2931 = vmul.f32 %v2921, %v2926
    %v2932 = vmul.f32 %v2922, %v2928
    %2933 = vrot.lane.b32.xlu0 %v1376, 32
    %v2934 = vpop.permute.xlu0 %2933
    %2935 = vrot.lane.b32.xlu0 %v1377, 32
    %v2936 = vpop.permute.xlu0 %2935
    %v2939 = vmul.f32 %v2896, %v2934
    %v2940 = vmul.f32 %v2898, %v2936
    %v2941 = vadd.f32 %v2931, %v2939
    %v2942 = vadd.f32 %v2932, %v2940
    %vm2943 = vcmask 523520
    %v2944 = vsel %vm2943, %v2941, 0.0
    %v2945 = vsel %vm2943, %v2942, 0.0
    %v2946 = vadd.f32 %v2944, %v2945
    %v2947 = vrot.slane %v2946, 4
    %v2948 = vadd.f32 %v2946, %v2947
    %v2949 = vrot.slane %v2948, 2
    %v2950 = vadd.f32 %v2948, %v2949
    %v2951 = vrot.slane %v2950, 1
    %v2952 = vadd.f32 %v2950, %v2951
    %v2953 = vmul.f32 %v2952, %v1387
    %2954 = vset.pattern.permute.xlu0 1
    %2955 = vperm.xlu0 %2954, %v80
    %v2956 = vpop.permute.xlu0 %2955
    %v2958 = vlaneseq
    %v2959 = vshrl.u32 %v2958, 7
    %v2960 = vsub.s32 0, %v2959
    %v2961 = vrot.slane %v2956, %v2960
    %v2962 = vmul.f32 %v2961, %v2953
    %2964 = vrot.lane.b32.xlu0 %v2962, 96
    %v2965 = vpop.permute.xlu0 %2964
    %v2967 = vadd.f32 %v1399, %v2965
    %v2968 = vsub.f32 %v101, 1.0
    %v2969 = vsub.f32 %v102, 1.0
    %v2970 = vmul.f32 %v2968, 1e+30
    %v2971 = vmul.f32 %v2969, 1e+30
    %2974 = vrot.lane.b32.xlu0 %v2970, 16
    %v2975 = vpop.permute.xlu0 %2974
    %2976 = vrot.lane.b32.xlu0 %v2971, 16
    %v2977 = vpop.permute.xlu0 %2976
    %2980 = vrot.lane.b32.xlu0 %v2970, 32
    %v2981 = vpop.permute.xlu0 %2980
    %2982 = vrot.lane.b32.xlu0 %v2971, 32
    %v2983 = vpop.permute.xlu0 %2982
    %2986 = vrot.lane.b32.xlu0 %v2970, 48
    %v2987 = vpop.permute.xlu0 %2986
    %2988 = vrot.lane.b32.xlu0 %v2971, 48
    %v2989 = vpop.permute.xlu0 %2988
    %2992 = vrot.lane.b32.xlu0 %v2970, 64
    %v2993 = vpop.permute.xlu0 %2992
    %2994 = vrot.lane.b32.xlu0 %v2971, 64
    %v2995 = vpop.permute.xlu0 %2994
    %2998 = vrot.lane.b32.xlu0 %v2970, 80
    %v2999 = vpop.permute.xlu0 %2998
    %3000 = vrot.lane.b32.xlu0 %v2971, 80
    %v3001 = vpop.permute.xlu0 %3000
    %3004 = vrot.lane.b32.xlu0 %v2970, 96
    %v3005 = vpop.permute.xlu0 %3004
    %3006 = vrot.lane.b32.xlu0 %v2971, 96
    %v3007 = vpop.permute.xlu0 %3006
    %3010 = vrot.lane.b32.xlu0 %v2970, 112
    %v3011 = vpop.permute.xlu0 %3010
    %3012 = vrot.lane.b32.xlu0 %v2971, 112
    %v3013 = vpop.permute.xlu0 %3012
    %v3016 = vsel %vm292, %v2970, %v2975
    %v3017 = vsel %vm292, %v2971, %v2977
    %v3018 = vsel %vm295, %v3016, %v2981
    %v3019 = vsel %vm295, %v3017, %v2983
    %v3020 = vsel %vm298, %v3018, %v2987
    %v3021 = vsel %vm298, %v3019, %v2989
    %v3022 = vsel %vm301, %v3020, %v2993
    %v3023 = vsel %vm301, %v3021, %v2995
    %v3024 = vsel %vm304, %v3022, %v2999
    %v3025 = vsel %vm304, %v3023, %v3001
    %v3026 = vsel %vm307, %v3024, %v3005
    %v3027 = vsel %vm307, %v3025, %v3007
    %v3028 = vsel %vm310, %v3026, %v3011
    %v3029 = vsel %vm310, %v3027, %v3013
    %v3030 = vmul.f32 %v226, %v324
    %v3031 = vmul.f32 %v231, %v324
    %v3032 = vmul.f32 %v226, %v328
    %v3033 = vmul.f32 %v231, %v328
    %v3034 = vmul.f32 %v226, %v332
    %v3035 = vmul.f32 %v231, %v332
    %v3036 = vmul.f32 %v226, %v336
    %v3037 = vmul.f32 %v231, %v336
    %v3038 = vmul.f32 %v226, %v340
    %v3039 = vmul.f32 %v231, %v340
    %v3040 = vmul.f32 %v226, %v344
    %v3041 = vmul.f32 %v231, %v344
    %v3042 = vmul.f32 %v226, %v348
    %v3043 = vmul.f32 %v231, %v348
    %v3044 = vmul.f32 %v226, %v352
    %v3045 = vmul.f32 %v231, %v352
    %3048 = vrot.lane.b32.xlu0 %v226, 96
    %v3049 = vpop.permute.xlu0 %3048
    %3050 = vrot.lane.b32.xlu0 %v231, 96
    %v3051 = vpop.permute.xlu0 %3050
    %v3052 = vsel %vm295, %v3049, 0
    %v3054 = vsel %vm295, %v3051, 0
    %v3057 = vsel %vm295, %v3030, 0
    %v3060 = vsel %vm295, %v3031, 0
    %v3063 = vsel %vm295, %v3032, 0
    %v3066 = vsel %vm295, %v3033, 0
    %v3069 = vsel %vm295, %v3034, 0
    %v3072 = vsel %vm295, %v3035, 0
    %v3075 = vsel %vm295, %v3036, 0
    %v3078 = vsel %vm295, %v3037, 0
    %v3081 = vsel %vm295, %v3038, 0
    %v3084 = vsel %vm295, %v3039, 0
    %v3087 = vsel %vm295, %v3040, 0
    %v3090 = vsel %vm295, %v3041, 0
    %v3093 = vsel %vm295, %v3042, 0
    %v3096 = vsel %vm295, %v3043, 0
    %v3099 = vsel %vm295, %v3044, 0
    %v3102 = vsel %vm295, %v3045, 0
    %3104 = vmatprep.subr.mxu0 0.0
    %3105 = vmatpush1.xpose.msra.mxu0 %v3057
    %3106 = vmatprep.subr.mxu0 0.0
    %3107 = vmatpush1.xpose.msra.mxu0 %v3060
    %3108 = vmatprep.subr.mxu0 0.0
    %3109 = vmatpush1.xpose.msra.mxu0 %v3063
    %3110 = vmatprep.subr.mxu0 0.0
    %3111 = vmatpush1.xpose.msra.mxu0 %v3066
    %3112 = vmatprep.subr.mxu0 0.0
    %3113 = vmatpush1.xpose.msra.mxu0 %v3069
    %3114 = vmatprep.subr.mxu0 0.0
    %3115 = vmatpush1.xpose.msra.mxu0 %v3072
    %3116 = vmatprep.subr.mxu0 0.0
    %3117 = vmatpush1.xpose.msra.mxu0 %v3075
    %3118 = vmatprep.subr.mxu0 0.0
    %3119 = vmatpush1.xpose.msra.mxu0 %v3078
    %3120 = vmatprep.subr.mxu0 0.0
    %3121 = vmatpush1.xpose.msra.mxu0 %v3081
    %3122 = vmatprep.subr.mxu0 0.0
    %3123 = vmatpush1.xpose.msra.mxu0 %v3084
    %3124 = vmatprep.subr.mxu0 0.0
    %3125 = vmatpush1.xpose.msra.mxu0 %v3087
    %3126 = vmatprep.subr.mxu0 0.0
    %3127 = vmatpush1.xpose.msra.mxu0 %v3090
    %3128 = vmatprep.subr.mxu0 0.0
    %3129 = vmatpush1.xpose.msra.mxu0 %v3093
    %3130 = vmatprep.subr.mxu0 0.0
    %3131 = vmatpush1.xpose.msra.mxu0 %v3096
    %3132 = vmatprep.subr.mxu0 0.0
    %3133 = vmatpush1.xpose.msra.mxu0 %v3099
    %3134 = vmatprep.subr.mxu0 0.0
    %3135 = vmatpush1.xpose.msra.mxu0 %v3102
    %3136 = vmatprep.subr.mxu0 0.0
    %3137 = vmatpush1.xpose.msra.mxu0 0.0
    %3138 = vmatprep.subr.mxu0 0.0
    %3139 = vmatpush1.xpose.msra.mxu0 0.0
    %3140 = vmatprep.subr.mxu0 0.0
    %3141 = vmatpush1.xpose.msra.mxu0 0.0
    %3142 = vmatprep.subr.mxu0 0.0
    %3143 = vmatpush1.xpose.msra.mxu0 0.0
    %3144 = vmatprep.subr.mxu0 0.0
    %3145 = vmatpush1.xpose.msra.mxu0 0.0
    %3146 = vmatprep.subr.mxu0 0.0
    %3147 = vmatpush1.xpose.msra.mxu0 0.0
    %3148 = vmatprep.subr.mxu0 0.0
    %3149 = vmatpush1.xpose.msra.mxu0 0.0
    %3150 = vmatprep.subr.mxu0 0.0
    %3151 = vmatpush1.xpose.msra.mxu0 0.0
    %3152 = vmatprep.subr.mxu0 0.0
    %3153 = vmatpush1.xpose.msra.mxu0 0.0
    %3154 = vmatprep.subr.mxu0 0.0
    %3155 = vmatpush1.xpose.msra.mxu0 0.0
    %3156 = vmatprep.subr.mxu0 0.0
    %3157 = vmatpush1.xpose.msra.mxu0 0.0
    %3158 = vmatprep.subr.mxu0 0.0
    %3159 = vmatpush1.xpose.msra.mxu0 0.0
    %3160 = vmatprep.subr.mxu0 0.0
    %3161 = vmatpush1.xpose.msra.mxu0 0.0
    %3162 = vmatprep.subr.mxu0 0.0
    %3163 = vmatpush1.xpose.msra.mxu0 0.0
    %3164 = vmatprep.subr.mxu0 0.0
    %3165 = vmatpush1.xpose.msra.mxu0 0.0
    %3166 = vmatprep.subr.mxu0 0.0
    %3167 = vmatpush1.xpose.msra.mxu0 0.0
    %3168 = vmatprep.mubr.f32.mxu0 0.0
    %3169 = vmatmul.mubr.f32.gmra.mrb[0].mxu0 %v3052
    %v3170 = vpop.f32.mrb[0].mxu0
    %v3171 = vadd.f32 0.0, %v3170
    %v3172 = vpop.f32.mrb[0].mxu0
    %3173 = vmatprep.mubr.f32.mxu0 0.0
    %3174 = vmatmul.mubr.f32.gmra.mrb[0].mxu0 %v3054
    %v3175 = vpop.f32.mrb[0].mxu0
    %v3176 = vadd.f32 0.0, %v3175
    %v3177 = vpop.f32.mrb[0].mxu0
    %3178 = vdwg.mxu0
    %vm3179 = vcmp.gt.f32.partialorder %v3171, 0.0
    %vm3180 = vcmp.gt.f32.partialorder %v3176, 0.0
    %v3181 = vmul.f32 %v3171, 0.2
    %v3182 = vmul.f32 %v3176, 0.2
    %v3183 = vsel %vm3179, %v3171, %v3181
    %v3184 = vsel %vm3180, %v3176, %v3182
    %v3185 = vadd.f32 %v3183, %v3028
    %v3186 = vadd.f32 %v3184, %v3029
    %v3187 = vmax.f32 %v3185, %v3186
    %v3188 = vrot.slane %v3187, 4
    %v3189 = vmax.f32 %v3187, %v3188
    %v3190 = vrot.slane %v3189, 2
    %v3191 = vmax.f32 %v3189, %v3190
    %v3192 = vrot.slane %v3191, 1
    %v3193 = vmax.f32 %v3191, %v3192
    %v3194 = vsub.f32 %v3185, %v3193
    %v3195 = vsub.f32 %v3186, %v3193
    %v3196 = vmul.f32 %v3194, 1.442695
    %v3197 = vpow.pop %v3196
    %v3198 = vmul.f32 %v3195, 1.442695
    %v3199 = vpow.pop %v3198
    %v3200 = vadd.f32 %v3197, %v3199
    %v3201 = vrot.slane %v3200, 4
    %v3202 = vadd.f32 %v3200, %v3201
    %v3203 = vrot.slane %v3202, 2
    %v3204 = vadd.f32 %v3202, %v3203
    %v3205 = vrot.slane %v3204, 1
    %v3206 = vadd.f32 %v3204, %v3205
    %v3207 = vrcp.pop %v3206
    %v3208 = vmul.f32 %v3197, %v3207
    %v3209 = vmul.f32 %v3199, %v3207
    %3210 = vxpose.xlu0.b32.start [1/16] %v3208, 128
    %3211 = vxpose.xlu0.b32.cont [2/16] %v3209, 128
    %3212 = vxpose.xlu0.b32.cont [3/16] 0.0, 128
    %3213 = vxpose.xlu0.b32.cont [4/16] 0.0, 128
    %3214 = vxpose.xlu0.b32.cont [5/16] 0.0, 128
    %3215 = vxpose.xlu0.b32.cont [6/16] 0.0, 128
    %3216 = vxpose.xlu0.b32.cont [7/16] 0.0, 128
    %3217 = vxpose.xlu0.b32.cont [8/16] 0.0, 128
    %3218 = vxpose.xlu0.b32.cont [9/16] 0.0, 128
    %3219 = vxpose.xlu0.b32.cont [10/16] 0.0, 128
    %3220 = vxpose.xlu0.b32.cont [11/16] 0.0, 128
    %3221 = vxpose.xlu0.b32.cont [12/16] 0.0, 128
    %3222 = vxpose.xlu0.b32.cont [13/16] 0.0, 128
    %3223 = vxpose.xlu0.b32.cont [14/16] 0.0, 128
    %3224 = vxpose.xlu0.b32.cont [15/16] 0.0, 128
    %3225 = vxpose.xlu0.b32.end [16/16] 0.0, 128
    %v3226 = vpop.trf.xlu0
    %v3227 = vpop.trf.xlu0
    %v3228 = vpop.trf.xlu0
    %v3229 = vpop.trf.xlu0
    %v3230 = vpop.trf.xlu0
    %v3231 = vpop.trf.xlu0
    %v3232 = vpop.trf.xlu0
    %v3233 = vpop.trf.xlu0
    %v3234 = vpop.trf.xlu0
    %v3235 = vpop.trf.xlu0
    %v3236 = vpop.trf.xlu0
    %v3237 = vpop.trf.xlu0
    %v3238 = vpop.trf.xlu0
    %v3239 = vpop.trf.xlu0
    %v3240 = vpop.trf.xlu0
    %v3241 = vpop.trf.xlu0
    %3242 = vrot.lane.b32.xlu0 %v226, 64
    %v3243 = vpop.permute.xlu0 %3242
    %3244 = vrot.lane.b32.xlu0 %v231, 64
    %v3245 = vpop.permute.xlu0 %3244
    %v3249 = vsel %vm292, %v3226, 0
    %v3252 = vsel %vm292, %v3227, 0
    %v3255 = vsel %vm292, %v3228, 0
    %v3258 = vsel %vm292, %v3229, 0
    %v3261 = vsel %vm292, %v3230, 0
    %v3264 = vsel %vm292, %v3231, 0
    %v3267 = vsel %vm292, %v3232, 0
    %v3270 = vsel %vm292, %v3233, 0
    %v3273 = vsel %vm292, %v3234, 0
    %v3276 = vsel %vm292, %v3235, 0
    %v3279 = vsel %vm292, %v3236, 0
    %v3282 = vsel %vm292, %v3237, 0
    %v3285 = vsel %vm292, %v3238, 0
    %v3288 = vsel %vm292, %v3239, 0
    %v3291 = vsel %vm292, %v3240, 0
    %v3294 = vsel %vm292, %v3241, 0
    %3296 = vmatprep.subr.mxu0 0.0
    %3297 = vmatpush1.msra.mxu0 %v3243
    %3298 = vmatprep.subr.mxu0 0.0
    %3299 = vmatpush1.msra.mxu0 %v3245
    %3300 = vmatprep.subr.mxu0 0.0
    %3301 = vmatpush1.msra.mxu0 0.0
    %3302 = vmatprep.subr.mxu0 0.0
    %3303 = vmatpush1.msra.mxu0 0.0
    %3304 = vmatprep.subr.mxu0 0.0
    %3305 = vmatpush1.msra.mxu0 0.0
    %3306 = vmatprep.subr.mxu0 0.0
    %3307 = vmatpush1.msra.mxu0 0.0
    %3308 = vmatprep.subr.mxu0 0.0
    %3309 = vmatpush1.msra.mxu0 0.0
    %3310 = vmatprep.subr.mxu0 0.0
    %3311 = vmatpush1.msra.mxu0 0.0
    %3312 = vmatprep.subr.mxu0 0.0
    %3313 = vmatpush1.msra.mxu0 0.0
    %3314 = vmatprep.subr.mxu0 0.0
    %3315 = vmatpush1.msra.mxu0 0.0
    %3316 = vmatprep.subr.mxu0 0.0
    %3317 = vmatpush1.msra.mxu0 0.0
    %3318 = vmatprep.subr.mxu0 0.0
    %3319 = vmatpush1.msra.mxu0 0.0
    %3320 = vmatprep.subr.mxu0 0.0
    %3321 = vmatpush1.msra.mxu0 0.0
    %3322 = vmatprep.subr.mxu0 0.0
    %3323 = vmatpush1.msra.mxu0 0.0
    %3324 = vmatprep.subr.mxu0 0.0
    %3325 = vmatpush1.msra.mxu0 0.0
    %3326 = vmatprep.subr.mxu0 0.0
    %3327 = vmatpush1.msra.mxu0 0.0
    %3328 = vmatprep.subr.mxu0 0.0
    %3329 = vmatpush1.msra.mxu0 0.0
    %3330 = vmatprep.subr.mxu0 0.0
    %3331 = vmatpush1.msra.mxu0 0.0
    %3332 = vmatprep.subr.mxu0 0.0
    %3333 = vmatpush1.msra.mxu0 0.0
    %3334 = vmatprep.subr.mxu0 0.0
    %3335 = vmatpush1.msra.mxu0 0.0
    %3336 = vmatprep.subr.mxu0 0.0
    %3337 = vmatpush1.msra.mxu0 0.0
    %3338 = vmatprep.subr.mxu0 0.0
    %3339 = vmatpush1.msra.mxu0 0.0
    %3340 = vmatprep.subr.mxu0 0.0
    %3341 = vmatpush1.msra.mxu0 0.0
    %3342 = vmatprep.subr.mxu0 0.0
    %3343 = vmatpush1.msra.mxu0 0.0
    %3344 = vmatprep.subr.mxu0 0.0
    %3345 = vmatpush1.msra.mxu0 0.0
    %3346 = vmatprep.subr.mxu0 0.0
    %3347 = vmatpush1.msra.mxu0 0.0
    %3348 = vmatprep.subr.mxu0 0.0
    %3349 = vmatpush1.msra.mxu0 0.0
    %3350 = vmatprep.subr.mxu0 0.0
    %3351 = vmatpush1.msra.mxu0 0.0
    %3352 = vmatprep.subr.mxu0 0.0
    %3353 = vmatpush1.msra.mxu0 0.0
    %3354 = vmatprep.subr.mxu0 0.0
    %3355 = vmatpush1.msra.mxu0 0.0
    %3356 = vmatprep.subr.mxu0 0.0
    %3357 = vmatpush1.msra.mxu0 0.0
    %3358 = vmatprep.subr.mxu0 0.0
    %3359 = vmatpush1.msra.mxu0 0.0
    %3360 = vmatprep.mubr.f32.mxu0 0.0
    %3361 = vmatmul.mubr.f32.gmra.mrb[0].mxu0 %v3249
    %v3362 = vpop.f32.mrb[0].mxu0
    %v3363 = vadd.f32 0.0, %v3362
    %v3364 = vpop.f32.mrb[0].mxu0
    %3365 = vmatprep.mubr.f32.mxu0 0.0
    %3366 = vmatmul.mubr.f32.gmra.mrb[0].mxu0 %v3252
    %v3367 = vpop.f32.mrb[0].mxu0
    %v3368 = vadd.f32 0.0, %v3367
    %v3369 = vpop.f32.mrb[0].mxu0
    %3370 = vmatprep.mubr.f32.mxu0 0.0
    %3371 = vmatmul.mubr.f32.gmra.mrb[0].mxu0 %v3255
    %v3372 = vpop.f32.mrb[0].mxu0
    %v3373 = vadd.f32 0.0, %v3372
    %v3374 = vpop.f32.mrb[0].mxu0
    %3375 = vmatprep.mubr.f32.mxu0 0.0
    %3376 = vmatmul.mubr.f32.gmra.mrb[0].mxu0 %v3258
    %v3377 = vpop.f32.mrb[0].mxu0
    %v3378 = vadd.f32 0.0, %v3377
    %v3379 = vpop.f32.mrb[0].mxu0
    %3380 = vmatprep.mubr.f32.mxu0 0.0
    %3381 = vmatmul.mubr.f32.gmra.mrb[0].mxu0 %v3261
    %v3382 = vpop.f32.mrb[0].mxu0
    %v3383 = vadd.f32 0.0, %v3382
    %v3384 = vpop.f32.mrb[0].mxu0
    %3385 = vmatprep.mubr.f32.mxu0 0.0
    %3386 = vmatmul.mubr.f32.gmra.mrb[0].mxu0 %v3264
    %v3387 = vpop.f32.mrb[0].mxu0
    %v3388 = vadd.f32 0.0, %v3387
    %v3389 = vpop.f32.mrb[0].mxu0
    %3390 = vmatprep.mubr.f32.mxu0 0.0
    %3391 = vmatmul.mubr.f32.gmra.mrb[0].mxu0 %v3267
    %v3392 = vpop.f32.mrb[0].mxu0
    %v3393 = vadd.f32 0.0, %v3392
    %v3394 = vpop.f32.mrb[0].mxu0
    %3395 = vmatprep.mubr.f32.mxu0 0.0
    %3396 = vmatmul.mubr.f32.gmra.mrb[0].mxu0 %v3270
    %v3397 = vpop.f32.mrb[0].mxu0
    %v3398 = vadd.f32 0.0, %v3397
    %v3399 = vpop.f32.mrb[0].mxu0
    %3400 = vmatprep.mubr.f32.mxu0 0.0
    %3401 = vmatmul.mubr.f32.gmra.mrb[0].mxu0 %v3273
    %v3402 = vpop.f32.mrb[0].mxu0
    %v3403 = vadd.f32 0.0, %v3402
    %v3404 = vpop.f32.mrb[0].mxu0
    %3405 = vmatprep.mubr.f32.mxu0 0.0
    %3406 = vmatmul.mubr.f32.gmra.mrb[0].mxu0 %v3276
    %v3407 = vpop.f32.mrb[0].mxu0
    %v3408 = vadd.f32 0.0, %v3407
    %v3409 = vpop.f32.mrb[0].mxu0
    %3410 = vmatprep.mubr.f32.mxu0 0.0
    %3411 = vmatmul.mubr.f32.gmra.mrb[0].mxu0 %v3279
    %v3412 = vpop.f32.mrb[0].mxu0
    %v3413 = vadd.f32 0.0, %v3412
    %v3414 = vpop.f32.mrb[0].mxu0
    %3415 = vmatprep.mubr.f32.mxu0 0.0
    %3416 = vmatmul.mubr.f32.gmra.mrb[0].mxu0 %v3282
    %v3417 = vpop.f32.mrb[0].mxu0
    %v3418 = vadd.f32 0.0, %v3417
    %v3419 = vpop.f32.mrb[0].mxu0
    %3420 = vmatprep.mubr.f32.mxu0 0.0
    %3421 = vmatmul.mubr.f32.gmra.mrb[0].mxu0 %v3285
    %v3422 = vpop.f32.mrb[0].mxu0
    %v3423 = vadd.f32 0.0, %v3422
    %v3424 = vpop.f32.mrb[0].mxu0
    %3425 = vmatprep.mubr.f32.mxu0 0.0
    %3426 = vmatmul.mubr.f32.gmra.mrb[0].mxu0 %v3288
    %v3427 = vpop.f32.mrb[0].mxu0
    %v3428 = vadd.f32 0.0, %v3427
    %v3429 = vpop.f32.mrb[0].mxu0
    %3430 = vmatprep.mubr.f32.mxu0 0.0
    %3431 = vmatmul.mubr.f32.gmra.mrb[0].mxu0 %v3291
    %v3432 = vpop.f32.mrb[0].mxu0
    %v3433 = vadd.f32 0.0, %v3432
    %v3434 = vpop.f32.mrb[0].mxu0
    %3435 = vmatprep.mubr.f32.mxu0 0.0
    %3436 = vmatmul.mubr.f32.gmra.mrb[0].mxu0 %v3294
    %v3437 = vpop.f32.mrb[0].mxu0
    %v3438 = vadd.f32 0.0, %v3437
    %v3439 = vpop.f32.mrb[0].mxu0
    %3440 = vdwg.mxu0
    %v3441 = vmul.f32 %v3363, %v324
    %v3442 = vmul.f32 %v3368, %v324
    %v3443 = vmul.f32 %v3373, %v328
    %v3444 = vmul.f32 %v3378, %v328
    %v3445 = vmul.f32 %v3383, %v332
    %v3446 = vmul.f32 %v3388, %v332
    %v3447 = vmul.f32 %v3393, %v336
    %v3448 = vmul.f32 %v3398, %v336
    %v3449 = vmul.f32 %v3403, %v340
    %v3450 = vmul.f32 %v3408, %v340
    %v3451 = vmul.f32 %v3413, %v344
    %v3452 = vmul.f32 %v3418, %v344
    %v3453 = vmul.f32 %v3423, %v348
    %v3454 = vmul.f32 %v3428, %v348
    %v3455 = vmul.f32 %v3433, %v352
    %v3456 = vmul.f32 %v3438, %v352
    %v3457 = vsel %vm295, %v3441, 0.0
    %v3458 = vsel %vm295, %v3443, 0.0
    %v3459 = vadd.f32 %v3457, %v3458
    %v3460 = vsel %vm295, %v3445, 0.0
    %v3461 = vadd.f32 %v3459, %v3460
    %v3462 = vsel %vm295, %v3447, 0.0
    %v3463 = vadd.f32 %v3461, %v3462
    %v3464 = vsel %vm295, %v3449, 0.0
    %v3465 = vadd.f32 %v3463, %v3464
    %v3466 = vsel %vm295, %v3451, 0.0
    %v3467 = vadd.f32 %v3465, %v3466
    %v3468 = vsel %vm295, %v3453, 0.0
    %v3469 = vadd.f32 %v3467, %v3468
    %v3470 = vsel %vm295, %v3455, 0.0
    %v3471 = vadd.f32 %v3469, %v3470
    %v3472 = vsel %vm295, %v3442, 0.0
    %v3473 = vsel %vm295, %v3444, 0.0
    %v3474 = vadd.f32 %v3472, %v3473
    %v3475 = vsel %vm295, %v3446, 0.0
    %v3476 = vadd.f32 %v3474, %v3475
    %v3477 = vsel %vm295, %v3448, 0.0
    %v3478 = vadd.f32 %v3476, %v3477
    %v3479 = vsel %vm295, %v3450, 0.0
    %v3480 = vadd.f32 %v3478, %v3479
    %v3481 = vsel %vm295, %v3452, 0.0
    %v3482 = vadd.f32 %v3480, %v3481
    %v3483 = vsel %vm295, %v3454, 0.0
    %v3484 = vadd.f32 %v3482, %v3483
    %v3485 = vsel %vm295, %v3456, 0.0
    %v3486 = vadd.f32 %v3484, %v3485
    %v3487 = vadd.f32 %v3471, %v823
    %v3488 = vadd.f32 %v3486, %v823
    %v3490 = vsel %vm295, %v3487, 0
    %v3493 = vsel %vm295, %v3488, 0
    %3495 = vmatprep.subr.mxu0 0.0
    %3496 = vmatpush1.msra.mxu0 %v1921
    %3497 = vmatprep.subr.mxu0 0.0
    %3498 = vmatpush1.msra.mxu0 %v1922
    %3499 = vmatprep.subr.mxu0 0.0
    %3500 = vmatpush1.msra.mxu0 %v1923
    %3501 = vmatprep.subr.mxu0 0.0
    %3502 = vmatpush1.msra.mxu0 %v1924
    %3503 = vmatprep.subr.mxu0 0.0
    %3504 = vmatpush1.msra.mxu0 0.0
    %3505 = vmatprep.subr.mxu0 0.0
    %3506 = vmatpush1.msra.mxu0 0.0
    %3507 = vmatprep.subr.mxu0 0.0
    %3508 = vmatpush1.msra.mxu0 0.0
    %3509 = vmatprep.subr.mxu0 0.0
    %3510 = vmatpush1.msra.mxu0 0.0
    %3511 = vmatprep.subr.mxu0 0.0
    %3512 = vmatpush1.msra.mxu0 0.0
    %3513 = vmatprep.subr.mxu0 0.0
    %3514 = vmatpush1.msra.mxu0 0.0
    %3515 = vmatprep.subr.mxu0 0.0
    %3516 = vmatpush1.msra.mxu0 0.0
    %3517 = vmatprep.subr.mxu0 0.0
    %3518 = vmatpush1.msra.mxu0 0.0
    %3519 = vmatprep.subr.mxu0 0.0
    %3520 = vmatpush1.msra.mxu0 0.0
    %3521 = vmatprep.subr.mxu0 0.0
    %3522 = vmatpush1.msra.mxu0 0.0
    %3523 = vmatprep.subr.mxu0 0.0
    %3524 = vmatpush1.msra.mxu0 0.0
    %3525 = vmatprep.subr.mxu0 0.0
    %3526 = vmatpush1.msra.mxu0 0.0
    %3527 = vmatprep.subr.mxu0 0.0
    %3528 = vmatpush1.msra.mxu0 0.0
    %3529 = vmatprep.subr.mxu0 0.0
    %3530 = vmatpush1.msra.mxu0 0.0
    %3531 = vmatprep.subr.mxu0 0.0
    %3532 = vmatpush1.msra.mxu0 0.0
    %3533 = vmatprep.subr.mxu0 0.0
    %3534 = vmatpush1.msra.mxu0 0.0
    %3535 = vmatprep.subr.mxu0 0.0
    %3536 = vmatpush1.msra.mxu0 0.0
    %3537 = vmatprep.subr.mxu0 0.0
    %3538 = vmatpush1.msra.mxu0 0.0
    %3539 = vmatprep.subr.mxu0 0.0
    %3540 = vmatpush1.msra.mxu0 0.0
    %3541 = vmatprep.subr.mxu0 0.0
    %3542 = vmatpush1.msra.mxu0 0.0
    %3543 = vmatprep.subr.mxu0 0.0
    %3544 = vmatpush1.msra.mxu0 0.0
    %3545 = vmatprep.subr.mxu0 0.0
    %3546 = vmatpush1.msra.mxu0 0.0
    %3547 = vmatprep.subr.mxu0 0.0
    %3548 = vmatpush1.msra.mxu0 0.0
    %3549 = vmatprep.subr.mxu0 0.0
    %3550 = vmatpush1.msra.mxu0 0.0
    %3551 = vmatprep.subr.mxu0 0.0
    %3552 = vmatpush1.msra.mxu0 0.0
    %3553 = vmatprep.subr.mxu0 0.0
    %3554 = vmatpush1.msra.mxu0 0.0
    %3555 = vmatprep.subr.mxu0 0.0
    %3556 = vmatpush1.msra.mxu0 0.0
    %3557 = vmatprep.subr.mxu0 0.0
    %3558 = vmatpush1.msra.mxu0 0.0
    %3559 = vmatprep.mubr.f32.mxu0 0.0
    %3560 = vmatmul.mubr.f32.gmra.mrb[0].mxu0 %v3490
    %v3561 = vpop.f32.mrb[0].mxu0
    %v3562 = vadd.f32 %v1930, %v3561
    %v3563 = vpop.f32.mrb[0].mxu0
    %3564 = vmatprep.mubr.f32.mxu0 0.0
    %3565 = vmatmul.mubr.f32.gmra.mrb[0].mxu0 %v3493
    %v3566 = vpop.f32.mrb[0].mxu0
    %v3567 = vadd.f32 %v1930, %v3566
    %v3568 = vpop.f32.mrb[0].mxu0
    %3569 = vdwg.mxu0
    %3570 = vmatprep.subr.mxu0 0.0
    %3571 = vmatpush1.msra.mxu0 %v2013
    %3572 = vmatprep.subr.mxu0 0.0
    %3573 = vmatpush1.msra.mxu0 %v2014
    %3574 = vmatprep.subr.mxu0 0.0
    %3575 = vmatpush1.msra.mxu0 %v2015
    %3576 = vmatprep.subr.mxu0 0.0
    %3577 = vmatpush1.msra.mxu0 %v2016
    %3578 = vmatprep.subr.mxu0 0.0
    %3579 = vmatpush1.msra.mxu0 0.0
    %3580 = vmatprep.subr.mxu0 0.0
    %3581 = vmatpush1.msra.mxu0 0.0
    %3582 = vmatprep.subr.mxu0 0.0
    %3583 = vmatpush1.msra.mxu0 0.0
    %3584 = vmatprep.subr.mxu0 0.0
    %3585 = vmatpush1.msra.mxu0 0.0
    %3586 = vmatprep.subr.mxu0 0.0
    %3587 = vmatpush1.msra.mxu0 0.0
    %3588 = vmatprep.subr.mxu0 0.0
    %3589 = vmatpush1.msra.mxu0 0.0
    %3590 = vmatprep.subr.mxu0 0.0
    %3591 = vmatpush1.msra.mxu0 0.0
    %3592 = vmatprep.subr.mxu0 0.0
    %3593 = vmatpush1.msra.mxu0 0.0
    %3594 = vmatprep.subr.mxu0 0.0
    %3595 = vmatpush1.msra.mxu0 0.0
    %3596 = vmatprep.subr.mxu0 0.0
    %3597 = vmatpush1.msra.mxu0 0.0
    %3598 = vmatprep.subr.mxu0 0.0
    %3599 = vmatpush1.msra.mxu0 0.0
    %3600 = vmatprep.subr.mxu0 0.0
    %3601 = vmatpush1.msra.mxu0 0.0
    %3602 = vmatprep.subr.mxu0 0.0
    %3603 = vmatpush1.msra.mxu0 0.0
    %3604 = vmatprep.subr.mxu0 0.0
    %3605 = vmatpush1.msra.mxu0 0.0
    %3606 = vmatprep.subr.mxu0 0.0
    %3607 = vmatpush1.msra.mxu0 0.0
    %3608 = vmatprep.subr.mxu0 0.0
    %3609 = vmatpush1.msra.mxu0 0.0
    %3610 = vmatprep.subr.mxu0 0.0
    %3611 = vmatpush1.msra.mxu0 0.0
    %3612 = vmatprep.subr.mxu0 0.0
    %3613 = vmatpush1.msra.mxu0 0.0
    %3614 = vmatprep.subr.mxu0 0.0
    %3615 = vmatpush1.msra.mxu0 0.0
    %3616 = vmatprep.subr.mxu0 0.0
    %3617 = vmatpush1.msra.mxu0 0.0
    %3618 = vmatprep.subr.mxu0 0.0
    %3619 = vmatpush1.msra.mxu0 0.0
    %3620 = vmatprep.subr.mxu0 0.0
    %3621 = vmatpush1.msra.mxu0 0.0
    %3622 = vmatprep.subr.mxu0 0.0
    %3623 = vmatpush1.msra.mxu0 0.0
    %3624 = vmatprep.subr.mxu0 0.0
    %3625 = vmatpush1.msra.mxu0 0.0
    %3626 = vmatprep.subr.mxu0 0.0
    %3627 = vmatpush1.msra.mxu0 0.0
    %3628 = vmatprep.subr.mxu0 0.0
    %3629 = vmatpush1.msra.mxu0 0.0
    %3630 = vmatprep.subr.mxu0 0.0
    %3631 = vmatpush1.msra.mxu0 0.0
    %3632 = vmatprep.subr.mxu0 0.0
    %3633 = vmatpush1.msra.mxu0 0.0
    %3634 = vmatprep.mubr.f32.mxu0 0.0
    %3635 = vmatmul.mubr.f32.gmra.mrb[0].mxu0 %v2163
    %v3636 = vpop.f32.mrb[0].mxu0
    %v3637 = vadd.f32 %v2022, %v3636
    %v3638 = vpop.f32.mrb[0].mxu0
    %3639 = vmatprep.mubr.f32.mxu0 0.0
    %3640 = vmatmul.mubr.f32.gmra.mrb[0].mxu0 %v2165
    %v3641 = vpop.f32.mrb[0].mxu0
    %v3642 = vadd.f32 %v2022, %v3641
    %v3643 = vpop.f32.mrb[0].mxu0
    %3644 = vdwg.mxu0
    %v3645 = vadd.f32 %v3562, %v3637
    %v3646 = vadd.f32 %v3567, %v3642
    %v3647 = vxor.u32 %v3645, 2147483648
    %v3648 = vxor.u32 %v3646, 2147483648
    %v3649 = vmul.f32 %v3647, 1.442695
    %v3650 = vpow.pop %v3649
    %v3651 = vmul.f32 %v3648, 1.442695
    %v3652 = vpow.pop %v3651
    %v3653 = vadd.f32 %v3650, 1.0
    %v3654 = vadd.f32 %v3652, 1.0
    %v3655 = vrcp.pop %v3653
    %v3656 = vmul.f32 1.0, %v3655
    %v3657 = vrcp.pop %v3654
    %v3658 = vmul.f32 1.0, %v3657
    %3661 = vrot.lane.b32.xlu0 %v3637, 64
    %v3662 = vpop.permute.xlu0 %3661
    %3663 = vrot.lane.b32.xlu0 %v3642, 64
    %v3664 = vpop.permute.xlu0 %3663
    %v3667 = vmul.f32 %v3656, %v3662
    %v3668 = vmul.f32 %v3658, %v3664
    %3671 = vrot.lane.b32.xlu0 %v3667, 64
    %v3672 = vpop.permute.xlu0 %3671
    %3673 = vrot.lane.b32.xlu0 %v3668, 64
    %v3674 = vpop.permute.xlu0 %3673
    %v3677 = vadd.f32 %v3562, %v3672
    %v3678 = vadd.f32 %v3567, %v3674
    %v3679 = vtanh.pop %v3677
    %v3680 = vtanh.pop %v3678
    %v3681 = vsub.f32 1.0, %v3656
    %v3682 = vsub.f32 1.0, %v3658
    %3685 = vrot.lane.b32.xlu0 %v3679, 96
    %v3686 = vpop.permute.xlu0 %3685
    %3687 = vrot.lane.b32.xlu0 %v3680, 96
    %v3688 = vpop.permute.xlu0 %3687
    %v3691 = vmul.f32 %v3681, %v3686
    %v3692 = vmul.f32 %v3682, %v3688
    %v3693 = vmul.f32 %v3656, %v2155
    %v3694 = vmul.f32 %v3658, %v2156
    %v3695 = vadd.f32 %v3691, %v3693
    %v3696 = vadd.f32 %v3692, %v3694
    %3699 = vrot.lane.b32.xlu0 %v3695, 96
    %v3700 = vpop.permute.xlu0 %3699
    %3701 = vrot.lane.b32.xlu0 %v3696, 96
    %v3702 = vpop.permute.xlu0 %3701
    %v3703 = vsel %vm295, %v3700, 0
    %v3705 = vsel %vm295, %v3702, 0
    %3707 = vmatprep.subr.mxu0 0.0
    %3708 = vmatpush1.msra.mxu0 %v827
    %3709 = vmatprep.subr.mxu0 0.0
    %3710 = vmatpush1.msra.mxu0 %v828
    %3711 = vmatprep.subr.mxu0 0.0
    %3712 = vmatpush1.msra.mxu0 %v829
    %3713 = vmatprep.subr.mxu0 0.0
    %3714 = vmatpush1.msra.mxu0 %v830
    %3715 = vmatprep.subr.mxu0 0.0
    %3716 = vmatpush1.msra.mxu0 0.0
    %3717 = vmatprep.subr.mxu0 0.0
    %3718 = vmatpush1.msra.mxu0 0.0
    %3719 = vmatprep.subr.mxu0 0.0
    %3720 = vmatpush1.msra.mxu0 0.0
    %3721 = vmatprep.subr.mxu0 0.0
    %3722 = vmatpush1.msra.mxu0 0.0
    %3723 = vmatprep.subr.mxu0 0.0
    %3724 = vmatpush1.msra.mxu0 0.0
    %3725 = vmatprep.subr.mxu0 0.0
    %3726 = vmatpush1.msra.mxu0 0.0
    %3727 = vmatprep.subr.mxu0 0.0
    %3728 = vmatpush1.msra.mxu0 0.0
    %3729 = vmatprep.subr.mxu0 0.0
    %3730 = vmatpush1.msra.mxu0 0.0
    %3731 = vmatprep.subr.mxu0 0.0
    %3732 = vmatpush1.msra.mxu0 0.0
    %3733 = vmatprep.subr.mxu0 0.0
    %3734 = vmatpush1.msra.mxu0 0.0
    %3735 = vmatprep.subr.mxu0 0.0
    %3736 = vmatpush1.msra.mxu0 0.0
    %3737 = vmatprep.subr.mxu0 0.0
    %3738 = vmatpush1.msra.mxu0 0.0
    %3739 = vmatprep.subr.mxu0 0.0
    %3740 = vmatpush1.msra.mxu0 0.0
    %3741 = vmatprep.subr.mxu0 0.0
    %3742 = vmatpush1.msra.mxu0 0.0
    %3743 = vmatprep.subr.mxu0 0.0
    %3744 = vmatpush1.msra.mxu0 0.0
    %3745 = vmatprep.subr.mxu0 0.0
    %3746 = vmatpush1.msra.mxu0 0.0
    %3747 = vmatprep.subr.mxu0 0.0
    %3748 = vmatpush1.msra.mxu0 0.0
    %3749 = vmatprep.subr.mxu0 0.0
    %3750 = vmatpush1.msra.mxu0 0.0
    %3751 = vmatprep.subr.mxu0 0.0
    %3752 = vmatpush1.msra.mxu0 0.0
    %3753 = vmatprep.subr.mxu0 0.0
    %3754 = vmatpush1.msra.mxu0 0.0
    %3755 = vmatprep.subr.mxu0 0.0
    %3756 = vmatpush1.msra.mxu0 0.0
    %3757 = vmatprep.subr.mxu0 0.0
    %3758 = vmatpush1.msra.mxu0 0.0
    %3759 = vmatprep.subr.mxu0 0.0
    %3760 = vmatpush1.msra.mxu0 0.0
    %3761 = vmatprep.subr.mxu0 0.0
    %3762 = vmatpush1.msra.mxu0 0.0
    %3763 = vmatprep.subr.mxu0 0.0
    %3764 = vmatpush1.msra.mxu0 0.0
    %3765 = vmatprep.subr.mxu0 0.0
    %3766 = vmatpush1.msra.mxu0 0.0
    %3767 = vmatprep.subr.mxu0 0.0
    %3768 = vmatpush1.msra.mxu0 0.0
    %3769 = vmatprep.subr.mxu0 0.0
    %3770 = vmatpush1.msra.mxu0 0.0
    %3771 = vmatprep.mubr.f32.mxu0 0.0
    %3772 = vmatmul.mubr.f32.gmra.mrb[0].mxu0 %v3703
    %v3773 = vpop.f32.mrb[0].mxu0
    %v3774 = vadd.f32 0.0, %v3773
    %v3775 = vpop.f32.mrb[0].mxu0
    %3776 = vmatprep.mubr.f32.mxu0 0.0
    %3777 = vmatmul.mubr.f32.gmra.mrb[0].mxu0 %v3705
    %v3778 = vpop.f32.mrb[0].mxu0
    %v3779 = vadd.f32 0.0, %v3778
    %v3780 = vpop.f32.mrb[0].mxu0
    %3781 = vdwg.mxu0
    %v3782 = vmul.f32 %v3774, %v324
    %v3783 = vmul.f32 %v3779, %v324
    %v3784 = vmul.f32 %v3774, %v328
    %v3785 = vmul.f32 %v3779, %v328
    %v3786 = vmul.f32 %v3774, %v332
    %v3787 = vmul.f32 %v3779, %v332
    %v3788 = vmul.f32 %v3774, %v336
    %v3789 = vmul.f32 %v3779, %v336
    %v3790 = vmul.f32 %v3774, %v340
    %v3791 = vmul.f32 %v3779, %v340
    %v3792 = vmul.f32 %v3774, %v344
    %v3793 = vmul.f32 %v3779, %v344
    %v3794 = vmul.f32 %v3774, %v348
    %v3795 = vmul.f32 %v3779, %v348
    %v3796 = vmul.f32 %v3774, %v352
    %v3797 = vmul.f32 %v3779, %v352
    %3800 = vrot.lane.b32.xlu0 %v3774, 96
    %v3801 = vpop.permute.xlu0 %3800
    %3802 = vrot.lane.b32.xlu0 %v3779, 96
    %v3803 = vpop.permute.xlu0 %3802
    %v3804 = vsel %vm295, %v3801, 0
    %v3806 = vsel %vm295, %v3803, 0
    %v3809 = vsel %vm295, %v3782, 0
    %v3812 = vsel %vm295, %v3783, 0
    %v3815 = vsel %vm295, %v3784, 0
    %v3818 = vsel %vm295, %v3785, 0
    %v3821 = vsel %vm295, %v3786, 0
    %v3824 = vsel %vm295, %v3787, 0
    %v3827 = vsel %vm295, %v3788, 0
    %v3830 = vsel %vm295, %v3789, 0
    %v3833 = vsel %vm295, %v3790, 0
    %v3836 = vsel %vm295, %v3791, 0
    %v3839 = vsel %vm295, %v3792, 0
    %v3842 = vsel %vm295, %v3793, 0
    %v3845 = vsel %vm295, %v3794, 0
    %v3848 = vsel %vm295, %v3795, 0
    %v3851 = vsel %vm295, %v3796, 0
    %v3854 = vsel %vm295, %v3797, 0
    %3856 = vmatprep.subr.mxu0 0.0
    %3857 = vmatpush1.xpose.msra.mxu0 %v3809
    %3858 = vmatprep.subr.mxu0 0.0
    %3859 = vmatpush1.xpose.msra.mxu0 %v3812
    %3860 = vmatprep.subr.mxu0 0.0
    %3861 = vmatpush1.xpose.msra.mxu0 %v3815
    %3862 = vmatprep.subr.mxu0 0.0
    %3863 = vmatpush1.xpose.msra.mxu0 %v3818
    %3864 = vmatprep.subr.mxu0 0.0
    %3865 = vmatpush1.xpose.msra.mxu0 %v3821
    %3866 = vmatprep.subr.mxu0 0.0
    %3867 = vmatpush1.xpose.msra.mxu0 %v3824
    %3868 = vmatprep.subr.mxu0 0.0
    %3869 = vmatpush1.xpose.msra.mxu0 %v3827
    %3870 = vmatprep.subr.mxu0 0.0
    %3871 = vmatpush1.xpose.msra.mxu0 %v3830
    %3872 = vmatprep.subr.mxu0 0.0
    %3873 = vmatpush1.xpose.msra.mxu0 %v3833
    %3874 = vmatprep.subr.mxu0 0.0
    %3875 = vmatpush1.xpose.msra.mxu0 %v3836
    %3876 = vmatprep.subr.mxu0 0.0
    %3877 = vmatpush1.xpose.msra.mxu0 %v3839
    %3878 = vmatprep.subr.mxu0 0.0
    %3879 = vmatpush1.xpose.msra.mxu0 %v3842
    %3880 = vmatprep.subr.mxu0 0.0
    %3881 = vmatpush1.xpose.msra.mxu0 %v3845
    %3882 = vmatprep.subr.mxu0 0.0
    %3883 = vmatpush1.xpose.msra.mxu0 %v3848
    %3884 = vmatprep.subr.mxu0 0.0
    %3885 = vmatpush1.xpose.msra.mxu0 %v3851
    %3886 = vmatprep.subr.mxu0 0.0
    %3887 = vmatpush1.xpose.msra.mxu0 %v3854
    %3888 = vmatprep.subr.mxu0 0.0
    %3889 = vmatpush1.xpose.msra.mxu0 0.0
    %3890 = vmatprep.subr.mxu0 0.0
    %3891 = vmatpush1.xpose.msra.mxu0 0.0
    %3892 = vmatprep.subr.mxu0 0.0
    %3893 = vmatpush1.xpose.msra.mxu0 0.0
    %3894 = vmatprep.subr.mxu0 0.0
    %3895 = vmatpush1.xpose.msra.mxu0 0.0
    %3896 = vmatprep.subr.mxu0 0.0
    %3897 = vmatpush1.xpose.msra.mxu0 0.0
    %3898 = vmatprep.subr.mxu0 0.0
    %3899 = vmatpush1.xpose.msra.mxu0 0.0
    %3900 = vmatprep.subr.mxu0 0.0
    %3901 = vmatpush1.xpose.msra.mxu0 0.0
    %3902 = vmatprep.subr.mxu0 0.0
    %3903 = vmatpush1.xpose.msra.mxu0 0.0
    %3904 = vmatprep.subr.mxu0 0.0
    %3905 = vmatpush1.xpose.msra.mxu0 0.0
    %3906 = vmatprep.subr.mxu0 0.0
    %3907 = vmatpush1.xpose.msra.mxu0 0.0
    %3908 = vmatprep.subr.mxu0 0.0
    %3909 = vmatpush1.xpose.msra.mxu0 0.0
    %3910 = vmatprep.subr.mxu0 0.0
    %3911 = vmatpush1.xpose.msra.mxu0 0.0
    %3912 = vmatprep.subr.mxu0 0.0
    %3913 = vmatpush1.xpose.msra.mxu0 0.0
    %3914 = vmatprep.subr.mxu0 0.0
    %3915 = vmatpush1.xpose.msra.mxu0 0.0
    %3916 = vmatprep.subr.mxu0 0.0
    %3917 = vmatpush1.xpose.msra.mxu0 0.0
    %3918 = vmatprep.subr.mxu0 0.0
    %3919 = vmatpush1.xpose.msra.mxu0 0.0
    %3920 = vmatprep.mubr.f32.mxu0 0.0
    %3921 = vmatmul.mubr.f32.gmra.mrb[0].mxu0 %v3804
    %v3922 = vpop.f32.mrb[0].mxu0
    %v3923 = vadd.f32 0.0, %v3922
    %v3924 = vpop.f32.mrb[0].mxu0
    %3925 = vmatprep.mubr.f32.mxu0 0.0
    %3926 = vmatmul.mubr.f32.gmra.mrb[0].mxu0 %v3806
    %v3927 = vpop.f32.mrb[0].mxu0
    %v3928 = vadd.f32 0.0, %v3927
    %v3929 = vpop.f32.mrb[0].mxu0
    %3930 = vdwg.mxu0
    %vm3931 = vcmp.gt.f32.partialorder %v3923, 0.0
    %vm3932 = vcmp.gt.f32.partialorder %v3928, 0.0
    %v3933 = vmul.f32 %v3923, 0.2
    %v3934 = vmul.f32 %v3928, 0.2
    %v3935 = vsel %vm3931, %v3923, %v3933
    %v3936 = vsel %vm3932, %v3928, %v3934
    %v3937 = vadd.f32 %v3935, %v3028
    %v3938 = vadd.f32 %v3936, %v3029
    %v3939 = vmax.f32 %v3937, %v3938
    %v3940 = vrot.slane %v3939, 4
    %v3941 = vmax.f32 %v3939, %v3940
    %v3942 = vrot.slane %v3941, 2
    %v3943 = vmax.f32 %v3941, %v3942
    %v3944 = vrot.slane %v3943, 1
    %v3945 = vmax.f32 %v3943, %v3944
    %v3946 = vsub.f32 %v3937, %v3945
    %v3947 = vsub.f32 %v3938, %v3945
    %v3948 = vmul.f32 %v3946, 1.442695
    %v3949 = vpow.pop %v3948
    %v3950 = vmul.f32 %v3947, 1.442695
    %v3951 = vpow.pop %v3950
    %v3952 = vadd.f32 %v3949, %v3951
    %v3953 = vrot.slane %v3952, 4
    %v3954 = vadd.f32 %v3952, %v3953
    %v3955 = vrot.slane %v3954, 2
    %v3956 = vadd.f32 %v3954, %v3955
    %v3957 = vrot.slane %v3956, 1
    %v3958 = vadd.f32 %v3956, %v3957
    %v3959 = vrcp.pop %v3958
    %v3960 = vmul.f32 %v3949, %v3959
    %v3961 = vmul.f32 %v3951, %v3959
    %3962 = vxpose.xlu0.b32.start [1/16] %v3960, 128
    %3963 = vxpose.xlu0.b32.cont [2/16] %v3961, 128
    %3964 = vxpose.xlu0.b32.cont [3/16] 0.0, 128
    %3965 = vxpose.xlu0.b32.cont [4/16] 0.0, 128
    %3966 = vxpose.xlu0.b32.cont [5/16] 0.0, 128
    %3967 = vxpose.xlu0.b32.cont [6/16] 0.0, 128
    %3968 = vxpose.xlu0.b32.cont [7/16] 0.0, 128
    %3969 = vxpose.xlu0.b32.cont [8/16] 0.0, 128
    %3970 = vxpose.xlu0.b32.cont [9/16] 0.0, 128
    %3971 = vxpose.xlu0.b32.cont [10/16] 0.0, 128
    %3972 = vxpose.xlu0.b32.cont [11/16] 0.0, 128
    %3973 = vxpose.xlu0.b32.cont [12/16] 0.0, 128
    %3974 = vxpose.xlu0.b32.cont [13/16] 0.0, 128
    %3975 = vxpose.xlu0.b32.cont [14/16] 0.0, 128
    %3976 = vxpose.xlu0.b32.cont [15/16] 0.0, 128
    %3977 = vxpose.xlu0.b32.end [16/16] 0.0, 128
    %v3978 = vpop.trf.xlu0
    %v3979 = vpop.trf.xlu0
    %v3980 = vpop.trf.xlu0
    %v3981 = vpop.trf.xlu0
    %v3982 = vpop.trf.xlu0
    %v3983 = vpop.trf.xlu0
    %v3984 = vpop.trf.xlu0
    %v3985 = vpop.trf.xlu0
    %v3986 = vpop.trf.xlu0
    %v3987 = vpop.trf.xlu0
    %v3988 = vpop.trf.xlu0
    %v3989 = vpop.trf.xlu0
    %v3990 = vpop.trf.xlu0
    %v3991 = vpop.trf.xlu0
    %v3992 = vpop.trf.xlu0
    %v3993 = vpop.trf.xlu0
    %3994 = vrot.lane.b32.xlu0 %v3774, 64
    %v3995 = vpop.permute.xlu0 %3994
    %3996 = vrot.lane.b32.xlu0 %v3779, 64
    %v3997 = vpop.permute.xlu0 %3996
    %v4001 = vsel %vm292, %v3978, 0
    %v4004 = vsel %vm292, %v3979, 0
    %v4007 = vsel %vm292, %v3980, 0
    %v4010 = vsel %vm292, %v3981, 0
    %v4013 = vsel %vm292, %v3982, 0
    %v4016 = vsel %vm292, %v3983, 0
    %v4019 = vsel %vm292, %v3984, 0
    %v4022 = vsel %vm292, %v3985, 0
    %v4025 = vsel %vm292, %v3986, 0
    %v4028 = vsel %vm292, %v3987, 0
    %v4031 = vsel %vm292, %v3988, 0
    %v4034 = vsel %vm292, %v3989, 0
    %v4037 = vsel %vm292, %v3990, 0
    %v4040 = vsel %vm292, %v3991, 0
    %v4043 = vsel %vm292, %v3992, 0
    %v4046 = vsel %vm292, %v3993, 0
    %4048 = vmatprep.subr.mxu0 0.0
    %4049 = vmatpush1.msra.mxu0 %v3995
    %4050 = vmatprep.subr.mxu0 0.0
    %4051 = vmatpush1.msra.mxu0 %v3997
    %4052 = vmatprep.subr.mxu0 0.0
    %4053 = vmatpush1.msra.mxu0 0.0
    %4054 = vmatprep.subr.mxu0 0.0
    %4055 = vmatpush1.msra.mxu0 0.0
    %4056 = vmatprep.subr.mxu0 0.0
    %4057 = vmatpush1.msra.mxu0 0.0
    %4058 = vmatprep.subr.mxu0 0.0
    %4059 = vmatpush1.msra.mxu0 0.0
    %4060 = vmatprep.subr.mxu0 0.0
    %4061 = vmatpush1.msra.mxu0 0.0
    %4062 = vmatprep.subr.mxu0 0.0
    %4063 = vmatpush1.msra.mxu0 0.0
    %4064 = vmatprep.subr.mxu0 0.0
    %4065 = vmatpush1.msra.mxu0 0.0
    %4066 = vmatprep.subr.mxu0 0.0
    %4067 = vmatpush1.msra.mxu0 0.0
    %4068 = vmatprep.subr.mxu0 0.0
    %4069 = vmatpush1.msra.mxu0 0.0
    %4070 = vmatprep.subr.mxu0 0.0
    %4071 = vmatpush1.msra.mxu0 0.0
    %4072 = vmatprep.subr.mxu0 0.0
    %4073 = vmatpush1.msra.mxu0 0.0
    %4074 = vmatprep.subr.mxu0 0.0
    %4075 = vmatpush1.msra.mxu0 0.0
    %4076 = vmatprep.subr.mxu0 0.0
    %4077 = vmatpush1.msra.mxu0 0.0
    %4078 = vmatprep.subr.mxu0 0.0
    %4079 = vmatpush1.msra.mxu0 0.0
    %4080 = vmatprep.subr.mxu0 0.0
    %4081 = vmatpush1.msra.mxu0 0.0
    %4082 = vmatprep.subr.mxu0 0.0
    %4083 = vmatpush1.msra.mxu0 0.0
    %4084 = vmatprep.subr.mxu0 0.0
    %4085 = vmatpush1.msra.mxu0 0.0
    %4086 = vmatprep.subr.mxu0 0.0
    %4087 = vmatpush1.msra.mxu0 0.0
    %4088 = vmatprep.subr.mxu0 0.0
    %4089 = vmatpush1.msra.mxu0 0.0
    %4090 = vmatprep.subr.mxu0 0.0
    %4091 = vmatpush1.msra.mxu0 0.0
    %4092 = vmatprep.subr.mxu0 0.0
    %4093 = vmatpush1.msra.mxu0 0.0
    %4094 = vmatprep.subr.mxu0 0.0
    %4095 = vmatpush1.msra.mxu0 0.0
    %4096 = vmatprep.subr.mxu0 0.0
    %4097 = vmatpush1.msra.mxu0 0.0
    %4098 = vmatprep.subr.mxu0 0.0
    %4099 = vmatpush1.msra.mxu0 0.0
    %4100 = vmatprep.subr.mxu0 0.0
    %4101 = vmatpush1.msra.mxu0 0.0
    %4102 = vmatprep.subr.mxu0 0.0
    %4103 = vmatpush1.msra.mxu0 0.0
    %4104 = vmatprep.subr.mxu0 0.0
    %4105 = vmatpush1.msra.mxu0 0.0
    %4106 = vmatprep.subr.mxu0 0.0
    %4107 = vmatpush1.msra.mxu0 0.0
    %4108 = vmatprep.subr.mxu0 0.0
    %4109 = vmatpush1.msra.mxu0 0.0
    %4110 = vmatprep.subr.mxu0 0.0
    %4111 = vmatpush1.msra.mxu0 0.0
    %4112 = vmatprep.mubr.f32.mxu0 0.0
    %4113 = vmatmul.mubr.f32.gmra.mrb[0].mxu0 %v4001
    %v4114 = vpop.f32.mrb[0].mxu0
    %v4115 = vadd.f32 0.0, %v4114
    %v4116 = vpop.f32.mrb[0].mxu0
    %4117 = vmatprep.mubr.f32.mxu0 0.0
    %4118 = vmatmul.mubr.f32.gmra.mrb[0].mxu0 %v4004
    %v4119 = vpop.f32.mrb[0].mxu0
    %v4120 = vadd.f32 0.0, %v4119
    %v4121 = vpop.f32.mrb[0].mxu0
    %4122 = vmatprep.mubr.f32.mxu0 0.0
    %4123 = vmatmul.mubr.f32.gmra.mrb[0].mxu0 %v4007
    %v4124 = vpop.f32.mrb[0].mxu0
    %v4125 = vadd.f32 0.0, %v4124
    %v4126 = vpop.f32.mrb[0].mxu0
    %4127 = vmatprep.mubr.f32.mxu0 0.0
    %4128 = vmatmul.mubr.f32.gmra.mrb[0].mxu0 %v4010
    %v4129 = vpop.f32.mrb[0].mxu0
    %v4130 = vadd.f32 0.0, %v4129
    %v4131 = vpop.f32.mrb[0].mxu0
    %4132 = vmatprep.mubr.f32.mxu0 0.0
    %4133 = vmatmul.mubr.f32.gmra.mrb[0].mxu0 %v4013
    %v4134 = vpop.f32.mrb[0].mxu0
    %v4135 = vadd.f32 0.0, %v4134
    %v4136 = vpop.f32.mrb[0].mxu0
    %4137 = vmatprep.mubr.f32.mxu0 0.0
    %4138 = vmatmul.mubr.f32.gmra.mrb[0].mxu0 %v4016
    %v4139 = vpop.f32.mrb[0].mxu0
    %v4140 = vadd.f32 0.0, %v4139
    %v4141 = vpop.f32.mrb[0].mxu0
    %4142 = vmatprep.mubr.f32.mxu0 0.0
    %4143 = vmatmul.mubr.f32.gmra.mrb[0].mxu0 %v4019
    %v4144 = vpop.f32.mrb[0].mxu0
    %v4145 = vadd.f32 0.0, %v4144
    %v4146 = vpop.f32.mrb[0].mxu0
    %4147 = vmatprep.mubr.f32.mxu0 0.0
    %4148 = vmatmul.mubr.f32.gmra.mrb[0].mxu0 %v4022
    %v4149 = vpop.f32.mrb[0].mxu0
    %v4150 = vadd.f32 0.0, %v4149
    %v4151 = vpop.f32.mrb[0].mxu0
    %4152 = vmatprep.mubr.f32.mxu0 0.0
    %4153 = vmatmul.mubr.f32.gmra.mrb[0].mxu0 %v4025
    %v4154 = vpop.f32.mrb[0].mxu0
    %v4155 = vadd.f32 0.0, %v4154
    %v4156 = vpop.f32.mrb[0].mxu0
    %4157 = vmatprep.mubr.f32.mxu0 0.0
    %4158 = vmatmul.mubr.f32.gmra.mrb[0].mxu0 %v4028
    %v4159 = vpop.f32.mrb[0].mxu0
    %v4160 = vadd.f32 0.0, %v4159
    %v4161 = vpop.f32.mrb[0].mxu0
    %4162 = vmatprep.mubr.f32.mxu0 0.0
    %4163 = vmatmul.mubr.f32.gmra.mrb[0].mxu0 %v4031
    %v4164 = vpop.f32.mrb[0].mxu0
    %v4165 = vadd.f32 0.0, %v4164
    %v4166 = vpop.f32.mrb[0].mxu0
    %4167 = vmatprep.mubr.f32.mxu0 0.0
    %4168 = vmatmul.mubr.f32.gmra.mrb[0].mxu0 %v4034
    %v4169 = vpop.f32.mrb[0].mxu0
    %v4170 = vadd.f32 0.0, %v4169
    %v4171 = vpop.f32.mrb[0].mxu0
    %4172 = vmatprep.mubr.f32.mxu0 0.0
    %4173 = vmatmul.mubr.f32.gmra.mrb[0].mxu0 %v4037
    %v4174 = vpop.f32.mrb[0].mxu0
    %v4175 = vadd.f32 0.0, %v4174
    %v4176 = vpop.f32.mrb[0].mxu0
    %4177 = vmatprep.mubr.f32.mxu0 0.0
    %4178 = vmatmul.mubr.f32.gmra.mrb[0].mxu0 %v4040
    %v4179 = vpop.f32.mrb[0].mxu0
    %v4180 = vadd.f32 0.0, %v4179
    %v4181 = vpop.f32.mrb[0].mxu0
    %4182 = vmatprep.mubr.f32.mxu0 0.0
    %4183 = vmatmul.mubr.f32.gmra.mrb[0].mxu0 %v4043
    %v4184 = vpop.f32.mrb[0].mxu0
    %v4185 = vadd.f32 0.0, %v4184
    %v4186 = vpop.f32.mrb[0].mxu0
    %4187 = vmatprep.mubr.f32.mxu0 0.0
    %4188 = vmatmul.mubr.f32.gmra.mrb[0].mxu0 %v4046
    %v4189 = vpop.f32.mrb[0].mxu0
    %v4190 = vadd.f32 0.0, %v4189
    %v4191 = vpop.f32.mrb[0].mxu0
    %4192 = vdwg.mxu0
    %v4193 = vmul.f32 %v4115, %v324
    %v4194 = vmul.f32 %v4120, %v324
    %v4195 = vmul.f32 %v4125, %v328
    %v4196 = vmul.f32 %v4130, %v328
    %v4197 = vmul.f32 %v4135, %v332
    %v4198 = vmul.f32 %v4140, %v332
    %v4199 = vmul.f32 %v4145, %v336
    %v4200 = vmul.f32 %v4150, %v336
    %v4201 = vmul.f32 %v4155, %v340
    %v4202 = vmul.f32 %v4160, %v340
    %v4203 = vmul.f32 %v4165, %v344
    %v4204 = vmul.f32 %v4170, %v344
    %v4205 = vmul.f32 %v4175, %v348
    %v4206 = vmul.f32 %v4180, %v348
    %v4207 = vmul.f32 %v4185, %v352
    %v4208 = vmul.f32 %v4190, %v352
    %v4209 = vsel %vm295, %v4193, 0.0
    %v4210 = vsel %vm295, %v4195, 0.0
    %v4211 = vadd.f32 %v4209, %v4210
    %v4212 = vsel %vm295, %v4197, 0.0
    %v4213 = vadd.f32 %v4211, %v4212
    %v4214 = vsel %vm295, %v4199, 0.0
    %v4215 = vadd.f32 %v4213, %v4214
    %v4216 = vsel %vm295, %v4201, 0.0
    %v4217 = vadd.f32 %v4215, %v4216
    %v4218 = vsel %vm295, %v4203, 0.0
    %v4219 = vadd.f32 %v4217, %v4218
    %v4220 = vsel %vm295, %v4205, 0.0
    %v4221 = vadd.f32 %v4219, %v4220
    %v4222 = vsel %vm295, %v4207, 0.0
    %v4223 = vadd.f32 %v4221, %v4222
    %v4224 = vsel %vm295, %v4194, 0.0
    %v4225 = vsel %vm295, %v4196, 0.0
    %v4226 = vadd.f32 %v4224, %v4225
    %v4227 = vsel %vm295, %v4198, 0.0
    %v4228 = vadd.f32 %v4226, %v4227
    %v4229 = vsel %vm295, %v4200, 0.0
    %v4230 = vadd.f32 %v4228, %v4229
    %v4231 = vsel %vm295, %v4202, 0.0
    %v4232 = vadd.f32 %v4230, %v4231
    %v4233 = vsel %vm295, %v4204, 0.0
    %v4234 = vadd.f32 %v4232, %v4233
    %v4235 = vsel %vm295, %v4206, 0.0
    %v4236 = vadd.f32 %v4234, %v4235
    %v4237 = vsel %vm295, %v4208, 0.0
    %v4238 = vadd.f32 %v4236, %v4237
    %v4239 = vadd.f32 %v4223, %v1374
    %v4240 = vadd.f32 %v4238, %v1374
    %v4242 = vsel %vm295, %v4239, 0
    %v4245 = vsel %vm295, %v4240, 0
    %4247 = vmatprep.subr.mxu0 0.0
    %4248 = vmatpush1.msra.mxu0 %v2701
    %4249 = vmatprep.subr.mxu0 0.0
    %4250 = vmatpush1.msra.mxu0 %v2702
    %4251 = vmatprep.subr.mxu0 0.0
    %4252 = vmatpush1.msra.mxu0 %v2703
    %4253 = vmatprep.subr.mxu0 0.0
    %4254 = vmatpush1.msra.mxu0 %v2704
    %4255 = vmatprep.subr.mxu0 0.0
    %4256 = vmatpush1.msra.mxu0 0.0
    %4257 = vmatprep.subr.mxu0 0.0
    %4258 = vmatpush1.msra.mxu0 0.0
    %4259 = vmatprep.subr.mxu0 0.0
    %4260 = vmatpush1.msra.mxu0 0.0
    %4261 = vmatprep.subr.mxu0 0.0
    %4262 = vmatpush1.msra.mxu0 0.0
    %4263 = vmatprep.subr.mxu0 0.0
    %4264 = vmatpush1.msra.mxu0 0.0
    %4265 = vmatprep.subr.mxu0 0.0
    %4266 = vmatpush1.msra.mxu0 0.0
    %4267 = vmatprep.subr.mxu0 0.0
    %4268 = vmatpush1.msra.mxu0 0.0
    %4269 = vmatprep.subr.mxu0 0.0
    %4270 = vmatpush1.msra.mxu0 0.0
    %4271 = vmatprep.subr.mxu0 0.0
    %4272 = vmatpush1.msra.mxu0 0.0
    %4273 = vmatprep.subr.mxu0 0.0
    %4274 = vmatpush1.msra.mxu0 0.0
    %4275 = vmatprep.subr.mxu0 0.0
    %4276 = vmatpush1.msra.mxu0 0.0
    %4277 = vmatprep.subr.mxu0 0.0
    %4278 = vmatpush1.msra.mxu0 0.0
    %4279 = vmatprep.subr.mxu0 0.0
    %4280 = vmatpush1.msra.mxu0 0.0
    %4281 = vmatprep.subr.mxu0 0.0
    %4282 = vmatpush1.msra.mxu0 0.0
    %4283 = vmatprep.subr.mxu0 0.0
    %4284 = vmatpush1.msra.mxu0 0.0
    %4285 = vmatprep.subr.mxu0 0.0
    %4286 = vmatpush1.msra.mxu0 0.0
    %4287 = vmatprep.subr.mxu0 0.0
    %4288 = vmatpush1.msra.mxu0 0.0
    %4289 = vmatprep.subr.mxu0 0.0
    %4290 = vmatpush1.msra.mxu0 0.0
    %4291 = vmatprep.subr.mxu0 0.0
    %4292 = vmatpush1.msra.mxu0 0.0
    %4293 = vmatprep.subr.mxu0 0.0
    %4294 = vmatpush1.msra.mxu0 0.0
    %4295 = vmatprep.subr.mxu0 0.0
    %4296 = vmatpush1.msra.mxu0 0.0
    %4297 = vmatprep.subr.mxu0 0.0
    %4298 = vmatpush1.msra.mxu0 0.0
    %4299 = vmatprep.subr.mxu0 0.0
    %4300 = vmatpush1.msra.mxu0 0.0
    %4301 = vmatprep.subr.mxu0 0.0
    %4302 = vmatpush1.msra.mxu0 0.0
    %4303 = vmatprep.subr.mxu0 0.0
    %4304 = vmatpush1.msra.mxu0 0.0
    %4305 = vmatprep.subr.mxu0 0.0
    %4306 = vmatpush1.msra.mxu0 0.0
    %4307 = vmatprep.subr.mxu0 0.0
    %4308 = vmatpush1.msra.mxu0 0.0
    %4309 = vmatprep.subr.mxu0 0.0
    %4310 = vmatpush1.msra.mxu0 0.0
    %4311 = vmatprep.mubr.f32.mxu0 0.0
    %4312 = vmatmul.mubr.f32.gmra.mrb[0].mxu0 %v4242
    %v4313 = vpop.f32.mrb[0].mxu0
    %v4314 = vadd.f32 %v2710, %v4313
    %v4315 = vpop.f32.mrb[0].mxu0
    %4316 = vmatprep.mubr.f32.mxu0 0.0
    %4317 = vmatmul.mubr.f32.gmra.mrb[0].mxu0 %v4245
    %v4318 = vpop.f32.mrb[0].mxu0
    %v4319 = vadd.f32 %v2710, %v4318
    %v4320 = vpop.f32.mrb[0].mxu0
    %4321 = vdwg.mxu0
    %4324 = vrot.lane.b32.xlu0 %v2941, 96
    %v4325 = vpop.permute.xlu0 %4324
    %4326 = vrot.lane.b32.xlu0 %v2942, 96
    %v4327 = vpop.permute.xlu0 %4326
    %v4328 = vsel %vm295, %v4325, 0
    %v4330 = vsel %vm295, %v4327, 0
    %4332 = vmatprep.subr.mxu0 0.0
    %4333 = vmatpush1.msra.mxu0 %v2793
    %4334 = vmatprep.subr.mxu0 0.0
    %4335 = vmatpush1.msra.mxu0 %v2794
    %4336 = vmatprep.subr.mxu0 0.0
    %4337 = vmatpush1.msra.mxu0 %v2795
    %4338 = vmatprep.subr.mxu0 0.0
    %4339 = vmatpush1.msra.mxu0 %v2796
    %4340 = vmatprep.subr.mxu0 0.0
    %4341 = vmatpush1.msra.mxu0 0.0
    %4342 = vmatprep.subr.mxu0 0.0
    %4343 = vmatpush1.msra.mxu0 0.0
    %4344 = vmatprep.subr.mxu0 0.0
    %4345 = vmatpush1.msra.mxu0 0.0
    %4346 = vmatprep.subr.mxu0 0.0
    %4347 = vmatpush1.msra.mxu0 0.0
    %4348 = vmatprep.subr.mxu0 0.0
    %4349 = vmatpush1.msra.mxu0 0.0
    %4350 = vmatprep.subr.mxu0 0.0
    %4351 = vmatpush1.msra.mxu0 0.0
    %4352 = vmatprep.subr.mxu0 0.0
    %4353 = vmatpush1.msra.mxu0 0.0
    %4354 = vmatprep.subr.mxu0 0.0
    %4355 = vmatpush1.msra.mxu0 0.0
    %4356 = vmatprep.subr.mxu0 0.0
    %4357 = vmatpush1.msra.mxu0 0.0
    %4358 = vmatprep.subr.mxu0 0.0
    %4359 = vmatpush1.msra.mxu0 0.0
    %4360 = vmatprep.subr.mxu0 0.0
    %4361 = vmatpush1.msra.mxu0 0.0
    %4362 = vmatprep.subr.mxu0 0.0
    %4363 = vmatpush1.msra.mxu0 0.0
    %4364 = vmatprep.subr.mxu0 0.0
    %4365 = vmatpush1.msra.mxu0 0.0
    %4366 = vmatprep.subr.mxu0 0.0
    %4367 = vmatpush1.msra.mxu0 0.0
    %4368 = vmatprep.subr.mxu0 0.0
    %4369 = vmatpush1.msra.mxu0 0.0
    %4370 = vmatprep.subr.mxu0 0.0
    %4371 = vmatpush1.msra.mxu0 0.0
    %4372 = vmatprep.subr.mxu0 0.0
    %4373 = vmatpush1.msra.mxu0 0.0
    %4374 = vmatprep.subr.mxu0 0.0
    %4375 = vmatpush1.msra.mxu0 0.0
    %4376 = vmatprep.subr.mxu0 0.0
    %4377 = vmatpush1.msra.mxu0 0.0
    %4378 = vmatprep.subr.mxu0 0.0
    %4379 = vmatpush1.msra.mxu0 0.0
    %4380 = vmatprep.subr.mxu0 0.0
    %4381 = vmatpush1.msra.mxu0 0.0
    %4382 = vmatprep.subr.mxu0 0.0
    %4383 = vmatpush1.msra.mxu0 0.0
    %4384 = vmatprep.subr.mxu0 0.0
    %4385 = vmatpush1.msra.mxu0 0.0
    %4386 = vmatprep.subr.mxu0 0.0
    %4387 = vmatpush1.msra.mxu0 0.0
    %4388 = vmatprep.subr.mxu0 0.0
    %4389 = vmatpush1.msra.mxu0 0.0
    %4390 = vmatprep.subr.mxu0 0.0
    %4391 = vmatpush1.msra.mxu0 0.0
    %4392 = vmatprep.subr.mxu0 0.0
    %4393 = vmatpush1.msra.mxu0 0.0
    %4394 = vmatprep.subr.mxu0 0.0
    %4395 = vmatpush1.msra.mxu0 0.0
    %4396 = vmatprep.mubr.f32.mxu0 0.0
    %4397 = vmatmul.mubr.f32.gmra.mrb[0].mxu0 %v4328
    %v4398 = vpop.f32.mrb[0].mxu0
    %v4399 = vadd.f32 %v2802, %v4398
    %v4400 = vpop.f32.mrb[0].mxu0
    %4401 = vmatprep.mubr.f32.mxu0 0.0
    %4402 = vmatmul.mubr.f32.gmra.mrb[0].mxu0 %v4330
    %v4403 = vpop.f32.mrb[0].mxu0
    %v4404 = vadd.f32 %v2802, %v4403
    %v4405 = vpop.f32.mrb[0].mxu0
    %4406 = vdwg.mxu0
    %v4407 = vadd.f32 %v4314, %v4399
    %v4408 = vadd.f32 %v4319, %v4404
    %v4409 = vxor.u32 %v4407, 2147483648
    %v4410 = vxor.u32 %v4408, 2147483648
    %v4411 = vmul.f32 %v4409, 1.442695
    %v4412 = vpow.pop %v4411
    %v4413 = vmul.f32 %v4410, 1.442695
    %v4414 = vpow.pop %v4413
    %v4415 = vadd.f32 %v4412, 1.0
    %v4416 = vadd.f32 %v4414, 1.0
    %v4417 = vrcp.pop %v4415
    %v4418 = vmul.f32 1.0, %v4417
    %v4419 = vrcp.pop %v4416
    %v4420 = vmul.f32 1.0, %v4419
    %4423 = vrot.lane.b32.xlu0 %v4399, 64
    %v4424 = vpop.permute.xlu0 %4423
    %4425 = vrot.lane.b32.xlu0 %v4404, 64
    %v4426 = vpop.permute.xlu0 %4425
    %v4429 = vmul.f32 %v4418, %v4424
    %v4430 = vmul.f32 %v4420, %v4426
    %4433 = vrot.lane.b32.xlu0 %v4429, 64
    %v4434 = vpop.permute.xlu0 %4433
    %4435 = vrot.lane.b32.xlu0 %v4430, 64
    %v4436 = vpop.permute.xlu0 %4435
    %v4439 = vadd.f32 %v4314, %v4434
    %v4440 = vadd.f32 %v4319, %v4436
    %v4441 = vtanh.pop %v4439
    %v4442 = vtanh.pop %v4440
    %v4443 = vsub.f32 1.0, %v4418
    %v4444 = vsub.f32 1.0, %v4420
    %4447 = vrot.lane.b32.xlu0 %v4441, 96
    %v4448 = vpop.permute.xlu0 %4447
    %4449 = vrot.lane.b32.xlu0 %v4442, 96
    %v4450 = vpop.permute.xlu0 %4449
    %v4453 = vmul.f32 %v4443, %v4448
    %v4454 = vmul.f32 %v4444, %v4450
    %v4455 = vmul.f32 %v4418, %v2941
    %v4456 = vmul.f32 %v4420, %v2942
    %v4457 = vadd.f32 %v4453, %v4455
    %v4458 = vadd.f32 %v4454, %v4456
    %v4459 = vsel %vm2943, %v4457, 0.0
    %v4460 = vsel %vm2943, %v4458, 0.0
    %v4461 = vadd.f32 %v4459, %v4460
    %v4462 = vrot.slane %v4461, 4
    %v4463 = vadd.f32 %v4461, %v4462
    %v4464 = vrot.slane %v4463, 2
    %v4465 = vadd.f32 %v4463, %v4464
    %v4466 = vrot.slane %v4465, 1
    %v4467 = vadd.f32 %v4465, %v4466
    %v4468 = vmul.f32 %v4467, %v1387
    %4469 = vset.pattern.permute.xlu0 2
    %4470 = vperm.xlu0 %4469, %v80
    %v4471 = vpop.permute.xlu0 %4470
    %v4473 = vlaneseq
    %v4474 = vshrl.u32 %v4473, 7
    %v4475 = vsub.s32 0, %v4474
    %v4476 = vrot.slane %v4471, %v4475
    %v4477 = vmul.f32 %v4476, %v4468
    %4479 = vrot.lane.b32.xlu0 %v4477, 96
    %v4480 = vpop.permute.xlu0 %4479
    %v4482 = vadd.f32 %v2967, %v4480
    %v4483 = vsub.f32 %v103, 1.0
    %v4484 = vsub.f32 %v104, 1.0
    %v4485 = vmul.f32 %v4483, 1e+30
    %v4486 = vmul.f32 %v4484, 1e+30
    %4489 = vrot.lane.b32.xlu0 %v4485, 16
    %v4490 = vpop.permute.xlu0 %4489
    %4491 = vrot.lane.b32.xlu0 %v4486, 16
    %v4492 = vpop.permute.xlu0 %4491
    %4495 = vrot.lane.b32.xlu0 %v4485, 32
    %v4496 = vpop.permute.xlu0 %4495
    %4497 = vrot.lane.b32.xlu0 %v4486, 32
    %v4498 = vpop.permute.xlu0 %4497
    %4501 = vrot.lane.b32.xlu0 %v4485, 48
    %v4502 = vpop.permute.xlu0 %4501
    %4503 = vrot.lane.b32.xlu0 %v4486, 48
    %v4504 = vpop.permute.xlu0 %4503
    %4507 = vrot.lane.b32.xlu0 %v4485, 64
    %v4508 = vpop.permute.xlu0 %4507
    %4509 = vrot.lane.b32.xlu0 %v4486, 64
    %v4510 = vpop.permute.xlu0 %4509
    %4513 = vrot.lane.b32.xlu0 %v4485, 80
    %v4514 = vpop.permute.xlu0 %4513
    %4515 = vrot.lane.b32.xlu0 %v4486, 80
    %v4516 = vpop.permute.xlu0 %4515
    %4519 = vrot.lane.b32.xlu0 %v4485, 96
    %v4520 = vpop.permute.xlu0 %4519
    %4521 = vrot.lane.b32.xlu0 %v4486, 96
    %v4522 = vpop.permute.xlu0 %4521
    %4525 = vrot.lane.b32.xlu0 %v4485, 112
    %v4526 = vpop.permute.xlu0 %4525
    %4527 = vrot.lane.b32.xlu0 %v4486, 112
    %v4528 = vpop.permute.xlu0 %4527
    %v4531 = vsel %vm292, %v4485, %v4490
    %v4532 = vsel %vm292, %v4486, %v4492
    %v4533 = vsel %vm295, %v4531, %v4496
    %v4534 = vsel %vm295, %v4532, %v4498
    %v4535 = vsel %vm298, %v4533, %v4502
    %v4536 = vsel %vm298, %v4534, %v4504
    %v4537 = vsel %vm301, %v4535, %v4508
    %v4538 = vsel %vm301, %v4536, %v4510
    %v4539 = vsel %vm304, %v4537, %v4514
    %v4540 = vsel %vm304, %v4538, %v4516
    %v4541 = vsel %vm307, %v4539, %v4520
    %v4542 = vsel %vm307, %v4540, %v4522
    %v4543 = vsel %vm310, %v4541, %v4526
    %v4544 = vsel %vm310, %v4542, %v4528
    %v4545 = vmul.f32 %v236, %v324
    %v4546 = vmul.f32 %v241, %v324
    %v4547 = vmul.f32 %v236, %v328
    %v4548 = vmul.f32 %v241, %v328
    %v4549 = vmul.f32 %v236, %v332
    %v4550 = vmul.f32 %v241, %v332
    %v4551 = vmul.f32 %v236, %v336
    %v4552 = vmul.f32 %v241, %v336
    %v4553 = vmul.f32 %v236, %v340
    %v4554 = vmul.f32 %v241, %v340
    %v4555 = vmul.f32 %v236, %v344
    %v4556 = vmul.f32 %v241, %v344
    %v4557 = vmul.f32 %v236, %v348
    %v4558 = vmul.f32 %v241, %v348
    %v4559 = vmul.f32 %v236, %v352
    %v4560 = vmul.f32 %v241, %v352
    %4563 = vrot.lane.b32.xlu0 %v236, 96
    %v4564 = vpop.permute.xlu0 %4563
    %4565 = vrot.lane.b32.xlu0 %v241, 96
    %v4566 = vpop.permute.xlu0 %4565
    %v4567 = vsel %vm295, %v4564, 0
    %v4569 = vsel %vm295, %v4566, 0
    %v4572 = vsel %vm295, %v4545, 0
    %v4575 = vsel %vm295, %v4546, 0
    %v4578 = vsel %vm295, %v4547, 0
    %v4581 = vsel %vm295, %v4548, 0
    %v4584 = vsel %vm295, %v4549, 0
    %v4587 = vsel %vm295, %v4550, 0
    %v4590 = vsel %vm295, %v4551, 0
    %v4593 = vsel %vm295, %v4552, 0
    %v4596 = vsel %vm295, %v4553, 0
    %v4599 = vsel %vm295, %v4554, 0
    %v4602 = vsel %vm295, %v4555, 0
    %v4605 = vsel %vm295, %v4556, 0
    %v4608 = vsel %vm295, %v4557, 0
    %v4611 = vsel %vm295, %v4558, 0
    %v4614 = vsel %vm295, %v4559, 0
    %v4617 = vsel %vm295, %v4560, 0
    %4619 = vmatprep.subr.mxu0 0.0
    %4620 = vmatpush1.xpose.msra.mxu0 %v4572
    %4621 = vmatprep.subr.mxu0 0.0
    %4622 = vmatpush1.xpose.msra.mxu0 %v4575
    %4623 = vmatprep.subr.mxu0 0.0
    %4624 = vmatpush1.xpose.msra.mxu0 %v4578
    %4625 = vmatprep.subr.mxu0 0.0
    %4626 = vmatpush1.xpose.msra.mxu0 %v4581
    %4627 = vmatprep.subr.mxu0 0.0
    %4628 = vmatpush1.xpose.msra.mxu0 %v4584
    %4629 = vmatprep.subr.mxu0 0.0
    %4630 = vmatpush1.xpose.msra.mxu0 %v4587
    %4631 = vmatprep.subr.mxu0 0.0
    %4632 = vmatpush1.xpose.msra.mxu0 %v4590
    %4633 = vmatprep.subr.mxu0 0.0
    %4634 = vmatpush1.xpose.msra.mxu0 %v4593
    %4635 = vmatprep.subr.mxu0 0.0
    %4636 = vmatpush1.xpose.msra.mxu0 %v4596
    %4637 = vmatprep.subr.mxu0 0.0
    %4638 = vmatpush1.xpose.msra.mxu0 %v4599
    %4639 = vmatprep.subr.mxu0 0.0
    %4640 = vmatpush1.xpose.msra.mxu0 %v4602
    %4641 = vmatprep.subr.mxu0 0.0
    %4642 = vmatpush1.xpose.msra.mxu0 %v4605
    %4643 = vmatprep.subr.mxu0 0.0
    %4644 = vmatpush1.xpose.msra.mxu0 %v4608
    %4645 = vmatprep.subr.mxu0 0.0
    %4646 = vmatpush1.xpose.msra.mxu0 %v4611
    %4647 = vmatprep.subr.mxu0 0.0
    %4648 = vmatpush1.xpose.msra.mxu0 %v4614
    %4649 = vmatprep.subr.mxu0 0.0
    %4650 = vmatpush1.xpose.msra.mxu0 %v4617
    %4651 = vmatprep.subr.mxu0 0.0
    %4652 = vmatpush1.xpose.msra.mxu0 0.0
    %4653 = vmatprep.subr.mxu0 0.0
    %4654 = vmatpush1.xpose.msra.mxu0 0.0
    %4655 = vmatprep.subr.mxu0 0.0
    %4656 = vmatpush1.xpose.msra.mxu0 0.0
    %4657 = vmatprep.subr.mxu0 0.0
    %4658 = vmatpush1.xpose.msra.mxu0 0.0
    %4659 = vmatprep.subr.mxu0 0.0
    %4660 = vmatpush1.xpose.msra.mxu0 0.0
    %4661 = vmatprep.subr.mxu0 0.0
    %4662 = vmatpush1.xpose.msra.mxu0 0.0
    %4663 = vmatprep.subr.mxu0 0.0
    %4664 = vmatpush1.xpose.msra.mxu0 0.0
    %4665 = vmatprep.subr.mxu0 0.0
    %4666 = vmatpush1.xpose.msra.mxu0 0.0
    %4667 = vmatprep.subr.mxu0 0.0
    %4668 = vmatpush1.xpose.msra.mxu0 0.0
    %4669 = vmatprep.subr.mxu0 0.0
    %4670 = vmatpush1.xpose.msra.mxu0 0.0
    %4671 = vmatprep.subr.mxu0 0.0
    %4672 = vmatpush1.xpose.msra.mxu0 0.0
    %4673 = vmatprep.subr.mxu0 0.0
    %4674 = vmatpush1.xpose.msra.mxu0 0.0
    %4675 = vmatprep.subr.mxu0 0.0
    %4676 = vmatpush1.xpose.msra.mxu0 0.0
    %4677 = vmatprep.subr.mxu0 0.0
    %4678 = vmatpush1.xpose.msra.mxu0 0.0
    %4679 = vmatprep.subr.mxu0 0.0
    %4680 = vmatpush1.xpose.msra.mxu0 0.0
    %4681 = vmatprep.subr.mxu0 0.0
    %4682 = vmatpush1.xpose.msra.mxu0 0.0
    %4683 = vmatprep.mubr.f32.mxu0 0.0
    %4684 = vmatmul.mubr.f32.gmra.mrb[0].mxu0 %v4567
    %v4685 = vpop.f32.mrb[0].mxu0
    %v4686 = vadd.f32 0.0, %v4685
    %v4687 = vpop.f32.mrb[0].mxu0
    %4688 = vmatprep.mubr.f32.mxu0 0.0
    %4689 = vmatmul.mubr.f32.gmra.mrb[0].mxu0 %v4569
    %v4690 = vpop.f32.mrb[0].mxu0
    %v4691 = vadd.f32 0.0, %v4690
    %v4692 = vpop.f32.mrb[0].mxu0
    %4693 = vdwg.mxu0
    %vm4694 = vcmp.gt.f32.partialorder %v4686, 0.0
    %vm4695 = vcmp.gt.f32.partialorder %v4691, 0.0
    %v4696 = vmul.f32 %v4686, 0.2
    %v4697 = vmul.f32 %v4691, 0.2
    %v4698 = vsel %vm4694, %v4686, %v4696
    %v4699 = vsel %vm4695, %v4691, %v4697
    %v4700 = vadd.f32 %v4698, %v4543
    %v4701 = vadd.f32 %v4699, %v4544
    %v4702 = vmax.f32 %v4700, %v4701
    %v4703 = vrot.slane %v4702, 4
    %v4704 = vmax.f32 %v4702, %v4703
    %v4705 = vrot.slane %v4704, 2
    %v4706 = vmax.f32 %v4704, %v4705
    %v4707 = vrot.slane %v4706, 1
    %v4708 = vmax.f32 %v4706, %v4707
    %v4709 = vsub.f32 %v4700, %v4708
    %v4710 = vsub.f32 %v4701, %v4708
    %v4711 = vmul.f32 %v4709, 1.442695
    %v4712 = vpow.pop %v4711
    %v4713 = vmul.f32 %v4710, 1.442695
    %v4714 = vpow.pop %v4713
    %v4715 = vadd.f32 %v4712, %v4714
    %v4716 = vrot.slane %v4715, 4
    %v4717 = vadd.f32 %v4715, %v4716
    %v4718 = vrot.slane %v4717, 2
    %v4719 = vadd.f32 %v4717, %v4718
    %v4720 = vrot.slane %v4719, 1
    %v4721 = vadd.f32 %v4719, %v4720
    %v4722 = vrcp.pop %v4721
    %v4723 = vmul.f32 %v4712, %v4722
    %v4724 = vmul.f32 %v4714, %v4722
    %4725 = vxpose.xlu0.b32.start [1/16] %v4723, 128
    %4726 = vxpose.xlu0.b32.cont [2/16] %v4724, 128
    %4727 = vxpose.xlu0.b32.cont [3/16] 0.0, 128
    %4728 = vxpose.xlu0.b32.cont [4/16] 0.0, 128
    %4729 = vxpose.xlu0.b32.cont [5/16] 0.0, 128
    %4730 = vxpose.xlu0.b32.cont [6/16] 0.0, 128
    %4731 = vxpose.xlu0.b32.cont [7/16] 0.0, 128
    %4732 = vxpose.xlu0.b32.cont [8/16] 0.0, 128
    %4733 = vxpose.xlu0.b32.cont [9/16] 0.0, 128
    %4734 = vxpose.xlu0.b32.cont [10/16] 0.0, 128
    %4735 = vxpose.xlu0.b32.cont [11/16] 0.0, 128
    %4736 = vxpose.xlu0.b32.cont [12/16] 0.0, 128
    %4737 = vxpose.xlu0.b32.cont [13/16] 0.0, 128
    %4738 = vxpose.xlu0.b32.cont [14/16] 0.0, 128
    %4739 = vxpose.xlu0.b32.cont [15/16] 0.0, 128
    %4740 = vxpose.xlu0.b32.end [16/16] 0.0, 128
    %v4741 = vpop.trf.xlu0
    %v4742 = vpop.trf.xlu0
    %v4743 = vpop.trf.xlu0
    %v4744 = vpop.trf.xlu0
    %v4745 = vpop.trf.xlu0
    %v4746 = vpop.trf.xlu0
    %v4747 = vpop.trf.xlu0
    %v4748 = vpop.trf.xlu0
    %v4749 = vpop.trf.xlu0
    %v4750 = vpop.trf.xlu0
    %v4751 = vpop.trf.xlu0
    %v4752 = vpop.trf.xlu0
    %v4753 = vpop.trf.xlu0
    %v4754 = vpop.trf.xlu0
    %v4755 = vpop.trf.xlu0
    %v4756 = vpop.trf.xlu0
    %4757 = vrot.lane.b32.xlu0 %v236, 64
    %v4758 = vpop.permute.xlu0 %4757
    %4759 = vrot.lane.b32.xlu0 %v241, 64
    %v4760 = vpop.permute.xlu0 %4759
    %v4764 = vsel %vm292, %v4741, 0
    %v4767 = vsel %vm292, %v4742, 0
    %v4770 = vsel %vm292, %v4743, 0
    %v4773 = vsel %vm292, %v4744, 0
    %v4776 = vsel %vm292, %v4745, 0
    %v4779 = vsel %vm292, %v4746, 0
    %v4782 = vsel %vm292, %v4747, 0
    %v4785 = vsel %vm292, %v4748, 0
    %v4788 = vsel %vm292, %v4749, 0
    %v4791 = vsel %vm292, %v4750, 0
    %v4794 = vsel %vm292, %v4751, 0
    %v4797 = vsel %vm292, %v4752, 0
    %v4800 = vsel %vm292, %v4753, 0
    %v4803 = vsel %vm292, %v4754, 0
    %v4806 = vsel %vm292, %v4755, 0
    %v4809 = vsel %vm292, %v4756, 0
    %4811 = vmatprep.subr.mxu0 0.0
    %4812 = vmatpush1.msra.mxu0 %v4758
    %4813 = vmatprep.subr.mxu0 0.0
    %4814 = vmatpush1.msra.mxu0 %v4760
    %4815 = vmatprep.subr.mxu0 0.0
    %4816 = vmatpush1.msra.mxu0 0.0
    %4817 = vmatprep.subr.mxu0 0.0
    %4818 = vmatpush1.msra.mxu0 0.0
    %4819 = vmatprep.subr.mxu0 0.0
    %4820 = vmatpush1.msra.mxu0 0.0
    %4821 = vmatprep.subr.mxu0 0.0
    %4822 = vmatpush1.msra.mxu0 0.0
    %4823 = vmatprep.subr.mxu0 0.0
    %4824 = vmatpush1.msra.mxu0 0.0
    %4825 = vmatprep.subr.mxu0 0.0
    %4826 = vmatpush1.msra.mxu0 0.0
    %4827 = vmatprep.subr.mxu0 0.0
    %4828 = vmatpush1.msra.mxu0 0.0
    %4829 = vmatprep.subr.mxu0 0.0
    %4830 = vmatpush1.msra.mxu0 0.0
    %4831 = vmatprep.subr.mxu0 0.0
    %4832 = vmatpush1.msra.mxu0 0.0
    %4833 = vmatprep.subr.mxu0 0.0
    %4834 = vmatpush1.msra.mxu0 0.0
    %4835 = vmatprep.subr.mxu0 0.0
    %4836 = vmatpush1.msra.mxu0 0.0
    %4837 = vmatprep.subr.mxu0 0.0
    %4838 = vmatpush1.msra.mxu0 0.0
    %4839 = vmatprep.subr.mxu0 0.0
    %4840 = vmatpush1.msra.mxu0 0.0
    %4841 = vmatprep.subr.mxu0 0.0
    %4842 = vmatpush1.msra.mxu0 0.0
    %4843 = vmatprep.subr.mxu0 0.0
    %4844 = vmatpush1.msra.mxu0 0.0
    %4845 = vmatprep.subr.mxu0 0.0
    %4846 = vmatpush1.msra.mxu0 0.0
    %4847 = vmatprep.subr.mxu0 0.0
    %4848 = vmatpush1.msra.mxu0 0.0
    %4849 = vmatprep.subr.mxu0 0.0
    %4850 = vmatpush1.msra.mxu0 0.0
    %4851 = vmatprep.subr.mxu0 0.0
    %4852 = vmatpush1.msra.mxu0 0.0
    %4853 = vmatprep.subr.mxu0 0.0
    %4854 = vmatpush1.msra.mxu0 0.0
    %4855 = vmatprep.subr.mxu0 0.0
    %4856 = vmatpush1.msra.mxu0 0.0
    %4857 = vmatprep.subr.mxu0 0.0
    %4858 = vmatpush1.msra.mxu0 0.0
    %4859 = vmatprep.subr.mxu0 0.0
    %4860 = vmatpush1.msra.mxu0 0.0
    %4861 = vmatprep.subr.mxu0 0.0
    %4862 = vmatpush1.msra.mxu0 0.0
    %4863 = vmatprep.subr.mxu0 0.0
    %4864 = vmatpush1.msra.mxu0 0.0
    %4865 = vmatprep.subr.mxu0 0.0
    %4866 = vmatpush1.msra.mxu0 0.0
    %4867 = vmatprep.subr.mxu0 0.0
    %4868 = vmatpush1.msra.mxu0 0.0
    %4869 = vmatprep.subr.mxu0 0.0
    %4870 = vmatpush1.msra.mxu0 0.0
    %4871 = vmatprep.subr.mxu0 0.0
    %4872 = vmatpush1.msra.mxu0 0.0
    %4873 = vmatprep.subr.mxu0 0.0
    %4874 = vmatpush1.msra.mxu0 0.0
    %4875 = vmatprep.mubr.f32.mxu0 0.0
    %4876 = vmatmul.mubr.f32.gmra.mrb[0].mxu0 %v4764
    %v4877 = vpop.f32.mrb[0].mxu0
    %v4878 = vadd.f32 0.0, %v4877
    %v4879 = vpop.f32.mrb[0].mxu0
    %4880 = vmatprep.mubr.f32.mxu0 0.0
    %4881 = vmatmul.mubr.f32.gmra.mrb[0].mxu0 %v4767
    %v4882 = vpop.f32.mrb[0].mxu0
    %v4883 = vadd.f32 0.0, %v4882
    %v4884 = vpop.f32.mrb[0].mxu0
    %4885 = vmatprep.mubr.f32.mxu0 0.0
    %4886 = vmatmul.mubr.f32.gmra.mrb[0].mxu0 %v4770
    %v4887 = vpop.f32.mrb[0].mxu0
    %v4888 = vadd.f32 0.0, %v4887
    %v4889 = vpop.f32.mrb[0].mxu0
    %4890 = vmatprep.mubr.f32.mxu0 0.0
    %4891 = vmatmul.mubr.f32.gmra.mrb[0].mxu0 %v4773
    %v4892 = vpop.f32.mrb[0].mxu0
    %v4893 = vadd.f32 0.0, %v4892
    %v4894 = vpop.f32.mrb[0].mxu0
    %4895 = vmatprep.mubr.f32.mxu0 0.0
    %4896 = vmatmul.mubr.f32.gmra.mrb[0].mxu0 %v4776
    %v4897 = vpop.f32.mrb[0].mxu0
    %v4898 = vadd.f32 0.0, %v4897
    %v4899 = vpop.f32.mrb[0].mxu0
    %4900 = vmatprep.mubr.f32.mxu0 0.0
    %4901 = vmatmul.mubr.f32.gmra.mrb[0].mxu0 %v4779
    %v4902 = vpop.f32.mrb[0].mxu0
    %v4903 = vadd.f32 0.0, %v4902
    %v4904 = vpop.f32.mrb[0].mxu0
    %4905 = vmatprep.mubr.f32.mxu0 0.0
    %4906 = vmatmul.mubr.f32.gmra.mrb[0].mxu0 %v4782
    %v4907 = vpop.f32.mrb[0].mxu0
    %v4908 = vadd.f32 0.0, %v4907
    %v4909 = vpop.f32.mrb[0].mxu0
    %4910 = vmatprep.mubr.f32.mxu0 0.0
    %4911 = vmatmul.mubr.f32.gmra.mrb[0].mxu0 %v4785
    %v4912 = vpop.f32.mrb[0].mxu0
    %v4913 = vadd.f32 0.0, %v4912
    %v4914 = vpop.f32.mrb[0].mxu0
    %4915 = vmatprep.mubr.f32.mxu0 0.0
    %4916 = vmatmul.mubr.f32.gmra.mrb[0].mxu0 %v4788
    %v4917 = vpop.f32.mrb[0].mxu0
    %v4918 = vadd.f32 0.0, %v4917
    %v4919 = vpop.f32.mrb[0].mxu0
    %4920 = vmatprep.mubr.f32.mxu0 0.0
    %4921 = vmatmul.mubr.f32.gmra.mrb[0].mxu0 %v4791
    %v4922 = vpop.f32.mrb[0].mxu0
    %v4923 = vadd.f32 0.0, %v4922
    %v4924 = vpop.f32.mrb[0].mxu0
    %4925 = vmatprep.mubr.f32.mxu0 0.0
    %4926 = vmatmul.mubr.f32.gmra.mrb[0].mxu0 %v4794
    %v4927 = vpop.f32.mrb[0].mxu0
    %v4928 = vadd.f32 0.0, %v4927
    %v4929 = vpop.f32.mrb[0].mxu0
    %4930 = vmatprep.mubr.f32.mxu0 0.0
    %4931 = vmatmul.mubr.f32.gmra.mrb[0].mxu0 %v4797
    %v4932 = vpop.f32.mrb[0].mxu0
    %v4933 = vadd.f32 0.0, %v4932
    %v4934 = vpop.f32.mrb[0].mxu0
    %4935 = vmatprep.mubr.f32.mxu0 0.0
    %4936 = vmatmul.mubr.f32.gmra.mrb[0].mxu0 %v4800
    %v4937 = vpop.f32.mrb[0].mxu0
    %v4938 = vadd.f32 0.0, %v4937
    %v4939 = vpop.f32.mrb[0].mxu0
    %4940 = vmatprep.mubr.f32.mxu0 0.0
    %4941 = vmatmul.mubr.f32.gmra.mrb[0].mxu0 %v4803
    %v4942 = vpop.f32.mrb[0].mxu0
    %v4943 = vadd.f32 0.0, %v4942
    %v4944 = vpop.f32.mrb[0].mxu0
    %4945 = vmatprep.mubr.f32.mxu0 0.0
    %4946 = vmatmul.mubr.f32.gmra.mrb[0].mxu0 %v4806
    %v4947 = vpop.f32.mrb[0].mxu0
    %v4948 = vadd.f32 0.0, %v4947
    %v4949 = vpop.f32.mrb[0].mxu0
    %4950 = vmatprep.mubr.f32.mxu0 0.0
    %4951 = vmatmul.mubr.f32.gmra.mrb[0].mxu0 %v4809
    %v4952 = vpop.f32.mrb[0].mxu0
    %v4953 = vadd.f32 0.0, %v4952
    %v4954 = vpop.f32.mrb[0].mxu0
    %4955 = vdwg.mxu0
    %v4956 = vmul.f32 %v4878, %v324
    %v4957 = vmul.f32 %v4883, %v324
    %v4958 = vmul.f32 %v4888, %v328
    %v4959 = vmul.f32 %v4893, %v328
    %v4960 = vmul.f32 %v4898, %v332
    %v4961 = vmul.f32 %v4903, %v332
    %v4962 = vmul.f32 %v4908, %v336
    %v4963 = vmul.f32 %v4913, %v336
    %v4964 = vmul.f32 %v4918, %v340
    %v4965 = vmul.f32 %v4923, %v340
    %v4966 = vmul.f32 %v4928, %v344
    %v4967 = vmul.f32 %v4933, %v344
    %v4968 = vmul.f32 %v4938, %v348
    %v4969 = vmul.f32 %v4943, %v348
    %v4970 = vmul.f32 %v4948, %v352
    %v4971 = vmul.f32 %v4953, %v352
    %v4972 = vsel %vm295, %v4956, 0.0
    %v4973 = vsel %vm295, %v4958, 0.0
    %v4974 = vadd.f32 %v4972, %v4973
    %v4975 = vsel %vm295, %v4960, 0.0
    %v4976 = vadd.f32 %v4974, %v4975
    %v4977 = vsel %vm295, %v4962, 0.0
    %v4978 = vadd.f32 %v4976, %v4977
    %v4979 = vsel %vm295, %v4964, 0.0
    %v4980 = vadd.f32 %v4978, %v4979
    %v4981 = vsel %vm295, %v4966, 0.0
    %v4982 = vadd.f32 %v4980, %v4981
    %v4983 = vsel %vm295, %v4968, 0.0
    %v4984 = vadd.f32 %v4982, %v4983
    %v4985 = vsel %vm295, %v4970, 0.0
    %v4986 = vadd.f32 %v4984, %v4985
    %v4987 = vsel %vm295, %v4957, 0.0
    %v4988 = vsel %vm295, %v4959, 0.0
    %v4989 = vadd.f32 %v4987, %v4988
    %v4990 = vsel %vm295, %v4961, 0.0
    %v4991 = vadd.f32 %v4989, %v4990
    %v4992 = vsel %vm295, %v4963, 0.0
    %v4993 = vadd.f32 %v4991, %v4992
    %v4994 = vsel %vm295, %v4965, 0.0
    %v4995 = vadd.f32 %v4993, %v4994
    %v4996 = vsel %vm295, %v4967, 0.0
    %v4997 = vadd.f32 %v4995, %v4996
    %v4998 = vsel %vm295, %v4969, 0.0
    %v4999 = vadd.f32 %v4997, %v4998
    %v5000 = vsel %vm295, %v4971, 0.0
    %v5001 = vadd.f32 %v4999, %v5000
    %v5002 = vadd.f32 %v4986, %v823
    %v5003 = vadd.f32 %v5001, %v823
    %v5005 = vsel %vm295, %v5002, 0
    %v5008 = vsel %vm295, %v5003, 0
    %5010 = vmatprep.subr.mxu0 0.0
    %5011 = vmatpush1.msra.mxu0 %v1921
    %5012 = vmatprep.subr.mxu0 0.0
    %5013 = vmatpush1.msra.mxu0 %v1922
    %5014 = vmatprep.subr.mxu0 0.0
    %5015 = vmatpush1.msra.mxu0 %v1923
    %5016 = vmatprep.subr.mxu0 0.0
    %5017 = vmatpush1.msra.mxu0 %v1924
    %5018 = vmatprep.subr.mxu0 0.0
    %5019 = vmatpush1.msra.mxu0 0.0
    %5020 = vmatprep.subr.mxu0 0.0
    %5021 = vmatpush1.msra.mxu0 0.0
    %5022 = vmatprep.subr.mxu0 0.0
    %5023 = vmatpush1.msra.mxu0 0.0
    %5024 = vmatprep.subr.mxu0 0.0
    %5025 = vmatpush1.msra.mxu0 0.0
    %5026 = vmatprep.subr.mxu0 0.0
    %5027 = vmatpush1.msra.mxu0 0.0
    %5028 = vmatprep.subr.mxu0 0.0
    %5029 = vmatpush1.msra.mxu0 0.0
    %5030 = vmatprep.subr.mxu0 0.0
    %5031 = vmatpush1.msra.mxu0 0.0
    %5032 = vmatprep.subr.mxu0 0.0
    %5033 = vmatpush1.msra.mxu0 0.0
    %5034 = vmatprep.subr.mxu0 0.0
    %5035 = vmatpush1.msra.mxu0 0.0
    %5036 = vmatprep.subr.mxu0 0.0
    %5037 = vmatpush1.msra.mxu0 0.0
    %5038 = vmatprep.subr.mxu0 0.0
    %5039 = vmatpush1.msra.mxu0 0.0
    %5040 = vmatprep.subr.mxu0 0.0
    %5041 = vmatpush1.msra.mxu0 0.0
    %5042 = vmatprep.subr.mxu0 0.0
    %5043 = vmatpush1.msra.mxu0 0.0
    %5044 = vmatprep.subr.mxu0 0.0
    %5045 = vmatpush1.msra.mxu0 0.0
    %5046 = vmatprep.subr.mxu0 0.0
    %5047 = vmatpush1.msra.mxu0 0.0
    %5048 = vmatprep.subr.mxu0 0.0
    %5049 = vmatpush1.msra.mxu0 0.0
    %5050 = vmatprep.subr.mxu0 0.0
    %5051 = vmatpush1.msra.mxu0 0.0
    %5052 = vmatprep.subr.mxu0 0.0
    %5053 = vmatpush1.msra.mxu0 0.0
    %5054 = vmatprep.subr.mxu0 0.0
    %5055 = vmatpush1.msra.mxu0 0.0
    %5056 = vmatprep.subr.mxu0 0.0
    %5057 = vmatpush1.msra.mxu0 0.0
    %5058 = vmatprep.subr.mxu0 0.0
    %5059 = vmatpush1.msra.mxu0 0.0
    %5060 = vmatprep.subr.mxu0 0.0
    %5061 = vmatpush1.msra.mxu0 0.0
    %5062 = vmatprep.subr.mxu0 0.0
    %5063 = vmatpush1.msra.mxu0 0.0
    %5064 = vmatprep.subr.mxu0 0.0
    %5065 = vmatpush1.msra.mxu0 0.0
    %5066 = vmatprep.subr.mxu0 0.0
    %5067 = vmatpush1.msra.mxu0 0.0
    %5068 = vmatprep.subr.mxu0 0.0
    %5069 = vmatpush1.msra.mxu0 0.0
    %5070 = vmatprep.subr.mxu0 0.0
    %5071 = vmatpush1.msra.mxu0 0.0
    %5072 = vmatprep.subr.mxu0 0.0
    %5073 = vmatpush1.msra.mxu0 0.0
    %5074 = vmatprep.mubr.f32.mxu0 0.0
    %5075 = vmatmul.mubr.f32.gmra.mrb[0].mxu0 %v5005
    %v5076 = vpop.f32.mrb[0].mxu0
    %v5077 = vadd.f32 %v1930, %v5076
    %v5078 = vpop.f32.mrb[0].mxu0
    %5079 = vmatprep.mubr.f32.mxu0 0.0
    %5080 = vmatmul.mubr.f32.gmra.mrb[0].mxu0 %v5008
    %v5081 = vpop.f32.mrb[0].mxu0
    %v5082 = vadd.f32 %v1930, %v5081
    %v5083 = vpop.f32.mrb[0].mxu0
    %5084 = vdwg.mxu0
    %5085 = vmatprep.subr.mxu0 0.0
    %5086 = vmatpush1.msra.mxu0 %v2013
    %5087 = vmatprep.subr.mxu0 0.0
    %5088 = vmatpush1.msra.mxu0 %v2014
    %5089 = vmatprep.subr.mxu0 0.0
    %5090 = vmatpush1.msra.mxu0 %v2015
    %5091 = vmatprep.subr.mxu0 0.0
    %5092 = vmatpush1.msra.mxu0 %v2016
    %5093 = vmatprep.subr.mxu0 0.0
    %5094 = vmatpush1.msra.mxu0 0.0
    %5095 = vmatprep.subr.mxu0 0.0
    %5096 = vmatpush1.msra.mxu0 0.0
    %5097 = vmatprep.subr.mxu0 0.0
    %5098 = vmatpush1.msra.mxu0 0.0
    %5099 = vmatprep.subr.mxu0 0.0
    %5100 = vmatpush1.msra.mxu0 0.0
    %5101 = vmatprep.subr.mxu0 0.0
    %5102 = vmatpush1.msra.mxu0 0.0
    %5103 = vmatprep.subr.mxu0 0.0
    %5104 = vmatpush1.msra.mxu0 0.0
    %5105 = vmatprep.subr.mxu0 0.0
    %5106 = vmatpush1.msra.mxu0 0.0
    %5107 = vmatprep.subr.mxu0 0.0
    %5108 = vmatpush1.msra.mxu0 0.0
    %5109 = vmatprep.subr.mxu0 0.0
    %5110 = vmatpush1.msra.mxu0 0.0
    %5111 = vmatprep.subr.mxu0 0.0
    %5112 = vmatpush1.msra.mxu0 0.0
    %5113 = vmatprep.subr.mxu0 0.0
    %5114 = vmatpush1.msra.mxu0 0.0
    %5115 = vmatprep.subr.mxu0 0.0
    %5116 = vmatpush1.msra.mxu0 0.0
    %5117 = vmatprep.subr.mxu0 0.0
    %5118 = vmatpush1.msra.mxu0 0.0
    %5119 = vmatprep.subr.mxu0 0.0
    %5120 = vmatpush1.msra.mxu0 0.0
    %5121 = vmatprep.subr.mxu0 0.0
    %5122 = vmatpush1.msra.mxu0 0.0
    %5123 = vmatprep.subr.mxu0 0.0
    %5124 = vmatpush1.msra.mxu0 0.0
    %5125 = vmatprep.subr.mxu0 0.0
    %5126 = vmatpush1.msra.mxu0 0.0
    %5127 = vmatprep.subr.mxu0 0.0
    %5128 = vmatpush1.msra.mxu0 0.0
    %5129 = vmatprep.subr.mxu0 0.0
    %5130 = vmatpush1.msra.mxu0 0.0
    %5131 = vmatprep.subr.mxu0 0.0
    %5132 = vmatpush1.msra.mxu0 0.0
    %5133 = vmatprep.subr.mxu0 0.0
    %5134 = vmatpush1.msra.mxu0 0.0
    %5135 = vmatprep.subr.mxu0 0.0
    %5136 = vmatpush1.msra.mxu0 0.0
    %5137 = vmatprep.subr.mxu0 0.0
    %5138 = vmatpush1.msra.mxu0 0.0
    %5139 = vmatprep.subr.mxu0 0.0
    %5140 = vmatpush1.msra.mxu0 0.0
    %5141 = vmatprep.subr.mxu0 0.0
    %5142 = vmatpush1.msra.mxu0 0.0
    %5143 = vmatprep.subr.mxu0 0.0
    %5144 = vmatpush1.msra.mxu0 0.0
    %5145 = vmatprep.subr.mxu0 0.0
    %5146 = vmatpush1.msra.mxu0 0.0
    %5147 = vmatprep.subr.mxu0 0.0
    %5148 = vmatpush1.msra.mxu0 0.0
    %5149 = vmatprep.mubr.f32.mxu0 0.0
    %5150 = vmatmul.mubr.f32.gmra.mrb[0].mxu0 %v3703
    %v5151 = vpop.f32.mrb[0].mxu0
    %v5152 = vadd.f32 %v2022, %v5151
    %v5153 = vpop.f32.mrb[0].mxu0
    %5154 = vmatprep.mubr.f32.mxu0 0.0
    %5155 = vmatmul.mubr.f32.gmra.mrb[0].mxu0 %v3705
    %v5156 = vpop.f32.mrb[0].mxu0
    %v5157 = vadd.f32 %v2022, %v5156
    %v5158 = vpop.f32.mrb[0].mxu0
    %5159 = vdwg.mxu0
    %v5160 = vadd.f32 %v5077, %v5152
    %v5161 = vadd.f32 %v5082, %v5157
    %v5162 = vxor.u32 %v5160, 2147483648
    %v5163 = vxor.u32 %v5161, 2147483648
    %v5164 = vmul.f32 %v5162, 1.442695
    %v5165 = vpow.pop %v5164
    %v5166 = vmul.f32 %v5163, 1.442695
    %v5167 = vpow.pop %v5166
    %v5168 = vadd.f32 %v5165, 1.0
    %v5169 = vadd.f32 %v5167, 1.0
    %v5170 = vrcp.pop %v5168
    %v5171 = vmul.f32 1.0, %v5170
    %v5172 = vrcp.pop %v5169
    %v5173 = vmul.f32 1.0, %v5172
    %5176 = vrot.lane.b32.xlu0 %v5152, 64
    %v5177 = vpop.permute.xlu0 %5176
    %5178 = vrot.lane.b32.xlu0 %v5157, 64
    %v5179 = vpop.permute.xlu0 %5178
    %v5182 = vmul.f32 %v5171, %v5177
    %v5183 = vmul.f32 %v5173, %v5179
    %5186 = vrot.lane.b32.xlu0 %v5182, 64
    %v5187 = vpop.permute.xlu0 %5186
    %5188 = vrot.lane.b32.xlu0 %v5183, 64
    %v5189 = vpop.permute.xlu0 %5188
    %v5192 = vadd.f32 %v5077, %v5187
    %v5193 = vadd.f32 %v5082, %v5189
    %v5194 = vtanh.pop %v5192
    %v5195 = vtanh.pop %v5193
    %v5196 = vsub.f32 1.0, %v5171
    %v5197 = vsub.f32 1.0, %v5173
    %5200 = vrot.lane.b32.xlu0 %v5194, 96
    %v5201 = vpop.permute.xlu0 %5200
    %5202 = vrot.lane.b32.xlu0 %v5195, 96
    %v5203 = vpop.permute.xlu0 %5202
    %v5206 = vmul.f32 %v5196, %v5201
    %v5207 = vmul.f32 %v5197, %v5203
    %v5208 = vmul.f32 %v5171, %v3695
    %v5209 = vmul.f32 %v5173, %v3696
    %v5210 = vadd.f32 %v5206, %v5208
    %v5211 = vadd.f32 %v5207, %v5209
    %5214 = vrot.lane.b32.xlu0 %v5210, 96
    %v5215 = vpop.permute.xlu0 %5214
    %5216 = vrot.lane.b32.xlu0 %v5211, 96
    %v5217 = vpop.permute.xlu0 %5216
    %v5218 = vsel %vm295, %v5215, 0
    %v5220 = vsel %vm295, %v5217, 0
    %5222 = vmatprep.subr.mxu0 0.0
    %5223 = vmatpush1.msra.mxu0 %v827
    %5224 = vmatprep.subr.mxu0 0.0
    %5225 = vmatpush1.msra.mxu0 %v828
    %5226 = vmatprep.subr.mxu0 0.0
    %5227 = vmatpush1.msra.mxu0 %v829
    %5228 = vmatprep.subr.mxu0 0.0
    %5229 = vmatpush1.msra.mxu0 %v830
    %5230 = vmatprep.subr.mxu0 0.0
    %5231 = vmatpush1.msra.mxu0 0.0
    %5232 = vmatprep.subr.mxu0 0.0
    %5233 = vmatpush1.msra.mxu0 0.0
    %5234 = vmatprep.subr.mxu0 0.0
    %5235 = vmatpush1.msra.mxu0 0.0
    %5236 = vmatprep.subr.mxu0 0.0
    %5237 = vmatpush1.msra.mxu0 0.0
    %5238 = vmatprep.subr.mxu0 0.0
    %5239 = vmatpush1.msra.mxu0 0.0
    %5240 = vmatprep.subr.mxu0 0.0
    %5241 = vmatpush1.msra.mxu0 0.0
    %5242 = vmatprep.subr.mxu0 0.0
    %5243 = vmatpush1.msra.mxu0 0.0
    %5244 = vmatprep.subr.mxu0 0.0
    %5245 = vmatpush1.msra.mxu0 0.0
    %5246 = vmatprep.subr.mxu0 0.0
    %5247 = vmatpush1.msra.mxu0 0.0
    %5248 = vmatprep.subr.mxu0 0.0
    %5249 = vmatpush1.msra.mxu0 0.0
    %5250 = vmatprep.subr.mxu0 0.0
    %5251 = vmatpush1.msra.mxu0 0.0
    %5252 = vmatprep.subr.mxu0 0.0
    %5253 = vmatpush1.msra.mxu0 0.0
    %5254 = vmatprep.subr.mxu0 0.0
    %5255 = vmatpush1.msra.mxu0 0.0
    %5256 = vmatprep.subr.mxu0 0.0
    %5257 = vmatpush1.msra.mxu0 0.0
    %5258 = vmatprep.subr.mxu0 0.0
    %5259 = vmatpush1.msra.mxu0 0.0
    %5260 = vmatprep.subr.mxu0 0.0
    %5261 = vmatpush1.msra.mxu0 0.0
    %5262 = vmatprep.subr.mxu0 0.0
    %5263 = vmatpush1.msra.mxu0 0.0
    %5264 = vmatprep.subr.mxu0 0.0
    %5265 = vmatpush1.msra.mxu0 0.0
    %5266 = vmatprep.subr.mxu0 0.0
    %5267 = vmatpush1.msra.mxu0 0.0
    %5268 = vmatprep.subr.mxu0 0.0
    %5269 = vmatpush1.msra.mxu0 0.0
    %5270 = vmatprep.subr.mxu0 0.0
    %5271 = vmatpush1.msra.mxu0 0.0
    %5272 = vmatprep.subr.mxu0 0.0
    %5273 = vmatpush1.msra.mxu0 0.0
    %5274 = vmatprep.subr.mxu0 0.0
    %5275 = vmatpush1.msra.mxu0 0.0
    %5276 = vmatprep.subr.mxu0 0.0
    %5277 = vmatpush1.msra.mxu0 0.0
    %5278 = vmatprep.subr.mxu0 0.0
    %5279 = vmatpush1.msra.mxu0 0.0
    %5280 = vmatprep.subr.mxu0 0.0
    %5281 = vmatpush1.msra.mxu0 0.0
    %5282 = vmatprep.subr.mxu0 0.0
    %5283 = vmatpush1.msra.mxu0 0.0
    %5284 = vmatprep.subr.mxu0 0.0
    %5285 = vmatpush1.msra.mxu0 0.0
    %5286 = vmatprep.mubr.f32.mxu0 0.0
    %5287 = vmatmul.mubr.f32.gmra.mrb[0].mxu0 %v5218
    %v5288 = vpop.f32.mrb[0].mxu0
    %v5289 = vadd.f32 0.0, %v5288
    %v5290 = vpop.f32.mrb[0].mxu0
    %5291 = vmatprep.mubr.f32.mxu0 0.0
    %5292 = vmatmul.mubr.f32.gmra.mrb[0].mxu0 %v5220
    %v5293 = vpop.f32.mrb[0].mxu0
    %v5294 = vadd.f32 0.0, %v5293
    %v5295 = vpop.f32.mrb[0].mxu0
    %5296 = vdwg.mxu0
    %v5297 = vmul.f32 %v5289, %v324
    %v5298 = vmul.f32 %v5294, %v324
    %v5299 = vmul.f32 %v5289, %v328
    %v5300 = vmul.f32 %v5294, %v328
    %v5301 = vmul.f32 %v5289, %v332
    %v5302 = vmul.f32 %v5294, %v332
    %v5303 = vmul.f32 %v5289, %v336
    %v5304 = vmul.f32 %v5294, %v336
    %v5305 = vmul.f32 %v5289, %v340
    %v5306 = vmul.f32 %v5294, %v340
    %v5307 = vmul.f32 %v5289, %v344
    %v5308 = vmul.f32 %v5294, %v344
    %v5309 = vmul.f32 %v5289, %v348
    %v5310 = vmul.f32 %v5294, %v348
    %v5311 = vmul.f32 %v5289, %v352
    %v5312 = vmul.f32 %v5294, %v352
    %5315 = vrot.lane.b32.xlu0 %v5289, 96
    %v5316 = vpop.permute.xlu0 %5315
    %5317 = vrot.lane.b32.xlu0 %v5294, 96
    %v5318 = vpop.permute.xlu0 %5317
    %v5319 = vsel %vm295, %v5316, 0
    %v5321 = vsel %vm295, %v5318, 0
    %v5324 = vsel %vm295, %v5297, 0
    %v5327 = vsel %vm295, %v5298, 0
    %v5330 = vsel %vm295, %v5299, 0
    %v5333 = vsel %vm295, %v5300, 0
    %v5336 = vsel %vm295, %v5301, 0
    %v5339 = vsel %vm295, %v5302, 0
    %v5342 = vsel %vm295, %v5303, 0
    %v5345 = vsel %vm295, %v5304, 0
    %v5348 = vsel %vm295, %v5305, 0
    %v5351 = vsel %vm295, %v5306, 0
    %v5354 = vsel %vm295, %v5307, 0
    %v5357 = vsel %vm295, %v5308, 0
    %v5360 = vsel %vm295, %v5309, 0
    %v5363 = vsel %vm295, %v5310, 0
    %v5366 = vsel %vm295, %v5311, 0
    %v5369 = vsel %vm295, %v5312, 0
    %5371 = vmatprep.subr.mxu0 0.0
    %5372 = vmatpush1.xpose.msra.mxu0 %v5324
    %5373 = vmatprep.subr.mxu0 0.0
    %5374 = vmatpush1.xpose.msra.mxu0 %v5327
    %5375 = vmatprep.subr.mxu0 0.0
    %5376 = vmatpush1.xpose.msra.mxu0 %v5330
    %5377 = vmatprep.subr.mxu0 0.0
    %5378 = vmatpush1.xpose.msra.mxu0 %v5333
    %5379 = vmatprep.subr.mxu0 0.0
    %5380 = vmatpush1.xpose.msra.mxu0 %v5336
    %5381 = vmatprep.subr.mxu0 0.0
    %5382 = vmatpush1.xpose.msra.mxu0 %v5339
    %5383 = vmatprep.subr.mxu0 0.0
    %5384 = vmatpush1.xpose.msra.mxu0 %v5342
    %5385 = vmatprep.subr.mxu0 0.0
    %5386 = vmatpush1.xpose.msra.mxu0 %v5345
    %5387 = vmatprep.subr.mxu0 0.0
    %5388 = vmatpush1.xpose.msra.mxu0 %v5348
    %5389 = vmatprep.subr.mxu0 0.0
    %5390 = vmatpush1.xpose.msra.mxu0 %v5351
    %5391 = vmatprep.subr.mxu0 0.0
    %5392 = vmatpush1.xpose.msra.mxu0 %v5354
    %5393 = vmatprep.subr.mxu0 0.0
    %5394 = vmatpush1.xpose.msra.mxu0 %v5357
    %5395 = vmatprep.subr.mxu0 0.0
    %5396 = vmatpush1.xpose.msra.mxu0 %v5360
    %5397 = vmatprep.subr.mxu0 0.0
    %5398 = vmatpush1.xpose.msra.mxu0 %v5363
    %5399 = vmatprep.subr.mxu0 0.0
    %5400 = vmatpush1.xpose.msra.mxu0 %v5366
    %5401 = vmatprep.subr.mxu0 0.0
    %5402 = vmatpush1.xpose.msra.mxu0 %v5369
    %5403 = vmatprep.subr.mxu0 0.0
    %5404 = vmatpush1.xpose.msra.mxu0 0.0
    %5405 = vmatprep.subr.mxu0 0.0
    %5406 = vmatpush1.xpose.msra.mxu0 0.0
    %5407 = vmatprep.subr.mxu0 0.0
    %5408 = vmatpush1.xpose.msra.mxu0 0.0
    %5409 = vmatprep.subr.mxu0 0.0
    %5410 = vmatpush1.xpose.msra.mxu0 0.0
    %5411 = vmatprep.subr.mxu0 0.0
    %5412 = vmatpush1.xpose.msra.mxu0 0.0
    %5413 = vmatprep.subr.mxu0 0.0
    %5414 = vmatpush1.xpose.msra.mxu0 0.0
    %5415 = vmatprep.subr.mxu0 0.0
    %5416 = vmatpush1.xpose.msra.mxu0 0.0
    %5417 = vmatprep.subr.mxu0 0.0
    %5418 = vmatpush1.xpose.msra.mxu0 0.0
    %5419 = vmatprep.subr.mxu0 0.0
    %5420 = vmatpush1.xpose.msra.mxu0 0.0
    %5421 = vmatprep.subr.mxu0 0.0
    %5422 = vmatpush1.xpose.msra.mxu0 0.0
    %5423 = vmatprep.subr.mxu0 0.0
    %5424 = vmatpush1.xpose.msra.mxu0 0.0
    %5425 = vmatprep.subr.mxu0 0.0
    %5426 = vmatpush1.xpose.msra.mxu0 0.0
    %5427 = vmatprep.subr.mxu0 0.0
    %5428 = vmatpush1.xpose.msra.mxu0 0.0
    %5429 = vmatprep.subr.mxu0 0.0
    %5430 = vmatpush1.xpose.msra.mxu0 0.0
    %5431 = vmatprep.subr.mxu0 0.0
    %5432 = vmatpush1.xpose.msra.mxu0 0.0
    %5433 = vmatprep.subr.mxu0 0.0
    %5434 = vmatpush1.xpose.msra.mxu0 0.0
    %5435 = vmatprep.mubr.f32.mxu0 0.0
    %5436 = vmatmul.mubr.f32.gmra.mrb[0].mxu0 %v5319
    %v5437 = vpop.f32.mrb[0].mxu0
    %v5438 = vadd.f32 0.0, %v5437
    %v5439 = vpop.f32.mrb[0].mxu0
    %5440 = vmatprep.mubr.f32.mxu0 0.0
    %5441 = vmatmul.mubr.f32.gmra.mrb[0].mxu0 %v5321
    %v5442 = vpop.f32.mrb[0].mxu0
    %v5443 = vadd.f32 0.0, %v5442
    %v5444 = vpop.f32.mrb[0].mxu0
    %5445 = vdwg.mxu0
    %vm5446 = vcmp.gt.f32.partialorder %v5438, 0.0
    %vm5447 = vcmp.gt.f32.partialorder %v5443, 0.0
    %v5448 = vmul.f32 %v5438, 0.2
    %v5449 = vmul.f32 %v5443, 0.2
    %v5450 = vsel %vm5446, %v5438, %v5448
    %v5451 = vsel %vm5447, %v5443, %v5449
    %v5452 = vadd.f32 %v5450, %v4543
    %v5453 = vadd.f32 %v5451, %v4544
    %v5454 = vmax.f32 %v5452, %v5453
    %v5455 = vrot.slane %v5454, 4
    %v5456 = vmax.f32 %v5454, %v5455
    %v5457 = vrot.slane %v5456, 2
    %v5458 = vmax.f32 %v5456, %v5457
    %v5459 = vrot.slane %v5458, 1
    %v5460 = vmax.f32 %v5458, %v5459
    %v5461 = vsub.f32 %v5452, %v5460
    %v5462 = vsub.f32 %v5453, %v5460
    %v5463 = vmul.f32 %v5461, 1.442695
    %v5464 = vpow.pop %v5463
    %v5465 = vmul.f32 %v5462, 1.442695
    %v5466 = vpow.pop %v5465
    %v5467 = vadd.f32 %v5464, %v5466
    %v5468 = vrot.slane %v5467, 4
    %v5469 = vadd.f32 %v5467, %v5468
    %v5470 = vrot.slane %v5469, 2
    %v5471 = vadd.f32 %v5469, %v5470
    %v5472 = vrot.slane %v5471, 1
    %v5473 = vadd.f32 %v5471, %v5472
    %v5474 = vrcp.pop %v5473
    %v5475 = vmul.f32 %v5464, %v5474
    %v5476 = vmul.f32 %v5466, %v5474
    %5477 = vxpose.xlu0.b32.start [1/16] %v5475, 128
    %5478 = vxpose.xlu0.b32.cont [2/16] %v5476, 128
    %5479 = vxpose.xlu0.b32.cont [3/16] 0.0, 128
    %5480 = vxpose.xlu0.b32.cont [4/16] 0.0, 128
    %5481 = vxpose.xlu0.b32.cont [5/16] 0.0, 128
    %5482 = vxpose.xlu0.b32.cont [6/16] 0.0, 128
    %5483 = vxpose.xlu0.b32.cont [7/16] 0.0, 128
    %5484 = vxpose.xlu0.b32.cont [8/16] 0.0, 128
    %5485 = vxpose.xlu0.b32.cont [9/16] 0.0, 128
    %5486 = vxpose.xlu0.b32.cont [10/16] 0.0, 128
    %5487 = vxpose.xlu0.b32.cont [11/16] 0.0, 128
    %5488 = vxpose.xlu0.b32.cont [12/16] 0.0, 128
    %5489 = vxpose.xlu0.b32.cont [13/16] 0.0, 128
    %5490 = vxpose.xlu0.b32.cont [14/16] 0.0, 128
    %5491 = vxpose.xlu0.b32.cont [15/16] 0.0, 128
    %5492 = vxpose.xlu0.b32.end [16/16] 0.0, 128
    %v5493 = vpop.trf.xlu0
    %v5494 = vpop.trf.xlu0
    %v5495 = vpop.trf.xlu0
    %v5496 = vpop.trf.xlu0
    %v5497 = vpop.trf.xlu0
    %v5498 = vpop.trf.xlu0
    %v5499 = vpop.trf.xlu0
    %v5500 = vpop.trf.xlu0
    %v5501 = vpop.trf.xlu0
    %v5502 = vpop.trf.xlu0
    %v5503 = vpop.trf.xlu0
    %v5504 = vpop.trf.xlu0
    %v5505 = vpop.trf.xlu0
    %v5506 = vpop.trf.xlu0
    %v5507 = vpop.trf.xlu0
    %v5508 = vpop.trf.xlu0
    %5509 = vrot.lane.b32.xlu0 %v5289, 64
    %v5510 = vpop.permute.xlu0 %5509
    %5511 = vrot.lane.b32.xlu0 %v5294, 64
    %v5512 = vpop.permute.xlu0 %5511
    %v5516 = vsel %vm292, %v5493, 0
    %v5519 = vsel %vm292, %v5494, 0
    %v5522 = vsel %vm292, %v5495, 0
    %v5525 = vsel %vm292, %v5496, 0
    %v5528 = vsel %vm292, %v5497, 0
    %v5531 = vsel %vm292, %v5498, 0
    %v5534 = vsel %vm292, %v5499, 0
    %v5537 = vsel %vm292, %v5500, 0
    %v5540 = vsel %vm292, %v5501, 0
    %v5543 = vsel %vm292, %v5502, 0
    %v5546 = vsel %vm292, %v5503, 0
    %v5549 = vsel %vm292, %v5504, 0
    %v5552 = vsel %vm292, %v5505, 0
    %v5555 = vsel %vm292, %v5506, 0
    %v5558 = vsel %vm292, %v5507, 0
    %v5561 = vsel %vm292, %v5508, 0
    %5563 = vmatprep.subr.mxu0 0.0
    %5564 = vmatpush1.msra.mxu0 %v5510
    %5565 = vmatprep.subr.mxu0 0.0
    %5566 = vmatpush1.msra.mxu0 %v5512
    %5567 = vmatprep.subr.mxu0 0.0
    %5568 = vmatpush1.msra.mxu0 0.0
    %5569 = vmatprep.subr.mxu0 0.0
    %5570 = vmatpush1.msra.mxu0 0.0
    %5571 = vmatprep.subr.mxu0 0.0
    %5572 = vmatpush1.msra.mxu0 0.0
    %5573 = vmatprep.subr.mxu0 0.0
    %5574 = vmatpush1.msra.mxu0 0.0
    %5575 = vmatprep.subr.mxu0 0.0
    %5576 = vmatpush1.msra.mxu0 0.0
    %5577 = vmatprep.subr.mxu0 0.0
    %5578 = vmatpush1.msra.mxu0 0.0
    %5579 = vmatprep.subr.mxu0 0.0
    %5580 = vmatpush1.msra.mxu0 0.0
    %5581 = vmatprep.subr.mxu0 0.0
    %5582 = vmatpush1.msra.mxu0 0.0
    %5583 = vmatprep.subr.mxu0 0.0
    %5584 = vmatpush1.msra.mxu0 0.0
    %5585 = vmatprep.subr.mxu0 0.0
    %5586 = vmatpush1.msra.mxu0 0.0
    %5587 = vmatprep.subr.mxu0 0.0
    %5588 = vmatpush1.msra.mxu0 0.0
    %5589 = vmatprep.subr.mxu0 0.0
    %5590 = vmatpush1.msra.mxu0 0.0
    %5591 = vmatprep.subr.mxu0 0.0
    %5592 = vmatpush1.msra.mxu0 0.0
    %5593 = vmatprep.subr.mxu0 0.0
    %5594 = vmatpush1.msra.mxu0 0.0
    %5595 = vmatprep.subr.mxu0 0.0
    %5596 = vmatpush1.msra.mxu0 0.0
    %5597 = vmatprep.subr.mxu0 0.0
    %5598 = vmatpush1.msra.mxu0 0.0
    %5599 = vmatprep.subr.mxu0 0.0
    %5600 = vmatpush1.msra.mxu0 0.0
    %5601 = vmatprep.subr.mxu0 0.0
    %5602 = vmatpush1.msra.mxu0 0.0
    %5603 = vmatprep.subr.mxu0 0.0
    %5604 = vmatpush1.msra.mxu0 0.0
    %5605 = vmatprep.subr.mxu0 0.0
    %5606 = vmatpush1.msra.mxu0 0.0
    %5607 = vmatprep.subr.mxu0 0.0
    %5608 = vmatpush1.msra.mxu0 0.0
    %5609 = vmatprep.subr.mxu0 0.0
    %5610 = vmatpush1.msra.mxu0 0.0
    %5611 = vmatprep.subr.mxu0 0.0
    %5612 = vmatpush1.msra.mxu0 0.0
    %5613 = vmatprep.subr.mxu0 0.0
    %5614 = vmatpush1.msra.mxu0 0.0
    %5615 = vmatprep.subr.mxu0 0.0
    %5616 = vmatpush1.msra.mxu0 0.0
    %5617 = vmatprep.subr.mxu0 0.0
    %5618 = vmatpush1.msra.mxu0 0.0
    %5619 = vmatprep.subr.mxu0 0.0
    %5620 = vmatpush1.msra.mxu0 0.0
    %5621 = vmatprep.subr.mxu0 0.0
    %5622 = vmatpush1.msra.mxu0 0.0
    %5623 = vmatprep.subr.mxu0 0.0
    %5624 = vmatpush1.msra.mxu0 0.0
    %5625 = vmatprep.subr.mxu0 0.0
    %5626 = vmatpush1.msra.mxu0 0.0
    %5627 = vmatprep.mubr.f32.mxu0 0.0
    %5628 = vmatmul.mubr.f32.gmra.mrb[0].mxu0 %v5516
    %v5629 = vpop.f32.mrb[0].mxu0
    %v5630 = vadd.f32 0.0, %v5629
    %v5631 = vpop.f32.mrb[0].mxu0
    %5632 = vmatprep.mubr.f32.mxu0 0.0
    %5633 = vmatmul.mubr.f32.gmra.mrb[0].mxu0 %v5519
    %v5634 = vpop.f32.mrb[0].mxu0
    %v5635 = vadd.f32 0.0, %v5634
    %v5636 = vpop.f32.mrb[0].mxu0
    %5637 = vmatprep.mubr.f32.mxu0 0.0
    %5638 = vmatmul.mubr.f32.gmra.mrb[0].mxu0 %v5522
    %v5639 = vpop.f32.mrb[0].mxu0
    %v5640 = vadd.f32 0.0, %v5639
    %v5641 = vpop.f32.mrb[0].mxu0
    %5642 = vmatprep.mubr.f32.mxu0 0.0
    %5643 = vmatmul.mubr.f32.gmra.mrb[0].mxu0 %v5525
    %v5644 = vpop.f32.mrb[0].mxu0
    %v5645 = vadd.f32 0.0, %v5644
    %v5646 = vpop.f32.mrb[0].mxu0
    %5647 = vmatprep.mubr.f32.mxu0 0.0
    %5648 = vmatmul.mubr.f32.gmra.mrb[0].mxu0 %v5528
    %v5649 = vpop.f32.mrb[0].mxu0
    %v5650 = vadd.f32 0.0, %v5649
    %v5651 = vpop.f32.mrb[0].mxu0
    %5652 = vmatprep.mubr.f32.mxu0 0.0
    %5653 = vmatmul.mubr.f32.gmra.mrb[0].mxu0 %v5531
    %v5654 = vpop.f32.mrb[0].mxu0
    %v5655 = vadd.f32 0.0, %v5654
    %v5656 = vpop.f32.mrb[0].mxu0
    %5657 = vmatprep.mubr.f32.mxu0 0.0
    %5658 = vmatmul.mubr.f32.gmra.mrb[0].mxu0 %v5534
    %v5659 = vpop.f32.mrb[0].mxu0
    %v5660 = vadd.f32 0.0, %v5659
    %v5661 = vpop.f32.mrb[0].mxu0
    %5662 = vmatprep.mubr.f32.mxu0 0.0
    %5663 = vmatmul.mubr.f32.gmra.mrb[0].mxu0 %v5537
    %v5664 = vpop.f32.mrb[0].mxu0
    %v5665 = vadd.f32 0.0, %v5664
    %v5666 = vpop.f32.mrb[0].mxu0
    %5667 = vmatprep.mubr.f32.mxu0 0.0
    %5668 = vmatmul.mubr.f32.gmra.mrb[0].mxu0 %v5540
    %v5669 = vpop.f32.mrb[0].mxu0
    %v5670 = vadd.f32 0.0, %v5669
    %v5671 = vpop.f32.mrb[0].mxu0
    %5672 = vmatprep.mubr.f32.mxu0 0.0
    %5673 = vmatmul.mubr.f32.gmra.mrb[0].mxu0 %v5543
    %v5674 = vpop.f32.mrb[0].mxu0
    %v5675 = vadd.f32 0.0, %v5674
    %v5676 = vpop.f32.mrb[0].mxu0
    %5677 = vmatprep.mubr.f32.mxu0 0.0
    %5678 = vmatmul.mubr.f32.gmra.mrb[0].mxu0 %v5546
    %v5679 = vpop.f32.mrb[0].mxu0
    %v5680 = vadd.f32 0.0, %v5679
    %v5681 = vpop.f32.mrb[0].mxu0
    %5682 = vmatprep.mubr.f32.mxu0 0.0
    %5683 = vmatmul.mubr.f32.gmra.mrb[0].mxu0 %v5549
    %v5684 = vpop.f32.mrb[0].mxu0
    %v5685 = vadd.f32 0.0, %v5684
    %v5686 = vpop.f32.mrb[0].mxu0
    %5687 = vmatprep.mubr.f32.mxu0 0.0
    %5688 = vmatmul.mubr.f32.gmra.mrb[0].mxu0 %v5552
    %v5689 = vpop.f32.mrb[0].mxu0
    %v5690 = vadd.f32 0.0, %v5689
    %v5691 = vpop.f32.mrb[0].mxu0
    %5692 = vmatprep.mubr.f32.mxu0 0.0
    %5693 = vmatmul.mubr.f32.gmra.mrb[0].mxu0 %v5555
    %v5694 = vpop.f32.mrb[0].mxu0
    %v5695 = vadd.f32 0.0, %v5694
    %v5696 = vpop.f32.mrb[0].mxu0
    %5697 = vmatprep.mubr.f32.mxu0 0.0
    %5698 = vmatmul.mubr.f32.gmra.mrb[0].mxu0 %v5558
    %v5699 = vpop.f32.mrb[0].mxu0
    %v5700 = vadd.f32 0.0, %v5699
    %v5701 = vpop.f32.mrb[0].mxu0
    %5702 = vmatprep.mubr.f32.mxu0 0.0
    %5703 = vmatmul.mubr.f32.gmra.mrb[0].mxu0 %v5561
    %v5704 = vpop.f32.mrb[0].mxu0
    %v5705 = vadd.f32 0.0, %v5704
    %v5706 = vpop.f32.mrb[0].mxu0
    %5707 = vdwg.mxu0
    %v5708 = vmul.f32 %v5630, %v324
    %v5709 = vmul.f32 %v5635, %v324
    %v5710 = vmul.f32 %v5640, %v328
    %v5711 = vmul.f32 %v5645, %v328
    %v5712 = vmul.f32 %v5650, %v332
    %v5713 = vmul.f32 %v5655, %v332
    %v5714 = vmul.f32 %v5660, %v336
    %v5715 = vmul.f32 %v5665, %v336
    %v5716 = vmul.f32 %v5670, %v340
    %v5717 = vmul.f32 %v5675, %v340
    %v5718 = vmul.f32 %v5680, %v344
    %v5719 = vmul.f32 %v5685, %v344
    %v5720 = vmul.f32 %v5690, %v348
    %v5721 = vmul.f32 %v5695, %v348
    %v5722 = vmul.f32 %v5700, %v352
    %v5723 = vmul.f32 %v5705, %v352
    %v5724 = vsel %vm295, %v5708, 0.0
    %v5725 = vsel %vm295, %v5710, 0.0
    %v5726 = vadd.f32 %v5724, %v5725
    %v5727 = vsel %vm295, %v5712, 0.0
    %v5728 = vadd.f32 %v5726, %v5727
    %v5729 = vsel %vm295, %v5714, 0.0
    %v5730 = vadd.f32 %v5728, %v5729
    %v5731 = vsel %vm295, %v5716, 0.0
    %v5732 = vadd.f32 %v5730, %v5731
    %v5733 = vsel %vm295, %v5718, 0.0
    %v5734 = vadd.f32 %v5732, %v5733
    %v5735 = vsel %vm295, %v5720, 0.0
    %v5736 = vadd.f32 %v5734, %v5735
    %v5737 = vsel %vm295, %v5722, 0.0
    %v5738 = vadd.f32 %v5736, %v5737
    %v5739 = vsel %vm295, %v5709, 0.0
    %v5740 = vsel %vm295, %v5711, 0.0
    %v5741 = vadd.f32 %v5739, %v5740
    %v5742 = vsel %vm295, %v5713, 0.0
    %v5743 = vadd.f32 %v5741, %v5742
    %v5744 = vsel %vm295, %v5715, 0.0
    %v5745 = vadd.f32 %v5743, %v5744
    %v5746 = vsel %vm295, %v5717, 0.0
    %v5747 = vadd.f32 %v5745, %v5746
    %v5748 = vsel %vm295, %v5719, 0.0
    %v5749 = vadd.f32 %v5747, %v5748
    %v5750 = vsel %vm295, %v5721, 0.0
    %v5751 = vadd.f32 %v5749, %v5750
    %v5752 = vsel %vm295, %v5723, 0.0
    %v5753 = vadd.f32 %v5751, %v5752
    %v5754 = vadd.f32 %v5738, %v1374
    %v5755 = vadd.f32 %v5753, %v1374
    %v5757 = vsel %vm295, %v5754, 0
    %v5760 = vsel %vm295, %v5755, 0
    %5762 = vmatprep.subr.mxu0 0.0
    %5763 = vmatpush1.msra.mxu0 %v2701
    %5764 = vmatprep.subr.mxu0 0.0
    %5765 = vmatpush1.msra.mxu0 %v2702
    %5766 = vmatprep.subr.mxu0 0.0
    %5767 = vmatpush1.msra.mxu0 %v2703
    %5768 = vmatprep.subr.mxu0 0.0
    %5769 = vmatpush1.msra.mxu0 %v2704
    %5770 = vmatprep.subr.mxu0 0.0
    %5771 = vmatpush1.msra.mxu0 0.0
    %5772 = vmatprep.subr.mxu0 0.0
    %5773 = vmatpush1.msra.mxu0 0.0
    %5774 = vmatprep.subr.mxu0 0.0
    %5775 = vmatpush1.msra.mxu0 0.0
    %5776 = vmatprep.subr.mxu0 0.0
    %5777 = vmatpush1.msra.mxu0 0.0
    %5778 = vmatprep.subr.mxu0 0.0
    %5779 = vmatpush1.msra.mxu0 0.0
    %5780 = vmatprep.subr.mxu0 0.0
    %5781 = vmatpush1.msra.mxu0 0.0
    %5782 = vmatprep.subr.mxu0 0.0
    %5783 = vmatpush1.msra.mxu0 0.0
    %5784 = vmatprep.subr.mxu0 0.0
    %5785 = vmatpush1.msra.mxu0 0.0
    %5786 = vmatprep.subr.mxu0 0.0
    %5787 = vmatpush1.msra.mxu0 0.0
    %5788 = vmatprep.subr.mxu0 0.0
    %5789 = vmatpush1.msra.mxu0 0.0
    %5790 = vmatprep.subr.mxu0 0.0
    %5791 = vmatpush1.msra.mxu0 0.0
    %5792 = vmatprep.subr.mxu0 0.0
    %5793 = vmatpush1.msra.mxu0 0.0
    %5794 = vmatprep.subr.mxu0 0.0
    %5795 = vmatpush1.msra.mxu0 0.0
    %5796 = vmatprep.subr.mxu0 0.0
    %5797 = vmatpush1.msra.mxu0 0.0
    %5798 = vmatprep.subr.mxu0 0.0
    %5799 = vmatpush1.msra.mxu0 0.0
    %5800 = vmatprep.subr.mxu0 0.0
    %5801 = vmatpush1.msra.mxu0 0.0
    %5802 = vmatprep.subr.mxu0 0.0
    %5803 = vmatpush1.msra.mxu0 0.0
    %5804 = vmatprep.subr.mxu0 0.0
    %5805 = vmatpush1.msra.mxu0 0.0
    %5806 = vmatprep.subr.mxu0 0.0
    %5807 = vmatpush1.msra.mxu0 0.0
    %5808 = vmatprep.subr.mxu0 0.0
    %5809 = vmatpush1.msra.mxu0 0.0
    %5810 = vmatprep.subr.mxu0 0.0
    %5811 = vmatpush1.msra.mxu0 0.0
    %5812 = vmatprep.subr.mxu0 0.0
    %5813 = vmatpush1.msra.mxu0 0.0
    %5814 = vmatprep.subr.mxu0 0.0
    %5815 = vmatpush1.msra.mxu0 0.0
    %5816 = vmatprep.subr.mxu0 0.0
    %5817 = vmatpush1.msra.mxu0 0.0
    %5818 = vmatprep.subr.mxu0 0.0
    %5819 = vmatpush1.msra.mxu0 0.0
    %5820 = vmatprep.subr.mxu0 0.0
    %5821 = vmatpush1.msra.mxu0 0.0
    %5822 = vmatprep.subr.mxu0 0.0
    %5823 = vmatpush1.msra.mxu0 0.0
    %5824 = vmatprep.subr.mxu0 0.0
    %5825 = vmatpush1.msra.mxu0 0.0
    %5826 = vmatprep.mubr.f32.mxu0 0.0
    %5827 = vmatmul.mubr.f32.gmra.mrb[0].mxu0 %v5757
    %v5828 = vpop.f32.mrb[0].mxu0
    %v5829 = vadd.f32 %v2710, %v5828
    %v5830 = vpop.f32.mrb[0].mxu0
    %5831 = vmatprep.mubr.f32.mxu0 0.0
    %5832 = vmatmul.mubr.f32.gmra.mrb[0].mxu0 %v5760
    %v5833 = vpop.f32.mrb[0].mxu0
    %v5834 = vadd.f32 %v2710, %v5833
    %v5835 = vpop.f32.mrb[0].mxu0
    %5836 = vdwg.mxu0
    %5839 = vrot.lane.b32.xlu0 %v4457, 96
    %v5840 = vpop.permute.xlu0 %5839
    %5841 = vrot.lane.b32.xlu0 %v4458, 96
    %v5842 = vpop.permute.xlu0 %5841
    %v5843 = vsel %vm295, %v5840, 0
    %v5845 = vsel %vm295, %v5842, 0
    %5847 = vmatprep.subr.mxu0 0.0
    %5848 = vmatpush1.msra.mxu0 %v2793
    %5849 = vmatprep.subr.mxu0 0.0
    %5850 = vmatpush1.msra.mxu0 %v2794
    %5851 = vmatprep.subr.mxu0 0.0
    %5852 = vmatpush1.msra.mxu0 %v2795
    %5853 = vmatprep.subr.mxu0 0.0
    %5854 = vmatpush1.msra.mxu0 %v2796
    %5855 = vmatprep.subr.mxu0 0.0
    %5856 = vmatpush1.msra.mxu0 0.0
    %5857 = vmatprep.subr.mxu0 0.0
    %5858 = vmatpush1.msra.mxu0 0.0
    %5859 = vmatprep.subr.mxu0 0.0
    %5860 = vmatpush1.msra.mxu0 0.0
    %5861 = vmatprep.subr.mxu0 0.0
    %5862 = vmatpush1.msra.mxu0 0.0
    %5863 = vmatprep.subr.mxu0 0.0
    %5864 = vmatpush1.msra.mxu0 0.0
    %5865 = vmatprep.subr.mxu0 0.0
    %5866 = vmatpush1.msra.mxu0 0.0
    %5867 = vmatprep.subr.mxu0 0.0
    %5868 = vmatpush1.msra.mxu0 0.0
    %5869 = vmatprep.subr.mxu0 0.0
    %5870 = vmatpush1.msra.mxu0 0.0
    %5871 = vmatprep.subr.mxu0 0.0
    %5872 = vmatpush1.msra.mxu0 0.0
    %5873 = vmatprep.subr.mxu0 0.0
    %5874 = vmatpush1.msra.mxu0 0.0
    %5875 = vmatprep.subr.mxu0 0.0
    %5876 = vmatpush1.msra.mxu0 0.0
    %5877 = vmatprep.subr.mxu0 0.0
    %5878 = vmatpush1.msra.mxu0 0.0
    %5879 = vmatprep.subr.mxu0 0.0
    %5880 = vmatpush1.msra.mxu0 0.0
    %5881 = vmatprep.subr.mxu0 0.0
    %5882 = vmatpush1.msra.mxu0 0.0
    %5883 = vmatprep.subr.mxu0 0.0
    %5884 = vmatpush1.msra.mxu0 0.0
    %5885 = vmatprep.subr.mxu0 0.0
    %5886 = vmatpush1.msra.mxu0 0.0
    %5887 = vmatprep.subr.mxu0 0.0
    %5888 = vmatpush1.msra.mxu0 0.0
    %5889 = vmatprep.subr.mxu0 0.0
    %5890 = vmatpush1.msra.mxu0 0.0
    %5891 = vmatprep.subr.mxu0 0.0
    %5892 = vmatpush1.msra.mxu0 0.0
    %5893 = vmatprep.subr.mxu0 0.0
    %5894 = vmatpush1.msra.mxu0 0.0
    %5895 = vmatprep.subr.mxu0 0.0
    %5896 = vmatpush1.msra.mxu0 0.0
    %5897 = vmatprep.subr.mxu0 0.0
    %5898 = vmatpush1.msra.mxu0 0.0
    %5899 = vmatprep.subr.mxu0 0.0
    %5900 = vmatpush1.msra.mxu0 0.0
    %5901 = vmatprep.subr.mxu0 0.0
    %5902 = vmatpush1.msra.mxu0 0.0
    %5903 = vmatprep.subr.mxu0 0.0
    %5904 = vmatpush1.msra.mxu0 0.0
    %5905 = vmatprep.subr.mxu0 0.0
    %5906 = vmatpush1.msra.mxu0 0.0
    %5907 = vmatprep.subr.mxu0 0.0
    %5908 = vmatpush1.msra.mxu0 0.0
    %5909 = vmatprep.subr.mxu0 0.0
    %5910 = vmatpush1.msra.mxu0 0.0
    %5911 = vmatprep.mubr.f32.mxu0 0.0
    %5912 = vmatmul.mubr.f32.gmra.mrb[0].mxu0 %v5843
    %v5913 = vpop.f32.mrb[0].mxu0
    %v5914 = vadd.f32 %v2802, %v5913
    %v5915 = vpop.f32.mrb[0].mxu0
    %5916 = vmatprep.mubr.f32.mxu0 0.0
    %5917 = vmatmul.mubr.f32.gmra.mrb[0].mxu0 %v5845
    %v5918 = vpop.f32.mrb[0].mxu0
    %v5919 = vadd.f32 %v2802, %v5918
    %v5920 = vpop.f32.mrb[0].mxu0
    %5921 = vdwg.mxu0
    %v5922 = vadd.f32 %v5829, %v5914
    %v5923 = vadd.f32 %v5834, %v5919
    %v5924 = vxor.u32 %v5922, 2147483648
    %v5925 = vxor.u32 %v5923, 2147483648
    %v5926 = vmul.f32 %v5924, 1.442695
    %v5927 = vpow.pop %v5926
    %v5928 = vmul.f32 %v5925, 1.442695
    %v5929 = vpow.pop %v5928
    %v5930 = vadd.f32 %v5927, 1.0
    %v5931 = vadd.f32 %v5929, 1.0
    %v5932 = vrcp.pop %v5930
    %v5933 = vmul.f32 1.0, %v5932
    %v5934 = vrcp.pop %v5931
    %v5935 = vmul.f32 1.0, %v5934
    %5938 = vrot.lane.b32.xlu0 %v5914, 64
    %v5939 = vpop.permute.xlu0 %5938
    %5940 = vrot.lane.b32.xlu0 %v5919, 64
    %v5941 = vpop.permute.xlu0 %5940
    %v5944 = vmul.f32 %v5933, %v5939
    %v5945 = vmul.f32 %v5935, %v5941
    %5948 = vrot.lane.b32.xlu0 %v5944, 64
    %v5949 = vpop.permute.xlu0 %5948
    %5950 = vrot.lane.b32.xlu0 %v5945, 64
    %v5951 = vpop.permute.xlu0 %5950
    %v5954 = vadd.f32 %v5829, %v5949
    %v5955 = vadd.f32 %v5834, %v5951
    %v5956 = vtanh.pop %v5954
    %v5957 = vtanh.pop %v5955
    %v5958 = vsub.f32 1.0, %v5933
    %v5959 = vsub.f32 1.0, %v5935
    %5962 = vrot.lane.b32.xlu0 %v5956, 96
    %v5963 = vpop.permute.xlu0 %5962
    %5964 = vrot.lane.b32.xlu0 %v5957, 96
    %v5965 = vpop.permute.xlu0 %5964
    %v5968 = vmul.f32 %v5958, %v5963
    %v5969 = vmul.f32 %v5959, %v5965
    %v5970 = vmul.f32 %v5933, %v4457
    %v5971 = vmul.f32 %v5935, %v4458
    %v5972 = vadd.f32 %v5968, %v5970
    %v5973 = vadd.f32 %v5969, %v5971
    %v5974 = vsel %vm2943, %v5972, 0.0
    %v5975 = vsel %vm2943, %v5973, 0.0
    %v5976 = vadd.f32 %v5974, %v5975
    %v5977 = vrot.slane %v5976, 4
    %v5978 = vadd.f32 %v5976, %v5977
    %v5979 = vrot.slane %v5978, 2
    %v5980 = vadd.f32 %v5978, %v5979
    %v5981 = vrot.slane %v5980, 1
    %v5982 = vadd.f32 %v5980, %v5981
    %v5983 = vmul.f32 %v5982, %v1387
    %5984 = vset.pattern.permute.xlu0 3
    %5985 = vperm.xlu0 %5984, %v80
    %v5986 = vpop.permute.xlu0 %5985
    %v5988 = vlaneseq
    %v5989 = vshrl.u32 %v5988, 7
    %v5990 = vsub.s32 0, %v5989
    %v5991 = vrot.slane %v5986, %v5990
    %v5992 = vmul.f32 %v5991, %v5983
    %5994 = vrot.lane.b32.xlu0 %v5992, 96
    %v5995 = vpop.permute.xlu0 %5994
    %v5997 = vadd.f32 %v4482, %v5995
    %v5998 = vld [vmem:[%s16] sm:$0xff]
    %v5999 = vld [vmem:[%s16 + $0x8] sm:$0xff]
    %v6000 = vld [vmem:[%s16 + $0x10] sm:$0xff]
    %v6001 = vld [vmem:[%s16 + $0x18] sm:$0xff]
    %v6002 = vld [vmem:[%s17] sm:$0x1]
    %v6004 = vsel %vm295, %v5997, 0
    %6006 = vmatprep.subr.mxu0 0.0
    %6007 = vmatpush1.msra.mxu0 %v5998
    %6008 = vmatprep.subr.mxu0 0.0
    %6009 = vmatpush1.msra.mxu0 %v5999
    %6010 = vmatprep.subr.mxu0 0.0
    %6011 = vmatpush1.msra.mxu0 %v6000
    %6012 = vmatprep.subr.mxu0 0.0
    %6013 = vmatpush1.msra.mxu0 %v6001
    %6014 = vmatprep.subr.mxu0 0.0
    %6015 = vmatpush1.msra.mxu0 0.0
    %6016 = vmatprep.subr.mxu0 0.0
    %6017 = vmatpush1.msra.mxu0 0.0
    %6018 = vmatprep.subr.mxu0 0.0
    %6019 = vmatpush1.msra.mxu0 0.0
    %6020 = vmatprep.subr.mxu0 0.0
    %6021 = vmatpush1.msra.mxu0 0.0
    %6022 = vmatprep.subr.mxu0 0.0
    %6023 = vmatpush1.msra.mxu0 0.0
    %6024 = vmatprep.subr.mxu0 0.0
    %6025 = vmatpush1.msra.mxu0 0.0
    %6026 = vmatprep.subr.mxu0 0.0
    %6027 = vmatpush1.msra.mxu0 0.0
    %6028 = vmatprep.subr.mxu0 0.0
    %6029 = vmatpush1.msra.mxu0 0.0
    %6030 = vmatprep.subr.mxu0 0.0
    %6031 = vmatpush1.msra.mxu0 0.0
    %6032 = vmatprep.subr.mxu0 0.0
    %6033 = vmatpush1.msra.mxu0 0.0
    %6034 = vmatprep.subr.mxu0 0.0
    %6035 = vmatpush1.msra.mxu0 0.0
    %6036 = vmatprep.subr.mxu0 0.0
    %6037 = vmatpush1.msra.mxu0 0.0
    %6038 = vmatprep.subr.mxu0 0.0
    %6039 = vmatpush1.msra.mxu0 0.0
    %6040 = vmatprep.subr.mxu0 0.0
    %6041 = vmatpush1.msra.mxu0 0.0
    %6042 = vmatprep.subr.mxu0 0.0
    %6043 = vmatpush1.msra.mxu0 0.0
    %6044 = vmatprep.subr.mxu0 0.0
    %6045 = vmatpush1.msra.mxu0 0.0
    %6046 = vmatprep.subr.mxu0 0.0
    %6047 = vmatpush1.msra.mxu0 0.0
    %6048 = vmatprep.subr.mxu0 0.0
    %6049 = vmatpush1.msra.mxu0 0.0
    %6050 = vmatprep.subr.mxu0 0.0
    %6051 = vmatpush1.msra.mxu0 0.0
    %6052 = vmatprep.subr.mxu0 0.0
    %6053 = vmatpush1.msra.mxu0 0.0
    %6054 = vmatprep.subr.mxu0 0.0
    %6055 = vmatpush1.msra.mxu0 0.0
    %6056 = vmatprep.subr.mxu0 0.0
    %6057 = vmatpush1.msra.mxu0 0.0
    %6058 = vmatprep.subr.mxu0 0.0
    %6059 = vmatpush1.msra.mxu0 0.0
    %6060 = vmatprep.subr.mxu0 0.0
    %6061 = vmatpush1.msra.mxu0 0.0
    %6062 = vmatprep.subr.mxu0 0.0
    %6063 = vmatpush1.msra.mxu0 0.0
    %6064 = vmatprep.subr.mxu0 0.0
    %6065 = vmatpush1.msra.mxu0 0.0
    %6066 = vmatprep.subr.mxu0 0.0
    %6067 = vmatpush1.msra.mxu0 0.0
    %6068 = vmatprep.subr.mxu0 0.0
    %6069 = vmatpush1.msra.mxu0 0.0
    %6070 = vmatprep.mubr.f32.mxu0 0.0
    %6071 = vmatmul.mubr.f32.gmra.mrb[0].mxu0 %v6004
    %v6072 = vpop.f32.mrb[0].mxu0
    %v6073 = vadd.f32 %v6002, %v6072
    %v6074 = vpop.f32.mrb[0].mxu0
    %6075 = vdwg.mxu0
    %vm6076 = vcmask 57344
    %6077 = vst.msk [vmem:[#allocation2] sm:$0x1] %vm6076, %v6073
    // Predicated region
    $region74: #{temporal_gnn_forward.1} parent=1 // pred_check
      _
    $region75: #{temporal_gnn_forward.1} parent=1 // pred_check_branch
      %6079 = sbr.rel (0) target = $region77
    $region76: #{temporal_gnn_forward.1} parent=1 // pred_region
      %s6081 = ssub.s32 16, 16
      %6082 = vsyncadd [#allocation3], %s6081
      %s6084 = sshll.u32 [#allocation2], 4
      %s6085 = int_to_ptr.vmem [resolvable:$true] %s6084
      %6087 = dma.vmem_to_hbm [thread:$0]  %s6085, 16, %s18, [#allocation3]
    $region77: #{temporal_gnn_forward.1} parent=1 // pred_fallthru
      _
    // Predicated region
    $region78: #{temporal_gnn_forward.1} parent=1 // pred_check
      _
    $region79: #{temporal_gnn_forward.1} parent=1 // pred_check_branch
      %6089 = sbr.rel (0) target = $region81
    $region80: #{temporal_gnn_forward.1} parent=1 // pred_region
      %6090 = dma.done [#allocation3], 16
    $region81: #{temporal_gnn_forward.1} parent=1 // pred_fallthru
      _
    %6091 = vsyncpa [#allocation3], 1

</llo_original>
